<compile_context>
chip_gen: v7x
topology: tpu7x:2x2x1
jax: 0.10.0
libtpu: 0.0.40
codegen_flags: <defaults>
</compile_context>

<pallas_src>
import functools

import jax
import jax.numpy as jnp
from jax import lax
from jax.experimental import pallas as pl
from jax.experimental.pallas import tpu as pltpu


def _aspp_kernel(x_ref, w_ref, b_ref, o_ref, *, rates, tile_h, W, Cin, Cout,
                 maxp):
    """One (batch, H-tile) grid step.

    x_ref: (Hp, Wp, Cin)        zero-padded NHWC image (batch dim squeezed)
    w_ref: (R*9, Cout, Cin)     per-tap weights, tap order (rate, ky, kx)
    b_ref: (Cout, 1)            summed branch biases (f32)
    o_ref: (Cout, tile_h * W)   lane-dense NCHW-flattened output tile
    """
    h = pl.program_id(1)
    r0 = h * tile_h                      # first output row of this tile
    M = tile_h * W

    # Bias folded into the accumulator init (single hoisted broadcast).
    acc = jnp.broadcast_to(b_ref[...], (Cout, M))          # f32

    # R*9 accumulating MXU matmuls straight from the padded image: no im2col
    # scratch, no sub-128-lane masked stores.  Tap order matches w_ref.
    idx = 0
    for rate in rates:
        for ky in range(3):
            y0 = maxp + (ky - 1) * rate
            for kx in range(3):
                x0 = maxp + (kx - 1) * rate
                x_tap = x_ref[pl.ds(r0 + y0, tile_h), pl.ds(x0, W), :]
                # (tile_h, W, Cin) -> (M, Cin).  Layout-preserving when W is a
                # multiple of the sublane packing (16 for bf16, 8 for f32);
                # correct (possibly a relayout) otherwise.
                lhs = x_tap.reshape(M, Cin)
                # (Cout, Cin) x (M, Cin) -> (Cout, M), f32 accumulation.
                acc = acc + lax.dot_general(
                    w_ref[idx], lhs, (((1,), (1,)), ((), ())),
                    preferred_element_type=jnp.float32)
                idx += 1

    o_ref[...] = acc.astype(o_ref.dtype)


def _pick_tile_h(H, W, Cout, B, fixed_vmem_bytes,
                 budget_bytes=12 * 1024 * 1024):
    """Largest H-tile that divides H, keeps the output tile lane-dense
    ((t*W) % 128 == 0), fits the VMEM budget, and (when possible) still leaves
    >= 2 parallel grid steps so v7x's two TensorCores both get work."""
    candidates = [t for t in range(1, H + 1)
                  if H % t == 0 and ((t * W) % 128 == 0 or t == H)]
    if not candidates:
        return H                      # full-extent block is always legal
    candidates.sort(reverse=True)     # biggest first
    budget = max(budget_bytes - fixed_vmem_bytes, 0)

    def fits(t):
        # f32 output tile, double-buffered by the pipeline.
        return Cout * t * W * 4 * 2 <= budget

    fitting = [t for t in candidates if fits(t)]
    if not fitting:
        return candidates[-1]
    for t in fitting:                 # prefer >= 2 grid steps (v7x, 2 TCs)
        if B * (H // t) >= 2:
            return t
    return fitting[0]


def asppv2_forward(x_nchw, weights, biases, rates, *, tile_h=None,
                   compute_dtype=jnp.bfloat16):
    """ASPPv2 forward: sum_r [Conv2d(x, w_r, 3x3, dilation=r, padding=r) + b_r].

    x_nchw:  (B, Cin, H, W)        float32 (PyTorch NCHW)
    weights: (R, Cout, Cin, 3, 3)  per-branch PyTorch OIHW weights
    biases:  (R, Cout)
    rates:   static tuple of atrous rates
    returns: (B, Cout, H, W)

    Note: operands are rounded to `compute_dtype` (bf16 by default, MXU-native)
    with f32 accumulation; pass compute_dtype=jnp.float32 for f32-exact parity.
    """
    B, Cin, H, W = x_nchw.shape
    R, Cout = biases.shape
    assert weights.shape == (R, Cout, Cin, 3, 3), weights.shape
    maxp = max(rates)
    Hp, Wp = H + 2 * maxp, W + 2 * maxp
    itemsize = jnp.dtype(compute_dtype).itemsize

    # VMEM that does not scale with tile_h: batch-resident padded image (x2
    # pipeline buffers) + per-tap weight stack + bias.
    fixed_vmem = (Hp * Wp * Cin * itemsize * 2
                  + R * 9 * Cout * Cin * itemsize * 2
                  + Cout * 4)
    if tile_h is None:
        tile_h = _pick_tile_h(H, W, Cout, B, fixed_vmem)
    if H % tile_h != 0:
        raise ValueError(f"tile_h={tile_h} must divide H={H}")
    n_h = H // tile_h

    # NCHW -> NHWC, zero-pad spatially by max(rates) (covers every dilation;
    # out-of-range taps of smaller rates read the same zeros per-branch
    # padding would), cast to the MXU-native compute dtype.
    x_pad = jnp.pad(jnp.transpose(x_nchw, (0, 2, 3, 1)),
                    ((0, 0), (maxp, maxp), (maxp, maxp), (0, 0)))
    x_pad = x_pad.astype(compute_dtype)

    # (R, Cout, Cin, 3, 3) -> (R*9, Cout, Cin): per-tap weight stack whose
    # leading index order (rate, ky, kx) matches the in-kernel tap loop, so
    # each tap read is a tile-aligned leading-axis index.
    w_taps = jnp.transpose(weights, (0, 3, 4, 1, 2)).reshape(R * 9, Cout, Cin)
    w_taps = w_taps.astype(compute_dtype)

    # All branch biases land on the same summed output -> hoist to one add.
    b_col = jnp.sum(biases, axis=0).reshape(Cout, 1).astype(jnp.float32)

    kernel = functools.partial(_aspp_kernel, rates=tuple(rates),
                               tile_h=tile_h, W=W, Cin=Cin, Cout=Cout,
                               maxp=maxp)

    out_flat = pl.pallas_call(
        kernel,
        out_shape=jax.ShapeDtypeStruct((B, Cout, H * W), x_nchw.dtype),
        grid=(B, n_h),
        in_specs=[
            # Padded image: batch-resident (block index independent of h).
            pl.BlockSpec((None, Hp, Wp, Cin), lambda b, h: (b, 0, 0, 0)),
            pl.BlockSpec((R * 9, Cout, Cin), lambda b, h: (0, 0, 0)),
            pl.BlockSpec((Cout, 1), lambda b, h: (0, 0)),
        ],
        # Lane-dense NCHW-flattened output tile: (Cout, tile_h*W).
        out_specs=pl.BlockSpec((None, Cout, tile_h * W), lambda b, h: (b, 0, h)),
        compiler_params=pltpu.CompilerParams(
            dimension_semantics=("parallel", "parallel"),
            vmem_limit_bytes=32 * 1024 * 1024),
    )(x_pad, w_taps, b_col)

    return out_flat.reshape(B, Cout, H, W)


def _reference(x_nchw, weights, biases, rates):
    out = None
    for ri, rate in enumerate(rates):
        y = lax.conv_general_dilated(
            x_nchw, weights[ri],
            window_strides=(1, 1),
            padding=[(rate, rate), (rate, rate)],
            rhs_dilation=(rate, rate),
            dimension_numbers=("NCHW", "OIHW", "NCHW"),
        ) + biases[ri][None, :, None, None]
        out = y if out is None else out + y
    return out


if __name__ == "__main__":
    # Small synthetic config: ASPPv2(in_channels=4, atrous_rates=(1,2,3), out_channels=8)
    B, Cin, H, W = 2, 4, 16, 16
    Cout = 8
    rates = (1, 2, 3)
    R = len(rates)

    key = jax.random.PRNGKey(0)
    k1, k2, k3 = jax.random.split(key, 3)
    x = jax.random.normal(k1, (B, Cin, H, W), dtype=jnp.float32)
    weights = jax.random.normal(k2, (R, Cout, Cin, 3, 3), dtype=jnp.float32) * 0.1
    biases = jax.random.normal(k3, (R, Cout), dtype=jnp.float32) * 0.1

    fwd = jax.jit(asppv2_forward, static_argnums=(3,))
    out = jax.block_until_ready(fwd(x, weights, biases, rates))
    assert out.shape == (B, Cout, H, W)

    # The kernel computes with bf16 operands + f32 accumulation (MXU-native).
    # Check tightly against a reference fed the same bf16-rounded operands and
    # loosely against the pure-f32 reference.
    x_q = x.astype(jnp.bfloat16).astype(jnp.float32)
    w_q = weights.astype(jnp.bfloat16).astype(jnp.float32)
    ref_q = jax.block_until_ready(_reference(x_q, w_q, biases, rates))
    ref_f = jax.block_until_ready(_reference(x, weights, biases, rates))
    assert jnp.allclose(out, ref_q, atol=1e-2, rtol=1e-2), "mismatch vs bf16-rounded reference"
    assert jnp.allclose(out, ref_f, atol=1e-1, rtol=1e-1), "mismatch vs f32 reference"

    print("KERNEL_OK")
</pallas_src>

<mosaic_0001>
module attributes {stable_mosaic.version = 11 : i64} {
  func.func @_aspp_kernel(%arg0: i32, %arg1: i32, %arg2: memref<1x22x22x4xbf16, #tpu.memory_space<vmem>>, %arg3: memref<27x8x4xbf16, #tpu.memory_space<vmem>>, %arg4: memref<8x1xf32, #tpu.memory_space<vmem>>, %arg5: memref<1x8x256xf32, #tpu.memory_space<vmem>>) attributes {dimension_semantics = [#tpu.dimension_semantics<parallel>, #tpu.dimension_semantics<parallel>], iteration_bounds = array<i64: 2, 1>, scalar_prefetch = 0 : i64, scratch_operands = 0 : i64, tpu.core_type = #tpu.core_type<tc>, window_params = [{transform_indices = @transform_0, window_bounds = array<i64: 1, 22, 22, 4>}, {pipeline_mode = #tpu.pipeline_mode<synchronous>, transform_indices = @transform_1, window_bounds = array<i64: 27, 8, 4>}, {pipeline_mode = #tpu.pipeline_mode<synchronous>, transform_indices = @transform_2, window_bounds = array<i64: 8, 1>}, {transform_indices = @transform_3, window_bounds = array<i64: 1, 8, 256>}]} {
    %c16_i32 = arith.constant 16 : i32
    %0 = arith.muli %arg1, %c16_i32 : i32
    %c0 = arith.constant 0 : index
    %c0_0 = arith.constant 0 : index
    %1 = vector.load %arg4[%c0, %c0_0] : memref<8x1xf32, #tpu.memory_space<vmem>>, vector<8x1xf32>
    %2 = vector.shape_cast %1 : vector<8x1xf32> to vector<8x1xf32>
    %3 = vector.broadcast %2 : vector<8x1xf32> to vector<8x256xf32>
    %c2_i32 = arith.constant 2 : i32
    %4 = arith.addi %0, %c2_i32 : i32
    %c0_1 = arith.constant 0 : index
    %5 = arith.index_cast %4 : i32 to index
    %c2 = arith.constant 2 : index
    %c0_2 = arith.constant 0 : index
    %6 = vector.load %arg2[%c0_1, %5, %c2, %c0_2] : memref<1x22x22x4xbf16, #tpu.memory_space<vmem>>, vector<1x16x16x4xbf16>
    %7 = vector.shape_cast %6 : vector<1x16x16x4xbf16> to vector<16x16x4xbf16>
    %8 = vector.shape_cast %7 : vector<16x16x4xbf16> to vector<256x4xbf16>
    %c0_3 = arith.constant 0 : index
    %c0_4 = arith.constant 0 : index
    %c0_5 = arith.constant 0 : index
    %9 = vector.load %arg3[%c0_3, %c0_4, %c0_5] : memref<27x8x4xbf16, #tpu.memory_space<vmem>>, vector<1x8x4xbf16>
    %10 = vector.shape_cast %9 : vector<1x8x4xbf16> to vector<8x4xbf16>
    %cst = arith.constant dense<0.000000e+00> : vector<8x256xf32>
    %11 = tpu.matmul %10, %8, %cst {dimension_numbers = #tpu.dot_dimension_numbers<[1], [1], [0], [0], [0, 0, 1, 0], [], []>} : vector<8x4xbf16>, vector<256x4xbf16>, vector<8x256xf32> -> vector<8x256xf32>
    %12 = arith.addf %3, %11 : vector<8x256xf32>
    %c2_i32_6 = arith.constant 2 : i32
    %13 = arith.addi %0, %c2_i32_6 : i32
    %c0_7 = arith.constant 0 : index
    %14 = arith.index_cast %13 : i32 to index
    %c3 = arith.constant 3 : index
    %c0_8 = arith.constant 0 : index
    %15 = vector.load %arg2[%c0_7, %14, %c3, %c0_8] : memref<1x22x22x4xbf16, #tpu.memory_space<vmem>>, vector<1x16x16x4xbf16>
    %16 = vector.shape_cast %15 : vector<1x16x16x4xbf16> to vector<16x16x4xbf16>
    %17 = vector.shape_cast %16 : vector<16x16x4xbf16> to vector<256x4xbf16>
    %c1 = arith.constant 1 : index
    %c0_9 = arith.constant 0 : index
    %c0_10 = arith.constant 0 : index
    %18 = vector.load %arg3[%c1, %c0_9, %c0_10] : memref<27x8x4xbf16, #tpu.memory_space<vmem>>, vector<1x8x4xbf16>
    %19 = vector.shape_cast %18 : vector<1x8x4xbf16> to vector<8x4xbf16>
    %cst_11 = arith.constant dense<0.000000e+00> : vector<8x256xf32>
    %20 = tpu.matmul %19, %17, %cst_11 {dimension_numbers = #tpu.dot_dimension_numbers<[1], [1], [0], [0], [0, 0, 1, 0], [], []>} : vector<8x4xbf16>, vector<256x4xbf16>, vector<8x256xf32> -> vector<8x256xf32>
    %21 = arith.addf %12, %20 : vector<8x256xf32>
    %c2_i32_12 = arith.constant 2 : i32
    %22 = arith.addi %0, %c2_i32_12 : i32
    %c0_13 = arith.constant 0 : index
    %23 = arith.index_cast %22 : i32 to index
    %c4 = arith.constant 4 : index
    %c0_14 = arith.constant 0 : index
    %24 = vector.load %arg2[%c0_13, %23, %c4, %c0_14] : memref<1x22x22x4xbf16, #tpu.memory_space<vmem>>, vector<1x16x16x4xbf16>
    %25 = vector.shape_cast %24 : vector<1x16x16x4xbf16> to vector<16x16x4xbf16>
    %26 = vector.shape_cast %25 : vector<16x16x4xbf16> to vector<256x4xbf16>
    %c2_15 = arith.constant 2 : index
    %c0_16 = arith.constant 0 : index
    %c0_17 = arith.constant 0 : index
    %27 = vector.load %arg3[%c2_15, %c0_16, %c0_17] : memref<27x8x4xbf16, #tpu.memory_space<vmem>>, vector<1x8x4xbf16>
    %28 = vector.shape_cast %27 : vector<1x8x4xbf16> to vector<8x4xbf16>
    %cst_18 = arith.constant dense<0.000000e+00> : vector<8x256xf32>
    %29 = tpu.matmul %28, %26, %cst_18 {dimension_numbers = #tpu.dot_dimension_numbers<[1], [1], [0], [0], [0, 0, 1, 0], [], []>} : vector<8x4xbf16>, vector<256x4xbf16>, vector<8x256xf32> -> vector<8x256xf32>
    %30 = arith.addf %21, %29 : vector<8x256xf32>
    %c3_i32 = arith.constant 3 : i32
    %31 = arith.addi %0, %c3_i32 : i32
    %c0_19 = arith.constant 0 : index
    %32 = arith.index_cast %31 : i32 to index
    %c2_20 = arith.constant 2 : index
    %c0_21 = arith.constant 0 : index
    %33 = vector.load %arg2[%c0_19, %32, %c2_20, %c0_21] : memref<1x22x22x4xbf16, #tpu.memory_space<vmem>>, vector<1x16x16x4xbf16>
    %34 = vector.shape_cast %33 : vector<1x16x16x4xbf16> to vector<16x16x4xbf16>
    %35 = vector.shape_cast %34 : vector<16x16x4xbf16> to vector<256x4xbf16>
    %c3_22 = arith.constant 3 : index
    %c0_23 = arith.constant 0 : index
    %c0_24 = arith.constant 0 : index
    %36 = vector.load %arg3[%c3_22, %c0_23, %c0_24] : memref<27x8x4xbf16, #tpu.memory_space<vmem>>, vector<1x8x4xbf16>
    %37 = vector.shape_cast %36 : vector<1x8x4xbf16> to vector<8x4xbf16>
    %cst_25 = arith.constant dense<0.000000e+00> : vector<8x256xf32>
    %38 = tpu.matmul %37, %35, %cst_25 {dimension_numbers = #tpu.dot_dimension_numbers<[1], [1], [0], [0], [0, 0, 1, 0], [], []>} : vector<8x4xbf16>, vector<256x4xbf16>, vector<8x256xf32> -> vector<8x256xf32>
    %39 = arith.addf %30, %38 : vector<8x256xf32>
    %c3_i32_26 = arith.constant 3 : i32
    %40 = arith.addi %0, %c3_i32_26 : i32
    %c0_27 = arith.constant 0 : index
    %41 = arith.index_cast %40 : i32 to index
    %c3_28 = arith.constant 3 : index
    %c0_29 = arith.constant 0 : index
    %42 = vector.load %arg2[%c0_27, %41, %c3_28, %c0_29] : memref<1x22x22x4xbf16, #tpu.memory_space<vmem>>, vector<1x16x16x4xbf16>
    %43 = vector.shape_cast %42 : vector<1x16x16x4xbf16> to vector<16x16x4xbf16>
    %44 = vector.shape_cast %43 : vector<16x16x4xbf16> to vector<256x4xbf16>
    %c4_30 = arith.constant 4 : index
    %c0_31 = arith.constant 0 : index
    %c0_32 = arith.constant 0 : index
    %45 = vector.load %arg3[%c4_30, %c0_31, %c0_32] : memref<27x8x4xbf16, #tpu.memory_space<vmem>>, vector<1x8x4xbf16>
    %46 = vector.shape_cast %45 : vector<1x8x4xbf16> to vector<8x4xbf16>
    %cst_33 = arith.constant dense<0.000000e+00> : vector<8x256xf32>
    %47 = tpu.matmul %46, %44, %cst_33 {dimension_numbers = #tpu.dot_dimension_numbers<[1], [1], [0], [0], [0, 0, 1, 0], [], []>} : vector<8x4xbf16>, vector<256x4xbf16>, vector<8x256xf32> -> vector<8x256xf32>
    %48 = arith.addf %39, %47 : vector<8x256xf32>
    %c3_i32_34 = arith.constant 3 : i32
    %49 = arith.addi %0, %c3_i32_34 : i32
    %c0_35 = arith.constant 0 : index
    %50 = arith.index_cast %49 : i32 to index
    %c4_36 = arith.constant 4 : index
    %c0_37 = arith.constant 0 : index
    %51 = vector.load %arg2[%c0_35, %50, %c4_36, %c0_37] : memref<1x22x22x4xbf16, #tpu.memory_space<vmem>>, vector<1x16x16x4xbf16>
    %52 = vector.shape_cast %51 : vector<1x16x16x4xbf16> to vector<16x16x4xbf16>
    %53 = vector.shape_cast %52 : vector<16x16x4xbf16> to vector<256x4xbf16>
    %c5 = arith.constant 5 : index
    %c0_38 = arith.constant 0 : index
    %c0_39 = arith.constant 0 : index
    %54 = vector.load %arg3[%c5, %c0_38, %c0_39] : memref<27x8x4xbf16, #tpu.memory_space<vmem>>, vector<1x8x4xbf16>
    %55 = vector.shape_cast %54 : vector<1x8x4xbf16> to vector<8x4xbf16>
    %cst_40 = arith.constant dense<0.000000e+00> : vector<8x256xf32>
    %56 = tpu.matmul %55, %53, %cst_40 {dimension_numbers = #tpu.dot_dimension_numbers<[1], [1], [0], [0], [0, 0, 1, 0], [], []>} : vector<8x4xbf16>, vector<256x4xbf16>, vector<8x256xf32> -> vector<8x256xf32>
    %57 = arith.addf %48, %56 : vector<8x256xf32>
    %c4_i32 = arith.constant 4 : i32
    %58 = arith.addi %0, %c4_i32 : i32
    %c0_41 = arith.constant 0 : index
    %59 = arith.index_cast %58 : i32 to index
    %c2_42 = arith.constant 2 : index
    %c0_43 = arith.constant 0 : index
    %60 = vector.load %arg2[%c0_41, %59, %c2_42, %c0_43] : memref<1x22x22x4xbf16, #tpu.memory_space<vmem>>, vector<1x16x16x4xbf16>
    %61 = vector.shape_cast %60 : vector<1x16x16x4xbf16> to vector<16x16x4xbf16>
    %62 = vector.shape_cast %61 : vector<16x16x4xbf16> to vector<256x4xbf16>
    %c6 = arith.constant 6 : index
    %c0_44 = arith.constant 0 : index
    %c0_45 = arith.constant 0 : index
    %63 = vector.load %arg3[%c6, %c0_44, %c0_45] : memref<27x8x4xbf16, #tpu.memory_space<vmem>>, vector<1x8x4xbf16>
    %64 = vector.shape_cast %63 : vector<1x8x4xbf16> to vector<8x4xbf16>
    %cst_46 = arith.constant dense<0.000000e+00> : vector<8x256xf32>
    %65 = tpu.matmul %64, %62, %cst_46 {dimension_numbers = #tpu.dot_dimension_numbers<[1], [1], [0], [0], [0, 0, 1, 0], [], []>} : vector<8x4xbf16>, vector<256x4xbf16>, vector<8x256xf32> -> vector<8x256xf32>
    %66 = arith.addf %57, %65 : vector<8x256xf32>
    %c4_i32_47 = arith.constant 4 : i32
    %67 = arith.addi %0, %c4_i32_47 : i32
    %c0_48 = arith.constant 0 : index
    %68 = arith.index_cast %67 : i32 to index
    %c3_49 = arith.constant 3 : index
    %c0_50 = arith.constant 0 : index
    %69 = vector.load %arg2[%c0_48, %68, %c3_49, %c0_50] : memref<1x22x22x4xbf16, #tpu.memory_space<vmem>>, vector<1x16x16x4xbf16>
    %70 = vector.shape_cast %69 : vector<1x16x16x4xbf16> to vector<16x16x4xbf16>
    %71 = vector.shape_cast %70 : vector<16x16x4xbf16> to vector<256x4xbf16>
    %c7 = arith.constant 7 : index
    %c0_51 = arith.constant 0 : index
    %c0_52 = arith.constant 0 : index
    %72 = vector.load %arg3[%c7, %c0_51, %c0_52] : memref<27x8x4xbf16, #tpu.memory_space<vmem>>, vector<1x8x4xbf16>
    %73 = vector.shape_cast %72 : vector<1x8x4xbf16> to vector<8x4xbf16>
    %cst_53 = arith.constant dense<0.000000e+00> : vector<8x256xf32>
    %74 = tpu.matmul %73, %71, %cst_53 {dimension_numbers = #tpu.dot_dimension_numbers<[1], [1], [0], [0], [0, 0, 1, 0], [], []>} : vector<8x4xbf16>, vector<256x4xbf16>, vector<8x256xf32> -> vector<8x256xf32>
    %75 = arith.addf %66, %74 : vector<8x256xf32>
    %c4_i32_54 = arith.constant 4 : i32
    %76 = arith.addi %0, %c4_i32_54 : i32
    %c0_55 = arith.constant 0 : index
    %77 = arith.index_cast %76 : i32 to index
    %c4_56 = arith.constant 4 : index
    %c0_57 = arith.constant 0 : index
    %78 = vector.load %arg2[%c0_55, %77, %c4_56, %c0_57] : memref<1x22x22x4xbf16, #tpu.memory_space<vmem>>, vector<1x16x16x4xbf16>
    %79 = vector.shape_cast %78 : vector<1x16x16x4xbf16> to vector<16x16x4xbf16>
    %80 = vector.shape_cast %79 : vector<16x16x4xbf16> to vector<256x4xbf16>
    %c8 = arith.constant 8 : index
    %c0_58 = arith.constant 0 : index
    %c0_59 = arith.constant 0 : index
    %81 = vector.load %arg3[%c8, %c0_58, %c0_59] : memref<27x8x4xbf16, #tpu.memory_space<vmem>>, vector<1x8x4xbf16>
    %82 = vector.shape_cast %81 : vector<1x8x4xbf16> to vector<8x4xbf16>
    %cst_60 = arith.constant dense<0.000000e+00> : vector<8x256xf32>
    %83 = tpu.matmul %82, %80, %cst_60 {dimension_numbers = #tpu.dot_dimension_numbers<[1], [1], [0], [0], [0, 0, 1, 0], [], []>} : vector<8x4xbf16>, vector<256x4xbf16>, vector<8x256xf32> -> vector<8x256xf32>
    %84 = arith.addf %75, %83 : vector<8x256xf32>
    %c1_i32 = arith.constant 1 : i32
    %85 = arith.addi %0, %c1_i32 : i32
    %c0_61 = arith.constant 0 : index
    %86 = arith.index_cast %85 : i32 to index
    %c1_62 = arith.constant 1 : index
    %c0_63 = arith.constant 0 : index
    %87 = vector.load %arg2[%c0_61, %86, %c1_62, %c0_63] : memref<1x22x22x4xbf16, #tpu.memory_space<vmem>>, vector<1x16x16x4xbf16>
    %88 = vector.shape_cast %87 : vector<1x16x16x4xbf16> to vector<16x16x4xbf16>
    %89 = vector.shape_cast %88 : vector<16x16x4xbf16> to vector<256x4xbf16>
    %c9 = arith.constant 9 : index
    %c0_64 = arith.constant 0 : index
    %c0_65 = arith.constant 0 : index
    %90 = vector.load %arg3[%c9, %c0_64, %c0_65] : memref<27x8x4xbf16, #tpu.memory_space<vmem>>, vector<1x8x4xbf16>
    %91 = vector.shape_cast %90 : vector<1x8x4xbf16> to vector<8x4xbf16>
    %cst_66 = arith.constant dense<0.000000e+00> : vector<8x256xf32>
    %92 = tpu.matmul %91, %89, %cst_66 {dimension_numbers = #tpu.dot_dimension_numbers<[1], [1], [0], [0], [0, 0, 1, 0], [], []>} : vector<8x4xbf16>, vector<256x4xbf16>, vector<8x256xf32> -> vector<8x256xf32>
    %93 = arith.addf %84, %92 : vector<8x256xf32>
    %c1_i32_67 = arith.constant 1 : i32
    %94 = arith.addi %0, %c1_i32_67 : i32
    %c0_68 = arith.constant 0 : index
    %95 = arith.index_cast %94 : i32 to index
    %c3_69 = arith.constant 3 : index
    %c0_70 = arith.constant 0 : index
    %96 = vector.load %arg2[%c0_68, %95, %c3_69, %c0_70] : memref<1x22x22x4xbf16, #tpu.memory_space<vmem>>, vector<1x16x16x4xbf16>
    %97 = vector.shape_cast %96 : vector<1x16x16x4xbf16> to vector<16x16x4xbf16>
    %98 = vector.shape_cast %97 : vector<16x16x4xbf16> to vector<256x4xbf16>
    %c10 = arith.constant 10 : index
    %c0_71 = arith.constant 0 : index
    %c0_72 = arith.constant 0 : index
    %99 = vector.load %arg3[%c10, %c0_71, %c0_72] : memref<27x8x4xbf16, #tpu.memory_space<vmem>>, vector<1x8x4xbf16>
    %100 = vector.shape_cast %99 : vector<1x8x4xbf16> to vector<8x4xbf16>
    %cst_73 = arith.constant dense<0.000000e+00> : vector<8x256xf32>
    %101 = tpu.matmul %100, %98, %cst_73 {dimension_numbers = #tpu.dot_dimension_numbers<[1], [1], [0], [0], [0, 0, 1, 0], [], []>} : vector<8x4xbf16>, vector<256x4xbf16>, vector<8x256xf32> -> vector<8x256xf32>
    %102 = arith.addf %93, %101 : vector<8x256xf32>
    %c1_i32_74 = arith.constant 1 : i32
    %103 = arith.addi %0, %c1_i32_74 : i32
    %c0_75 = arith.constant 0 : index
    %104 = arith.index_cast %103 : i32 to index
    %c5_76 = arith.constant 5 : index
    %c0_77 = arith.constant 0 : index
    %105 = vector.load %arg2[%c0_75, %104, %c5_76, %c0_77] : memref<1x22x22x4xbf16, #tpu.memory_space<vmem>>, vector<1x16x16x4xbf16>
    %106 = vector.shape_cast %105 : vector<1x16x16x4xbf16> to vector<16x16x4xbf16>
    %107 = vector.shape_cast %106 : vector<16x16x4xbf16> to vector<256x4xbf16>
    %c11 = arith.constant 11 : index
    %c0_78 = arith.constant 0 : index
    %c0_79 = arith.constant 0 : index
    %108 = vector.load %arg3[%c11, %c0_78, %c0_79] : memref<27x8x4xbf16, #tpu.memory_space<vmem>>, vector<1x8x4xbf16>
    %109 = vector.shape_cast %108 : vector<1x8x4xbf16> to vector<8x4xbf16>
    %cst_80 = arith.constant dense<0.000000e+00> : vector<8x256xf32>
    %110 = tpu.matmul %109, %107, %cst_80 {dimension_numbers = #tpu.dot_dimension_numbers<[1], [1], [0], [0], [0, 0, 1, 0], [], []>} : vector<8x4xbf16>, vector<256x4xbf16>, vector<8x256xf32> -> vector<8x256xf32>
    %111 = arith.addf %102, %110 : vector<8x256xf32>
    %c3_i32_81 = arith.constant 3 : i32
    %112 = arith.addi %0, %c3_i32_81 : i32
    %c0_82 = arith.constant 0 : index
    %113 = arith.index_cast %112 : i32 to index
    %c1_83 = arith.constant 1 : index
    %c0_84 = arith.constant 0 : index
    %114 = vector.load %arg2[%c0_82, %113, %c1_83, %c0_84] : memref<1x22x22x4xbf16, #tpu.memory_space<vmem>>, vector<1x16x16x4xbf16>
    %115 = vector.shape_cast %114 : vector<1x16x16x4xbf16> to vector<16x16x4xbf16>
    %116 = vector.shape_cast %115 : vector<16x16x4xbf16> to vector<256x4xbf16>
    %c12 = arith.constant 12 : index
    %c0_85 = arith.constant 0 : index
    %c0_86 = arith.constant 0 : index
    %117 = vector.load %arg3[%c12, %c0_85, %c0_86] : memref<27x8x4xbf16, #tpu.memory_space<vmem>>, vector<1x8x4xbf16>
    %118 = vector.shape_cast %117 : vector<1x8x4xbf16> to vector<8x4xbf16>
    %cst_87 = arith.constant dense<0.000000e+00> : vector<8x256xf32>
    %119 = tpu.matmul %118, %116, %cst_87 {dimension_numbers = #tpu.dot_dimension_numbers<[1], [1], [0], [0], [0, 0, 1, 0], [], []>} : vector<8x4xbf16>, vector<256x4xbf16>, vector<8x256xf32> -> vector<8x256xf32>
    %120 = arith.addf %111, %119 : vector<8x256xf32>
    %c3_i32_88 = arith.constant 3 : i32
    %121 = arith.addi %0, %c3_i32_88 : i32
    %c0_89 = arith.constant 0 : index
    %122 = arith.index_cast %121 : i32 to index
    %c3_90 = arith.constant 3 : index
    %c0_91 = arith.constant 0 : index
    %123 = vector.load %arg2[%c0_89, %122, %c3_90, %c0_91] : memref<1x22x22x4xbf16, #tpu.memory_space<vmem>>, vector<1x16x16x4xbf16>
    %124 = vector.shape_cast %123 : vector<1x16x16x4xbf16> to vector<16x16x4xbf16>
    %125 = vector.shape_cast %124 : vector<16x16x4xbf16> to vector<256x4xbf16>
    %c13 = arith.constant 13 : index
    %c0_92 = arith.constant 0 : index
    %c0_93 = arith.constant 0 : index
    %126 = vector.load %arg3[%c13, %c0_92, %c0_93] : memref<27x8x4xbf16, #tpu.memory_space<vmem>>, vector<1x8x4xbf16>
    %127 = vector.shape_cast %126 : vector<1x8x4xbf16> to vector<8x4xbf16>
    %cst_94 = arith.constant dense<0.000000e+00> : vector<8x256xf32>
    %128 = tpu.matmul %127, %125, %cst_94 {dimension_numbers = #tpu.dot_dimension_numbers<[1], [1], [0], [0], [0, 0, 1, 0], [], []>} : vector<8x4xbf16>, vector<256x4xbf16>, vector<8x256xf32> -> vector<8x256xf32>
    %129 = arith.addf %120, %128 : vector<8x256xf32>
    %c3_i32_95 = arith.constant 3 : i32
    %130 = arith.addi %0, %c3_i32_95 : i32
    %c0_96 = arith.constant 0 : index
    %131 = arith.index_cast %130 : i32 to index
    %c5_97 = arith.constant 5 : index
    %c0_98 = arith.constant 0 : index
    %132 = vector.load %arg2[%c0_96, %131, %c5_97, %c0_98] : memref<1x22x22x4xbf16, #tpu.memory_space<vmem>>, vector<1x16x16x4xbf16>
    %133 = vector.shape_cast %132 : vector<1x16x16x4xbf16> to vector<16x16x4xbf16>
    %134 = vector.shape_cast %133 : vector<16x16x4xbf16> to vector<256x4xbf16>
    %c14 = arith.constant 14 : index
    %c0_99 = arith.constant 0 : index
    %c0_100 = arith.constant 0 : index
    %135 = vector.load %arg3[%c14, %c0_99, %c0_100] : memref<27x8x4xbf16, #tpu.memory_space<vmem>>, vector<1x8x4xbf16>
    %136 = vector.shape_cast %135 : vector<1x8x4xbf16> to vector<8x4xbf16>
    %cst_101 = arith.constant dense<0.000000e+00> : vector<8x256xf32>
    %137 = tpu.matmul %136, %134, %cst_101 {dimension_numbers = #tpu.dot_dimension_numbers<[1], [1], [0], [0], [0, 0, 1, 0], [], []>} : vector<8x4xbf16>, vector<256x4xbf16>, vector<8x256xf32> -> vector<8x256xf32>
    %138 = arith.addf %129, %137 : vector<8x256xf32>
    %c5_i32 = arith.constant 5 : i32
    %139 = arith.addi %0, %c5_i32 : i32
    %c0_102 = arith.constant 0 : index
    %140 = arith.index_cast %139 : i32 to index
    %c1_103 = arith.constant 1 : index
    %c0_104 = arith.constant 0 : index
    %141 = vector.load %arg2[%c0_102, %140, %c1_103, %c0_104] : memref<1x22x22x4xbf16, #tpu.memory_space<vmem>>, vector<1x16x16x4xbf16>
    %142 = vector.shape_cast %141 : vector<1x16x16x4xbf16> to vector<16x16x4xbf16>
    %143 = vector.shape_cast %142 : vector<16x16x4xbf16> to vector<256x4xbf16>
    %c15 = arith.constant 15 : index
    %c0_105 = arith.constant 0 : index
    %c0_106 = arith.constant 0 : index
    %144 = vector.load %arg3[%c15, %c0_105, %c0_106] : memref<27x8x4xbf16, #tpu.memory_space<vmem>>, vector<1x8x4xbf16>
    %145 = vector.shape_cast %144 : vector<1x8x4xbf16> to vector<8x4xbf16>
    %cst_107 = arith.constant dense<0.000000e+00> : vector<8x256xf32>
    %146 = tpu.matmul %145, %143, %cst_107 {dimension_numbers = #tpu.dot_dimension_numbers<[1], [1], [0], [0], [0, 0, 1, 0], [], []>} : vector<8x4xbf16>, vector<256x4xbf16>, vector<8x256xf32> -> vector<8x256xf32>
    %147 = arith.addf %138, %146 : vector<8x256xf32>
    %c5_i32_108 = arith.constant 5 : i32
    %148 = arith.addi %0, %c5_i32_108 : i32
    %c0_109 = arith.constant 0 : index
    %149 = arith.index_cast %148 : i32 to index
    %c3_110 = arith.constant 3 : index
    %c0_111 = arith.constant 0 : index
    %150 = vector.load %arg2[%c0_109, %149, %c3_110, %c0_111] : memref<1x22x22x4xbf16, #tpu.memory_space<vmem>>, vector<1x16x16x4xbf16>
    %151 = vector.shape_cast %150 : vector<1x16x16x4xbf16> to vector<16x16x4xbf16>
    %152 = vector.shape_cast %151 : vector<16x16x4xbf16> to vector<256x4xbf16>
    %c16 = arith.constant 16 : index
    %c0_112 = arith.constant 0 : index
    %c0_113 = arith.constant 0 : index
    %153 = vector.load %arg3[%c16, %c0_112, %c0_113] : memref<27x8x4xbf16, #tpu.memory_space<vmem>>, vector<1x8x4xbf16>
    %154 = vector.shape_cast %153 : vector<1x8x4xbf16> to vector<8x4xbf16>
    %cst_114 = arith.constant dense<0.000000e+00> : vector<8x256xf32>
    %155 = tpu.matmul %154, %152, %cst_114 {dimension_numbers = #tpu.dot_dimension_numbers<[1], [1], [0], [0], [0, 0, 1, 0], [], []>} : vector<8x4xbf16>, vector<256x4xbf16>, vector<8x256xf32> -> vector<8x256xf32>
    %156 = arith.addf %147, %155 : vector<8x256xf32>
    %c5_i32_115 = arith.constant 5 : i32
    %157 = arith.addi %0, %c5_i32_115 : i32
    %c0_116 = arith.constant 0 : index
    %158 = arith.index_cast %157 : i32 to index
    %c5_117 = arith.constant 5 : index
    %c0_118 = arith.constant 0 : index
    %159 = vector.load %arg2[%c0_116, %158, %c5_117, %c0_118] : memref<1x22x22x4xbf16, #tpu.memory_space<vmem>>, vector<1x16x16x4xbf16>
    %160 = vector.shape_cast %159 : vector<1x16x16x4xbf16> to vector<16x16x4xbf16>
    %161 = vector.shape_cast %160 : vector<16x16x4xbf16> to vector<256x4xbf16>
    %c17 = arith.constant 17 : index
    %c0_119 = arith.constant 0 : index
    %c0_120 = arith.constant 0 : index
    %162 = vector.load %arg3[%c17, %c0_119, %c0_120] : memref<27x8x4xbf16, #tpu.memory_space<vmem>>, vector<1x8x4xbf16>
    %163 = vector.shape_cast %162 : vector<1x8x4xbf16> to vector<8x4xbf16>
    %cst_121 = arith.constant dense<0.000000e+00> : vector<8x256xf32>
    %164 = tpu.matmul %163, %161, %cst_121 {dimension_numbers = #tpu.dot_dimension_numbers<[1], [1], [0], [0], [0, 0, 1, 0], [], []>} : vector<8x4xbf16>, vector<256x4xbf16>, vector<8x256xf32> -> vector<8x256xf32>
    %165 = arith.addf %156, %164 : vector<8x256xf32>
    %c0_i32 = arith.constant 0 : i32
    %166 = arith.addi %0, %c0_i32 : i32
    %c0_122 = arith.constant 0 : index
    %167 = arith.index_cast %166 : i32 to index
    %c0_123 = arith.constant 0 : index
    %c0_124 = arith.constant 0 : index
    %168 = vector.load %arg2[%c0_122, %167, %c0_123, %c0_124] : memref<1x22x22x4xbf16, #tpu.memory_space<vmem>>, vector<1x16x16x4xbf16>
    %169 = vector.shape_cast %168 : vector<1x16x16x4xbf16> to vector<16x16x4xbf16>
    %170 = vector.shape_cast %169 : vector<16x16x4xbf16> to vector<256x4xbf16>
    %c18 = arith.constant 18 : index
    %c0_125 = arith.constant 0 : index
    %c0_126 = arith.constant 0 : index
    %171 = vector.load %arg3[%c18, %c0_125, %c0_126] : memref<27x8x4xbf16, #tpu.memory_space<vmem>>, vector<1x8x4xbf16>
    %172 = vector.shape_cast %171 : vector<1x8x4xbf16> to vector<8x4xbf16>
    %cst_127 = arith.constant dense<0.000000e+00> : vector<8x256xf32>
    %173 = tpu.matmul %172, %170, %cst_127 {dimension_numbers = #tpu.dot_dimension_numbers<[1], [1], [0], [0], [0, 0, 1, 0], [], []>} : vector<8x4xbf16>, vector<256x4xbf16>, vector<8x256xf32> -> vector<8x256xf32>
    %174 = arith.addf %165, %173 : vector<8x256xf32>
    %c0_i32_128 = arith.constant 0 : i32
    %175 = arith.addi %0, %c0_i32_128 : i32
    %c0_129 = arith.constant 0 : index
    %176 = arith.index_cast %175 : i32 to index
    %c3_130 = arith.constant 3 : index
    %c0_131 = arith.constant 0 : index
    %177 = vector.load %arg2[%c0_129, %176, %c3_130, %c0_131] : memref<1x22x22x4xbf16, #tpu.memory_space<vmem>>, vector<1x16x16x4xbf16>
    %178 = vector.shape_cast %177 : vector<1x16x16x4xbf16> to vector<16x16x4xbf16>
    %179 = vector.shape_cast %178 : vector<16x16x4xbf16> to vector<256x4xbf16>
    %c19 = arith.constant 19 : index
    %c0_132 = arith.constant 0 : index
    %c0_133 = arith.constant 0 : index
    %180 = vector.load %arg3[%c19, %c0_132, %c0_133] : memref<27x8x4xbf16, #tpu.memory_space<vmem>>, vector<1x8x4xbf16>
    %181 = vector.shape_cast %180 : vector<1x8x4xbf16> to vector<8x4xbf16>
    %cst_134 = arith.constant dense<0.000000e+00> : vector<8x256xf32>
    %182 = tpu.matmul %181, %179, %cst_134 {dimension_numbers = #tpu.dot_dimension_numbers<[1], [1], [0], [0], [0, 0, 1, 0], [], []>} : vector<8x4xbf16>, vector<256x4xbf16>, vector<8x256xf32> -> vector<8x256xf32>
    %183 = arith.addf %174, %182 : vector<8x256xf32>
    %c0_i32_135 = arith.constant 0 : i32
    %184 = arith.addi %0, %c0_i32_135 : i32
    %c0_136 = arith.constant 0 : index
    %185 = arith.index_cast %184 : i32 to index
    %c6_137 = arith.constant 6 : index
    %c0_138 = arith.constant 0 : index
    %186 = vector.load %arg2[%c0_136, %185, %c6_137, %c0_138] : memref<1x22x22x4xbf16, #tpu.memory_space<vmem>>, vector<1x16x16x4xbf16>
    %187 = vector.shape_cast %186 : vector<1x16x16x4xbf16> to vector<16x16x4xbf16>
    %188 = vector.shape_cast %187 : vector<16x16x4xbf16> to vector<256x4xbf16>
    %c20 = arith.constant 20 : index
    %c0_139 = arith.constant 0 : index
    %c0_140 = arith.constant 0 : index
    %189 = vector.load %arg3[%c20, %c0_139, %c0_140] : memref<27x8x4xbf16, #tpu.memory_space<vmem>>, vector<1x8x4xbf16>
    %190 = vector.shape_cast %189 : vector<1x8x4xbf16> to vector<8x4xbf16>
    %cst_141 = arith.constant dense<0.000000e+00> : vector<8x256xf32>
    %191 = tpu.matmul %190, %188, %cst_141 {dimension_numbers = #tpu.dot_dimension_numbers<[1], [1], [0], [0], [0, 0, 1, 0], [], []>} : vector<8x4xbf16>, vector<256x4xbf16>, vector<8x256xf32> -> vector<8x256xf32>
    %192 = arith.addf %183, %191 : vector<8x256xf32>
    %c3_i32_142 = arith.constant 3 : i32
    %193 = arith.addi %0, %c3_i32_142 : i32
    %c0_143 = arith.constant 0 : index
    %194 = arith.index_cast %193 : i32 to index
    %c0_144 = arith.constant 0 : index
    %c0_145 = arith.constant 0 : index
    %195 = vector.load %arg2[%c0_143, %194, %c0_144, %c0_145] : memref<1x22x22x4xbf16, #tpu.memory_space<vmem>>, vector<1x16x16x4xbf16>
    %196 = vector.shape_cast %195 : vector<1x16x16x4xbf16> to vector<16x16x4xbf16>
    %197 = vector.shape_cast %196 : vector<16x16x4xbf16> to vector<256x4xbf16>
    %c21 = arith.constant 21 : index
    %c0_146 = arith.constant 0 : index
    %c0_147 = arith.constant 0 : index
    %198 = vector.load %arg3[%c21, %c0_146, %c0_147] : memref<27x8x4xbf16, #tpu.memory_space<vmem>>, vector<1x8x4xbf16>
    %199 = vector.shape_cast %198 : vector<1x8x4xbf16> to vector<8x4xbf16>
    %cst_148 = arith.constant dense<0.000000e+00> : vector<8x256xf32>
    %200 = tpu.matmul %199, %197, %cst_148 {dimension_numbers = #tpu.dot_dimension_numbers<[1], [1], [0], [0], [0, 0, 1, 0], [], []>} : vector<8x4xbf16>, vector<256x4xbf16>, vector<8x256xf32> -> vector<8x256xf32>
    %201 = arith.addf %192, %200 : vector<8x256xf32>
    %c3_i32_149 = arith.constant 3 : i32
    %202 = arith.addi %0, %c3_i32_149 : i32
    %c0_150 = arith.constant 0 : index
    %203 = arith.index_cast %202 : i32 to index
    %c3_151 = arith.constant 3 : index
    %c0_152 = arith.constant 0 : index
    %204 = vector.load %arg2[%c0_150, %203, %c3_151, %c0_152] : memref<1x22x22x4xbf16, #tpu.memory_space<vmem>>, vector<1x16x16x4xbf16>
    %205 = vector.shape_cast %204 : vector<1x16x16x4xbf16> to vector<16x16x4xbf16>
    %206 = vector.shape_cast %205 : vector<16x16x4xbf16> to vector<256x4xbf16>
    %c22 = arith.constant 22 : index
    %c0_153 = arith.constant 0 : index
    %c0_154 = arith.constant 0 : index
    %207 = vector.load %arg3[%c22, %c0_153, %c0_154] : memref<27x8x4xbf16, #tpu.memory_space<vmem>>, vector<1x8x4xbf16>
    %208 = vector.shape_cast %207 : vector<1x8x4xbf16> to vector<8x4xbf16>
    %cst_155 = arith.constant dense<0.000000e+00> : vector<8x256xf32>
    %209 = tpu.matmul %208, %206, %cst_155 {dimension_numbers = #tpu.dot_dimension_numbers<[1], [1], [0], [0], [0, 0, 1, 0], [], []>} : vector<8x4xbf16>, vector<256x4xbf16>, vector<8x256xf32> -> vector<8x256xf32>
    %210 = arith.addf %201, %209 : vector<8x256xf32>
    %c3_i32_156 = arith.constant 3 : i32
    %211 = arith.addi %0, %c3_i32_156 : i32
    %c0_157 = arith.constant 0 : index
    %212 = arith.index_cast %211 : i32 to index
    %c6_158 = arith.constant 6 : index
    %c0_159 = arith.constant 0 : index
    %213 = vector.load %arg2[%c0_157, %212, %c6_158, %c0_159] : memref<1x22x22x4xbf16, #tpu.memory_space<vmem>>, vector<1x16x16x4xbf16>
    %214 = vector.shape_cast %213 : vector<1x16x16x4xbf16> to vector<16x16x4xbf16>
    %215 = vector.shape_cast %214 : vector<16x16x4xbf16> to vector<256x4xbf16>
    %c23 = arith.constant 23 : index
    %c0_160 = arith.constant 0 : index
    %c0_161 = arith.constant 0 : index
    %216 = vector.load %arg3[%c23, %c0_160, %c0_161] : memref<27x8x4xbf16, #tpu.memory_space<vmem>>, vector<1x8x4xbf16>
    %217 = vector.shape_cast %216 : vector<1x8x4xbf16> to vector<8x4xbf16>
    %cst_162 = arith.constant dense<0.000000e+00> : vector<8x256xf32>
    %218 = tpu.matmul %217, %215, %cst_162 {dimension_numbers = #tpu.dot_dimension_numbers<[1], [1], [0], [0], [0, 0, 1, 0], [], []>} : vector<8x4xbf16>, vector<256x4xbf16>, vector<8x256xf32> -> vector<8x256xf32>
    %219 = arith.addf %210, %218 : vector<8x256xf32>
    %c6_i32 = arith.constant 6 : i32
    %220 = arith.addi %0, %c6_i32 : i32
    %c0_163 = arith.constant 0 : index
    %221 = arith.index_cast %220 : i32 to index
    %c0_164 = arith.constant 0 : index
    %c0_165 = arith.constant 0 : index
    %222 = vector.load %arg2[%c0_163, %221, %c0_164, %c0_165] : memref<1x22x22x4xbf16, #tpu.memory_space<vmem>>, vector<1x16x16x4xbf16>
    %223 = vector.shape_cast %222 : vector<1x16x16x4xbf16> to vector<16x16x4xbf16>
    %224 = vector.shape_cast %223 : vector<16x16x4xbf16> to vector<256x4xbf16>
    %c24 = arith.constant 24 : index
    %c0_166 = arith.constant 0 : index
    %c0_167 = arith.constant 0 : index
    %225 = vector.load %arg3[%c24, %c0_166, %c0_167] : memref<27x8x4xbf16, #tpu.memory_space<vmem>>, vector<1x8x4xbf16>
    %226 = vector.shape_cast %225 : vector<1x8x4xbf16> to vector<8x4xbf16>
    %cst_168 = arith.constant dense<0.000000e+00> : vector<8x256xf32>
    %227 = tpu.matmul %226, %224, %cst_168 {dimension_numbers = #tpu.dot_dimension_numbers<[1], [1], [0], [0], [0, 0, 1, 0], [], []>} : vector<8x4xbf16>, vector<256x4xbf16>, vector<8x256xf32> -> vector<8x256xf32>
    %228 = arith.addf %219, %227 : vector<8x256xf32>
    %c6_i32_169 = arith.constant 6 : i32
    %229 = arith.addi %0, %c6_i32_169 : i32
    %c0_170 = arith.constant 0 : index
    %230 = arith.index_cast %229 : i32 to index
    %c3_171 = arith.constant 3 : index
    %c0_172 = arith.constant 0 : index
    %231 = vector.load %arg2[%c0_170, %230, %c3_171, %c0_172] : memref<1x22x22x4xbf16, #tpu.memory_space<vmem>>, vector<1x16x16x4xbf16>
    %232 = vector.shape_cast %231 : vector<1x16x16x4xbf16> to vector<16x16x4xbf16>
    %233 = vector.shape_cast %232 : vector<16x16x4xbf16> to vector<256x4xbf16>
    %c25 = arith.constant 25 : index
    %c0_173 = arith.constant 0 : index
    %c0_174 = arith.constant 0 : index
    %234 = vector.load %arg3[%c25, %c0_173, %c0_174] : memref<27x8x4xbf16, #tpu.memory_space<vmem>>, vector<1x8x4xbf16>
    %235 = vector.shape_cast %234 : vector<1x8x4xbf16> to vector<8x4xbf16>
    %cst_175 = arith.constant dense<0.000000e+00> : vector<8x256xf32>
    %236 = tpu.matmul %235, %233, %cst_175 {dimension_numbers = #tpu.dot_dimension_numbers<[1], [1], [0], [0], [0, 0, 1, 0], [], []>} : vector<8x4xbf16>, vector<256x4xbf16>, vector<8x256xf32> -> vector<8x256xf32>
    %237 = arith.addf %228, %236 : vector<8x256xf32>
    %c6_i32_176 = arith.constant 6 : i32
    %238 = arith.addi %0, %c6_i32_176 : i32
    %c0_177 = arith.constant 0 : index
    %239 = arith.index_cast %238 : i32 to index
    %c6_178 = arith.constant 6 : index
    %c0_179 = arith.constant 0 : index
    %240 = vector.load %arg2[%c0_177, %239, %c6_178, %c0_179] : memref<1x22x22x4xbf16, #tpu.memory_space<vmem>>, vector<1x16x16x4xbf16>
    %241 = vector.shape_cast %240 : vector<1x16x16x4xbf16> to vector<16x16x4xbf16>
    %242 = vector.shape_cast %241 : vector<16x16x4xbf16> to vector<256x4xbf16>
    %c26 = arith.constant 26 : index
    %c0_180 = arith.constant 0 : index
    %c0_181 = arith.constant 0 : index
    %243 = vector.load %arg3[%c26, %c0_180, %c0_181] : memref<27x8x4xbf16, #tpu.memory_space<vmem>>, vector<1x8x4xbf16>
    %244 = vector.shape_cast %243 : vector<1x8x4xbf16> to vector<8x4xbf16>
    %cst_182 = arith.constant dense<0.000000e+00> : vector<8x256xf32>
    %245 = tpu.matmul %244, %242, %cst_182 {dimension_numbers = #tpu.dot_dimension_numbers<[1], [1], [0], [0], [0, 0, 1, 0], [], []>} : vector<8x4xbf16>, vector<256x4xbf16>, vector<8x256xf32> -> vector<8x256xf32>
    %246 = arith.addf %237, %245 : vector<8x256xf32>
    %c0_183 = arith.constant 0 : index
    %c0_184 = arith.constant 0 : index
    %c0_185 = arith.constant 0 : index
    %247 = vector.load %arg5[%c0_183, %c0_184, %c0_185] : memref<1x8x256xf32, #tpu.memory_space<vmem>>, vector<1x8x256xf32>
    %248 = vector.shape_cast %247 : vector<1x8x256xf32> to vector<8x256xf32>
    %249 = vector.shape_cast %246 : vector<8x256xf32> to vector<1x8x256xf32>
    tpu.vector_store %arg5[%c0_183, %c0_184, %c0_185], %249 {strides = array<i32>} : memref<1x8x256xf32, #tpu.memory_space<vmem>>, vector<1x8x256xf32>,
    return
  }
  func.func @transform_0(%arg0: i32, %arg1: i32) -> (i32, i32, i32, i32) {
    %c0_i32 = arith.constant 0 : i32
    %c0_i32_0 = arith.constant 0 : i32
    %c0_i32_1 = arith.constant 0 : i32
    %c0_i32_2 = arith.constant 0 : i32
    return %arg0, %c0_i32, %c0_i32_0, %c0_i32_1 : i32, i32, i32, i32
  }
  func.func @transform_1(%arg0: i32, %arg1: i32) -> (i32, i32, i32) {
    %c0_i32 = arith.constant 0 : i32
    %c0_i32_0 = arith.constant 0 : i32
    %c0_i32_1 = arith.constant 0 : i32
    %c0_i32_2 = arith.constant 0 : i32
    return %c0_i32, %c0_i32_0, %c0_i32_1 : i32, i32, i32
  }
  func.func @transform_2(%arg0: i32, %arg1: i32) -> (i32, i32) {
    %c0_i32 = arith.constant 0 : i32
    %c0_i32_0 = arith.constant 0 : i32
    %c0_i32_1 = arith.constant 0 : i32
    return %c0_i32, %c0_i32_0 : i32, i32
  }
  func.func @transform_3(%arg0: i32, %arg1: i32) -> (i32, i32, i32) {
    %c0_i32 = arith.constant 0 : i32
    %c0_i32_0 = arith.constant 0 : i32
    return %arg0, %c0_i32, %arg1 : i32, i32, i32
  }
}

</mosaic_0001>

<llo_original>
// kernel: asppv2_forward.1
$region0: #{asppv2_forward.1}
  #allocation0 [shape = 'u32[]', space=smem, size = 0x4, offset = 0x4, fixed_abs, tag = 'smem constant byte address 0x4 - core index']
  #allocation1 [shape = 'u32[144,128]{1,0:T(1,128)}', space=vmem, size = 0x12000, scoped, tag = 'internal scratch']
  %s0 = inlined_call_operand.vmem [shape: bf16[2,22,22,4], index: 0, kind: input, shape index: {}]
  %s1 = inlined_call_operand.vmem [shape: bf16[27,8,4], index: 1, kind: input, shape index: {}]
  %s2 = inlined_call_operand.vmem [shape: f32[8,1], index: 2, kind: input, shape index: {}]
  %s3 = inlined_call_operand.vmem [shape: f32[2,8,256], index: 3, kind: output, shape index: {}]
  %s4 = sld [smem:[#allocation0]]
  $region45: #{asppv2_forward.1} parent=0
    _
  %s6 = ssub.s32 1, %s4
  %s7 = scalar_select 0, %s6, %s4
  loop: start=0, step=1, limit=4
  $region2: #{asppv2_forward.1} parent=0 // loop_pre_header
    _
  $region3: #{asppv2_forward.1} parent=0 // loop_header
    %s9 = sphi 0, %s13
    %p10 = scmp.ge.s32.totalorder %s9, 4
    %s16 = sphi 0, %s28
    %s17 = sphi 0, %s24
    %s18 = sphi 0, %s16
    %s19 = sphi 0, %s17
    %s20 = sphi 0, %s18
    %s21 = sphi 0, %s19
    %s31 = sphi 0, %s33
    %s34 = sphi 0, %s31
    %s35 = sphi 0, %s34
    %s51 = sphi 0, %s35
    %s55 = sphi 0, %s55
    %s57 = sphi 0, %s55
    %s58 = sphi 0, %s57
    %s72 = sphi 0, %s58
    %s76 = sphi 0, %s76
    %s78 = sphi 0, %s76
    %s79 = sphi 0, %s78
    %s93 = sphi 0, %s79
    %s101 = sphi 0, %s103
    %s104 = sphi 0, %s101
    %s105 = sphi 0, %s104
    %s121 = sphi 0, %s105
  $region4: #{asppv2_forward.1} parent=0 // loop_header_branch
    %12 = sbr.rel (%p10) target = $region8
  $region5: #{asppv2_forward.1} parent=0 // loop_body
    %s14 = ssub.s32 %s9, 1
    %s15 = ssub.s32 %s9, 2
    %s22 = sadd.s32 1, %s17
    %p23 = scmp.ge.s32.totalorder %s22, 1
    %s24 = scalar_select %p23, 0, %s22
    %s25 = sadd.s32 1, %s16
    %s26 = scalar_select %p23, %s25, %s16
    %p27 = scmp.ge.s32.totalorder %s26, 2
    %s28 = scalar_select %p27, 0, %s26
    %s29 = ssub.s32 %s16, %s28
    %p30 = scmp.eq.s32.totalorder %s29, 0
    %s32 = sadd.s32 %s31, 1
    %s33 = scalar_select %p30, %s31, %s32
    %p36 = pneg %p30
    %p37 = scmp.eq.s32.totalorder %s9, 1
    %p38 = por %p36, %p37
    %p39 = scmp.ne.s32.totalorder %s31, %s34
    %p40 = scmp.eq.s32.totalorder %s9, 0
    %p41 = por %p39, %p40
    %p42 = scmp.ne.s32.totalorder %s31, %s34
    %p43 = scmp.eq.s32.totalorder %s14, 1
    %p44 = por %p42, %p43
    %p45 = scmp.ne.s32.totalorder %s34, %s35
    %p46 = scmp.eq.s32.totalorder %s14, 0
    %p47 = por %p45, %p46
    %p48 = scmp.ne.s32.totalorder %s34, %s35
    %p49 = scmp.eq.s32.totalorder %s15, 1
    %p50 = por %p48, %p49
    %p52 = scmp.ne.s32.totalorder %s35, %s51
    %p53 = scmp.eq.s32.totalorder %s15, 0
    %p54 = por %p52, %p53
    %s56 = sadd.s32 %s55, 1
    %p59 = scmp.eq.s32.totalorder %s9, 1
    %p60 = scmp.ne.s32.totalorder %s55, %s57
    %p61 = scmp.eq.s32.totalorder %s9, 0
    %p62 = por %p60, %p61
    %p63 = scmp.ne.s32.totalorder %s55, %s57
    %p64 = scmp.eq.s32.totalorder %s14, 1
    %p65 = por %p63, %p64
    %p66 = scmp.ne.s32.totalorder %s57, %s58
    %p67 = scmp.eq.s32.totalorder %s14, 0
    %p68 = por %p66, %p67
    %p69 = scmp.ne.s32.totalorder %s57, %s58
    %p70 = scmp.eq.s32.totalorder %s15, 1
    %p71 = por %p69, %p70
    %p73 = scmp.ne.s32.totalorder %s58, %s72
    %p74 = scmp.eq.s32.totalorder %s15, 0
    %p75 = por %p73, %p74
    %s77 = sadd.s32 %s76, 1
    %p80 = scmp.eq.s32.totalorder %s9, 1
    %p81 = scmp.ne.s32.totalorder %s76, %s78
    %p82 = scmp.eq.s32.totalorder %s9, 0
    %p83 = por %p81, %p82
    %p84 = scmp.ne.s32.totalorder %s76, %s78
    %p85 = scmp.eq.s32.totalorder %s14, 1
    %p86 = por %p84, %p85
    %p87 = scmp.ne.s32.totalorder %s78, %s79
    %p88 = scmp.eq.s32.totalorder %s14, 0
    %p89 = por %p87, %p88
    %p90 = scmp.ne.s32.totalorder %s78, %s79
    %p91 = scmp.eq.s32.totalorder %s15, 1
    %p92 = por %p90, %p91
    %p94 = scmp.ne.s32.totalorder %s79, %s93
    %p95 = scmp.eq.s32.totalorder %s15, 0
    %p96 = por %p94, %p95
    %s97 = ssub.s32 %s16, %s28
    %s98 = ssub.s32 %s17, %s24
    %s99 = sor.u32 %s97, %s98
    %p100 = scmp.eq.s32.totalorder %s99, 0
    %s102 = sadd.s32 %s101, 1
    %s103 = scalar_select %p100, %s101, %s102
    %p106 = pneg %p100
    %p107 = scmp.eq.s32.totalorder %s9, 1
    %p108 = por %p106, %p107
    %p109 = scmp.ne.s32.totalorder %s101, %s104
    %p110 = scmp.eq.s32.totalorder %s9, 0
    %p111 = por %p109, %p110
    %p112 = scmp.ne.s32.totalorder %s101, %s104
    %p113 = scmp.eq.s32.totalorder %s14, 1
    %p114 = por %p112, %p113
    %p115 = scmp.ne.s32.totalorder %s104, %s105
    %p116 = scmp.eq.s32.totalorder %s14, 0
    %p117 = por %p115, %p116
    %p118 = scmp.ne.s32.totalorder %s104, %s105
    %p119 = scmp.eq.s32.totalorder %s15, 1
    %p120 = por %p118, %p119
    %p122 = scmp.ne.s32.totalorder %s105, %s121
    %p123 = scmp.eq.s32.totalorder %s15, 0
    %p124 = por %p122, %p123
    %p125 = scmp.le.s32.totalorder 1, %s9
    %p126 = scmp.lt.s32.totalorder %s9, 3
    %p127 = pnand %p125, %p126
    %p128 = pneg %p127
    // Predicated region
    $region9: #{asppv2_forward.1} parent=5 // pred_check
      _
    $region10: #{asppv2_forward.1} parent=5 // pred_check_branch
      %130 = sbr.rel (%p127) target = $region12
    $region11: #{asppv2_forward.1} parent=5 // pred_region
      %s131 = ssub.s32 %s9, 1
      // Predicated region
      $region13: #{asppv2_forward.1} parent=11 // pred_check
        %p132 = pneg %p68
      $region14: #{asppv2_forward.1} parent=11 // pred_check_branch
        %134 = sbr.rel (%p132) target = $region16
      $region15: #{asppv2_forward.1} parent=11 // pred_region
        _
      $region16: #{asppv2_forward.1} parent=11 // pred_fallthru
        _
      // Predicated region
      $region17: #{asppv2_forward.1} parent=11 // pred_check
        %p135 = pneg %p89
      $region18: #{asppv2_forward.1} parent=11 // pred_check_branch
        %137 = sbr.rel (%p135) target = $region20
      $region19: #{asppv2_forward.1} parent=11 // pred_region
        _
      $region20: #{asppv2_forward.1} parent=11 // pred_fallthru
        _
    $region12: #{asppv2_forward.1} parent=5 // pred_fallthru
      _
    %p138 = scmp.lt.s32.totalorder %s9, 2
    // Predicated region
    $region21: #{asppv2_forward.1} parent=5 // pred_check
      %p139 = pneg %p138
    $region22: #{asppv2_forward.1} parent=5 // pred_check_branch
      %141 = sbr.rel (%p139) target = $region24
    $region23: #{asppv2_forward.1} parent=5 // pred_region
      // Predicated region
      $region25: #{asppv2_forward.1} parent=23 // pred_check
        %p142 = pneg %p41
      $region26: #{asppv2_forward.1} parent=23 // pred_check_branch
        %144 = sbr.rel (%p142) target = $region28
      $region27: #{asppv2_forward.1} parent=23 // pred_region
        %p145 = scmp.lt.s32.totalorder %s16, 1
        %s146 = scalar_select %p145, %s16, 1
        %s147 = smul.addr %s146, 66
        %s148 = smul.addr %s147, 4
        %s149 = scalar_lea.vmem %s0, %s148
      $region28: #{asppv2_forward.1} parent=23 // pred_fallthru
        _
    $region24: #{asppv2_forward.1} parent=5 // pred_fallthru
      _
    %p150 = scmp.le.s32.totalorder 1, %s9
    %p151 = scmp.lt.s32.totalorder %s9, 3
    %p152 = pnand %p150, %p151
    %p153 = pneg %p152
    // Predicated region
    $region29: #{asppv2_forward.1} parent=5 // pred_check
      _
    $region30: #{asppv2_forward.1} parent=5 // pred_check_branch
      %155 = sbr.rel (%p152) target = $region32
    $region31: #{asppv2_forward.1} parent=5 // pred_region
      %s156 = ssub.s32 %s9, 1
      %p157 = scmp.lt.s32.totalorder %s18, 1
      %s158 = scalar_select %p157, %s18, 1
      %s159 = smul.addr %s158, 66
      %s160 = smul.addr %s159, 4
      %s161 = scalar_lea.vmem %s0, %s160
      %p162 = pneg %p47
      %p163 = pneg %p44
      %p164 = pneg %p68
      %p165 = pneg %p65
      %p166 = pneg %p89
      %p167 = pneg %p86
      %p168 = pneg %p117
      %p169 = pneg %p114
      %s170 = smul.u32 2, %s19
      %p171 = scmp.lt.s32.totalorder %s18, 1
      %s172 = scalar_select %p171, %s18, 1
      %p173 = scmp.lt.s32.totalorder %s170, 1
      %s174 = scalar_select %p173, %s170, 1
      %s175 = smul.addr %s172, 2
      %s176 = sadd.s32 %s174, %s175
      %s177 = smul.addr %s176, 8
      %s178 = scalar_lea.vmem %s3, %s177
      %p179 = scmp.lt.s32.totalorder %s18, 1
      %s180 = scalar_select %p179, %s18, 1
      %s181 = smul.addr %s180, 66
      %s182 = smul.addr %s181, 4
      %s183 = scalar_lea.vmem %s0, %s182
      %s184 = smul.u32 2, %s19
      %p185 = scmp.lt.s32.totalorder %s18, 1
      %s186 = scalar_select %p185, %s18, 1
      %p187 = scmp.lt.s32.totalorder %s184, 1
      %s188 = scalar_select %p187, %s184, 1
      %s189 = smul.addr %s186, 2
      %s190 = sadd.s32 %s188, %s189
      %s191 = smul.addr %s190, 8
      %s192 = scalar_lea.vmem %s3, %s191
      %s193 = smul.u32 2, %s19
      %s195 = smul.u32 %s19, 16
      %v196 = vld [vmem:[%s2] sm:$0xff]
      %198 = vset.pattern.permute.xlu0 0
      %199 = vperm.xlu0 %198, %v196
      %v200 = vpop.permute.xlu0 %199
      %s202 = sadd.s32 %s195, 2
      %s203 = smul.u32 %s202, 3
      %s204 = smul.addr %s203, 4
      %s205 = scalar_lea.vmem %s183, %s204
      %v206 = vld [vmem:[%s205] sm:$0xe]
      %v207 = vld [vmem:[%s205 + $0x4] sm:$0xf]
      %v208 = vld [vmem:[%s205 + $0x8] sm:$0x1]
      %v209 = vld [vmem:[%s205 + $0xc] sm:$0xe]
      %v210 = vld [vmem:[%s205 + $0x10] sm:$0xf]
      %v211 = vld [vmem:[%s205 + $0x14] sm:$0x1]
      %v212 = vld [vmem:[%s205 + $0x18] sm:$0xe]
      %v213 = vld [vmem:[%s205 + $0x1c] sm:$0xf]
      %v214 = vld [vmem:[%s205 + $0x20] sm:$0x1]
      %v215 = vld [vmem:[%s205 + $0x24] sm:$0xe]
      %v216 = vld [vmem:[%s205 + $0x28] sm:$0xf]
      %v217 = vld [vmem:[%s205 + $0x2c] sm:$0x1]
      %v218 = vld [vmem:[%s205 + $0x30] sm:$0xe]
      %v219 = vld [vmem:[%s205 + $0x34] sm:$0xf]
      %v220 = vld [vmem:[%s205 + $0x38] sm:$0x1]
      %v221 = vld [vmem:[%s205 + $0x3c] sm:$0xe]
      %v222 = vld [vmem:[%s205 + $0x40] sm:$0xf]
      %v223 = vld [vmem:[%s205 + $0x44] sm:$0x1]
      %v224 = vld [vmem:[%s205 + $0x48] sm:$0xe]
      %v225 = vld [vmem:[%s205 + $0x4c] sm:$0xf]
      %v226 = vld [vmem:[%s205 + $0x50] sm:$0x1]
      %v227 = vld [vmem:[%s205 + $0x54] sm:$0xe]
      %v228 = vld [vmem:[%s205 + $0x58] sm:$0xf]
      %v229 = vld [vmem:[%s205 + $0x5c] sm:$0x1]
      %v230 = vld [vmem:[%s205 + $0x60] sm:$0xe]
      %v231 = vld [vmem:[%s205 + $0x64] sm:$0xf]
      %v232 = vld [vmem:[%s205 + $0x68] sm:$0x1]
      %v233 = vld [vmem:[%s205 + $0x6c] sm:$0xe]
      %v234 = vld [vmem:[%s205 + $0x70] sm:$0xf]
      %v235 = vld [vmem:[%s205 + $0x74] sm:$0x1]
      %v236 = vld [vmem:[%s205 + $0x78] sm:$0xe]
      %v237 = vld [vmem:[%s205 + $0x7c] sm:$0xf]
      %v238 = vld [vmem:[%s205 + $0x80] sm:$0x1]
      %v239 = vld [vmem:[%s205 + $0x84] sm:$0xe]
      %v240 = vld [vmem:[%s205 + $0x88] sm:$0xf]
      %v241 = vld [vmem:[%s205 + $0x8c] sm:$0x1]
      %v242 = vld [vmem:[%s205 + $0x90] sm:$0xe]
      %v243 = vld [vmem:[%s205 + $0x94] sm:$0xf]
      %v244 = vld [vmem:[%s205 + $0x98] sm:$0x1]
      %v245 = vld [vmem:[%s205 + $0x9c] sm:$0xe]
      %v246 = vld [vmem:[%s205 + $0xa0] sm:$0xf]
      %v247 = vld [vmem:[%s205 + $0xa4] sm:$0x1]
      %v248 = vld [vmem:[%s205 + $0xa8] sm:$0xe]
      %v249 = vld [vmem:[%s205 + $0xac] sm:$0xf]
      %v250 = vld [vmem:[%s205 + $0xb0] sm:$0x1]
      %v251 = vld [vmem:[%s205 + $0xb4] sm:$0xe]
      %v252 = vld [vmem:[%s205 + $0xb8] sm:$0xf]
      %v253 = vld [vmem:[%s205 + $0xbc] sm:$0x1]
      %vm302 = vcmask 1042432
      %vm303 = vcmask 1046532
      %vm304 = vmor %vm302, %vm303
      %v305 = vrot.slane %v206, 5
      %v306 = vrot.slane %v305, 4
      %v307 = vrot.slane %v207, 5
      %v308 = vsel %vm304, %v306, %v307
      %v309 = vrot.slane %v307, 4
      %v310 = vrot.slane %v208, 5
      %v311 = vsel %vm304, %v309, %v310
      %v312 = vrot.slane %v209, 5
      %v313 = vrot.slane %v312, 4
      %v314 = vrot.slane %v210, 5
      %v315 = vsel %vm304, %v313, %v314
      %v316 = vrot.slane %v314, 4
      %v317 = vrot.slane %v211, 5
      %v318 = vsel %vm304, %v316, %v317
      %v319 = vrot.slane %v212, 5
      %v320 = vrot.slane %v319, 4
      %v321 = vrot.slane %v213, 5
      %v322 = vsel %vm304, %v320, %v321
      %v323 = vrot.slane %v321, 4
      %v324 = vrot.slane %v214, 5
      %v325 = vsel %vm304, %v323, %v324
      %v326 = vrot.slane %v215, 5
      %v327 = vrot.slane %v326, 4
      %v328 = vrot.slane %v216, 5
      %v329 = vsel %vm304, %v327, %v328
      %v330 = vrot.slane %v328, 4
      %v331 = vrot.slane %v217, 5
      %v332 = vsel %vm304, %v330, %v331
      %v333 = vrot.slane %v218, 5
      %v334 = vrot.slane %v333, 4
      %v335 = vrot.slane %v219, 5
      %v336 = vsel %vm304, %v334, %v335
      %v337 = vrot.slane %v335, 4
      %v338 = vrot.slane %v220, 5
      %v339 = vsel %vm304, %v337, %v338
      %v340 = vrot.slane %v221, 5
      %v341 = vrot.slane %v340, 4
      %v342 = vrot.slane %v222, 5
      %v343 = vsel %vm304, %v341, %v342
      %v344 = vrot.slane %v342, 4
      %v345 = vrot.slane %v223, 5
      %v346 = vsel %vm304, %v344, %v345
      %v347 = vrot.slane %v224, 5
      %v348 = vrot.slane %v347, 4
      %v349 = vrot.slane %v225, 5
      %v350 = vsel %vm304, %v348, %v349
      %v351 = vrot.slane %v349, 4
      %v352 = vrot.slane %v226, 5
      %v353 = vsel %vm304, %v351, %v352
      %v354 = vrot.slane %v227, 5
      %v355 = vrot.slane %v354, 4
      %v356 = vrot.slane %v228, 5
      %v357 = vsel %vm304, %v355, %v356
      %v358 = vrot.slane %v356, 4
      %v359 = vrot.slane %v229, 5
      %v360 = vsel %vm304, %v358, %v359
      %v361 = vrot.slane %v230, 5
      %v362 = vrot.slane %v361, 4
      %v363 = vrot.slane %v231, 5
      %v364 = vsel %vm304, %v362, %v363
      %v365 = vrot.slane %v363, 4
      %v366 = vrot.slane %v232, 5
      %v367 = vsel %vm304, %v365, %v366
      %v368 = vrot.slane %v233, 5
      %v369 = vrot.slane %v368, 4
      %v370 = vrot.slane %v234, 5
      %v371 = vsel %vm304, %v369, %v370
      %v372 = vrot.slane %v370, 4
      %v373 = vrot.slane %v235, 5
      %v374 = vsel %vm304, %v372, %v373
      %v375 = vrot.slane %v236, 5
      %v376 = vrot.slane %v375, 4
      %v377 = vrot.slane %v237, 5
      %v378 = vsel %vm304, %v376, %v377
      %v379 = vrot.slane %v377, 4
      %v380 = vrot.slane %v238, 5
      %v381 = vsel %vm304, %v379, %v380
      %v382 = vrot.slane %v239, 5
      %v383 = vrot.slane %v382, 4
      %v384 = vrot.slane %v240, 5
      %v385 = vsel %vm304, %v383, %v384
      %v386 = vrot.slane %v384, 4
      %v387 = vrot.slane %v241, 5
      %v388 = vsel %vm304, %v386, %v387
      %v389 = vrot.slane %v242, 5
      %v390 = vrot.slane %v389, 4
      %v391 = vrot.slane %v243, 5
      %v392 = vsel %vm304, %v390, %v391
      %v393 = vrot.slane %v391, 4
      %v394 = vrot.slane %v244, 5
      %v395 = vsel %vm304, %v393, %v394
      %v396 = vrot.slane %v245, 5
      %v397 = vrot.slane %v396, 4
      %v398 = vrot.slane %v246, 5
      %v399 = vsel %vm304, %v397, %v398
      %v400 = vrot.slane %v398, 4
      %v401 = vrot.slane %v247, 5
      %v402 = vsel %vm304, %v400, %v401
      %v403 = vrot.slane %v248, 5
      %v404 = vrot.slane %v403, 4
      %v405 = vrot.slane %v249, 5
      %v406 = vsel %vm304, %v404, %v405
      %v407 = vrot.slane %v405, 4
      %v408 = vrot.slane %v250, 5
      %v409 = vsel %vm304, %v407, %v408
      %v410 = vrot.slane %v251, 5
      %v411 = vrot.slane %v410, 4
      %v412 = vrot.slane %v252, 5
      %v413 = vsel %vm304, %v411, %v412
      %v414 = vrot.slane %v412, 4
      %v415 = vrot.slane %v253, 5
      %v416 = vsel %vm304, %v414, %v415
      %v417 = vld [vmem:[%s1] sm:$0xf]
      %v418 = vunpack.c.l.b16 %v308
      %v419 = vunpack.c.l.b16 %v311
      %v420 = vunpack.c.l.b16 %v315
      %v421 = vunpack.c.l.b16 %v318
      %v422 = vunpack.c.l.b16 %v322
      %v423 = vunpack.c.l.b16 %v325
      %v424 = vunpack.c.l.b16 %v329
      %v425 = vunpack.c.l.b16 %v332
      %v426 = vunpack.c.l.b16 %v336
      %v427 = vunpack.c.l.b16 %v339
      %v428 = vunpack.c.l.b16 %v343
      %v429 = vunpack.c.l.b16 %v346
      %v430 = vunpack.c.l.b16 %v350
      %v431 = vunpack.c.l.b16 %v353
      %v432 = vunpack.c.l.b16 %v357
      %v433 = vunpack.c.l.b16 %v360
      %v434 = vunpack.c.l.b16 %v364
      %v435 = vunpack.c.l.b16 %v367
      %v436 = vunpack.c.l.b16 %v371
      %v437 = vunpack.c.l.b16 %v374
      %v438 = vunpack.c.l.b16 %v378
      %v439 = vunpack.c.l.b16 %v381
      %v440 = vunpack.c.l.b16 %v385
      %v441 = vunpack.c.l.b16 %v388
      %v442 = vunpack.c.l.b16 %v392
      %v443 = vunpack.c.l.b16 %v395
      %v444 = vunpack.c.l.b16 %v399
      %v445 = vunpack.c.l.b16 %v402
      %v446 = vunpack.c.l.b16 %v406
      %v447 = vunpack.c.l.b16 %v409
      %v448 = vunpack.c.l.b16 %v413
      %v449 = vunpack.c.l.b16 %v416
      %v450 = vpack.c.b16 %v419, %v418
      %v451 = vpack.c.b16 %v421, %v420
      %v452 = vpack.c.b16 %v423, %v422
      %v453 = vpack.c.b16 %v425, %v424
      %v454 = vpack.c.b16 %v427, %v426
      %v455 = vpack.c.b16 %v429, %v428
      %v456 = vpack.c.b16 %v431, %v430
      %v457 = vpack.c.b16 %v433, %v432
      %v458 = vpack.c.b16 %v435, %v434
      %v459 = vpack.c.b16 %v437, %v436
      %v460 = vpack.c.b16 %v439, %v438
      %v461 = vpack.c.b16 %v441, %v440
      %v462 = vpack.c.b16 %v443, %v442
      %v463 = vpack.c.b16 %v445, %v444
      %v464 = vpack.c.b16 %v447, %v446
      %v465 = vpack.c.b16 %v449, %v448
      %vm466 = vcmask 31744
      %v468 = vsel %vm466, %v417, 0
      %v471 = vsel %vm466, %v450, 0
      %v474 = vsel %vm466, %v451, 0
      %v477 = vsel %vm466, %v452, 0
      %v480 = vsel %vm466, %v453, 0
      %v483 = vsel %vm466, %v454, 0
      %v486 = vsel %vm466, %v455, 0
      %v489 = vsel %vm466, %v456, 0
      %v492 = vsel %vm466, %v457, 0
      %v495 = vsel %vm466, %v458, 0
      %v498 = vsel %vm466, %v459, 0
      %v501 = vsel %vm466, %v460, 0
      %v504 = vsel %vm466, %v461, 0
      %v507 = vsel %vm466, %v462, 0
      %v510 = vsel %vm466, %v463, 0
      %v513 = vsel %vm466, %v464, 0
      %v516 = vsel %vm466, %v465, 0
      %518 = vmatprep.subr.bf16.mxu0 0
      %519 = vmatpush1.bf16.xpose.msra.mxu0 %v471
      %520 = vmatprep.subr.bf16.mxu0 0
      %521 = vmatpush1.bf16.xpose.msra.mxu0 %v474
      %522 = vmatprep.subr.bf16.mxu0 0
      %523 = vmatpush1.bf16.xpose.msra.mxu0 %v477
      %524 = vmatprep.subr.bf16.mxu0 0
      %525 = vmatpush1.bf16.xpose.msra.mxu0 %v480
      %526 = vmatprep.subr.bf16.mxu0 0
      %527 = vmatpush1.bf16.xpose.msra.mxu0 %v483
      %528 = vmatprep.subr.bf16.mxu0 0
      %529 = vmatpush1.bf16.xpose.msra.mxu0 %v486
      %530 = vmatprep.subr.bf16.mxu0 0
      %531 = vmatpush1.bf16.xpose.msra.mxu0 %v489
      %532 = vmatprep.subr.bf16.mxu0 0
      %533 = vmatpush1.bf16.xpose.msra.mxu0 %v492
      %534 = vmatprep.subr.bf16.mxu0 0
      %535 = vmatpush1.bf16.xpose.msra.mxu0 %v495
      %536 = vmatprep.subr.bf16.mxu0 0
      %537 = vmatpush1.bf16.xpose.msra.mxu0 %v498
      %538 = vmatprep.subr.bf16.mxu0 0
      %539 = vmatpush1.bf16.xpose.msra.mxu0 %v501
      %540 = vmatprep.subr.bf16.mxu0 0
      %541 = vmatpush1.bf16.xpose.msra.mxu0 %v504
      %542 = vmatprep.subr.bf16.mxu0 0
      %543 = vmatpush1.bf16.xpose.msra.mxu0 %v507
      %544 = vmatprep.subr.bf16.mxu0 0
      %545 = vmatpush1.bf16.xpose.msra.mxu0 %v510
      %546 = vmatprep.subr.bf16.mxu0 0
      %547 = vmatpush1.bf16.xpose.msra.mxu0 %v513
      %548 = vmatprep.subr.bf16.mxu0 0
      %549 = vmatpush1.bf16.xpose.msra.mxu0 %v516
      %550 = vmatprep.mubr.bf16.mxu0 0
      %551 = vmatmul.mubr.bf16.gmra.mrb[0].mxu0 %v468
      %v552 = vpop.f32.mrb[0].mxu0
      %v553 = vadd.f32 0.0, %v552
      %v554 = vpop.f32.mrb[0].mxu0
      %v555 = vadd.f32 0.0, %v554
      %v556 = vpop.f32.mrb[0].mxu0
      %v557 = vpop.f32.mrb[0].mxu0
      %558 = vdwg.mxu0
      %v559 = vadd.f32 %v200, %v553
      %v560 = vadd.f32 %v200, %v555
      %v561 = vld [vmem:[%s205 + $0x8] sm:$0x3]
      %v562 = vld [vmem:[%s205 + $0x14] sm:$0x3]
      %v563 = vld [vmem:[%s205 + $0x20] sm:$0x3]
      %v564 = vld [vmem:[%s205 + $0x2c] sm:$0x3]
      %v565 = vld [vmem:[%s205 + $0x38] sm:$0x3]
      %v566 = vld [vmem:[%s205 + $0x44] sm:$0x3]
      %v567 = vld [vmem:[%s205 + $0x50] sm:$0x3]
      %v568 = vld [vmem:[%s205 + $0x5c] sm:$0x3]
      %v569 = vld [vmem:[%s205 + $0x68] sm:$0x3]
      %v570 = vld [vmem:[%s205 + $0x74] sm:$0x3]
      %v571 = vld [vmem:[%s205 + $0x80] sm:$0x3]
      %v572 = vld [vmem:[%s205 + $0x8c] sm:$0x3]
      %v573 = vld [vmem:[%s205 + $0x98] sm:$0x3]
      %v574 = vld [vmem:[%s205 + $0xa4] sm:$0x3]
      %v575 = vld [vmem:[%s205 + $0xb0] sm:$0x3]
      %v576 = vld [vmem:[%s205 + $0xbc] sm:$0x3]
      %vm577 = vsmask.f32 2304
      %vm578 = vsmask.f32 6416
      %vm579 = vmor %vm577, %vm578
      %v581 = vshrl.u32 %v206, 16
      %v583 = vrot.slane %v581, 5
      %v584 = vshll.u32 %v206, 16
      %v586 = vrot.slane %v584, 6
      %v587 = vor.u32 %v583, %v586
      %v588 = vrot.slane %v587, 4
      %v590 = vshrl.u32 %v207, 16
      %v592 = vrot.slane %v590, 5
      %v593 = vshll.u32 %v207, 16
      %v595 = vrot.slane %v593, 6
      %v596 = vor.u32 %v592, %v595
      %v597 = vsel %vm579, %v588, %v596
      %v598 = vrot.slane %v596, 4
      %v600 = vshrl.u32 %v561, 16
      %v602 = vrot.slane %v600, 5
      %v603 = vshll.u32 %v561, 16
      %v605 = vrot.slane %v603, 6
      %v606 = vor.u32 %v602, %v605
      %v607 = vsel %vm579, %v598, %v606
      %v609 = vshrl.u32 %v209, 16
      %v611 = vrot.slane %v609, 5
      %v612 = vshll.u32 %v209, 16
      %v614 = vrot.slane %v612, 6
      %v615 = vor.u32 %v611, %v614
      %v616 = vrot.slane %v615, 4
      %v618 = vshrl.u32 %v210, 16
      %v620 = vrot.slane %v618, 5
      %v621 = vshll.u32 %v210, 16
      %v623 = vrot.slane %v621, 6
      %v624 = vor.u32 %v620, %v623
      %v625 = vsel %vm579, %v616, %v624
      %v626 = vrot.slane %v624, 4
      %v628 = vshrl.u32 %v562, 16
      %v630 = vrot.slane %v628, 5
      %v631 = vshll.u32 %v562, 16
      %v633 = vrot.slane %v631, 6
      %v634 = vor.u32 %v630, %v633
      %v635 = vsel %vm579, %v626, %v634
      %v637 = vshrl.u32 %v212, 16
      %v639 = vrot.slane %v637, 5
      %v640 = vshll.u32 %v212, 16
      %v642 = vrot.slane %v640, 6
      %v643 = vor.u32 %v639, %v642
      %v644 = vrot.slane %v643, 4
      %v646 = vshrl.u32 %v213, 16
      %v648 = vrot.slane %v646, 5
      %v649 = vshll.u32 %v213, 16
      %v651 = vrot.slane %v649, 6
      %v652 = vor.u32 %v648, %v651
      %v653 = vsel %vm579, %v644, %v652
      %v654 = vrot.slane %v652, 4
      %v656 = vshrl.u32 %v563, 16
      %v658 = vrot.slane %v656, 5
      %v659 = vshll.u32 %v563, 16
      %v661 = vrot.slane %v659, 6
      %v662 = vor.u32 %v658, %v661
      %v663 = vsel %vm579, %v654, %v662
      %v665 = vshrl.u32 %v215, 16
      %v667 = vrot.slane %v665, 5
      %v668 = vshll.u32 %v215, 16
      %v670 = vrot.slane %v668, 6
      %v671 = vor.u32 %v667, %v670
      %v672 = vrot.slane %v671, 4
      %v674 = vshrl.u32 %v216, 16
      %v676 = vrot.slane %v674, 5
      %v677 = vshll.u32 %v216, 16
      %v679 = vrot.slane %v677, 6
      %v680 = vor.u32 %v676, %v679
      %v681 = vsel %vm579, %v672, %v680
      %v682 = vrot.slane %v680, 4
      %v684 = vshrl.u32 %v564, 16
      %v686 = vrot.slane %v684, 5
      %v687 = vshll.u32 %v564, 16
      %v689 = vrot.slane %v687, 6
      %v690 = vor.u32 %v686, %v689
      %v691 = vsel %vm579, %v682, %v690
      %v693 = vshrl.u32 %v218, 16
      %v695 = vrot.slane %v693, 5
      %v696 = vshll.u32 %v218, 16
      %v698 = vrot.slane %v696, 6
      %v699 = vor.u32 %v695, %v698
      %v700 = vrot.slane %v699, 4
      %v702 = vshrl.u32 %v219, 16
      %v704 = vrot.slane %v702, 5
      %v705 = vshll.u32 %v219, 16
      %v707 = vrot.slane %v705, 6
      %v708 = vor.u32 %v704, %v707
      %v709 = vsel %vm579, %v700, %v708
      %v710 = vrot.slane %v708, 4
      %v712 = vshrl.u32 %v565, 16
      %v714 = vrot.slane %v712, 5
      %v715 = vshll.u32 %v565, 16
      %v717 = vrot.slane %v715, 6
      %v718 = vor.u32 %v714, %v717
      %v719 = vsel %vm579, %v710, %v718
      %v721 = vshrl.u32 %v221, 16
      %v723 = vrot.slane %v721, 5
      %v724 = vshll.u32 %v221, 16
      %v726 = vrot.slane %v724, 6
      %v727 = vor.u32 %v723, %v726
      %v728 = vrot.slane %v727, 4
      %v730 = vshrl.u32 %v222, 16
      %v732 = vrot.slane %v730, 5
      %v733 = vshll.u32 %v222, 16
      %v735 = vrot.slane %v733, 6
      %v736 = vor.u32 %v732, %v735
      %v737 = vsel %vm579, %v728, %v736
      %v738 = vrot.slane %v736, 4
      %v740 = vshrl.u32 %v566, 16
      %v742 = vrot.slane %v740, 5
      %v743 = vshll.u32 %v566, 16
      %v745 = vrot.slane %v743, 6
      %v746 = vor.u32 %v742, %v745
      %v747 = vsel %vm579, %v738, %v746
      %v749 = vshrl.u32 %v224, 16
      %v751 = vrot.slane %v749, 5
      %v752 = vshll.u32 %v224, 16
      %v754 = vrot.slane %v752, 6
      %v755 = vor.u32 %v751, %v754
      %v756 = vrot.slane %v755, 4
      %v758 = vshrl.u32 %v225, 16
      %v760 = vrot.slane %v758, 5
      %v761 = vshll.u32 %v225, 16
      %v763 = vrot.slane %v761, 6
      %v764 = vor.u32 %v760, %v763
      %v765 = vsel %vm579, %v756, %v764
      %v766 = vrot.slane %v764, 4
      %v768 = vshrl.u32 %v567, 16
      %v770 = vrot.slane %v768, 5
      %v771 = vshll.u32 %v567, 16
      %v773 = vrot.slane %v771, 6
      %v774 = vor.u32 %v770, %v773
      %v775 = vsel %vm579, %v766, %v774
      %v777 = vshrl.u32 %v227, 16
      %v779 = vrot.slane %v777, 5
      %v780 = vshll.u32 %v227, 16
      %v782 = vrot.slane %v780, 6
      %v783 = vor.u32 %v779, %v782
      %v784 = vrot.slane %v783, 4
      %v786 = vshrl.u32 %v228, 16
      %v788 = vrot.slane %v786, 5
      %v789 = vshll.u32 %v228, 16
      %v791 = vrot.slane %v789, 6
      %v792 = vor.u32 %v788, %v791
      %v793 = vsel %vm579, %v784, %v792
      %v794 = vrot.slane %v792, 4
      %v796 = vshrl.u32 %v568, 16
      %v798 = vrot.slane %v796, 5
      %v799 = vshll.u32 %v568, 16
      %v801 = vrot.slane %v799, 6
      %v802 = vor.u32 %v798, %v801
      %v803 = vsel %vm579, %v794, %v802
      %v805 = vshrl.u32 %v230, 16
      %v807 = vrot.slane %v805, 5
      %v808 = vshll.u32 %v230, 16
      %v810 = vrot.slane %v808, 6
      %v811 = vor.u32 %v807, %v810
      %v812 = vrot.slane %v811, 4
      %v814 = vshrl.u32 %v231, 16
      %v816 = vrot.slane %v814, 5
      %v817 = vshll.u32 %v231, 16
      %v819 = vrot.slane %v817, 6
      %v820 = vor.u32 %v816, %v819
      %v821 = vsel %vm579, %v812, %v820
      %v822 = vrot.slane %v820, 4
      %v824 = vshrl.u32 %v569, 16
      %v826 = vrot.slane %v824, 5
      %v827 = vshll.u32 %v569, 16
      %v829 = vrot.slane %v827, 6
      %v830 = vor.u32 %v826, %v829
      %v831 = vsel %vm579, %v822, %v830
      %v833 = vshrl.u32 %v233, 16
      %v835 = vrot.slane %v833, 5
      %v836 = vshll.u32 %v233, 16
      %v838 = vrot.slane %v836, 6
      %v839 = vor.u32 %v835, %v838
      %v840 = vrot.slane %v839, 4
      %v842 = vshrl.u32 %v234, 16
      %v844 = vrot.slane %v842, 5
      %v845 = vshll.u32 %v234, 16
      %v847 = vrot.slane %v845, 6
      %v848 = vor.u32 %v844, %v847
      %v849 = vsel %vm579, %v840, %v848
      %v850 = vrot.slane %v848, 4
      %v852 = vshrl.u32 %v570, 16
      %v854 = vrot.slane %v852, 5
      %v855 = vshll.u32 %v570, 16
      %v857 = vrot.slane %v855, 6
      %v858 = vor.u32 %v854, %v857
      %v859 = vsel %vm579, %v850, %v858
      %v861 = vshrl.u32 %v236, 16
      %v863 = vrot.slane %v861, 5
      %v864 = vshll.u32 %v236, 16
      %v866 = vrot.slane %v864, 6
      %v867 = vor.u32 %v863, %v866
      %v868 = vrot.slane %v867, 4
      %v870 = vshrl.u32 %v237, 16
      %v872 = vrot.slane %v870, 5
      %v873 = vshll.u32 %v237, 16
      %v875 = vrot.slane %v873, 6
      %v876 = vor.u32 %v872, %v875
      %v877 = vsel %vm579, %v868, %v876
      %v878 = vrot.slane %v876, 4
      %v880 = vshrl.u32 %v571, 16
      %v882 = vrot.slane %v880, 5
      %v883 = vshll.u32 %v571, 16
      %v885 = vrot.slane %v883, 6
      %v886 = vor.u32 %v882, %v885
      %v887 = vsel %vm579, %v878, %v886
      %v889 = vshrl.u32 %v239, 16
      %v891 = vrot.slane %v889, 5
      %v892 = vshll.u32 %v239, 16
      %v894 = vrot.slane %v892, 6
      %v895 = vor.u32 %v891, %v894
      %v896 = vrot.slane %v895, 4
      %v898 = vshrl.u32 %v240, 16
      %v900 = vrot.slane %v898, 5
      %v901 = vshll.u32 %v240, 16
      %v903 = vrot.slane %v901, 6
      %v904 = vor.u32 %v900, %v903
      %v905 = vsel %vm579, %v896, %v904
      %v906 = vrot.slane %v904, 4
      %v908 = vshrl.u32 %v572, 16
      %v910 = vrot.slane %v908, 5
      %v911 = vshll.u32 %v572, 16
      %v913 = vrot.slane %v911, 6
      %v914 = vor.u32 %v910, %v913
      %v915 = vsel %vm579, %v906, %v914
      %v917 = vshrl.u32 %v242, 16
      %v919 = vrot.slane %v917, 5
      %v920 = vshll.u32 %v242, 16
      %v922 = vrot.slane %v920, 6
      %v923 = vor.u32 %v919, %v922
      %v924 = vrot.slane %v923, 4
      %v926 = vshrl.u32 %v243, 16
      %v928 = vrot.slane %v926, 5
      %v929 = vshll.u32 %v243, 16
      %v931 = vrot.slane %v929, 6
      %v932 = vor.u32 %v928, %v931
      %v933 = vsel %vm579, %v924, %v932
      %v934 = vrot.slane %v932, 4
      %v936 = vshrl.u32 %v573, 16
      %v938 = vrot.slane %v936, 5
      %v939 = vshll.u32 %v573, 16
      %v941 = vrot.slane %v939, 6
      %v942 = vor.u32 %v938, %v941
      %v943 = vsel %vm579, %v934, %v942
      %v945 = vshrl.u32 %v245, 16
      %v947 = vrot.slane %v945, 5
      %v948 = vshll.u32 %v245, 16
      %v950 = vrot.slane %v948, 6
      %v951 = vor.u32 %v947, %v950
      %v952 = vrot.slane %v951, 4
      %v954 = vshrl.u32 %v246, 16
      %v956 = vrot.slane %v954, 5
      %v957 = vshll.u32 %v246, 16
      %v959 = vrot.slane %v957, 6
      %v960 = vor.u32 %v956, %v959
      %v961 = vsel %vm579, %v952, %v960
      %v962 = vrot.slane %v960, 4
      %v964 = vshrl.u32 %v574, 16
      %v966 = vrot.slane %v964, 5
      %v967 = vshll.u32 %v574, 16
      %v969 = vrot.slane %v967, 6
      %v970 = vor.u32 %v966, %v969
      %v971 = vsel %vm579, %v962, %v970
      %v973 = vshrl.u32 %v248, 16
      %v975 = vrot.slane %v973, 5
      %v976 = vshll.u32 %v248, 16
      %v978 = vrot.slane %v976, 6
      %v979 = vor.u32 %v975, %v978
      %v980 = vrot.slane %v979, 4
      %v982 = vshrl.u32 %v249, 16
      %v984 = vrot.slane %v982, 5
      %v985 = vshll.u32 %v249, 16
      %v987 = vrot.slane %v985, 6
      %v988 = vor.u32 %v984, %v987
      %v989 = vsel %vm579, %v980, %v988
      %v990 = vrot.slane %v988, 4
      %v992 = vshrl.u32 %v575, 16
      %v994 = vrot.slane %v992, 5
      %v995 = vshll.u32 %v575, 16
      %v997 = vrot.slane %v995, 6
      %v998 = vor.u32 %v994, %v997
      %v999 = vsel %vm579, %v990, %v998
      %v1001 = vshrl.u32 %v251, 16
      %v1003 = vrot.slane %v1001, 5
      %v1004 = vshll.u32 %v251, 16
      %v1006 = vrot.slane %v1004, 6
      %v1007 = vor.u32 %v1003, %v1006
      %v1008 = vrot.slane %v1007, 4
      %v1010 = vshrl.u32 %v252, 16
      %v1012 = vrot.slane %v1010, 5
      %v1013 = vshll.u32 %v252, 16
      %v1015 = vrot.slane %v1013, 6
      %v1016 = vor.u32 %v1012, %v1015
      %v1017 = vsel %vm579, %v1008, %v1016
      %v1018 = vrot.slane %v1016, 4
      %v1020 = vshrl.u32 %v576, 16
      %v1022 = vrot.slane %v1020, 5
      %v1023 = vshll.u32 %v576, 16
      %v1025 = vrot.slane %v1023, 6
      %v1026 = vor.u32 %v1022, %v1025
      %v1027 = vsel %vm579, %v1018, %v1026
      %s1028 = scalar_lea.vmem %s1, 4
      %v1029 = vld [vmem:[%s1028] sm:$0xf]
      %v1030 = vunpack.c.l.b16 %v597
      %v1031 = vunpack.c.l.b16 %v607
      %v1032 = vunpack.c.l.b16 %v625
      %v1033 = vunpack.c.l.b16 %v635
      %v1034 = vunpack.c.l.b16 %v653
      %v1035 = vunpack.c.l.b16 %v663
      %v1036 = vunpack.c.l.b16 %v681
      %v1037 = vunpack.c.l.b16 %v691
      %v1038 = vunpack.c.l.b16 %v709
      %v1039 = vunpack.c.l.b16 %v719
      %v1040 = vunpack.c.l.b16 %v737
      %v1041 = vunpack.c.l.b16 %v747
      %v1042 = vunpack.c.l.b16 %v765
      %v1043 = vunpack.c.l.b16 %v775
      %v1044 = vunpack.c.l.b16 %v793
      %v1045 = vunpack.c.l.b16 %v803
      %v1046 = vunpack.c.l.b16 %v821
      %v1047 = vunpack.c.l.b16 %v831
      %v1048 = vunpack.c.l.b16 %v849
      %v1049 = vunpack.c.l.b16 %v859
      %v1050 = vunpack.c.l.b16 %v877
      %v1051 = vunpack.c.l.b16 %v887
      %v1052 = vunpack.c.l.b16 %v905
      %v1053 = vunpack.c.l.b16 %v915
      %v1054 = vunpack.c.l.b16 %v933
      %v1055 = vunpack.c.l.b16 %v943
      %v1056 = vunpack.c.l.b16 %v961
      %v1057 = vunpack.c.l.b16 %v971
      %v1058 = vunpack.c.l.b16 %v989
      %v1059 = vunpack.c.l.b16 %v999
      %v1060 = vunpack.c.l.b16 %v1017
      %v1061 = vunpack.c.l.b16 %v1027
      %v1062 = vpack.c.b16 %v1031, %v1030
      %v1063 = vpack.c.b16 %v1033, %v1032
      %v1064 = vpack.c.b16 %v1035, %v1034
      %v1065 = vpack.c.b16 %v1037, %v1036
      %v1066 = vpack.c.b16 %v1039, %v1038
      %v1067 = vpack.c.b16 %v1041, %v1040
      %v1068 = vpack.c.b16 %v1043, %v1042
      %v1069 = vpack.c.b16 %v1045, %v1044
      %v1070 = vpack.c.b16 %v1047, %v1046
      %v1071 = vpack.c.b16 %v1049, %v1048
      %v1072 = vpack.c.b16 %v1051, %v1050
      %v1073 = vpack.c.b16 %v1053, %v1052
      %v1074 = vpack.c.b16 %v1055, %v1054
      %v1075 = vpack.c.b16 %v1057, %v1056
      %v1076 = vpack.c.b16 %v1059, %v1058
      %v1077 = vpack.c.b16 %v1061, %v1060
      %v1079 = vsel %vm466, %v1029, 0
      %v1082 = vsel %vm466, %v1062, 0
      %v1085 = vsel %vm466, %v1063, 0
      %v1088 = vsel %vm466, %v1064, 0
      %v1091 = vsel %vm466, %v1065, 0
      %v1094 = vsel %vm466, %v1066, 0
      %v1097 = vsel %vm466, %v1067, 0
      %v1100 = vsel %vm466, %v1068, 0
      %v1103 = vsel %vm466, %v1069, 0
      %v1106 = vsel %vm466, %v1070, 0
      %v1109 = vsel %vm466, %v1071, 0
      %v1112 = vsel %vm466, %v1072, 0
      %v1115 = vsel %vm466, %v1073, 0
      %v1118 = vsel %vm466, %v1074, 0
      %v1121 = vsel %vm466, %v1075, 0
      %v1124 = vsel %vm466, %v1076, 0
      %v1127 = vsel %vm466, %v1077, 0
      %1129 = vmatprep.subr.bf16.mxu0 0
      %1130 = vmatpush1.bf16.xpose.msra.mxu0 %v1082
      %1131 = vmatprep.subr.bf16.mxu0 0
      %1132 = vmatpush1.bf16.xpose.msra.mxu0 %v1085
      %1133 = vmatprep.subr.bf16.mxu0 0
      %1134 = vmatpush1.bf16.xpose.msra.mxu0 %v1088
      %1135 = vmatprep.subr.bf16.mxu0 0
      %1136 = vmatpush1.bf16.xpose.msra.mxu0 %v1091
      %1137 = vmatprep.subr.bf16.mxu0 0
      %1138 = vmatpush1.bf16.xpose.msra.mxu0 %v1094
      %1139 = vmatprep.subr.bf16.mxu0 0
      %1140 = vmatpush1.bf16.xpose.msra.mxu0 %v1097
      %1141 = vmatprep.subr.bf16.mxu0 0
      %1142 = vmatpush1.bf16.xpose.msra.mxu0 %v1100
      %1143 = vmatprep.subr.bf16.mxu0 0
      %1144 = vmatpush1.bf16.xpose.msra.mxu0 %v1103
      %1145 = vmatprep.subr.bf16.mxu0 0
      %1146 = vmatpush1.bf16.xpose.msra.mxu0 %v1106
      %1147 = vmatprep.subr.bf16.mxu0 0
      %1148 = vmatpush1.bf16.xpose.msra.mxu0 %v1109
      %1149 = vmatprep.subr.bf16.mxu0 0
      %1150 = vmatpush1.bf16.xpose.msra.mxu0 %v1112
      %1151 = vmatprep.subr.bf16.mxu0 0
      %1152 = vmatpush1.bf16.xpose.msra.mxu0 %v1115
      %1153 = vmatprep.subr.bf16.mxu0 0
      %1154 = vmatpush1.bf16.xpose.msra.mxu0 %v1118
      %1155 = vmatprep.subr.bf16.mxu0 0
      %1156 = vmatpush1.bf16.xpose.msra.mxu0 %v1121
      %1157 = vmatprep.subr.bf16.mxu0 0
      %1158 = vmatpush1.bf16.xpose.msra.mxu0 %v1124
      %1159 = vmatprep.subr.bf16.mxu0 0
      %1160 = vmatpush1.bf16.xpose.msra.mxu0 %v1127
      %1161 = vmatprep.mubr.bf16.mxu0 0
      %1162 = vmatmul.mubr.bf16.gmra.mrb[0].mxu0 %v1079
      %v1163 = vpop.f32.mrb[0].mxu0
      %v1164 = vadd.f32 0.0, %v1163
      %v1165 = vpop.f32.mrb[0].mxu0
      %v1166 = vadd.f32 0.0, %v1165
      %v1167 = vpop.f32.mrb[0].mxu0
      %v1168 = vpop.f32.mrb[0].mxu0
      %1169 = vdwg.mxu0
      %v1170 = vadd.f32 %v559, %v1164
      %v1171 = vadd.f32 %v560, %v1166
      %v1172 = vld [vmem:[%s205] sm:$0xc]
      %v1173 = vld [vmem:[%s205 + $0xc] sm:$0xc]
      %v1174 = vld [vmem:[%s205 + $0x18] sm:$0xc]
      %v1175 = vld [vmem:[%s205 + $0x24] sm:$0xc]
      %v1176 = vld [vmem:[%s205 + $0x30] sm:$0xc]
      %v1177 = vld [vmem:[%s205 + $0x3c] sm:$0xc]
      %v1178 = vld [vmem:[%s205 + $0x48] sm:$0xc]
      %v1179 = vld [vmem:[%s205 + $0x54] sm:$0xc]
      %v1180 = vld [vmem:[%s205 + $0x60] sm:$0xc]
      %v1181 = vld [vmem:[%s205 + $0x6c] sm:$0xc]
      %v1182 = vld [vmem:[%s205 + $0x78] sm:$0xc]
      %v1183 = vld [vmem:[%s205 + $0x84] sm:$0xc]
      %v1184 = vld [vmem:[%s205 + $0x90] sm:$0xc]
      %v1185 = vld [vmem:[%s205 + $0x9c] sm:$0xc]
      %v1186 = vld [vmem:[%s205 + $0xa8] sm:$0xc]
      %v1187 = vld [vmem:[%s205 + $0xb4] sm:$0xc]
      %vm1220 = vcmask 1041408
      %vm1221 = vcmask 1045508
      %vm1222 = vmor %vm1220, %vm1221
      %v1223 = vrot.slane %v1172, 6
      %v1224 = vrot.slane %v1223, 4
      %v1225 = vrot.slane %v207, 6
      %v1226 = vsel %vm1222, %v1224, %v1225
      %v1227 = vrot.slane %v1225, 4
      %v1228 = vrot.slane %v561, 6
      %v1229 = vsel %vm1222, %v1227, %v1228
      %v1230 = vrot.slane %v1173, 6
      %v1231 = vrot.slane %v1230, 4
      %v1232 = vrot.slane %v210, 6
      %v1233 = vsel %vm1222, %v1231, %v1232
      %v1234 = vrot.slane %v1232, 4
      %v1235 = vrot.slane %v562, 6
      %v1236 = vsel %vm1222, %v1234, %v1235
      %v1237 = vrot.slane %v1174, 6
      %v1238 = vrot.slane %v1237, 4
      %v1239 = vrot.slane %v213, 6
      %v1240 = vsel %vm1222, %v1238, %v1239
      %v1241 = vrot.slane %v1239, 4
      %v1242 = vrot.slane %v563, 6
      %v1243 = vsel %vm1222, %v1241, %v1242
      %v1244 = vrot.slane %v1175, 6
      %v1245 = vrot.slane %v1244, 4
      %v1246 = vrot.slane %v216, 6
      %v1247 = vsel %vm1222, %v1245, %v1246
      %v1248 = vrot.slane %v1246, 4
      %v1249 = vrot.slane %v564, 6
      %v1250 = vsel %vm1222, %v1248, %v1249
      %v1251 = vrot.slane %v1176, 6
      %v1252 = vrot.slane %v1251, 4
      %v1253 = vrot.slane %v219, 6
      %v1254 = vsel %vm1222, %v1252, %v1253
      %v1255 = vrot.slane %v1253, 4
      %v1256 = vrot.slane %v565, 6
      %v1257 = vsel %vm1222, %v1255, %v1256
      %v1258 = vrot.slane %v1177, 6
      %v1259 = vrot.slane %v1258, 4
      %v1260 = vrot.slane %v222, 6
      %v1261 = vsel %vm1222, %v1259, %v1260
      %v1262 = vrot.slane %v1260, 4
      %v1263 = vrot.slane %v566, 6
      %v1264 = vsel %vm1222, %v1262, %v1263
      %v1265 = vrot.slane %v1178, 6
      %v1266 = vrot.slane %v1265, 4
      %v1267 = vrot.slane %v225, 6
      %v1268 = vsel %vm1222, %v1266, %v1267
      %v1269 = vrot.slane %v1267, 4
      %v1270 = vrot.slane %v567, 6
      %v1271 = vsel %vm1222, %v1269, %v1270
      %v1272 = vrot.slane %v1179, 6
      %v1273 = vrot.slane %v1272, 4
      %v1274 = vrot.slane %v228, 6
      %v1275 = vsel %vm1222, %v1273, %v1274
      %v1276 = vrot.slane %v1274, 4
      %v1277 = vrot.slane %v568, 6
      %v1278 = vsel %vm1222, %v1276, %v1277
      %v1279 = vrot.slane %v1180, 6
      %v1280 = vrot.slane %v1279, 4
      %v1281 = vrot.slane %v231, 6
      %v1282 = vsel %vm1222, %v1280, %v1281
      %v1283 = vrot.slane %v1281, 4
      %v1284 = vrot.slane %v569, 6
      %v1285 = vsel %vm1222, %v1283, %v1284
      %v1286 = vrot.slane %v1181, 6
      %v1287 = vrot.slane %v1286, 4
      %v1288 = vrot.slane %v234, 6
      %v1289 = vsel %vm1222, %v1287, %v1288
      %v1290 = vrot.slane %v1288, 4
      %v1291 = vrot.slane %v570, 6
      %v1292 = vsel %vm1222, %v1290, %v1291
      %v1293 = vrot.slane %v1182, 6
      %v1294 = vrot.slane %v1293, 4
      %v1295 = vrot.slane %v237, 6
      %v1296 = vsel %vm1222, %v1294, %v1295
      %v1297 = vrot.slane %v1295, 4
      %v1298 = vrot.slane %v571, 6
      %v1299 = vsel %vm1222, %v1297, %v1298
      %v1300 = vrot.slane %v1183, 6
      %v1301 = vrot.slane %v1300, 4
      %v1302 = vrot.slane %v240, 6
      %v1303 = vsel %vm1222, %v1301, %v1302
      %v1304 = vrot.slane %v1302, 4
      %v1305 = vrot.slane %v572, 6
      %v1306 = vsel %vm1222, %v1304, %v1305
      %v1307 = vrot.slane %v1184, 6
      %v1308 = vrot.slane %v1307, 4
      %v1309 = vrot.slane %v243, 6
      %v1310 = vsel %vm1222, %v1308, %v1309
      %v1311 = vrot.slane %v1309, 4
      %v1312 = vrot.slane %v573, 6
      %v1313 = vsel %vm1222, %v1311, %v1312
      %v1314 = vrot.slane %v1185, 6
      %v1315 = vrot.slane %v1314, 4
      %v1316 = vrot.slane %v246, 6
      %v1317 = vsel %vm1222, %v1315, %v1316
      %v1318 = vrot.slane %v1316, 4
      %v1319 = vrot.slane %v574, 6
      %v1320 = vsel %vm1222, %v1318, %v1319
      %v1321 = vrot.slane %v1186, 6
      %v1322 = vrot.slane %v1321, 4
      %v1323 = vrot.slane %v249, 6
      %v1324 = vsel %vm1222, %v1322, %v1323
      %v1325 = vrot.slane %v1323, 4
      %v1326 = vrot.slane %v575, 6
      %v1327 = vsel %vm1222, %v1325, %v1326
      %v1328 = vrot.slane %v1187, 6
      %v1329 = vrot.slane %v1328, 4
      %v1330 = vrot.slane %v252, 6
      %v1331 = vsel %vm1222, %v1329, %v1330
      %v1332 = vrot.slane %v1330, 4
      %v1333 = vrot.slane %v576, 6
      %v1334 = vsel %vm1222, %v1332, %v1333
      %s1335 = scalar_lea.vmem %s1, 8
      %v1336 = vld [vmem:[%s1335] sm:$0xf]
      %v1337 = vunpack.c.l.b16 %v1226
      %v1338 = vunpack.c.l.b16 %v1229
      %v1339 = vunpack.c.l.b16 %v1233
      %v1340 = vunpack.c.l.b16 %v1236
      %v1341 = vunpack.c.l.b16 %v1240
      %v1342 = vunpack.c.l.b16 %v1243
      %v1343 = vunpack.c.l.b16 %v1247
      %v1344 = vunpack.c.l.b16 %v1250
      %v1345 = vunpack.c.l.b16 %v1254
      %v1346 = vunpack.c.l.b16 %v1257
      %v1347 = vunpack.c.l.b16 %v1261
      %v1348 = vunpack.c.l.b16 %v1264
      %v1349 = vunpack.c.l.b16 %v1268
      %v1350 = vunpack.c.l.b16 %v1271
      %v1351 = vunpack.c.l.b16 %v1275
      %v1352 = vunpack.c.l.b16 %v1278
      %v1353 = vunpack.c.l.b16 %v1282
      %v1354 = vunpack.c.l.b16 %v1285
      %v1355 = vunpack.c.l.b16 %v1289
      %v1356 = vunpack.c.l.b16 %v1292
      %v1357 = vunpack.c.l.b16 %v1296
      %v1358 = vunpack.c.l.b16 %v1299
      %v1359 = vunpack.c.l.b16 %v1303
      %v1360 = vunpack.c.l.b16 %v1306
      %v1361 = vunpack.c.l.b16 %v1310
      %v1362 = vunpack.c.l.b16 %v1313
      %v1363 = vunpack.c.l.b16 %v1317
      %v1364 = vunpack.c.l.b16 %v1320
      %v1365 = vunpack.c.l.b16 %v1324
      %v1366 = vunpack.c.l.b16 %v1327
      %v1367 = vunpack.c.l.b16 %v1331
      %v1368 = vunpack.c.l.b16 %v1334
      %v1369 = vpack.c.b16 %v1338, %v1337
      %v1370 = vpack.c.b16 %v1340, %v1339
      %v1371 = vpack.c.b16 %v1342, %v1341
      %v1372 = vpack.c.b16 %v1344, %v1343
      %v1373 = vpack.c.b16 %v1346, %v1345
      %v1374 = vpack.c.b16 %v1348, %v1347
      %v1375 = vpack.c.b16 %v1350, %v1349
      %v1376 = vpack.c.b16 %v1352, %v1351
      %v1377 = vpack.c.b16 %v1354, %v1353
      %v1378 = vpack.c.b16 %v1356, %v1355
      %v1379 = vpack.c.b16 %v1358, %v1357
      %v1380 = vpack.c.b16 %v1360, %v1359
      %v1381 = vpack.c.b16 %v1362, %v1361
      %v1382 = vpack.c.b16 %v1364, %v1363
      %v1383 = vpack.c.b16 %v1366, %v1365
      %v1384 = vpack.c.b16 %v1368, %v1367
      %v1386 = vsel %vm466, %v1336, 0
      %v1389 = vsel %vm466, %v1369, 0
      %v1392 = vsel %vm466, %v1370, 0
      %v1395 = vsel %vm466, %v1371, 0
      %v1398 = vsel %vm466, %v1372, 0
      %v1401 = vsel %vm466, %v1373, 0
      %v1404 = vsel %vm466, %v1374, 0
      %v1407 = vsel %vm466, %v1375, 0
      %v1410 = vsel %vm466, %v1376, 0
      %v1413 = vsel %vm466, %v1377, 0
      %v1416 = vsel %vm466, %v1378, 0
      %v1419 = vsel %vm466, %v1379, 0
      %v1422 = vsel %vm466, %v1380, 0
      %v1425 = vsel %vm466, %v1381, 0
      %v1428 = vsel %vm466, %v1382, 0
      %v1431 = vsel %vm466, %v1383, 0
      %v1434 = vsel %vm466, %v1384, 0
      %1436 = vmatprep.subr.bf16.mxu0 0
      %1437 = vmatpush1.bf16.xpose.msra.mxu0 %v1389
      %1438 = vmatprep.subr.bf16.mxu0 0
      %1439 = vmatpush1.bf16.xpose.msra.mxu0 %v1392
      %1440 = vmatprep.subr.bf16.mxu0 0
      %1441 = vmatpush1.bf16.xpose.msra.mxu0 %v1395
      %1442 = vmatprep.subr.bf16.mxu0 0
      %1443 = vmatpush1.bf16.xpose.msra.mxu0 %v1398
      %1444 = vmatprep.subr.bf16.mxu0 0
      %1445 = vmatpush1.bf16.xpose.msra.mxu0 %v1401
      %1446 = vmatprep.subr.bf16.mxu0 0
      %1447 = vmatpush1.bf16.xpose.msra.mxu0 %v1404
      %1448 = vmatprep.subr.bf16.mxu0 0
      %1449 = vmatpush1.bf16.xpose.msra.mxu0 %v1407
      %1450 = vmatprep.subr.bf16.mxu0 0
      %1451 = vmatpush1.bf16.xpose.msra.mxu0 %v1410
      %1452 = vmatprep.subr.bf16.mxu0 0
      %1453 = vmatpush1.bf16.xpose.msra.mxu0 %v1413
      %1454 = vmatprep.subr.bf16.mxu0 0
      %1455 = vmatpush1.bf16.xpose.msra.mxu0 %v1416
      %1456 = vmatprep.subr.bf16.mxu0 0
      %1457 = vmatpush1.bf16.xpose.msra.mxu0 %v1419
      %1458 = vmatprep.subr.bf16.mxu0 0
      %1459 = vmatpush1.bf16.xpose.msra.mxu0 %v1422
      %1460 = vmatprep.subr.bf16.mxu0 0
      %1461 = vmatpush1.bf16.xpose.msra.mxu0 %v1425
      %1462 = vmatprep.subr.bf16.mxu0 0
      %1463 = vmatpush1.bf16.xpose.msra.mxu0 %v1428
      %1464 = vmatprep.subr.bf16.mxu0 0
      %1465 = vmatpush1.bf16.xpose.msra.mxu0 %v1431
      %1466 = vmatprep.subr.bf16.mxu0 0
      %1467 = vmatpush1.bf16.xpose.msra.mxu0 %v1434
      %1468 = vmatprep.mubr.bf16.mxu0 0
      %1469 = vmatmul.mubr.bf16.gmra.mrb[0].mxu0 %v1386
      %v1470 = vpop.f32.mrb[0].mxu0
      %v1471 = vadd.f32 0.0, %v1470
      %v1472 = vpop.f32.mrb[0].mxu0
      %v1473 = vadd.f32 0.0, %v1472
      %v1474 = vpop.f32.mrb[0].mxu0
      %v1475 = vpop.f32.mrb[0].mxu0
      %1476 = vdwg.mxu0
      %v1477 = vadd.f32 %v1170, %v1471
      %v1478 = vadd.f32 %v1171, %v1473
      %s1479 = sadd.s32 %s195, 3
      %s1480 = smul.u32 %s1479, 3
      %s1481 = smul.addr %s1480, 4
      %s1482 = scalar_lea.vmem %s183, %s1481
      %v1483 = vld [vmem:[%s1482] sm:$0xe]
      %v1484 = vld [vmem:[%s1482 + $0x4] sm:$0xf]
      %v1485 = vld [vmem:[%s1482 + $0x8] sm:$0x1]
      %v1486 = vld [vmem:[%s1482 + $0xc] sm:$0xe]
      %v1487 = vld [vmem:[%s1482 + $0x10] sm:$0xf]
      %v1488 = vld [vmem:[%s1482 + $0x14] sm:$0x1]
      %v1489 = vld [vmem:[%s1482 + $0x18] sm:$0xe]
      %v1490 = vld [vmem:[%s1482 + $0x1c] sm:$0xf]
      %v1491 = vld [vmem:[%s1482 + $0x20] sm:$0x1]
      %v1492 = vld [vmem:[%s1482 + $0x24] sm:$0xe]
      %v1493 = vld [vmem:[%s1482 + $0x28] sm:$0xf]
      %v1494 = vld [vmem:[%s1482 + $0x2c] sm:$0x1]
      %v1495 = vld [vmem:[%s1482 + $0x30] sm:$0xe]
      %v1496 = vld [vmem:[%s1482 + $0x34] sm:$0xf]
      %v1497 = vld [vmem:[%s1482 + $0x38] sm:$0x1]
      %v1498 = vld [vmem:[%s1482 + $0x3c] sm:$0xe]
      %v1499 = vld [vmem:[%s1482 + $0x40] sm:$0xf]
      %v1500 = vld [vmem:[%s1482 + $0x44] sm:$0x1]
      %v1501 = vld [vmem:[%s1482 + $0x48] sm:$0xe]
      %v1502 = vld [vmem:[%s1482 + $0x4c] sm:$0xf]
      %v1503 = vld [vmem:[%s1482 + $0x50] sm:$0x1]
      %v1504 = vld [vmem:[%s1482 + $0x54] sm:$0xe]
      %v1505 = vld [vmem:[%s1482 + $0x58] sm:$0xf]
      %v1506 = vld [vmem:[%s1482 + $0x5c] sm:$0x1]
      %v1507 = vld [vmem:[%s1482 + $0x60] sm:$0xe]
      %v1508 = vld [vmem:[%s1482 + $0x64] sm:$0xf]
      %v1509 = vld [vmem:[%s1482 + $0x68] sm:$0x1]
      %v1510 = vld [vmem:[%s1482 + $0x6c] sm:$0xe]
      %v1511 = vld [vmem:[%s1482 + $0x70] sm:$0xf]
      %v1512 = vld [vmem:[%s1482 + $0x74] sm:$0x1]
      %v1513 = vld [vmem:[%s1482 + $0x78] sm:$0xe]
      %v1514 = vld [vmem:[%s1482 + $0x7c] sm:$0xf]
      %v1515 = vld [vmem:[%s1482 + $0x80] sm:$0x1]
      %v1516 = vld [vmem:[%s1482 + $0x84] sm:$0xe]
      %v1517 = vld [vmem:[%s1482 + $0x88] sm:$0xf]
      %v1518 = vld [vmem:[%s1482 + $0x8c] sm:$0x1]
      %v1519 = vld [vmem:[%s1482 + $0x90] sm:$0xe]
      %v1520 = vld [vmem:[%s1482 + $0x94] sm:$0xf]
      %v1521 = vld [vmem:[%s1482 + $0x98] sm:$0x1]
      %v1522 = vld [vmem:[%s1482 + $0x9c] sm:$0xe]
      %v1523 = vld [vmem:[%s1482 + $0xa0] sm:$0xf]
      %v1524 = vld [vmem:[%s1482 + $0xa4] sm:$0x1]
      %v1525 = vld [vmem:[%s1482 + $0xa8] sm:$0xe]
      %v1526 = vld [vmem:[%s1482 + $0xac] sm:$0xf]
      %v1527 = vld [vmem:[%s1482 + $0xb0] sm:$0x1]
      %v1528 = vld [vmem:[%s1482 + $0xb4] sm:$0xe]
      %v1529 = vld [vmem:[%s1482 + $0xb8] sm:$0xf]
      %v1530 = vld [vmem:[%s1482 + $0xbc] sm:$0x1]
      %v1579 = vrot.slane %v1483, 5
      %v1580 = vrot.slane %v1579, 4
      %v1581 = vrot.slane %v1484, 5
      %v1582 = vsel %vm304, %v1580, %v1581
      %v1583 = vrot.slane %v1581, 4
      %v1584 = vrot.slane %v1485, 5
      %v1585 = vsel %vm304, %v1583, %v1584
      %v1586 = vrot.slane %v1486, 5
      %v1587 = vrot.slane %v1586, 4
      %v1588 = vrot.slane %v1487, 5
      %v1589 = vsel %vm304, %v1587, %v1588
      %v1590 = vrot.slane %v1588, 4
      %v1591 = vrot.slane %v1488, 5
      %v1592 = vsel %vm304, %v1590, %v1591
      %v1593 = vrot.slane %v1489, 5
      %v1594 = vrot.slane %v1593, 4
      %v1595 = vrot.slane %v1490, 5
      %v1596 = vsel %vm304, %v1594, %v1595
      %v1597 = vrot.slane %v1595, 4
      %v1598 = vrot.slane %v1491, 5
      %v1599 = vsel %vm304, %v1597, %v1598
      %v1600 = vrot.slane %v1492, 5
      %v1601 = vrot.slane %v1600, 4
      %v1602 = vrot.slane %v1493, 5
      %v1603 = vsel %vm304, %v1601, %v1602
      %v1604 = vrot.slane %v1602, 4
      %v1605 = vrot.slane %v1494, 5
      %v1606 = vsel %vm304, %v1604, %v1605
      %v1607 = vrot.slane %v1495, 5
      %v1608 = vrot.slane %v1607, 4
      %v1609 = vrot.slane %v1496, 5
      %v1610 = vsel %vm304, %v1608, %v1609
      %v1611 = vrot.slane %v1609, 4
      %v1612 = vrot.slane %v1497, 5
      %v1613 = vsel %vm304, %v1611, %v1612
      %v1614 = vrot.slane %v1498, 5
      %v1615 = vrot.slane %v1614, 4
      %v1616 = vrot.slane %v1499, 5
      %v1617 = vsel %vm304, %v1615, %v1616
      %v1618 = vrot.slane %v1616, 4
      %v1619 = vrot.slane %v1500, 5
      %v1620 = vsel %vm304, %v1618, %v1619
      %v1621 = vrot.slane %v1501, 5
      %v1622 = vrot.slane %v1621, 4
      %v1623 = vrot.slane %v1502, 5
      %v1624 = vsel %vm304, %v1622, %v1623
      %v1625 = vrot.slane %v1623, 4
      %v1626 = vrot.slane %v1503, 5
      %v1627 = vsel %vm304, %v1625, %v1626
      %v1628 = vrot.slane %v1504, 5
      %v1629 = vrot.slane %v1628, 4
      %v1630 = vrot.slane %v1505, 5
      %v1631 = vsel %vm304, %v1629, %v1630
      %v1632 = vrot.slane %v1630, 4
      %v1633 = vrot.slane %v1506, 5
      %v1634 = vsel %vm304, %v1632, %v1633
      %v1635 = vrot.slane %v1507, 5
      %v1636 = vrot.slane %v1635, 4
      %v1637 = vrot.slane %v1508, 5
      %v1638 = vsel %vm304, %v1636, %v1637
      %v1639 = vrot.slane %v1637, 4
      %v1640 = vrot.slane %v1509, 5
      %v1641 = vsel %vm304, %v1639, %v1640
      %v1642 = vrot.slane %v1510, 5
      %v1643 = vrot.slane %v1642, 4
      %v1644 = vrot.slane %v1511, 5
      %v1645 = vsel %vm304, %v1643, %v1644
      %v1646 = vrot.slane %v1644, 4
      %v1647 = vrot.slane %v1512, 5
      %v1648 = vsel %vm304, %v1646, %v1647
      %v1649 = vrot.slane %v1513, 5
      %v1650 = vrot.slane %v1649, 4
      %v1651 = vrot.slane %v1514, 5
      %v1652 = vsel %vm304, %v1650, %v1651
      %v1653 = vrot.slane %v1651, 4
      %v1654 = vrot.slane %v1515, 5
      %v1655 = vsel %vm304, %v1653, %v1654
      %v1656 = vrot.slane %v1516, 5
      %v1657 = vrot.slane %v1656, 4
      %v1658 = vrot.slane %v1517, 5
      %v1659 = vsel %vm304, %v1657, %v1658
      %v1660 = vrot.slane %v1658, 4
      %v1661 = vrot.slane %v1518, 5
      %v1662 = vsel %vm304, %v1660, %v1661
      %v1663 = vrot.slane %v1519, 5
      %v1664 = vrot.slane %v1663, 4
      %v1665 = vrot.slane %v1520, 5
      %v1666 = vsel %vm304, %v1664, %v1665
      %v1667 = vrot.slane %v1665, 4
      %v1668 = vrot.slane %v1521, 5
      %v1669 = vsel %vm304, %v1667, %v1668
      %v1670 = vrot.slane %v1522, 5
      %v1671 = vrot.slane %v1670, 4
      %v1672 = vrot.slane %v1523, 5
      %v1673 = vsel %vm304, %v1671, %v1672
      %v1674 = vrot.slane %v1672, 4
      %v1675 = vrot.slane %v1524, 5
      %v1676 = vsel %vm304, %v1674, %v1675
      %v1677 = vrot.slane %v1525, 5
      %v1678 = vrot.slane %v1677, 4
      %v1679 = vrot.slane %v1526, 5
      %v1680 = vsel %vm304, %v1678, %v1679
      %v1681 = vrot.slane %v1679, 4
      %v1682 = vrot.slane %v1527, 5
      %v1683 = vsel %vm304, %v1681, %v1682
      %v1684 = vrot.slane %v1528, 5
      %v1685 = vrot.slane %v1684, 4
      %v1686 = vrot.slane %v1529, 5
      %v1687 = vsel %vm304, %v1685, %v1686
      %v1688 = vrot.slane %v1686, 4
      %v1689 = vrot.slane %v1530, 5
      %v1690 = vsel %vm304, %v1688, %v1689
      %s1691 = scalar_lea.vmem %s1, 12
      %v1692 = vld [vmem:[%s1691] sm:$0xf]
      %v1693 = vunpack.c.l.b16 %v1582
      %v1694 = vunpack.c.l.b16 %v1585
      %v1695 = vunpack.c.l.b16 %v1589
      %v1696 = vunpack.c.l.b16 %v1592
      %v1697 = vunpack.c.l.b16 %v1596
      %v1698 = vunpack.c.l.b16 %v1599
      %v1699 = vunpack.c.l.b16 %v1603
      %v1700 = vunpack.c.l.b16 %v1606
      %v1701 = vunpack.c.l.b16 %v1610
      %v1702 = vunpack.c.l.b16 %v1613
      %v1703 = vunpack.c.l.b16 %v1617
      %v1704 = vunpack.c.l.b16 %v1620
      %v1705 = vunpack.c.l.b16 %v1624
      %v1706 = vunpack.c.l.b16 %v1627
      %v1707 = vunpack.c.l.b16 %v1631
      %v1708 = vunpack.c.l.b16 %v1634
      %v1709 = vunpack.c.l.b16 %v1638
      %v1710 = vunpack.c.l.b16 %v1641
      %v1711 = vunpack.c.l.b16 %v1645
      %v1712 = vunpack.c.l.b16 %v1648
      %v1713 = vunpack.c.l.b16 %v1652
      %v1714 = vunpack.c.l.b16 %v1655
      %v1715 = vunpack.c.l.b16 %v1659
      %v1716 = vunpack.c.l.b16 %v1662
      %v1717 = vunpack.c.l.b16 %v1666
      %v1718 = vunpack.c.l.b16 %v1669
      %v1719 = vunpack.c.l.b16 %v1673
      %v1720 = vunpack.c.l.b16 %v1676
      %v1721 = vunpack.c.l.b16 %v1680
      %v1722 = vunpack.c.l.b16 %v1683
      %v1723 = vunpack.c.l.b16 %v1687
      %v1724 = vunpack.c.l.b16 %v1690
      %v1725 = vpack.c.b16 %v1694, %v1693
      %v1726 = vpack.c.b16 %v1696, %v1695
      %v1727 = vpack.c.b16 %v1698, %v1697
      %v1728 = vpack.c.b16 %v1700, %v1699
      %v1729 = vpack.c.b16 %v1702, %v1701
      %v1730 = vpack.c.b16 %v1704, %v1703
      %v1731 = vpack.c.b16 %v1706, %v1705
      %v1732 = vpack.c.b16 %v1708, %v1707
      %v1733 = vpack.c.b16 %v1710, %v1709
      %v1734 = vpack.c.b16 %v1712, %v1711
      %v1735 = vpack.c.b16 %v1714, %v1713
      %v1736 = vpack.c.b16 %v1716, %v1715
      %v1737 = vpack.c.b16 %v1718, %v1717
      %v1738 = vpack.c.b16 %v1720, %v1719
      %v1739 = vpack.c.b16 %v1722, %v1721
      %v1740 = vpack.c.b16 %v1724, %v1723
      %v1742 = vsel %vm466, %v1692, 0
      %v1745 = vsel %vm466, %v1725, 0
      %v1748 = vsel %vm466, %v1726, 0
      %v1751 = vsel %vm466, %v1727, 0
      %v1754 = vsel %vm466, %v1728, 0
      %v1757 = vsel %vm466, %v1729, 0
      %v1760 = vsel %vm466, %v1730, 0
      %v1763 = vsel %vm466, %v1731, 0
      %v1766 = vsel %vm466, %v1732, 0
      %v1769 = vsel %vm466, %v1733, 0
      %v1772 = vsel %vm466, %v1734, 0
      %v1775 = vsel %vm466, %v1735, 0
      %v1778 = vsel %vm466, %v1736, 0
      %v1781 = vsel %vm466, %v1737, 0
      %v1784 = vsel %vm466, %v1738, 0
      %v1787 = vsel %vm466, %v1739, 0
      %v1790 = vsel %vm466, %v1740, 0
      %1792 = vmatprep.subr.bf16.mxu0 0
      %1793 = vmatpush1.bf16.xpose.msra.mxu0 %v1745
      %1794 = vmatprep.subr.bf16.mxu0 0
      %1795 = vmatpush1.bf16.xpose.msra.mxu0 %v1748
      %1796 = vmatprep.subr.bf16.mxu0 0
      %1797 = vmatpush1.bf16.xpose.msra.mxu0 %v1751
      %1798 = vmatprep.subr.bf16.mxu0 0
      %1799 = vmatpush1.bf16.xpose.msra.mxu0 %v1754
      %1800 = vmatprep.subr.bf16.mxu0 0
      %1801 = vmatpush1.bf16.xpose.msra.mxu0 %v1757
      %1802 = vmatprep.subr.bf16.mxu0 0
      %1803 = vmatpush1.bf16.xpose.msra.mxu0 %v1760
      %1804 = vmatprep.subr.bf16.mxu0 0
      %1805 = vmatpush1.bf16.xpose.msra.mxu0 %v1763
      %1806 = vmatprep.subr.bf16.mxu0 0
      %1807 = vmatpush1.bf16.xpose.msra.mxu0 %v1766
      %1808 = vmatprep.subr.bf16.mxu0 0
      %1809 = vmatpush1.bf16.xpose.msra.mxu0 %v1769
      %1810 = vmatprep.subr.bf16.mxu0 0
      %1811 = vmatpush1.bf16.xpose.msra.mxu0 %v1772
      %1812 = vmatprep.subr.bf16.mxu0 0
      %1813 = vmatpush1.bf16.xpose.msra.mxu0 %v1775
      %1814 = vmatprep.subr.bf16.mxu0 0
      %1815 = vmatpush1.bf16.xpose.msra.mxu0 %v1778
      %1816 = vmatprep.subr.bf16.mxu0 0
      %1817 = vmatpush1.bf16.xpose.msra.mxu0 %v1781
      %1818 = vmatprep.subr.bf16.mxu0 0
      %1819 = vmatpush1.bf16.xpose.msra.mxu0 %v1784
      %1820 = vmatprep.subr.bf16.mxu0 0
      %1821 = vmatpush1.bf16.xpose.msra.mxu0 %v1787
      %1822 = vmatprep.subr.bf16.mxu0 0
      %1823 = vmatpush1.bf16.xpose.msra.mxu0 %v1790
      %1824 = vmatprep.mubr.bf16.mxu0 0
      %1825 = vmatmul.mubr.bf16.gmra.mrb[0].mxu0 %v1742
      %v1826 = vpop.f32.mrb[0].mxu0
      %v1827 = vadd.f32 0.0, %v1826
      %v1828 = vpop.f32.mrb[0].mxu0
      %v1829 = vadd.f32 0.0, %v1828
      %v1830 = vpop.f32.mrb[0].mxu0
      %v1831 = vpop.f32.mrb[0].mxu0
      %1832 = vdwg.mxu0
      %v1833 = vadd.f32 %v1477, %v1827
      %v1834 = vadd.f32 %v1478, %v1829
      %v1835 = vld [vmem:[%s1482 + $0x8] sm:$0x3]
      %v1836 = vld [vmem:[%s1482 + $0x14] sm:$0x3]
      %v1837 = vld [vmem:[%s1482 + $0x20] sm:$0x3]
      %v1838 = vld [vmem:[%s1482 + $0x2c] sm:$0x3]
      %v1839 = vld [vmem:[%s1482 + $0x38] sm:$0x3]
      %v1840 = vld [vmem:[%s1482 + $0x44] sm:$0x3]
      %v1841 = vld [vmem:[%s1482 + $0x50] sm:$0x3]
      %v1842 = vld [vmem:[%s1482 + $0x5c] sm:$0x3]
      %v1843 = vld [vmem:[%s1482 + $0x68] sm:$0x3]
      %v1844 = vld [vmem:[%s1482 + $0x74] sm:$0x3]
      %v1845 = vld [vmem:[%s1482 + $0x80] sm:$0x3]
      %v1846 = vld [vmem:[%s1482 + $0x8c] sm:$0x3]
      %v1847 = vld [vmem:[%s1482 + $0x98] sm:$0x3]
      %v1848 = vld [vmem:[%s1482 + $0xa4] sm:$0x3]
      %v1849 = vld [vmem:[%s1482 + $0xb0] sm:$0x3]
      %v1850 = vld [vmem:[%s1482 + $0xbc] sm:$0x3]
      %v1852 = vshrl.u32 %v1483, 16
      %v1854 = vrot.slane %v1852, 5
      %v1855 = vshll.u32 %v1483, 16
      %v1857 = vrot.slane %v1855, 6
      %v1858 = vor.u32 %v1854, %v1857
      %v1859 = vrot.slane %v1858, 4
      %v1861 = vshrl.u32 %v1484, 16
      %v1863 = vrot.slane %v1861, 5
      %v1864 = vshll.u32 %v1484, 16
      %v1866 = vrot.slane %v1864, 6
      %v1867 = vor.u32 %v1863, %v1866
      %v1868 = vsel %vm579, %v1859, %v1867
      %v1869 = vrot.slane %v1867, 4
      %v1871 = vshrl.u32 %v1835, 16
      %v1873 = vrot.slane %v1871, 5
      %v1874 = vshll.u32 %v1835, 16
      %v1876 = vrot.slane %v1874, 6
      %v1877 = vor.u32 %v1873, %v1876
      %v1878 = vsel %vm579, %v1869, %v1877
      %v1880 = vshrl.u32 %v1486, 16
      %v1882 = vrot.slane %v1880, 5
      %v1883 = vshll.u32 %v1486, 16
      %v1885 = vrot.slane %v1883, 6
      %v1886 = vor.u32 %v1882, %v1885
      %v1887 = vrot.slane %v1886, 4
      %v1889 = vshrl.u32 %v1487, 16
      %v1891 = vrot.slane %v1889, 5
      %v1892 = vshll.u32 %v1487, 16
      %v1894 = vrot.slane %v1892, 6
      %v1895 = vor.u32 %v1891, %v1894
      %v1896 = vsel %vm579, %v1887, %v1895
      %v1897 = vrot.slane %v1895, 4
      %v1899 = vshrl.u32 %v1836, 16
      %v1901 = vrot.slane %v1899, 5
      %v1902 = vshll.u32 %v1836, 16
      %v1904 = vrot.slane %v1902, 6
      %v1905 = vor.u32 %v1901, %v1904
      %v1906 = vsel %vm579, %v1897, %v1905
      %v1908 = vshrl.u32 %v1489, 16
      %v1910 = vrot.slane %v1908, 5
      %v1911 = vshll.u32 %v1489, 16
      %v1913 = vrot.slane %v1911, 6
      %v1914 = vor.u32 %v1910, %v1913
      %v1915 = vrot.slane %v1914, 4
      %v1917 = vshrl.u32 %v1490, 16
      %v1919 = vrot.slane %v1917, 5
      %v1920 = vshll.u32 %v1490, 16
      %v1922 = vrot.slane %v1920, 6
      %v1923 = vor.u32 %v1919, %v1922
      %v1924 = vsel %vm579, %v1915, %v1923
      %v1925 = vrot.slane %v1923, 4
      %v1927 = vshrl.u32 %v1837, 16
      %v1929 = vrot.slane %v1927, 5
      %v1930 = vshll.u32 %v1837, 16
      %v1932 = vrot.slane %v1930, 6
      %v1933 = vor.u32 %v1929, %v1932
      %v1934 = vsel %vm579, %v1925, %v1933
      %v1936 = vshrl.u32 %v1492, 16
      %v1938 = vrot.slane %v1936, 5
      %v1939 = vshll.u32 %v1492, 16
      %v1941 = vrot.slane %v1939, 6
      %v1942 = vor.u32 %v1938, %v1941
      %v1943 = vrot.slane %v1942, 4
      %v1945 = vshrl.u32 %v1493, 16
      %v1947 = vrot.slane %v1945, 5
      %v1948 = vshll.u32 %v1493, 16
      %v1950 = vrot.slane %v1948, 6
      %v1951 = vor.u32 %v1947, %v1950
      %v1952 = vsel %vm579, %v1943, %v1951
      %v1953 = vrot.slane %v1951, 4
      %v1955 = vshrl.u32 %v1838, 16
      %v1957 = vrot.slane %v1955, 5
      %v1958 = vshll.u32 %v1838, 16
      %v1960 = vrot.slane %v1958, 6
      %v1961 = vor.u32 %v1957, %v1960
      %v1962 = vsel %vm579, %v1953, %v1961
      %v1964 = vshrl.u32 %v1495, 16
      %v1966 = vrot.slane %v1964, 5
      %v1967 = vshll.u32 %v1495, 16
      %v1969 = vrot.slane %v1967, 6
      %v1970 = vor.u32 %v1966, %v1969
      %v1971 = vrot.slane %v1970, 4
      %v1973 = vshrl.u32 %v1496, 16
      %v1975 = vrot.slane %v1973, 5
      %v1976 = vshll.u32 %v1496, 16
      %v1978 = vrot.slane %v1976, 6
      %v1979 = vor.u32 %v1975, %v1978
      %v1980 = vsel %vm579, %v1971, %v1979
      %v1981 = vrot.slane %v1979, 4
      %v1983 = vshrl.u32 %v1839, 16
      %v1985 = vrot.slane %v1983, 5
      %v1986 = vshll.u32 %v1839, 16
      %v1988 = vrot.slane %v1986, 6
      %v1989 = vor.u32 %v1985, %v1988
      %v1990 = vsel %vm579, %v1981, %v1989
      %v1992 = vshrl.u32 %v1498, 16
      %v1994 = vrot.slane %v1992, 5
      %v1995 = vshll.u32 %v1498, 16
      %v1997 = vrot.slane %v1995, 6
      %v1998 = vor.u32 %v1994, %v1997
      %v1999 = vrot.slane %v1998, 4
      %v2001 = vshrl.u32 %v1499, 16
      %v2003 = vrot.slane %v2001, 5
      %v2004 = vshll.u32 %v1499, 16
      %v2006 = vrot.slane %v2004, 6
      %v2007 = vor.u32 %v2003, %v2006
      %v2008 = vsel %vm579, %v1999, %v2007
      %v2009 = vrot.slane %v2007, 4
      %v2011 = vshrl.u32 %v1840, 16
      %v2013 = vrot.slane %v2011, 5
      %v2014 = vshll.u32 %v1840, 16
      %v2016 = vrot.slane %v2014, 6
      %v2017 = vor.u32 %v2013, %v2016
      %v2018 = vsel %vm579, %v2009, %v2017
      %v2020 = vshrl.u32 %v1501, 16
      %v2022 = vrot.slane %v2020, 5
      %v2023 = vshll.u32 %v1501, 16
      %v2025 = vrot.slane %v2023, 6
      %v2026 = vor.u32 %v2022, %v2025
      %v2027 = vrot.slane %v2026, 4
      %v2029 = vshrl.u32 %v1502, 16
      %v2031 = vrot.slane %v2029, 5
      %v2032 = vshll.u32 %v1502, 16
      %v2034 = vrot.slane %v2032, 6
      %v2035 = vor.u32 %v2031, %v2034
      %v2036 = vsel %vm579, %v2027, %v2035
      %v2037 = vrot.slane %v2035, 4
      %v2039 = vshrl.u32 %v1841, 16
      %v2041 = vrot.slane %v2039, 5
      %v2042 = vshll.u32 %v1841, 16
      %v2044 = vrot.slane %v2042, 6
      %v2045 = vor.u32 %v2041, %v2044
      %v2046 = vsel %vm579, %v2037, %v2045
      %v2048 = vshrl.u32 %v1504, 16
      %v2050 = vrot.slane %v2048, 5
      %v2051 = vshll.u32 %v1504, 16
      %v2053 = vrot.slane %v2051, 6
      %v2054 = vor.u32 %v2050, %v2053
      %v2055 = vrot.slane %v2054, 4
      %v2057 = vshrl.u32 %v1505, 16
      %v2059 = vrot.slane %v2057, 5
      %v2060 = vshll.u32 %v1505, 16
      %v2062 = vrot.slane %v2060, 6
      %v2063 = vor.u32 %v2059, %v2062
      %v2064 = vsel %vm579, %v2055, %v2063
      %v2065 = vrot.slane %v2063, 4
      %v2067 = vshrl.u32 %v1842, 16
      %v2069 = vrot.slane %v2067, 5
      %v2070 = vshll.u32 %v1842, 16
      %v2072 = vrot.slane %v2070, 6
      %v2073 = vor.u32 %v2069, %v2072
      %v2074 = vsel %vm579, %v2065, %v2073
      %v2076 = vshrl.u32 %v1507, 16
      %v2078 = vrot.slane %v2076, 5
      %v2079 = vshll.u32 %v1507, 16
      %v2081 = vrot.slane %v2079, 6
      %v2082 = vor.u32 %v2078, %v2081
      %v2083 = vrot.slane %v2082, 4
      %v2085 = vshrl.u32 %v1508, 16
      %v2087 = vrot.slane %v2085, 5
      %v2088 = vshll.u32 %v1508, 16
      %v2090 = vrot.slane %v2088, 6
      %v2091 = vor.u32 %v2087, %v2090
      %v2092 = vsel %vm579, %v2083, %v2091
      %v2093 = vrot.slane %v2091, 4
      %v2095 = vshrl.u32 %v1843, 16
      %v2097 = vrot.slane %v2095, 5
      %v2098 = vshll.u32 %v1843, 16
      %v2100 = vrot.slane %v2098, 6
      %v2101 = vor.u32 %v2097, %v2100
      %v2102 = vsel %vm579, %v2093, %v2101
      %v2104 = vshrl.u32 %v1510, 16
      %v2106 = vrot.slane %v2104, 5
      %v2107 = vshll.u32 %v1510, 16
      %v2109 = vrot.slane %v2107, 6
      %v2110 = vor.u32 %v2106, %v2109
      %v2111 = vrot.slane %v2110, 4
      %v2113 = vshrl.u32 %v1511, 16
      %v2115 = vrot.slane %v2113, 5
      %v2116 = vshll.u32 %v1511, 16
      %v2118 = vrot.slane %v2116, 6
      %v2119 = vor.u32 %v2115, %v2118
      %v2120 = vsel %vm579, %v2111, %v2119
      %v2121 = vrot.slane %v2119, 4
      %v2123 = vshrl.u32 %v1844, 16
      %v2125 = vrot.slane %v2123, 5
      %v2126 = vshll.u32 %v1844, 16
      %v2128 = vrot.slane %v2126, 6
      %v2129 = vor.u32 %v2125, %v2128
      %v2130 = vsel %vm579, %v2121, %v2129
      %v2132 = vshrl.u32 %v1513, 16
      %v2134 = vrot.slane %v2132, 5
      %v2135 = vshll.u32 %v1513, 16
      %v2137 = vrot.slane %v2135, 6
      %v2138 = vor.u32 %v2134, %v2137
      %v2139 = vrot.slane %v2138, 4
      %v2141 = vshrl.u32 %v1514, 16
      %v2143 = vrot.slane %v2141, 5
      %v2144 = vshll.u32 %v1514, 16
      %v2146 = vrot.slane %v2144, 6
      %v2147 = vor.u32 %v2143, %v2146
      %v2148 = vsel %vm579, %v2139, %v2147
      %v2149 = vrot.slane %v2147, 4
      %v2151 = vshrl.u32 %v1845, 16
      %v2153 = vrot.slane %v2151, 5
      %v2154 = vshll.u32 %v1845, 16
      %v2156 = vrot.slane %v2154, 6
      %v2157 = vor.u32 %v2153, %v2156
      %v2158 = vsel %vm579, %v2149, %v2157
      %v2160 = vshrl.u32 %v1516, 16
      %v2162 = vrot.slane %v2160, 5
      %v2163 = vshll.u32 %v1516, 16
      %v2165 = vrot.slane %v2163, 6
      %v2166 = vor.u32 %v2162, %v2165
      %v2167 = vrot.slane %v2166, 4
      %v2169 = vshrl.u32 %v1517, 16
      %v2171 = vrot.slane %v2169, 5
      %v2172 = vshll.u32 %v1517, 16
      %v2174 = vrot.slane %v2172, 6
      %v2175 = vor.u32 %v2171, %v2174
      %v2176 = vsel %vm579, %v2167, %v2175
      %v2177 = vrot.slane %v2175, 4
      %v2179 = vshrl.u32 %v1846, 16
      %v2181 = vrot.slane %v2179, 5
      %v2182 = vshll.u32 %v1846, 16
      %v2184 = vrot.slane %v2182, 6
      %v2185 = vor.u32 %v2181, %v2184
      %v2186 = vsel %vm579, %v2177, %v2185
      %v2188 = vshrl.u32 %v1519, 16
      %v2190 = vrot.slane %v2188, 5
      %v2191 = vshll.u32 %v1519, 16
      %v2193 = vrot.slane %v2191, 6
      %v2194 = vor.u32 %v2190, %v2193
      %v2195 = vrot.slane %v2194, 4
      %v2197 = vshrl.u32 %v1520, 16
      %v2199 = vrot.slane %v2197, 5
      %v2200 = vshll.u32 %v1520, 16
      %v2202 = vrot.slane %v2200, 6
      %v2203 = vor.u32 %v2199, %v2202
      %v2204 = vsel %vm579, %v2195, %v2203
      %v2205 = vrot.slane %v2203, 4
      %v2207 = vshrl.u32 %v1847, 16
      %v2209 = vrot.slane %v2207, 5
      %v2210 = vshll.u32 %v1847, 16
      %v2212 = vrot.slane %v2210, 6
      %v2213 = vor.u32 %v2209, %v2212
      %v2214 = vsel %vm579, %v2205, %v2213
      %v2216 = vshrl.u32 %v1522, 16
      %v2218 = vrot.slane %v2216, 5
      %v2219 = vshll.u32 %v1522, 16
      %v2221 = vrot.slane %v2219, 6
      %v2222 = vor.u32 %v2218, %v2221
      %v2223 = vrot.slane %v2222, 4
      %v2225 = vshrl.u32 %v1523, 16
      %v2227 = vrot.slane %v2225, 5
      %v2228 = vshll.u32 %v1523, 16
      %v2230 = vrot.slane %v2228, 6
      %v2231 = vor.u32 %v2227, %v2230
      %v2232 = vsel %vm579, %v2223, %v2231
      %v2233 = vrot.slane %v2231, 4
      %v2235 = vshrl.u32 %v1848, 16
      %v2237 = vrot.slane %v2235, 5
      %v2238 = vshll.u32 %v1848, 16
      %v2240 = vrot.slane %v2238, 6
      %v2241 = vor.u32 %v2237, %v2240
      %v2242 = vsel %vm579, %v2233, %v2241
      %v2244 = vshrl.u32 %v1525, 16
      %v2246 = vrot.slane %v2244, 5
      %v2247 = vshll.u32 %v1525, 16
      %v2249 = vrot.slane %v2247, 6
      %v2250 = vor.u32 %v2246, %v2249
      %v2251 = vrot.slane %v2250, 4
      %v2253 = vshrl.u32 %v1526, 16
      %v2255 = vrot.slane %v2253, 5
      %v2256 = vshll.u32 %v1526, 16
      %v2258 = vrot.slane %v2256, 6
      %v2259 = vor.u32 %v2255, %v2258
      %v2260 = vsel %vm579, %v2251, %v2259
      %v2261 = vrot.slane %v2259, 4
      %v2263 = vshrl.u32 %v1849, 16
      %v2265 = vrot.slane %v2263, 5
      %v2266 = vshll.u32 %v1849, 16
      %v2268 = vrot.slane %v2266, 6
      %v2269 = vor.u32 %v2265, %v2268
      %v2270 = vsel %vm579, %v2261, %v2269
      %v2272 = vshrl.u32 %v1528, 16
      %v2274 = vrot.slane %v2272, 5
      %v2275 = vshll.u32 %v1528, 16
      %v2277 = vrot.slane %v2275, 6
      %v2278 = vor.u32 %v2274, %v2277
      %v2279 = vrot.slane %v2278, 4
      %v2281 = vshrl.u32 %v1529, 16
      %v2283 = vrot.slane %v2281, 5
      %v2284 = vshll.u32 %v1529, 16
      %v2286 = vrot.slane %v2284, 6
      %v2287 = vor.u32 %v2283, %v2286
      %v2288 = vsel %vm579, %v2279, %v2287
      %v2289 = vrot.slane %v2287, 4
      %v2291 = vshrl.u32 %v1850, 16
      %v2293 = vrot.slane %v2291, 5
      %v2294 = vshll.u32 %v1850, 16
      %v2296 = vrot.slane %v2294, 6
      %v2297 = vor.u32 %v2293, %v2296
      %v2298 = vsel %vm579, %v2289, %v2297
      %s2299 = scalar_lea.vmem %s1, 16
      %v2300 = vld [vmem:[%s2299] sm:$0xf]
      %v2301 = vunpack.c.l.b16 %v1868
      %v2302 = vunpack.c.l.b16 %v1878
      %v2303 = vunpack.c.l.b16 %v1896
      %v2304 = vunpack.c.l.b16 %v1906
      %v2305 = vunpack.c.l.b16 %v1924
      %v2306 = vunpack.c.l.b16 %v1934
      %v2307 = vunpack.c.l.b16 %v1952
      %v2308 = vunpack.c.l.b16 %v1962
      %v2309 = vunpack.c.l.b16 %v1980
      %v2310 = vunpack.c.l.b16 %v1990
      %v2311 = vunpack.c.l.b16 %v2008
      %v2312 = vunpack.c.l.b16 %v2018
      %v2313 = vunpack.c.l.b16 %v2036
      %v2314 = vunpack.c.l.b16 %v2046
      %v2315 = vunpack.c.l.b16 %v2064
      %v2316 = vunpack.c.l.b16 %v2074
      %v2317 = vunpack.c.l.b16 %v2092
      %v2318 = vunpack.c.l.b16 %v2102
      %v2319 = vunpack.c.l.b16 %v2120
      %v2320 = vunpack.c.l.b16 %v2130
      %v2321 = vunpack.c.l.b16 %v2148
      %v2322 = vunpack.c.l.b16 %v2158
      %v2323 = vunpack.c.l.b16 %v2176
      %v2324 = vunpack.c.l.b16 %v2186
      %v2325 = vunpack.c.l.b16 %v2204
      %v2326 = vunpack.c.l.b16 %v2214
      %v2327 = vunpack.c.l.b16 %v2232
      %v2328 = vunpack.c.l.b16 %v2242
      %v2329 = vunpack.c.l.b16 %v2260
      %v2330 = vunpack.c.l.b16 %v2270
      %v2331 = vunpack.c.l.b16 %v2288
      %v2332 = vunpack.c.l.b16 %v2298
      %v2333 = vpack.c.b16 %v2302, %v2301
      %v2334 = vpack.c.b16 %v2304, %v2303
      %v2335 = vpack.c.b16 %v2306, %v2305
      %v2336 = vpack.c.b16 %v2308, %v2307
      %v2337 = vpack.c.b16 %v2310, %v2309
      %v2338 = vpack.c.b16 %v2312, %v2311
      %v2339 = vpack.c.b16 %v2314, %v2313
      %v2340 = vpack.c.b16 %v2316, %v2315
      %v2341 = vpack.c.b16 %v2318, %v2317
      %v2342 = vpack.c.b16 %v2320, %v2319
      %v2343 = vpack.c.b16 %v2322, %v2321
      %v2344 = vpack.c.b16 %v2324, %v2323
      %v2345 = vpack.c.b16 %v2326, %v2325
      %v2346 = vpack.c.b16 %v2328, %v2327
      %v2347 = vpack.c.b16 %v2330, %v2329
      %v2348 = vpack.c.b16 %v2332, %v2331
      %v2350 = vsel %vm466, %v2300, 0
      %v2353 = vsel %vm466, %v2333, 0
      %v2356 = vsel %vm466, %v2334, 0
      %v2359 = vsel %vm466, %v2335, 0
      %v2362 = vsel %vm466, %v2336, 0
      %v2365 = vsel %vm466, %v2337, 0
      %v2368 = vsel %vm466, %v2338, 0
      %v2371 = vsel %vm466, %v2339, 0
      %v2374 = vsel %vm466, %v2340, 0
      %v2377 = vsel %vm466, %v2341, 0
      %v2380 = vsel %vm466, %v2342, 0
      %v2383 = vsel %vm466, %v2343, 0
      %v2386 = vsel %vm466, %v2344, 0
      %v2389 = vsel %vm466, %v2345, 0
      %v2392 = vsel %vm466, %v2346, 0
      %v2395 = vsel %vm466, %v2347, 0
      %v2398 = vsel %vm466, %v2348, 0
      %2400 = vmatprep.subr.bf16.mxu0 0
      %2401 = vmatpush1.bf16.xpose.msra.mxu0 %v2353
      %2402 = vmatprep.subr.bf16.mxu0 0
      %2403 = vmatpush1.bf16.xpose.msra.mxu0 %v2356
      %2404 = vmatprep.subr.bf16.mxu0 0
      %2405 = vmatpush1.bf16.xpose.msra.mxu0 %v2359
      %2406 = vmatprep.subr.bf16.mxu0 0
      %2407 = vmatpush1.bf16.xpose.msra.mxu0 %v2362
      %2408 = vmatprep.subr.bf16.mxu0 0
      %2409 = vmatpush1.bf16.xpose.msra.mxu0 %v2365
      %2410 = vmatprep.subr.bf16.mxu0 0
      %2411 = vmatpush1.bf16.xpose.msra.mxu0 %v2368
      %2412 = vmatprep.subr.bf16.mxu0 0
      %2413 = vmatpush1.bf16.xpose.msra.mxu0 %v2371
      %2414 = vmatprep.subr.bf16.mxu0 0
      %2415 = vmatpush1.bf16.xpose.msra.mxu0 %v2374
      %2416 = vmatprep.subr.bf16.mxu0 0
      %2417 = vmatpush1.bf16.xpose.msra.mxu0 %v2377
      %2418 = vmatprep.subr.bf16.mxu0 0
      %2419 = vmatpush1.bf16.xpose.msra.mxu0 %v2380
      %2420 = vmatprep.subr.bf16.mxu0 0
      %2421 = vmatpush1.bf16.xpose.msra.mxu0 %v2383
      %2422 = vmatprep.subr.bf16.mxu0 0
      %2423 = vmatpush1.bf16.xpose.msra.mxu0 %v2386
      %2424 = vmatprep.subr.bf16.mxu0 0
      %2425 = vmatpush1.bf16.xpose.msra.mxu0 %v2389
      %2426 = vmatprep.subr.bf16.mxu0 0
      %2427 = vmatpush1.bf16.xpose.msra.mxu0 %v2392
      %2428 = vmatprep.subr.bf16.mxu0 0
      %2429 = vmatpush1.bf16.xpose.msra.mxu0 %v2395
      %2430 = vmatprep.subr.bf16.mxu0 0
      %2431 = vmatpush1.bf16.xpose.msra.mxu0 %v2398
      %2432 = vmatprep.mubr.bf16.mxu0 0
      %2433 = vmatmul.mubr.bf16.gmra.mrb[0].mxu0 %v2350
      %v2434 = vpop.f32.mrb[0].mxu0
      %v2435 = vadd.f32 0.0, %v2434
      %v2436 = vpop.f32.mrb[0].mxu0
      %v2437 = vadd.f32 0.0, %v2436
      %v2438 = vpop.f32.mrb[0].mxu0
      %v2439 = vpop.f32.mrb[0].mxu0
      %2440 = vdwg.mxu0
      %v2441 = vadd.f32 %v1833, %v2435
      %v2442 = vadd.f32 %v1834, %v2437
      %v2443 = vld [vmem:[%s1482] sm:$0xc]
      %v2444 = vld [vmem:[%s1482 + $0xc] sm:$0xc]
      %v2445 = vld [vmem:[%s1482 + $0x18] sm:$0xc]
      %v2446 = vld [vmem:[%s1482 + $0x24] sm:$0xc]
      %v2447 = vld [vmem:[%s1482 + $0x30] sm:$0xc]
      %v2448 = vld [vmem:[%s1482 + $0x3c] sm:$0xc]
      %v2449 = vld [vmem:[%s1482 + $0x48] sm:$0xc]
      %v2450 = vld [vmem:[%s1482 + $0x54] sm:$0xc]
      %v2451 = vld [vmem:[%s1482 + $0x60] sm:$0xc]
      %v2452 = vld [vmem:[%s1482 + $0x6c] sm:$0xc]
      %v2453 = vld [vmem:[%s1482 + $0x78] sm:$0xc]
      %v2454 = vld [vmem:[%s1482 + $0x84] sm:$0xc]
      %v2455 = vld [vmem:[%s1482 + $0x90] sm:$0xc]
      %v2456 = vld [vmem:[%s1482 + $0x9c] sm:$0xc]
      %v2457 = vld [vmem:[%s1482 + $0xa8] sm:$0xc]
      %v2458 = vld [vmem:[%s1482 + $0xb4] sm:$0xc]
      %v2491 = vrot.slane %v2443, 6
      %v2492 = vrot.slane %v2491, 4
      %v2493 = vrot.slane %v1484, 6
      %v2494 = vsel %vm1222, %v2492, %v2493
      %v2495 = vrot.slane %v2493, 4
      %v2496 = vrot.slane %v1835, 6
      %v2497 = vsel %vm1222, %v2495, %v2496
      %v2498 = vrot.slane %v2444, 6
      %v2499 = vrot.slane %v2498, 4
      %v2500 = vrot.slane %v1487, 6
      %v2501 = vsel %vm1222, %v2499, %v2500
      %v2502 = vrot.slane %v2500, 4
      %v2503 = vrot.slane %v1836, 6
      %v2504 = vsel %vm1222, %v2502, %v2503
      %v2505 = vrot.slane %v2445, 6
      %v2506 = vrot.slane %v2505, 4
      %v2507 = vrot.slane %v1490, 6
      %v2508 = vsel %vm1222, %v2506, %v2507
      %v2509 = vrot.slane %v2507, 4
      %v2510 = vrot.slane %v1837, 6
      %v2511 = vsel %vm1222, %v2509, %v2510
      %v2512 = vrot.slane %v2446, 6
      %v2513 = vrot.slane %v2512, 4
      %v2514 = vrot.slane %v1493, 6
      %v2515 = vsel %vm1222, %v2513, %v2514
      %v2516 = vrot.slane %v2514, 4
      %v2517 = vrot.slane %v1838, 6
      %v2518 = vsel %vm1222, %v2516, %v2517
      %v2519 = vrot.slane %v2447, 6
      %v2520 = vrot.slane %v2519, 4
      %v2521 = vrot.slane %v1496, 6
      %v2522 = vsel %vm1222, %v2520, %v2521
      %v2523 = vrot.slane %v2521, 4
      %v2524 = vrot.slane %v1839, 6
      %v2525 = vsel %vm1222, %v2523, %v2524
      %v2526 = vrot.slane %v2448, 6
      %v2527 = vrot.slane %v2526, 4
      %v2528 = vrot.slane %v1499, 6
      %v2529 = vsel %vm1222, %v2527, %v2528
      %v2530 = vrot.slane %v2528, 4
      %v2531 = vrot.slane %v1840, 6
      %v2532 = vsel %vm1222, %v2530, %v2531
      %v2533 = vrot.slane %v2449, 6
      %v2534 = vrot.slane %v2533, 4
      %v2535 = vrot.slane %v1502, 6
      %v2536 = vsel %vm1222, %v2534, %v2535
      %v2537 = vrot.slane %v2535, 4
      %v2538 = vrot.slane %v1841, 6
      %v2539 = vsel %vm1222, %v2537, %v2538
      %v2540 = vrot.slane %v2450, 6
      %v2541 = vrot.slane %v2540, 4
      %v2542 = vrot.slane %v1505, 6
      %v2543 = vsel %vm1222, %v2541, %v2542
      %v2544 = vrot.slane %v2542, 4
      %v2545 = vrot.slane %v1842, 6
      %v2546 = vsel %vm1222, %v2544, %v2545
      %v2547 = vrot.slane %v2451, 6
      %v2548 = vrot.slane %v2547, 4
      %v2549 = vrot.slane %v1508, 6
      %v2550 = vsel %vm1222, %v2548, %v2549
      %v2551 = vrot.slane %v2549, 4
      %v2552 = vrot.slane %v1843, 6
      %v2553 = vsel %vm1222, %v2551, %v2552
      %v2554 = vrot.slane %v2452, 6
      %v2555 = vrot.slane %v2554, 4
      %v2556 = vrot.slane %v1511, 6
      %v2557 = vsel %vm1222, %v2555, %v2556
      %v2558 = vrot.slane %v2556, 4
      %v2559 = vrot.slane %v1844, 6
      %v2560 = vsel %vm1222, %v2558, %v2559
      %v2561 = vrot.slane %v2453, 6
      %v2562 = vrot.slane %v2561, 4
      %v2563 = vrot.slane %v1514, 6
      %v2564 = vsel %vm1222, %v2562, %v2563
      %v2565 = vrot.slane %v2563, 4
      %v2566 = vrot.slane %v1845, 6
      %v2567 = vsel %vm1222, %v2565, %v2566
      %v2568 = vrot.slane %v2454, 6
      %v2569 = vrot.slane %v2568, 4
      %v2570 = vrot.slane %v1517, 6
      %v2571 = vsel %vm1222, %v2569, %v2570
      %v2572 = vrot.slane %v2570, 4
      %v2573 = vrot.slane %v1846, 6
      %v2574 = vsel %vm1222, %v2572, %v2573
      %v2575 = vrot.slane %v2455, 6
      %v2576 = vrot.slane %v2575, 4
      %v2577 = vrot.slane %v1520, 6
      %v2578 = vsel %vm1222, %v2576, %v2577
      %v2579 = vrot.slane %v2577, 4
      %v2580 = vrot.slane %v1847, 6
      %v2581 = vsel %vm1222, %v2579, %v2580
      %v2582 = vrot.slane %v2456, 6
      %v2583 = vrot.slane %v2582, 4
      %v2584 = vrot.slane %v1523, 6
      %v2585 = vsel %vm1222, %v2583, %v2584
      %v2586 = vrot.slane %v2584, 4
      %v2587 = vrot.slane %v1848, 6
      %v2588 = vsel %vm1222, %v2586, %v2587
      %v2589 = vrot.slane %v2457, 6
      %v2590 = vrot.slane %v2589, 4
      %v2591 = vrot.slane %v1526, 6
      %v2592 = vsel %vm1222, %v2590, %v2591
      %v2593 = vrot.slane %v2591, 4
      %v2594 = vrot.slane %v1849, 6
      %v2595 = vsel %vm1222, %v2593, %v2594
      %v2596 = vrot.slane %v2458, 6
      %v2597 = vrot.slane %v2596, 4
      %v2598 = vrot.slane %v1529, 6
      %v2599 = vsel %vm1222, %v2597, %v2598
      %v2600 = vrot.slane %v2598, 4
      %v2601 = vrot.slane %v1850, 6
      %v2602 = vsel %vm1222, %v2600, %v2601
      %s2603 = scalar_lea.vmem %s1, 20
      %v2604 = vld [vmem:[%s2603] sm:$0xf]
      %v2605 = vunpack.c.l.b16 %v2494
      %v2606 = vunpack.c.l.b16 %v2497
      %v2607 = vunpack.c.l.b16 %v2501
      %v2608 = vunpack.c.l.b16 %v2504
      %v2609 = vunpack.c.l.b16 %v2508
      %v2610 = vunpack.c.l.b16 %v2511
      %v2611 = vunpack.c.l.b16 %v2515
      %v2612 = vunpack.c.l.b16 %v2518
      %v2613 = vunpack.c.l.b16 %v2522
      %v2614 = vunpack.c.l.b16 %v2525
      %v2615 = vunpack.c.l.b16 %v2529
      %v2616 = vunpack.c.l.b16 %v2532
      %v2617 = vunpack.c.l.b16 %v2536
      %v2618 = vunpack.c.l.b16 %v2539
      %v2619 = vunpack.c.l.b16 %v2543
      %v2620 = vunpack.c.l.b16 %v2546
      %v2621 = vunpack.c.l.b16 %v2550
      %v2622 = vunpack.c.l.b16 %v2553
      %v2623 = vunpack.c.l.b16 %v2557
      %v2624 = vunpack.c.l.b16 %v2560
      %v2625 = vunpack.c.l.b16 %v2564
      %v2626 = vunpack.c.l.b16 %v2567
      %v2627 = vunpack.c.l.b16 %v2571
      %v2628 = vunpack.c.l.b16 %v2574
      %v2629 = vunpack.c.l.b16 %v2578
      %v2630 = vunpack.c.l.b16 %v2581
      %v2631 = vunpack.c.l.b16 %v2585
      %v2632 = vunpack.c.l.b16 %v2588
      %v2633 = vunpack.c.l.b16 %v2592
      %v2634 = vunpack.c.l.b16 %v2595
      %v2635 = vunpack.c.l.b16 %v2599
      %v2636 = vunpack.c.l.b16 %v2602
      %v2637 = vpack.c.b16 %v2606, %v2605
      %v2638 = vpack.c.b16 %v2608, %v2607
      %v2639 = vpack.c.b16 %v2610, %v2609
      %v2640 = vpack.c.b16 %v2612, %v2611
      %v2641 = vpack.c.b16 %v2614, %v2613
      %v2642 = vpack.c.b16 %v2616, %v2615
      %v2643 = vpack.c.b16 %v2618, %v2617
      %v2644 = vpack.c.b16 %v2620, %v2619
      %v2645 = vpack.c.b16 %v2622, %v2621
      %v2646 = vpack.c.b16 %v2624, %v2623
      %v2647 = vpack.c.b16 %v2626, %v2625
      %v2648 = vpack.c.b16 %v2628, %v2627
      %v2649 = vpack.c.b16 %v2630, %v2629
      %v2650 = vpack.c.b16 %v2632, %v2631
      %v2651 = vpack.c.b16 %v2634, %v2633
      %v2652 = vpack.c.b16 %v2636, %v2635
      %v2654 = vsel %vm466, %v2604, 0
      %v2657 = vsel %vm466, %v2637, 0
      %v2660 = vsel %vm466, %v2638, 0
      %v2663 = vsel %vm466, %v2639, 0
      %v2666 = vsel %vm466, %v2640, 0
      %v2669 = vsel %vm466, %v2641, 0
      %v2672 = vsel %vm466, %v2642, 0
      %v2675 = vsel %vm466, %v2643, 0
      %v2678 = vsel %vm466, %v2644, 0
      %v2681 = vsel %vm466, %v2645, 0
      %v2684 = vsel %vm466, %v2646, 0
      %v2687 = vsel %vm466, %v2647, 0
      %v2690 = vsel %vm466, %v2648, 0
      %v2693 = vsel %vm466, %v2649, 0
      %v2696 = vsel %vm466, %v2650, 0
      %v2699 = vsel %vm466, %v2651, 0
      %v2702 = vsel %vm466, %v2652, 0
      %2704 = vmatprep.subr.bf16.mxu0 0
      %2705 = vmatpush1.bf16.xpose.msra.mxu0 %v2657
      %2706 = vmatprep.subr.bf16.mxu0 0
      %2707 = vmatpush1.bf16.xpose.msra.mxu0 %v2660
      %2708 = vmatprep.subr.bf16.mxu0 0
      %2709 = vmatpush1.bf16.xpose.msra.mxu0 %v2663
      %2710 = vmatprep.subr.bf16.mxu0 0
      %2711 = vmatpush1.bf16.xpose.msra.mxu0 %v2666
      %2712 = vmatprep.subr.bf16.mxu0 0
      %2713 = vmatpush1.bf16.xpose.msra.mxu0 %v2669
      %2714 = vmatprep.subr.bf16.mxu0 0
      %2715 = vmatpush1.bf16.xpose.msra.mxu0 %v2672
      %2716 = vmatprep.subr.bf16.mxu0 0
      %2717 = vmatpush1.bf16.xpose.msra.mxu0 %v2675
      %2718 = vmatprep.subr.bf16.mxu0 0
      %2719 = vmatpush1.bf16.xpose.msra.mxu0 %v2678
      %2720 = vmatprep.subr.bf16.mxu0 0
      %2721 = vmatpush1.bf16.xpose.msra.mxu0 %v2681
      %2722 = vmatprep.subr.bf16.mxu0 0
      %2723 = vmatpush1.bf16.xpose.msra.mxu0 %v2684
      %2724 = vmatprep.subr.bf16.mxu0 0
      %2725 = vmatpush1.bf16.xpose.msra.mxu0 %v2687
      %2726 = vmatprep.subr.bf16.mxu0 0
      %2727 = vmatpush1.bf16.xpose.msra.mxu0 %v2690
      %2728 = vmatprep.subr.bf16.mxu0 0
      %2729 = vmatpush1.bf16.xpose.msra.mxu0 %v2693
      %2730 = vmatprep.subr.bf16.mxu0 0
      %2731 = vmatpush1.bf16.xpose.msra.mxu0 %v2696
      %2732 = vmatprep.subr.bf16.mxu0 0
      %2733 = vmatpush1.bf16.xpose.msra.mxu0 %v2699
      %2734 = vmatprep.subr.bf16.mxu0 0
      %2735 = vmatpush1.bf16.xpose.msra.mxu0 %v2702
      %2736 = vmatprep.mubr.bf16.mxu0 0
      %2737 = vmatmul.mubr.bf16.gmra.mrb[0].mxu0 %v2654
      %v2738 = vpop.f32.mrb[0].mxu0
      %v2739 = vadd.f32 0.0, %v2738
      %v2740 = vpop.f32.mrb[0].mxu0
      %v2741 = vadd.f32 0.0, %v2740
      %v2742 = vpop.f32.mrb[0].mxu0
      %v2743 = vpop.f32.mrb[0].mxu0
      %2744 = vdwg.mxu0
      %v2745 = vadd.f32 %v2441, %v2739
      %v2746 = vadd.f32 %v2442, %v2741
      %s2747 = sadd.s32 %s195, 4
      %s2748 = smul.u32 %s2747, 3
      %s2749 = smul.addr %s2748, 4
      %s2750 = scalar_lea.vmem %s183, %s2749
      %v2751 = vld [vmem:[%s2750] sm:$0xe]
      %v2752 = vld [vmem:[%s2750 + $0x4] sm:$0xf]
      %v2753 = vld [vmem:[%s2750 + $0x8] sm:$0x1]
      %v2754 = vld [vmem:[%s2750 + $0xc] sm:$0xe]
      %v2755 = vld [vmem:[%s2750 + $0x10] sm:$0xf]
      %v2756 = vld [vmem:[%s2750 + $0x14] sm:$0x1]
      %v2757 = vld [vmem:[%s2750 + $0x18] sm:$0xe]
      %v2758 = vld [vmem:[%s2750 + $0x1c] sm:$0xf]
      %v2759 = vld [vmem:[%s2750 + $0x20] sm:$0x1]
      %v2760 = vld [vmem:[%s2750 + $0x24] sm:$0xe]
      %v2761 = vld [vmem:[%s2750 + $0x28] sm:$0xf]
      %v2762 = vld [vmem:[%s2750 + $0x2c] sm:$0x1]
      %v2763 = vld [vmem:[%s2750 + $0x30] sm:$0xe]
      %v2764 = vld [vmem:[%s2750 + $0x34] sm:$0xf]
      %v2765 = vld [vmem:[%s2750 + $0x38] sm:$0x1]
      %v2766 = vld [vmem:[%s2750 + $0x3c] sm:$0xe]
      %v2767 = vld [vmem:[%s2750 + $0x40] sm:$0xf]
      %v2768 = vld [vmem:[%s2750 + $0x44] sm:$0x1]
      %v2769 = vld [vmem:[%s2750 + $0x48] sm:$0xe]
      %v2770 = vld [vmem:[%s2750 + $0x4c] sm:$0xf]
      %v2771 = vld [vmem:[%s2750 + $0x50] sm:$0x1]
      %v2772 = vld [vmem:[%s2750 + $0x54] sm:$0xe]
      %v2773 = vld [vmem:[%s2750 + $0x58] sm:$0xf]
      %v2774 = vld [vmem:[%s2750 + $0x5c] sm:$0x1]
      %v2775 = vld [vmem:[%s2750 + $0x60] sm:$0xe]
      %v2776 = vld [vmem:[%s2750 + $0x64] sm:$0xf]
      %v2777 = vld [vmem:[%s2750 + $0x68] sm:$0x1]
      %v2778 = vld [vmem:[%s2750 + $0x6c] sm:$0xe]
      %v2779 = vld [vmem:[%s2750 + $0x70] sm:$0xf]
      %v2780 = vld [vmem:[%s2750 + $0x74] sm:$0x1]
      %v2781 = vld [vmem:[%s2750 + $0x78] sm:$0xe]
      %v2782 = vld [vmem:[%s2750 + $0x7c] sm:$0xf]
      %v2783 = vld [vmem:[%s2750 + $0x80] sm:$0x1]
      %v2784 = vld [vmem:[%s2750 + $0x84] sm:$0xe]
      %v2785 = vld [vmem:[%s2750 + $0x88] sm:$0xf]
      %v2786 = vld [vmem:[%s2750 + $0x8c] sm:$0x1]
      %v2787 = vld [vmem:[%s2750 + $0x90] sm:$0xe]
      %v2788 = vld [vmem:[%s2750 + $0x94] sm:$0xf]
      %v2789 = vld [vmem:[%s2750 + $0x98] sm:$0x1]
      %v2790 = vld [vmem:[%s2750 + $0x9c] sm:$0xe]
      %v2791 = vld [vmem:[%s2750 + $0xa0] sm:$0xf]
      %v2792 = vld [vmem:[%s2750 + $0xa4] sm:$0x1]
      %v2793 = vld [vmem:[%s2750 + $0xa8] sm:$0xe]
      %v2794 = vld [vmem:[%s2750 + $0xac] sm:$0xf]
      %v2795 = vld [vmem:[%s2750 + $0xb0] sm:$0x1]
      %v2796 = vld [vmem:[%s2750 + $0xb4] sm:$0xe]
      %v2797 = vld [vmem:[%s2750 + $0xb8] sm:$0xf]
      %v2798 = vld [vmem:[%s2750 + $0xbc] sm:$0x1]
      %v2847 = vrot.slane %v2751, 5
      %v2848 = vrot.slane %v2847, 4
      %v2849 = vrot.slane %v2752, 5
      %v2850 = vsel %vm304, %v2848, %v2849
      %v2851 = vrot.slane %v2849, 4
      %v2852 = vrot.slane %v2753, 5
      %v2853 = vsel %vm304, %v2851, %v2852
      %v2854 = vrot.slane %v2754, 5
      %v2855 = vrot.slane %v2854, 4
      %v2856 = vrot.slane %v2755, 5
      %v2857 = vsel %vm304, %v2855, %v2856
      %v2858 = vrot.slane %v2856, 4
      %v2859 = vrot.slane %v2756, 5
      %v2860 = vsel %vm304, %v2858, %v2859
      %v2861 = vrot.slane %v2757, 5
      %v2862 = vrot.slane %v2861, 4
      %v2863 = vrot.slane %v2758, 5
      %v2864 = vsel %vm304, %v2862, %v2863
      %v2865 = vrot.slane %v2863, 4
      %v2866 = vrot.slane %v2759, 5
      %v2867 = vsel %vm304, %v2865, %v2866
      %v2868 = vrot.slane %v2760, 5
      %v2869 = vrot.slane %v2868, 4
      %v2870 = vrot.slane %v2761, 5
      %v2871 = vsel %vm304, %v2869, %v2870
      %v2872 = vrot.slane %v2870, 4
      %v2873 = vrot.slane %v2762, 5
      %v2874 = vsel %vm304, %v2872, %v2873
      %v2875 = vrot.slane %v2763, 5
      %v2876 = vrot.slane %v2875, 4
      %v2877 = vrot.slane %v2764, 5
      %v2878 = vsel %vm304, %v2876, %v2877
      %v2879 = vrot.slane %v2877, 4
      %v2880 = vrot.slane %v2765, 5
      %v2881 = vsel %vm304, %v2879, %v2880
      %v2882 = vrot.slane %v2766, 5
      %v2883 = vrot.slane %v2882, 4
      %v2884 = vrot.slane %v2767, 5
      %v2885 = vsel %vm304, %v2883, %v2884
      %v2886 = vrot.slane %v2884, 4
      %v2887 = vrot.slane %v2768, 5
      %v2888 = vsel %vm304, %v2886, %v2887
      %v2889 = vrot.slane %v2769, 5
      %v2890 = vrot.slane %v2889, 4
      %v2891 = vrot.slane %v2770, 5
      %v2892 = vsel %vm304, %v2890, %v2891
      %v2893 = vrot.slane %v2891, 4
      %v2894 = vrot.slane %v2771, 5
      %v2895 = vsel %vm304, %v2893, %v2894
      %v2896 = vrot.slane %v2772, 5
      %v2897 = vrot.slane %v2896, 4
      %v2898 = vrot.slane %v2773, 5
      %v2899 = vsel %vm304, %v2897, %v2898
      %v2900 = vrot.slane %v2898, 4
      %v2901 = vrot.slane %v2774, 5
      %v2902 = vsel %vm304, %v2900, %v2901
      %v2903 = vrot.slane %v2775, 5
      %v2904 = vrot.slane %v2903, 4
      %v2905 = vrot.slane %v2776, 5
      %v2906 = vsel %vm304, %v2904, %v2905
      %v2907 = vrot.slane %v2905, 4
      %v2908 = vrot.slane %v2777, 5
      %v2909 = vsel %vm304, %v2907, %v2908
      %v2910 = vrot.slane %v2778, 5
      %v2911 = vrot.slane %v2910, 4
      %v2912 = vrot.slane %v2779, 5
      %v2913 = vsel %vm304, %v2911, %v2912
      %v2914 = vrot.slane %v2912, 4
      %v2915 = vrot.slane %v2780, 5
      %v2916 = vsel %vm304, %v2914, %v2915
      %v2917 = vrot.slane %v2781, 5
      %v2918 = vrot.slane %v2917, 4
      %v2919 = vrot.slane %v2782, 5
      %v2920 = vsel %vm304, %v2918, %v2919
      %v2921 = vrot.slane %v2919, 4
      %v2922 = vrot.slane %v2783, 5
      %v2923 = vsel %vm304, %v2921, %v2922
      %v2924 = vrot.slane %v2784, 5
      %v2925 = vrot.slane %v2924, 4
      %v2926 = vrot.slane %v2785, 5
      %v2927 = vsel %vm304, %v2925, %v2926
      %v2928 = vrot.slane %v2926, 4
      %v2929 = vrot.slane %v2786, 5
      %v2930 = vsel %vm304, %v2928, %v2929
      %v2931 = vrot.slane %v2787, 5
      %v2932 = vrot.slane %v2931, 4
      %v2933 = vrot.slane %v2788, 5
      %v2934 = vsel %vm304, %v2932, %v2933
      %v2935 = vrot.slane %v2933, 4
      %v2936 = vrot.slane %v2789, 5
      %v2937 = vsel %vm304, %v2935, %v2936
      %v2938 = vrot.slane %v2790, 5
      %v2939 = vrot.slane %v2938, 4
      %v2940 = vrot.slane %v2791, 5
      %v2941 = vsel %vm304, %v2939, %v2940
      %v2942 = vrot.slane %v2940, 4
      %v2943 = vrot.slane %v2792, 5
      %v2944 = vsel %vm304, %v2942, %v2943
      %v2945 = vrot.slane %v2793, 5
      %v2946 = vrot.slane %v2945, 4
      %v2947 = vrot.slane %v2794, 5
      %v2948 = vsel %vm304, %v2946, %v2947
      %v2949 = vrot.slane %v2947, 4
      %v2950 = vrot.slane %v2795, 5
      %v2951 = vsel %vm304, %v2949, %v2950
      %v2952 = vrot.slane %v2796, 5
      %v2953 = vrot.slane %v2952, 4
      %v2954 = vrot.slane %v2797, 5
      %v2955 = vsel %vm304, %v2953, %v2954
      %v2956 = vrot.slane %v2954, 4
      %v2957 = vrot.slane %v2798, 5
      %v2958 = vsel %vm304, %v2956, %v2957
      %s2959 = scalar_lea.vmem %s1, 24
      %v2960 = vld [vmem:[%s2959] sm:$0xf]
      %v2961 = vunpack.c.l.b16 %v2850
      %v2962 = vunpack.c.l.b16 %v2853
      %v2963 = vunpack.c.l.b16 %v2857
      %v2964 = vunpack.c.l.b16 %v2860
      %v2965 = vunpack.c.l.b16 %v2864
      %v2966 = vunpack.c.l.b16 %v2867
      %v2967 = vunpack.c.l.b16 %v2871
      %v2968 = vunpack.c.l.b16 %v2874
      %v2969 = vunpack.c.l.b16 %v2878
      %v2970 = vunpack.c.l.b16 %v2881
      %v2971 = vunpack.c.l.b16 %v2885
      %v2972 = vunpack.c.l.b16 %v2888
      %v2973 = vunpack.c.l.b16 %v2892
      %v2974 = vunpack.c.l.b16 %v2895
      %v2975 = vunpack.c.l.b16 %v2899
      %v2976 = vunpack.c.l.b16 %v2902
      %v2977 = vunpack.c.l.b16 %v2906
      %v2978 = vunpack.c.l.b16 %v2909
      %v2979 = vunpack.c.l.b16 %v2913
      %v2980 = vunpack.c.l.b16 %v2916
      %v2981 = vunpack.c.l.b16 %v2920
      %v2982 = vunpack.c.l.b16 %v2923
      %v2983 = vunpack.c.l.b16 %v2927
      %v2984 = vunpack.c.l.b16 %v2930
      %v2985 = vunpack.c.l.b16 %v2934
      %v2986 = vunpack.c.l.b16 %v2937
      %v2987 = vunpack.c.l.b16 %v2941
      %v2988 = vunpack.c.l.b16 %v2944
      %v2989 = vunpack.c.l.b16 %v2948
      %v2990 = vunpack.c.l.b16 %v2951
      %v2991 = vunpack.c.l.b16 %v2955
      %v2992 = vunpack.c.l.b16 %v2958
      %v2993 = vpack.c.b16 %v2962, %v2961
      %v2994 = vpack.c.b16 %v2964, %v2963
      %v2995 = vpack.c.b16 %v2966, %v2965
      %v2996 = vpack.c.b16 %v2968, %v2967
      %v2997 = vpack.c.b16 %v2970, %v2969
      %v2998 = vpack.c.b16 %v2972, %v2971
      %v2999 = vpack.c.b16 %v2974, %v2973
      %v3000 = vpack.c.b16 %v2976, %v2975
      %v3001 = vpack.c.b16 %v2978, %v2977
      %v3002 = vpack.c.b16 %v2980, %v2979
      %v3003 = vpack.c.b16 %v2982, %v2981
      %v3004 = vpack.c.b16 %v2984, %v2983
      %v3005 = vpack.c.b16 %v2986, %v2985
      %v3006 = vpack.c.b16 %v2988, %v2987
      %v3007 = vpack.c.b16 %v2990, %v2989
      %v3008 = vpack.c.b16 %v2992, %v2991
      %v3010 = vsel %vm466, %v2960, 0
      %v3013 = vsel %vm466, %v2993, 0
      %v3016 = vsel %vm466, %v2994, 0
      %v3019 = vsel %vm466, %v2995, 0
      %v3022 = vsel %vm466, %v2996, 0
      %v3025 = vsel %vm466, %v2997, 0
      %v3028 = vsel %vm466, %v2998, 0
      %v3031 = vsel %vm466, %v2999, 0
      %v3034 = vsel %vm466, %v3000, 0
      %v3037 = vsel %vm466, %v3001, 0
      %v3040 = vsel %vm466, %v3002, 0
      %v3043 = vsel %vm466, %v3003, 0
      %v3046 = vsel %vm466, %v3004, 0
      %v3049 = vsel %vm466, %v3005, 0
      %v3052 = vsel %vm466, %v3006, 0
      %v3055 = vsel %vm466, %v3007, 0
      %v3058 = vsel %vm466, %v3008, 0
      %3060 = vmatprep.subr.bf16.mxu0 0
      %3061 = vmatpush1.bf16.xpose.msra.mxu0 %v3013
      %3062 = vmatprep.subr.bf16.mxu0 0
      %3063 = vmatpush1.bf16.xpose.msra.mxu0 %v3016
      %3064 = vmatprep.subr.bf16.mxu0 0
      %3065 = vmatpush1.bf16.xpose.msra.mxu0 %v3019
      %3066 = vmatprep.subr.bf16.mxu0 0
      %3067 = vmatpush1.bf16.xpose.msra.mxu0 %v3022
      %3068 = vmatprep.subr.bf16.mxu0 0
      %3069 = vmatpush1.bf16.xpose.msra.mxu0 %v3025
      %3070 = vmatprep.subr.bf16.mxu0 0
      %3071 = vmatpush1.bf16.xpose.msra.mxu0 %v3028
      %3072 = vmatprep.subr.bf16.mxu0 0
      %3073 = vmatpush1.bf16.xpose.msra.mxu0 %v3031
      %3074 = vmatprep.subr.bf16.mxu0 0
      %3075 = vmatpush1.bf16.xpose.msra.mxu0 %v3034
      %3076 = vmatprep.subr.bf16.mxu0 0
      %3077 = vmatpush1.bf16.xpose.msra.mxu0 %v3037
      %3078 = vmatprep.subr.bf16.mxu0 0
      %3079 = vmatpush1.bf16.xpose.msra.mxu0 %v3040
      %3080 = vmatprep.subr.bf16.mxu0 0
      %3081 = vmatpush1.bf16.xpose.msra.mxu0 %v3043
      %3082 = vmatprep.subr.bf16.mxu0 0
      %3083 = vmatpush1.bf16.xpose.msra.mxu0 %v3046
      %3084 = vmatprep.subr.bf16.mxu0 0
      %3085 = vmatpush1.bf16.xpose.msra.mxu0 %v3049
      %3086 = vmatprep.subr.bf16.mxu0 0
      %3087 = vmatpush1.bf16.xpose.msra.mxu0 %v3052
      %3088 = vmatprep.subr.bf16.mxu0 0
      %3089 = vmatpush1.bf16.xpose.msra.mxu0 %v3055
      %3090 = vmatprep.subr.bf16.mxu0 0
      %3091 = vmatpush1.bf16.xpose.msra.mxu0 %v3058
      %3092 = vmatprep.mubr.bf16.mxu0 0
      %3093 = vmatmul.mubr.bf16.gmra.mrb[0].mxu0 %v3010
      %v3094 = vpop.f32.mrb[0].mxu0
      %v3095 = vadd.f32 0.0, %v3094
      %v3096 = vpop.f32.mrb[0].mxu0
      %v3097 = vadd.f32 0.0, %v3096
      %v3098 = vpop.f32.mrb[0].mxu0
      %v3099 = vpop.f32.mrb[0].mxu0
      %3100 = vdwg.mxu0
      %v3101 = vadd.f32 %v2745, %v3095
      %v3102 = vadd.f32 %v2746, %v3097
      %v3103 = vld [vmem:[%s2750 + $0x8] sm:$0x3]
      %v3104 = vld [vmem:[%s2750 + $0x14] sm:$0x3]
      %v3105 = vld [vmem:[%s2750 + $0x20] sm:$0x3]
      %v3106 = vld [vmem:[%s2750 + $0x2c] sm:$0x3]
      %v3107 = vld [vmem:[%s2750 + $0x38] sm:$0x3]
      %v3108 = vld [vmem:[%s2750 + $0x44] sm:$0x3]
      %v3109 = vld [vmem:[%s2750 + $0x50] sm:$0x3]
      %v3110 = vld [vmem:[%s2750 + $0x5c] sm:$0x3]
      %v3111 = vld [vmem:[%s2750 + $0x68] sm:$0x3]
      %v3112 = vld [vmem:[%s2750 + $0x74] sm:$0x3]
      %v3113 = vld [vmem:[%s2750 + $0x80] sm:$0x3]
      %v3114 = vld [vmem:[%s2750 + $0x8c] sm:$0x3]
      %v3115 = vld [vmem:[%s2750 + $0x98] sm:$0x3]
      %v3116 = vld [vmem:[%s2750 + $0xa4] sm:$0x3]
      %v3117 = vld [vmem:[%s2750 + $0xb0] sm:$0x3]
      %v3118 = vld [vmem:[%s2750 + $0xbc] sm:$0x3]
      %v3120 = vshrl.u32 %v2751, 16
      %v3122 = vrot.slane %v3120, 5
      %v3123 = vshll.u32 %v2751, 16
      %v3125 = vrot.slane %v3123, 6
      %v3126 = vor.u32 %v3122, %v3125
      %v3127 = vrot.slane %v3126, 4
      %v3129 = vshrl.u32 %v2752, 16
      %v3131 = vrot.slane %v3129, 5
      %v3132 = vshll.u32 %v2752, 16
      %v3134 = vrot.slane %v3132, 6
      %v3135 = vor.u32 %v3131, %v3134
      %v3136 = vsel %vm579, %v3127, %v3135
      %v3137 = vrot.slane %v3135, 4
      %v3139 = vshrl.u32 %v3103, 16
      %v3141 = vrot.slane %v3139, 5
      %v3142 = vshll.u32 %v3103, 16
      %v3144 = vrot.slane %v3142, 6
      %v3145 = vor.u32 %v3141, %v3144
      %v3146 = vsel %vm579, %v3137, %v3145
      %v3148 = vshrl.u32 %v2754, 16
      %v3150 = vrot.slane %v3148, 5
      %v3151 = vshll.u32 %v2754, 16
      %v3153 = vrot.slane %v3151, 6
      %v3154 = vor.u32 %v3150, %v3153
      %v3155 = vrot.slane %v3154, 4
      %v3157 = vshrl.u32 %v2755, 16
      %v3159 = vrot.slane %v3157, 5
      %v3160 = vshll.u32 %v2755, 16
      %v3162 = vrot.slane %v3160, 6
      %v3163 = vor.u32 %v3159, %v3162
      %v3164 = vsel %vm579, %v3155, %v3163
      %v3165 = vrot.slane %v3163, 4
      %v3167 = vshrl.u32 %v3104, 16
      %v3169 = vrot.slane %v3167, 5
      %v3170 = vshll.u32 %v3104, 16
      %v3172 = vrot.slane %v3170, 6
      %v3173 = vor.u32 %v3169, %v3172
      %v3174 = vsel %vm579, %v3165, %v3173
      %v3176 = vshrl.u32 %v2757, 16
      %v3178 = vrot.slane %v3176, 5
      %v3179 = vshll.u32 %v2757, 16
      %v3181 = vrot.slane %v3179, 6
      %v3182 = vor.u32 %v3178, %v3181
      %v3183 = vrot.slane %v3182, 4
      %v3185 = vshrl.u32 %v2758, 16
      %v3187 = vrot.slane %v3185, 5
      %v3188 = vshll.u32 %v2758, 16
      %v3190 = vrot.slane %v3188, 6
      %v3191 = vor.u32 %v3187, %v3190
      %v3192 = vsel %vm579, %v3183, %v3191
      %v3193 = vrot.slane %v3191, 4
      %v3195 = vshrl.u32 %v3105, 16
      %v3197 = vrot.slane %v3195, 5
      %v3198 = vshll.u32 %v3105, 16
      %v3200 = vrot.slane %v3198, 6
      %v3201 = vor.u32 %v3197, %v3200
      %v3202 = vsel %vm579, %v3193, %v3201
      %v3204 = vshrl.u32 %v2760, 16
      %v3206 = vrot.slane %v3204, 5
      %v3207 = vshll.u32 %v2760, 16
      %v3209 = vrot.slane %v3207, 6
      %v3210 = vor.u32 %v3206, %v3209
      %v3211 = vrot.slane %v3210, 4
      %v3213 = vshrl.u32 %v2761, 16
      %v3215 = vrot.slane %v3213, 5
      %v3216 = vshll.u32 %v2761, 16
      %v3218 = vrot.slane %v3216, 6
      %v3219 = vor.u32 %v3215, %v3218
      %v3220 = vsel %vm579, %v3211, %v3219
      %v3221 = vrot.slane %v3219, 4
      %v3223 = vshrl.u32 %v3106, 16
      %v3225 = vrot.slane %v3223, 5
      %v3226 = vshll.u32 %v3106, 16
      %v3228 = vrot.slane %v3226, 6
      %v3229 = vor.u32 %v3225, %v3228
      %v3230 = vsel %vm579, %v3221, %v3229
      %v3232 = vshrl.u32 %v2763, 16
      %v3234 = vrot.slane %v3232, 5
      %v3235 = vshll.u32 %v2763, 16
      %v3237 = vrot.slane %v3235, 6
      %v3238 = vor.u32 %v3234, %v3237
      %v3239 = vrot.slane %v3238, 4
      %v3241 = vshrl.u32 %v2764, 16
      %v3243 = vrot.slane %v3241, 5
      %v3244 = vshll.u32 %v2764, 16
      %v3246 = vrot.slane %v3244, 6
      %v3247 = vor.u32 %v3243, %v3246
      %v3248 = vsel %vm579, %v3239, %v3247
      %v3249 = vrot.slane %v3247, 4
      %v3251 = vshrl.u32 %v3107, 16
      %v3253 = vrot.slane %v3251, 5
      %v3254 = vshll.u32 %v3107, 16
      %v3256 = vrot.slane %v3254, 6
      %v3257 = vor.u32 %v3253, %v3256
      %v3258 = vsel %vm579, %v3249, %v3257
      %v3260 = vshrl.u32 %v2766, 16
      %v3262 = vrot.slane %v3260, 5
      %v3263 = vshll.u32 %v2766, 16
      %v3265 = vrot.slane %v3263, 6
      %v3266 = vor.u32 %v3262, %v3265
      %v3267 = vrot.slane %v3266, 4
      %v3269 = vshrl.u32 %v2767, 16
      %v3271 = vrot.slane %v3269, 5
      %v3272 = vshll.u32 %v2767, 16
      %v3274 = vrot.slane %v3272, 6
      %v3275 = vor.u32 %v3271, %v3274
      %v3276 = vsel %vm579, %v3267, %v3275
      %v3277 = vrot.slane %v3275, 4
      %v3279 = vshrl.u32 %v3108, 16
      %v3281 = vrot.slane %v3279, 5
      %v3282 = vshll.u32 %v3108, 16
      %v3284 = vrot.slane %v3282, 6
      %v3285 = vor.u32 %v3281, %v3284
      %v3286 = vsel %vm579, %v3277, %v3285
      %v3288 = vshrl.u32 %v2769, 16
      %v3290 = vrot.slane %v3288, 5
      %v3291 = vshll.u32 %v2769, 16
      %v3293 = vrot.slane %v3291, 6
      %v3294 = vor.u32 %v3290, %v3293
      %v3295 = vrot.slane %v3294, 4
      %v3297 = vshrl.u32 %v2770, 16
      %v3299 = vrot.slane %v3297, 5
      %v3300 = vshll.u32 %v2770, 16
      %v3302 = vrot.slane %v3300, 6
      %v3303 = vor.u32 %v3299, %v3302
      %v3304 = vsel %vm579, %v3295, %v3303
      %v3305 = vrot.slane %v3303, 4
      %v3307 = vshrl.u32 %v3109, 16
      %v3309 = vrot.slane %v3307, 5
      %v3310 = vshll.u32 %v3109, 16
      %v3312 = vrot.slane %v3310, 6
      %v3313 = vor.u32 %v3309, %v3312
      %v3314 = vsel %vm579, %v3305, %v3313
      %v3316 = vshrl.u32 %v2772, 16
      %v3318 = vrot.slane %v3316, 5
      %v3319 = vshll.u32 %v2772, 16
      %v3321 = vrot.slane %v3319, 6
      %v3322 = vor.u32 %v3318, %v3321
      %v3323 = vrot.slane %v3322, 4
      %v3325 = vshrl.u32 %v2773, 16
      %v3327 = vrot.slane %v3325, 5
      %v3328 = vshll.u32 %v2773, 16
      %v3330 = vrot.slane %v3328, 6
      %v3331 = vor.u32 %v3327, %v3330
      %v3332 = vsel %vm579, %v3323, %v3331
      %v3333 = vrot.slane %v3331, 4
      %v3335 = vshrl.u32 %v3110, 16
      %v3337 = vrot.slane %v3335, 5
      %v3338 = vshll.u32 %v3110, 16
      %v3340 = vrot.slane %v3338, 6
      %v3341 = vor.u32 %v3337, %v3340
      %v3342 = vsel %vm579, %v3333, %v3341
      %v3344 = vshrl.u32 %v2775, 16
      %v3346 = vrot.slane %v3344, 5
      %v3347 = vshll.u32 %v2775, 16
      %v3349 = vrot.slane %v3347, 6
      %v3350 = vor.u32 %v3346, %v3349
      %v3351 = vrot.slane %v3350, 4
      %v3353 = vshrl.u32 %v2776, 16
      %v3355 = vrot.slane %v3353, 5
      %v3356 = vshll.u32 %v2776, 16
      %v3358 = vrot.slane %v3356, 6
      %v3359 = vor.u32 %v3355, %v3358
      %v3360 = vsel %vm579, %v3351, %v3359
      %v3361 = vrot.slane %v3359, 4
      %v3363 = vshrl.u32 %v3111, 16
      %v3365 = vrot.slane %v3363, 5
      %v3366 = vshll.u32 %v3111, 16
      %v3368 = vrot.slane %v3366, 6
      %v3369 = vor.u32 %v3365, %v3368
      %v3370 = vsel %vm579, %v3361, %v3369
      %v3372 = vshrl.u32 %v2778, 16
      %v3374 = vrot.slane %v3372, 5
      %v3375 = vshll.u32 %v2778, 16
      %v3377 = vrot.slane %v3375, 6
      %v3378 = vor.u32 %v3374, %v3377
      %v3379 = vrot.slane %v3378, 4
      %v3381 = vshrl.u32 %v2779, 16
      %v3383 = vrot.slane %v3381, 5
      %v3384 = vshll.u32 %v2779, 16
      %v3386 = vrot.slane %v3384, 6
      %v3387 = vor.u32 %v3383, %v3386
      %v3388 = vsel %vm579, %v3379, %v3387
      %v3389 = vrot.slane %v3387, 4
      %v3391 = vshrl.u32 %v3112, 16
      %v3393 = vrot.slane %v3391, 5
      %v3394 = vshll.u32 %v3112, 16
      %v3396 = vrot.slane %v3394, 6
      %v3397 = vor.u32 %v3393, %v3396
      %v3398 = vsel %vm579, %v3389, %v3397
      %v3400 = vshrl.u32 %v2781, 16
      %v3402 = vrot.slane %v3400, 5
      %v3403 = vshll.u32 %v2781, 16
      %v3405 = vrot.slane %v3403, 6
      %v3406 = vor.u32 %v3402, %v3405
      %v3407 = vrot.slane %v3406, 4
      %v3409 = vshrl.u32 %v2782, 16
      %v3411 = vrot.slane %v3409, 5
      %v3412 = vshll.u32 %v2782, 16
      %v3414 = vrot.slane %v3412, 6
      %v3415 = vor.u32 %v3411, %v3414
      %v3416 = vsel %vm579, %v3407, %v3415
      %v3417 = vrot.slane %v3415, 4
      %v3419 = vshrl.u32 %v3113, 16
      %v3421 = vrot.slane %v3419, 5
      %v3422 = vshll.u32 %v3113, 16
      %v3424 = vrot.slane %v3422, 6
      %v3425 = vor.u32 %v3421, %v3424
      %v3426 = vsel %vm579, %v3417, %v3425
      %v3428 = vshrl.u32 %v2784, 16
      %v3430 = vrot.slane %v3428, 5
      %v3431 = vshll.u32 %v2784, 16
      %v3433 = vrot.slane %v3431, 6
      %v3434 = vor.u32 %v3430, %v3433
      %v3435 = vrot.slane %v3434, 4
      %v3437 = vshrl.u32 %v2785, 16
      %v3439 = vrot.slane %v3437, 5
      %v3440 = vshll.u32 %v2785, 16
      %v3442 = vrot.slane %v3440, 6
      %v3443 = vor.u32 %v3439, %v3442
      %v3444 = vsel %vm579, %v3435, %v3443
      %v3445 = vrot.slane %v3443, 4
      %v3447 = vshrl.u32 %v3114, 16
      %v3449 = vrot.slane %v3447, 5
      %v3450 = vshll.u32 %v3114, 16
      %v3452 = vrot.slane %v3450, 6
      %v3453 = vor.u32 %v3449, %v3452
      %v3454 = vsel %vm579, %v3445, %v3453
      %v3456 = vshrl.u32 %v2787, 16
      %v3458 = vrot.slane %v3456, 5
      %v3459 = vshll.u32 %v2787, 16
      %v3461 = vrot.slane %v3459, 6
      %v3462 = vor.u32 %v3458, %v3461
      %v3463 = vrot.slane %v3462, 4
      %v3465 = vshrl.u32 %v2788, 16
      %v3467 = vrot.slane %v3465, 5
      %v3468 = vshll.u32 %v2788, 16
      %v3470 = vrot.slane %v3468, 6
      %v3471 = vor.u32 %v3467, %v3470
      %v3472 = vsel %vm579, %v3463, %v3471
      %v3473 = vrot.slane %v3471, 4
      %v3475 = vshrl.u32 %v3115, 16
      %v3477 = vrot.slane %v3475, 5
      %v3478 = vshll.u32 %v3115, 16
      %v3480 = vrot.slane %v3478, 6
      %v3481 = vor.u32 %v3477, %v3480
      %v3482 = vsel %vm579, %v3473, %v3481
      %v3484 = vshrl.u32 %v2790, 16
      %v3486 = vrot.slane %v3484, 5
      %v3487 = vshll.u32 %v2790, 16
      %v3489 = vrot.slane %v3487, 6
      %v3490 = vor.u32 %v3486, %v3489
      %v3491 = vrot.slane %v3490, 4
      %v3493 = vshrl.u32 %v2791, 16
      %v3495 = vrot.slane %v3493, 5
      %v3496 = vshll.u32 %v2791, 16
      %v3498 = vrot.slane %v3496, 6
      %v3499 = vor.u32 %v3495, %v3498
      %v3500 = vsel %vm579, %v3491, %v3499
      %v3501 = vrot.slane %v3499, 4
      %v3503 = vshrl.u32 %v3116, 16
      %v3505 = vrot.slane %v3503, 5
      %v3506 = vshll.u32 %v3116, 16
      %v3508 = vrot.slane %v3506, 6
      %v3509 = vor.u32 %v3505, %v3508
      %v3510 = vsel %vm579, %v3501, %v3509
      %v3512 = vshrl.u32 %v2793, 16
      %v3514 = vrot.slane %v3512, 5
      %v3515 = vshll.u32 %v2793, 16
      %v3517 = vrot.slane %v3515, 6
      %v3518 = vor.u32 %v3514, %v3517
      %v3519 = vrot.slane %v3518, 4
      %v3521 = vshrl.u32 %v2794, 16
      %v3523 = vrot.slane %v3521, 5
      %v3524 = vshll.u32 %v2794, 16
      %v3526 = vrot.slane %v3524, 6
      %v3527 = vor.u32 %v3523, %v3526
      %v3528 = vsel %vm579, %v3519, %v3527
      %v3529 = vrot.slane %v3527, 4
      %v3531 = vshrl.u32 %v3117, 16
      %v3533 = vrot.slane %v3531, 5
      %v3534 = vshll.u32 %v3117, 16
      %v3536 = vrot.slane %v3534, 6
      %v3537 = vor.u32 %v3533, %v3536
      %v3538 = vsel %vm579, %v3529, %v3537
      %v3540 = vshrl.u32 %v2796, 16
      %v3542 = vrot.slane %v3540, 5
      %v3543 = vshll.u32 %v2796, 16
      %v3545 = vrot.slane %v3543, 6
      %v3546 = vor.u32 %v3542, %v3545
      %v3547 = vrot.slane %v3546, 4
      %v3549 = vshrl.u32 %v2797, 16
      %v3551 = vrot.slane %v3549, 5
      %v3552 = vshll.u32 %v2797, 16
      %v3554 = vrot.slane %v3552, 6
      %v3555 = vor.u32 %v3551, %v3554
      %v3556 = vsel %vm579, %v3547, %v3555
      %v3557 = vrot.slane %v3555, 4
      %v3559 = vshrl.u32 %v3118, 16
      %v3561 = vrot.slane %v3559, 5
      %v3562 = vshll.u32 %v3118, 16
      %v3564 = vrot.slane %v3562, 6
      %v3565 = vor.u32 %v3561, %v3564
      %v3566 = vsel %vm579, %v3557, %v3565
      %s3567 = scalar_lea.vmem %s1, 28
      %v3568 = vld [vmem:[%s3567] sm:$0xf]
      %v3569 = vunpack.c.l.b16 %v3136
      %v3570 = vunpack.c.l.b16 %v3146
      %v3571 = vunpack.c.l.b16 %v3164
      %v3572 = vunpack.c.l.b16 %v3174
      %v3573 = vunpack.c.l.b16 %v3192
      %v3574 = vunpack.c.l.b16 %v3202
      %v3575 = vunpack.c.l.b16 %v3220
      %v3576 = vunpack.c.l.b16 %v3230
      %v3577 = vunpack.c.l.b16 %v3248
      %v3578 = vunpack.c.l.b16 %v3258
      %v3579 = vunpack.c.l.b16 %v3276
      %v3580 = vunpack.c.l.b16 %v3286
      %v3581 = vunpack.c.l.b16 %v3304
      %v3582 = vunpack.c.l.b16 %v3314
      %v3583 = vunpack.c.l.b16 %v3332
      %v3584 = vunpack.c.l.b16 %v3342
      %v3585 = vunpack.c.l.b16 %v3360
      %v3586 = vunpack.c.l.b16 %v3370
      %v3587 = vunpack.c.l.b16 %v3388
      %v3588 = vunpack.c.l.b16 %v3398
      %v3589 = vunpack.c.l.b16 %v3416
      %v3590 = vunpack.c.l.b16 %v3426
      %v3591 = vunpack.c.l.b16 %v3444
      %v3592 = vunpack.c.l.b16 %v3454
      %v3593 = vunpack.c.l.b16 %v3472
      %v3594 = vunpack.c.l.b16 %v3482
      %v3595 = vunpack.c.l.b16 %v3500
      %v3596 = vunpack.c.l.b16 %v3510
      %v3597 = vunpack.c.l.b16 %v3528
      %v3598 = vunpack.c.l.b16 %v3538
      %v3599 = vunpack.c.l.b16 %v3556
      %v3600 = vunpack.c.l.b16 %v3566
      %v3601 = vpack.c.b16 %v3570, %v3569
      %v3602 = vpack.c.b16 %v3572, %v3571
      %v3603 = vpack.c.b16 %v3574, %v3573
      %v3604 = vpack.c.b16 %v3576, %v3575
      %v3605 = vpack.c.b16 %v3578, %v3577
      %v3606 = vpack.c.b16 %v3580, %v3579
      %v3607 = vpack.c.b16 %v3582, %v3581
      %v3608 = vpack.c.b16 %v3584, %v3583
      %v3609 = vpack.c.b16 %v3586, %v3585
      %v3610 = vpack.c.b16 %v3588, %v3587
      %v3611 = vpack.c.b16 %v3590, %v3589
      %v3612 = vpack.c.b16 %v3592, %v3591
      %v3613 = vpack.c.b16 %v3594, %v3593
      %v3614 = vpack.c.b16 %v3596, %v3595
      %v3615 = vpack.c.b16 %v3598, %v3597
      %v3616 = vpack.c.b16 %v3600, %v3599
      %v3618 = vsel %vm466, %v3568, 0
      %v3621 = vsel %vm466, %v3601, 0
      %v3624 = vsel %vm466, %v3602, 0
      %v3627 = vsel %vm466, %v3603, 0
      %v3630 = vsel %vm466, %v3604, 0
      %v3633 = vsel %vm466, %v3605, 0
      %v3636 = vsel %vm466, %v3606, 0
      %v3639 = vsel %vm466, %v3607, 0
      %v3642 = vsel %vm466, %v3608, 0
      %v3645 = vsel %vm466, %v3609, 0
      %v3648 = vsel %vm466, %v3610, 0
      %v3651 = vsel %vm466, %v3611, 0
      %v3654 = vsel %vm466, %v3612, 0
      %v3657 = vsel %vm466, %v3613, 0
      %v3660 = vsel %vm466, %v3614, 0
      %v3663 = vsel %vm466, %v3615, 0
      %v3666 = vsel %vm466, %v3616, 0
      %3668 = vmatprep.subr.bf16.mxu0 0
      %3669 = vmatpush1.bf16.xpose.msra.mxu0 %v3621
      %3670 = vmatprep.subr.bf16.mxu0 0
      %3671 = vmatpush1.bf16.xpose.msra.mxu0 %v3624
      %3672 = vmatprep.subr.bf16.mxu0 0
      %3673 = vmatpush1.bf16.xpose.msra.mxu0 %v3627
      %3674 = vmatprep.subr.bf16.mxu0 0
      %3675 = vmatpush1.bf16.xpose.msra.mxu0 %v3630
      %3676 = vmatprep.subr.bf16.mxu0 0
      %3677 = vmatpush1.bf16.xpose.msra.mxu0 %v3633
      %3678 = vmatprep.subr.bf16.mxu0 0
      %3679 = vmatpush1.bf16.xpose.msra.mxu0 %v3636
      %3680 = vmatprep.subr.bf16.mxu0 0
      %3681 = vmatpush1.bf16.xpose.msra.mxu0 %v3639
      %3682 = vmatprep.subr.bf16.mxu0 0
      %3683 = vmatpush1.bf16.xpose.msra.mxu0 %v3642
      %3684 = vmatprep.subr.bf16.mxu0 0
      %3685 = vmatpush1.bf16.xpose.msra.mxu0 %v3645
      %3686 = vmatprep.subr.bf16.mxu0 0
      %3687 = vmatpush1.bf16.xpose.msra.mxu0 %v3648
      %3688 = vmatprep.subr.bf16.mxu0 0
      %3689 = vmatpush1.bf16.xpose.msra.mxu0 %v3651
      %3690 = vmatprep.subr.bf16.mxu0 0
      %3691 = vmatpush1.bf16.xpose.msra.mxu0 %v3654
      %3692 = vmatprep.subr.bf16.mxu0 0
      %3693 = vmatpush1.bf16.xpose.msra.mxu0 %v3657
      %3694 = vmatprep.subr.bf16.mxu0 0
      %3695 = vmatpush1.bf16.xpose.msra.mxu0 %v3660
      %3696 = vmatprep.subr.bf16.mxu0 0
      %3697 = vmatpush1.bf16.xpose.msra.mxu0 %v3663
      %3698 = vmatprep.subr.bf16.mxu0 0
      %3699 = vmatpush1.bf16.xpose.msra.mxu0 %v3666
      %3700 = vmatprep.mubr.bf16.mxu0 0
      %3701 = vmatmul.mubr.bf16.gmra.mrb[0].mxu0 %v3618
      %v3702 = vpop.f32.mrb[0].mxu0
      %v3703 = vadd.f32 0.0, %v3702
      %v3704 = vpop.f32.mrb[0].mxu0
      %v3705 = vadd.f32 0.0, %v3704
      %v3706 = vpop.f32.mrb[0].mxu0
      %v3707 = vpop.f32.mrb[0].mxu0
      %3708 = vdwg.mxu0
      %v3709 = vadd.f32 %v3101, %v3703
      %v3710 = vadd.f32 %v3102, %v3705
      %v3711 = vld [vmem:[%s2750] sm:$0xc]
      %v3712 = vld [vmem:[%s2750 + $0xc] sm:$0xc]
      %v3713 = vld [vmem:[%s2750 + $0x18] sm:$0xc]
      %v3714 = vld [vmem:[%s2750 + $0x24] sm:$0xc]
      %v3715 = vld [vmem:[%s2750 + $0x30] sm:$0xc]
      %v3716 = vld [vmem:[%s2750 + $0x3c] sm:$0xc]
      %v3717 = vld [vmem:[%s2750 + $0x48] sm:$0xc]
      %v3718 = vld [vmem:[%s2750 + $0x54] sm:$0xc]
      %v3719 = vld [vmem:[%s2750 + $0x60] sm:$0xc]
      %v3720 = vld [vmem:[%s2750 + $0x6c] sm:$0xc]
      %v3721 = vld [vmem:[%s2750 + $0x78] sm:$0xc]
      %v3722 = vld [vmem:[%s2750 + $0x84] sm:$0xc]
      %v3723 = vld [vmem:[%s2750 + $0x90] sm:$0xc]
      %v3724 = vld [vmem:[%s2750 + $0x9c] sm:$0xc]
      %v3725 = vld [vmem:[%s2750 + $0xa8] sm:$0xc]
      %v3726 = vld [vmem:[%s2750 + $0xb4] sm:$0xc]
      %v3759 = vrot.slane %v3711, 6
      %v3760 = vrot.slane %v3759, 4
      %v3761 = vrot.slane %v2752, 6
      %v3762 = vsel %vm1222, %v3760, %v3761
      %v3763 = vrot.slane %v3761, 4
      %v3764 = vrot.slane %v3103, 6
      %v3765 = vsel %vm1222, %v3763, %v3764
      %v3766 = vrot.slane %v3712, 6
      %v3767 = vrot.slane %v3766, 4
      %v3768 = vrot.slane %v2755, 6
      %v3769 = vsel %vm1222, %v3767, %v3768
      %v3770 = vrot.slane %v3768, 4
      %v3771 = vrot.slane %v3104, 6
      %v3772 = vsel %vm1222, %v3770, %v3771
      %v3773 = vrot.slane %v3713, 6
      %v3774 = vrot.slane %v3773, 4
      %v3775 = vrot.slane %v2758, 6
      %v3776 = vsel %vm1222, %v3774, %v3775
      %v3777 = vrot.slane %v3775, 4
      %v3778 = vrot.slane %v3105, 6
      %v3779 = vsel %vm1222, %v3777, %v3778
      %v3780 = vrot.slane %v3714, 6
      %v3781 = vrot.slane %v3780, 4
      %v3782 = vrot.slane %v2761, 6
      %v3783 = vsel %vm1222, %v3781, %v3782
      %v3784 = vrot.slane %v3782, 4
      %v3785 = vrot.slane %v3106, 6
      %v3786 = vsel %vm1222, %v3784, %v3785
      %v3787 = vrot.slane %v3715, 6
      %v3788 = vrot.slane %v3787, 4
      %v3789 = vrot.slane %v2764, 6
      %v3790 = vsel %vm1222, %v3788, %v3789
      %v3791 = vrot.slane %v3789, 4
      %v3792 = vrot.slane %v3107, 6
      %v3793 = vsel %vm1222, %v3791, %v3792
      %v3794 = vrot.slane %v3716, 6
      %v3795 = vrot.slane %v3794, 4
      %v3796 = vrot.slane %v2767, 6
      %v3797 = vsel %vm1222, %v3795, %v3796
      %v3798 = vrot.slane %v3796, 4
      %v3799 = vrot.slane %v3108, 6
      %v3800 = vsel %vm1222, %v3798, %v3799
      %v3801 = vrot.slane %v3717, 6
      %v3802 = vrot.slane %v3801, 4
      %v3803 = vrot.slane %v2770, 6
      %v3804 = vsel %vm1222, %v3802, %v3803
      %v3805 = vrot.slane %v3803, 4
      %v3806 = vrot.slane %v3109, 6
      %v3807 = vsel %vm1222, %v3805, %v3806
      %v3808 = vrot.slane %v3718, 6
      %v3809 = vrot.slane %v3808, 4
      %v3810 = vrot.slane %v2773, 6
      %v3811 = vsel %vm1222, %v3809, %v3810
      %v3812 = vrot.slane %v3810, 4
      %v3813 = vrot.slane %v3110, 6
      %v3814 = vsel %vm1222, %v3812, %v3813
      %v3815 = vrot.slane %v3719, 6
      %v3816 = vrot.slane %v3815, 4
      %v3817 = vrot.slane %v2776, 6
      %v3818 = vsel %vm1222, %v3816, %v3817
      %v3819 = vrot.slane %v3817, 4
      %v3820 = vrot.slane %v3111, 6
      %v3821 = vsel %vm1222, %v3819, %v3820
      %v3822 = vrot.slane %v3720, 6
      %v3823 = vrot.slane %v3822, 4
      %v3824 = vrot.slane %v2779, 6
      %v3825 = vsel %vm1222, %v3823, %v3824
      %v3826 = vrot.slane %v3824, 4
      %v3827 = vrot.slane %v3112, 6
      %v3828 = vsel %vm1222, %v3826, %v3827
      %v3829 = vrot.slane %v3721, 6
      %v3830 = vrot.slane %v3829, 4
      %v3831 = vrot.slane %v2782, 6
      %v3832 = vsel %vm1222, %v3830, %v3831
      %v3833 = vrot.slane %v3831, 4
      %v3834 = vrot.slane %v3113, 6
      %v3835 = vsel %vm1222, %v3833, %v3834
      %v3836 = vrot.slane %v3722, 6
      %v3837 = vrot.slane %v3836, 4
      %v3838 = vrot.slane %v2785, 6
      %v3839 = vsel %vm1222, %v3837, %v3838
      %v3840 = vrot.slane %v3838, 4
      %v3841 = vrot.slane %v3114, 6
      %v3842 = vsel %vm1222, %v3840, %v3841
      %v3843 = vrot.slane %v3723, 6
      %v3844 = vrot.slane %v3843, 4
      %v3845 = vrot.slane %v2788, 6
      %v3846 = vsel %vm1222, %v3844, %v3845
      %v3847 = vrot.slane %v3845, 4
      %v3848 = vrot.slane %v3115, 6
      %v3849 = vsel %vm1222, %v3847, %v3848
      %v3850 = vrot.slane %v3724, 6
      %v3851 = vrot.slane %v3850, 4
      %v3852 = vrot.slane %v2791, 6
      %v3853 = vsel %vm1222, %v3851, %v3852
      %v3854 = vrot.slane %v3852, 4
      %v3855 = vrot.slane %v3116, 6
      %v3856 = vsel %vm1222, %v3854, %v3855
      %v3857 = vrot.slane %v3725, 6
      %v3858 = vrot.slane %v3857, 4
      %v3859 = vrot.slane %v2794, 6
      %v3860 = vsel %vm1222, %v3858, %v3859
      %v3861 = vrot.slane %v3859, 4
      %v3862 = vrot.slane %v3117, 6
      %v3863 = vsel %vm1222, %v3861, %v3862
      %v3864 = vrot.slane %v3726, 6
      %v3865 = vrot.slane %v3864, 4
      %v3866 = vrot.slane %v2797, 6
      %v3867 = vsel %vm1222, %v3865, %v3866
      %v3868 = vrot.slane %v3866, 4
      %v3869 = vrot.slane %v3118, 6
      %v3870 = vsel %vm1222, %v3868, %v3869
      %s3871 = scalar_lea.vmem %s1, 32
      %v3872 = vld [vmem:[%s3871] sm:$0xf]
      %v3873 = vunpack.c.l.b16 %v3762
      %v3874 = vunpack.c.l.b16 %v3765
      %v3875 = vunpack.c.l.b16 %v3769
      %v3876 = vunpack.c.l.b16 %v3772
      %v3877 = vunpack.c.l.b16 %v3776
      %v3878 = vunpack.c.l.b16 %v3779
      %v3879 = vunpack.c.l.b16 %v3783
      %v3880 = vunpack.c.l.b16 %v3786
      %v3881 = vunpack.c.l.b16 %v3790
      %v3882 = vunpack.c.l.b16 %v3793
      %v3883 = vunpack.c.l.b16 %v3797
      %v3884 = vunpack.c.l.b16 %v3800
      %v3885 = vunpack.c.l.b16 %v3804
      %v3886 = vunpack.c.l.b16 %v3807
      %v3887 = vunpack.c.l.b16 %v3811
      %v3888 = vunpack.c.l.b16 %v3814
      %v3889 = vunpack.c.l.b16 %v3818
      %v3890 = vunpack.c.l.b16 %v3821
      %v3891 = vunpack.c.l.b16 %v3825
      %v3892 = vunpack.c.l.b16 %v3828
      %v3893 = vunpack.c.l.b16 %v3832
      %v3894 = vunpack.c.l.b16 %v3835
      %v3895 = vunpack.c.l.b16 %v3839
      %v3896 = vunpack.c.l.b16 %v3842
      %v3897 = vunpack.c.l.b16 %v3846
      %v3898 = vunpack.c.l.b16 %v3849
      %v3899 = vunpack.c.l.b16 %v3853
      %v3900 = vunpack.c.l.b16 %v3856
      %v3901 = vunpack.c.l.b16 %v3860
      %v3902 = vunpack.c.l.b16 %v3863
      %v3903 = vunpack.c.l.b16 %v3867
      %v3904 = vunpack.c.l.b16 %v3870
      %v3905 = vpack.c.b16 %v3874, %v3873
      %v3906 = vpack.c.b16 %v3876, %v3875
      %v3907 = vpack.c.b16 %v3878, %v3877
      %v3908 = vpack.c.b16 %v3880, %v3879
      %v3909 = vpack.c.b16 %v3882, %v3881
      %v3910 = vpack.c.b16 %v3884, %v3883
      %v3911 = vpack.c.b16 %v3886, %v3885
      %v3912 = vpack.c.b16 %v3888, %v3887
      %v3913 = vpack.c.b16 %v3890, %v3889
      %v3914 = vpack.c.b16 %v3892, %v3891
      %v3915 = vpack.c.b16 %v3894, %v3893
      %v3916 = vpack.c.b16 %v3896, %v3895
      %v3917 = vpack.c.b16 %v3898, %v3897
      %v3918 = vpack.c.b16 %v3900, %v3899
      %v3919 = vpack.c.b16 %v3902, %v3901
      %v3920 = vpack.c.b16 %v3904, %v3903
      %v3922 = vsel %vm466, %v3872, 0
      %v3925 = vsel %vm466, %v3905, 0
      %v3928 = vsel %vm466, %v3906, 0
      %v3931 = vsel %vm466, %v3907, 0
      %v3934 = vsel %vm466, %v3908, 0
      %v3937 = vsel %vm466, %v3909, 0
      %v3940 = vsel %vm466, %v3910, 0
      %v3943 = vsel %vm466, %v3911, 0
      %v3946 = vsel %vm466, %v3912, 0
      %v3949 = vsel %vm466, %v3913, 0
      %v3952 = vsel %vm466, %v3914, 0
      %v3955 = vsel %vm466, %v3915, 0
      %v3958 = vsel %vm466, %v3916, 0
      %v3961 = vsel %vm466, %v3917, 0
      %v3964 = vsel %vm466, %v3918, 0
      %v3967 = vsel %vm466, %v3919, 0
      %v3970 = vsel %vm466, %v3920, 0
      %3972 = vmatprep.subr.bf16.mxu0 0
      %3973 = vmatpush1.bf16.xpose.msra.mxu0 %v3925
      %3974 = vmatprep.subr.bf16.mxu0 0
      %3975 = vmatpush1.bf16.xpose.msra.mxu0 %v3928
      %3976 = vmatprep.subr.bf16.mxu0 0
      %3977 = vmatpush1.bf16.xpose.msra.mxu0 %v3931
      %3978 = vmatprep.subr.bf16.mxu0 0
      %3979 = vmatpush1.bf16.xpose.msra.mxu0 %v3934
      %3980 = vmatprep.subr.bf16.mxu0 0
      %3981 = vmatpush1.bf16.xpose.msra.mxu0 %v3937
      %3982 = vmatprep.subr.bf16.mxu0 0
      %3983 = vmatpush1.bf16.xpose.msra.mxu0 %v3940
      %3984 = vmatprep.subr.bf16.mxu0 0
      %3985 = vmatpush1.bf16.xpose.msra.mxu0 %v3943
      %3986 = vmatprep.subr.bf16.mxu0 0
      %3987 = vmatpush1.bf16.xpose.msra.mxu0 %v3946
      %3988 = vmatprep.subr.bf16.mxu0 0
      %3989 = vmatpush1.bf16.xpose.msra.mxu0 %v3949
      %3990 = vmatprep.subr.bf16.mxu0 0
      %3991 = vmatpush1.bf16.xpose.msra.mxu0 %v3952
      %3992 = vmatprep.subr.bf16.mxu0 0
      %3993 = vmatpush1.bf16.xpose.msra.mxu0 %v3955
      %3994 = vmatprep.subr.bf16.mxu0 0
      %3995 = vmatpush1.bf16.xpose.msra.mxu0 %v3958
      %3996 = vmatprep.subr.bf16.mxu0 0
      %3997 = vmatpush1.bf16.xpose.msra.mxu0 %v3961
      %3998 = vmatprep.subr.bf16.mxu0 0
      %3999 = vmatpush1.bf16.xpose.msra.mxu0 %v3964
      %4000 = vmatprep.subr.bf16.mxu0 0
      %4001 = vmatpush1.bf16.xpose.msra.mxu0 %v3967
      %4002 = vmatprep.subr.bf16.mxu0 0
      %4003 = vmatpush1.bf16.xpose.msra.mxu0 %v3970
      %4004 = vmatprep.mubr.bf16.mxu0 0
      %4005 = vmatmul.mubr.bf16.gmra.mrb[0].mxu0 %v3922
      %v4006 = vpop.f32.mrb[0].mxu0
      %v4007 = vadd.f32 0.0, %v4006
      %v4008 = vpop.f32.mrb[0].mxu0
      %v4009 = vadd.f32 0.0, %v4008
      %v4010 = vpop.f32.mrb[0].mxu0
      %v4011 = vpop.f32.mrb[0].mxu0
      %4012 = vdwg.mxu0
      %v4013 = vadd.f32 %v3709, %v4007
      %v4014 = vadd.f32 %v3710, %v4009
      %s4015 = sadd.s32 %s195, 1
      %s4016 = smul.u32 %s4015, 3
      %s4017 = smul.addr %s4016, 4
      %s4018 = scalar_lea.vmem %s183, %s4017
      %v4019 = vld [vmem:[%s4018] sm:$0xf]
      %v4020 = vld [vmem:[%s4018 + $0x4] sm:$0xf]
      %v4021 = vld [vmem:[%s4018 + $0x8] sm:$0x1]
      %v4022 = vld [vmem:[%s4018 + $0xc] sm:$0xf]
      %v4023 = vld [vmem:[%s4018 + $0x10] sm:$0xf]
      %v4024 = vld [vmem:[%s4018 + $0x14] sm:$0x1]
      %v4025 = vld [vmem:[%s4018 + $0x18] sm:$0xf]
      %v4026 = vld [vmem:[%s4018 + $0x1c] sm:$0xf]
      %v4027 = vld [vmem:[%s4018 + $0x20] sm:$0x1]
      %v4028 = vld [vmem:[%s4018 + $0x24] sm:$0xf]
      %v4029 = vld [vmem:[%s4018 + $0x28] sm:$0xf]
      %v4030 = vld [vmem:[%s4018 + $0x2c] sm:$0x1]
      %v4031 = vld [vmem:[%s4018 + $0x30] sm:$0xf]
      %v4032 = vld [vmem:[%s4018 + $0x34] sm:$0xf]
      %v4033 = vld [vmem:[%s4018 + $0x38] sm:$0x1]
      %v4034 = vld [vmem:[%s4018 + $0x3c] sm:$0xf]
      %v4035 = vld [vmem:[%s4018 + $0x40] sm:$0xf]
      %v4036 = vld [vmem:[%s4018 + $0x44] sm:$0x1]
      %v4037 = vld [vmem:[%s4018 + $0x48] sm:$0xf]
      %v4038 = vld [vmem:[%s4018 + $0x4c] sm:$0xf]
      %v4039 = vld [vmem:[%s4018 + $0x50] sm:$0x1]
      %v4040 = vld [vmem:[%s4018 + $0x54] sm:$0xf]
      %v4041 = vld [vmem:[%s4018 + $0x58] sm:$0xf]
      %v4042 = vld [vmem:[%s4018 + $0x5c] sm:$0x1]
      %v4043 = vld [vmem:[%s4018 + $0x60] sm:$0xf]
      %v4044 = vld [vmem:[%s4018 + $0x64] sm:$0xf]
      %v4045 = vld [vmem:[%s4018 + $0x68] sm:$0x1]
      %v4046 = vld [vmem:[%s4018 + $0x6c] sm:$0xf]
      %v4047 = vld [vmem:[%s4018 + $0x70] sm:$0xf]
      %v4048 = vld [vmem:[%s4018 + $0x74] sm:$0x1]
      %v4049 = vld [vmem:[%s4018 + $0x78] sm:$0xf]
      %v4050 = vld [vmem:[%s4018 + $0x7c] sm:$0xf]
      %v4051 = vld [vmem:[%s4018 + $0x80] sm:$0x1]
      %v4052 = vld [vmem:[%s4018 + $0x84] sm:$0xf]
      %v4053 = vld [vmem:[%s4018 + $0x88] sm:$0xf]
      %v4054 = vld [vmem:[%s4018 + $0x8c] sm:$0x1]
      %v4055 = vld [vmem:[%s4018 + $0x90] sm:$0xf]
      %v4056 = vld [vmem:[%s4018 + $0x94] sm:$0xf]
      %v4057 = vld [vmem:[%s4018 + $0x98] sm:$0x1]
      %v4058 = vld [vmem:[%s4018 + $0x9c] sm:$0xf]
      %v4059 = vld [vmem:[%s4018 + $0xa0] sm:$0xf]
      %v4060 = vld [vmem:[%s4018 + $0xa4] sm:$0x1]
      %v4061 = vld [vmem:[%s4018 + $0xa8] sm:$0xf]
      %v4062 = vld [vmem:[%s4018 + $0xac] sm:$0xf]
      %v4063 = vld [vmem:[%s4018 + $0xb0] sm:$0x1]
      %v4064 = vld [vmem:[%s4018 + $0xb4] sm:$0xf]
      %v4065 = vld [vmem:[%s4018 + $0xb8] sm:$0xf]
      %v4066 = vld [vmem:[%s4018 + $0xbc] sm:$0x1]
      %vm4067 = vsmask.f32 3328
      %vm4068 = vsmask.f32 7440
      %vm4069 = vmor %vm4067, %vm4068
      %v4071 = vshrl.u32 %v4019, 16
      %v4073 = vrot.slane %v4071, 4
      %v4074 = vshll.u32 %v4019, 16
      %v4076 = vrot.slane %v4074, 5
      %v4077 = vor.u32 %v4073, %v4076
      %v4078 = vrot.slane %v4077, 4
      %v4080 = vshll.u32 %v4020, 16
      %v4082 = vrot.slane %v4080, 5
      %v4083 = vsel %vm4069, %v4078, %v4082
      %v4084 = vshrl.u32 %v4020, 16
      %v4086 = vrot.slane %v4084, 4
      %v4087 = vor.u32 %v4086, %v4082
      %v4088 = vrot.slane %v4087, 4
      %v4090 = vshll.u32 %v4021, 16
      %v4092 = vrot.slane %v4090, 5
      %v4093 = vsel %vm4069, %v4088, %v4092
      %v4095 = vshrl.u32 %v4022, 16
      %v4097 = vrot.slane %v4095, 4
      %v4098 = vshll.u32 %v4022, 16
      %v4100 = vrot.slane %v4098, 5
      %v4101 = vor.u32 %v4097, %v4100
      %v4102 = vrot.slane %v4101, 4
      %v4104 = vshll.u32 %v4023, 16
      %v4106 = vrot.slane %v4104, 5
      %v4107 = vsel %vm4069, %v4102, %v4106
      %v4108 = vshrl.u32 %v4023, 16
      %v4110 = vrot.slane %v4108, 4
      %v4111 = vor.u32 %v4110, %v4106
      %v4112 = vrot.slane %v4111, 4
      %v4114 = vshll.u32 %v4024, 16
      %v4116 = vrot.slane %v4114, 5
      %v4117 = vsel %vm4069, %v4112, %v4116
      %v4119 = vshrl.u32 %v4025, 16
      %v4121 = vrot.slane %v4119, 4
      %v4122 = vshll.u32 %v4025, 16
      %v4124 = vrot.slane %v4122, 5
      %v4125 = vor.u32 %v4121, %v4124
      %v4126 = vrot.slane %v4125, 4
      %v4128 = vshll.u32 %v4026, 16
      %v4130 = vrot.slane %v4128, 5
      %v4131 = vsel %vm4069, %v4126, %v4130
      %v4132 = vshrl.u32 %v4026, 16
      %v4134 = vrot.slane %v4132, 4
      %v4135 = vor.u32 %v4134, %v4130
      %v4136 = vrot.slane %v4135, 4
      %v4138 = vshll.u32 %v4027, 16
      %v4140 = vrot.slane %v4138, 5
      %v4141 = vsel %vm4069, %v4136, %v4140
      %v4143 = vshrl.u32 %v4028, 16
      %v4145 = vrot.slane %v4143, 4
      %v4146 = vshll.u32 %v4028, 16
      %v4148 = vrot.slane %v4146, 5
      %v4149 = vor.u32 %v4145, %v4148
      %v4150 = vrot.slane %v4149, 4
      %v4152 = vshll.u32 %v4029, 16
      %v4154 = vrot.slane %v4152, 5
      %v4155 = vsel %vm4069, %v4150, %v4154
      %v4156 = vshrl.u32 %v4029, 16
      %v4158 = vrot.slane %v4156, 4
      %v4159 = vor.u32 %v4158, %v4154
      %v4160 = vrot.slane %v4159, 4
      %v4162 = vshll.u32 %v4030, 16
      %v4164 = vrot.slane %v4162, 5
      %v4165 = vsel %vm4069, %v4160, %v4164
      %v4167 = vshrl.u32 %v4031, 16
      %v4169 = vrot.slane %v4167, 4
      %v4170 = vshll.u32 %v4031, 16
      %v4172 = vrot.slane %v4170, 5
      %v4173 = vor.u32 %v4169, %v4172
      %v4174 = vrot.slane %v4173, 4
      %v4176 = vshll.u32 %v4032, 16
      %v4178 = vrot.slane %v4176, 5
      %v4179 = vsel %vm4069, %v4174, %v4178
      %v4180 = vshrl.u32 %v4032, 16
      %v4182 = vrot.slane %v4180, 4
      %v4183 = vor.u32 %v4182, %v4178
      %v4184 = vrot.slane %v4183, 4
      %v4186 = vshll.u32 %v4033, 16
      %v4188 = vrot.slane %v4186, 5
      %v4189 = vsel %vm4069, %v4184, %v4188
      %v4191 = vshrl.u32 %v4034, 16
      %v4193 = vrot.slane %v4191, 4
      %v4194 = vshll.u32 %v4034, 16
      %v4196 = vrot.slane %v4194, 5
      %v4197 = vor.u32 %v4193, %v4196
      %v4198 = vrot.slane %v4197, 4
      %v4200 = vshll.u32 %v4035, 16
      %v4202 = vrot.slane %v4200, 5
      %v4203 = vsel %vm4069, %v4198, %v4202
      %v4204 = vshrl.u32 %v4035, 16
      %v4206 = vrot.slane %v4204, 4
      %v4207 = vor.u32 %v4206, %v4202
      %v4208 = vrot.slane %v4207, 4
      %v4210 = vshll.u32 %v4036, 16
      %v4212 = vrot.slane %v4210, 5
      %v4213 = vsel %vm4069, %v4208, %v4212
      %v4215 = vshrl.u32 %v4037, 16
      %v4217 = vrot.slane %v4215, 4
      %v4218 = vshll.u32 %v4037, 16
      %v4220 = vrot.slane %v4218, 5
      %v4221 = vor.u32 %v4217, %v4220
      %v4222 = vrot.slane %v4221, 4
      %v4224 = vshll.u32 %v4038, 16
      %v4226 = vrot.slane %v4224, 5
      %v4227 = vsel %vm4069, %v4222, %v4226
      %v4228 = vshrl.u32 %v4038, 16
      %v4230 = vrot.slane %v4228, 4
      %v4231 = vor.u32 %v4230, %v4226
      %v4232 = vrot.slane %v4231, 4
      %v4234 = vshll.u32 %v4039, 16
      %v4236 = vrot.slane %v4234, 5
      %v4237 = vsel %vm4069, %v4232, %v4236
      %v4239 = vshrl.u32 %v4040, 16
      %v4241 = vrot.slane %v4239, 4
      %v4242 = vshll.u32 %v4040, 16
      %v4244 = vrot.slane %v4242, 5
      %v4245 = vor.u32 %v4241, %v4244
      %v4246 = vrot.slane %v4245, 4
      %v4248 = vshll.u32 %v4041, 16
      %v4250 = vrot.slane %v4248, 5
      %v4251 = vsel %vm4069, %v4246, %v4250
      %v4252 = vshrl.u32 %v4041, 16
      %v4254 = vrot.slane %v4252, 4
      %v4255 = vor.u32 %v4254, %v4250
      %v4256 = vrot.slane %v4255, 4
      %v4258 = vshll.u32 %v4042, 16
      %v4260 = vrot.slane %v4258, 5
      %v4261 = vsel %vm4069, %v4256, %v4260
      %v4263 = vshrl.u32 %v4043, 16
      %v4265 = vrot.slane %v4263, 4
      %v4266 = vshll.u32 %v4043, 16
      %v4268 = vrot.slane %v4266, 5
      %v4269 = vor.u32 %v4265, %v4268
      %v4270 = vrot.slane %v4269, 4
      %v4272 = vshll.u32 %v4044, 16
      %v4274 = vrot.slane %v4272, 5
      %v4275 = vsel %vm4069, %v4270, %v4274
      %v4276 = vshrl.u32 %v4044, 16
      %v4278 = vrot.slane %v4276, 4
      %v4279 = vor.u32 %v4278, %v4274
      %v4280 = vrot.slane %v4279, 4
      %v4282 = vshll.u32 %v4045, 16
      %v4284 = vrot.slane %v4282, 5
      %v4285 = vsel %vm4069, %v4280, %v4284
      %v4287 = vshrl.u32 %v4046, 16
      %v4289 = vrot.slane %v4287, 4
      %v4290 = vshll.u32 %v4046, 16
      %v4292 = vrot.slane %v4290, 5
      %v4293 = vor.u32 %v4289, %v4292
      %v4294 = vrot.slane %v4293, 4
      %v4296 = vshll.u32 %v4047, 16
      %v4298 = vrot.slane %v4296, 5
      %v4299 = vsel %vm4069, %v4294, %v4298
      %v4300 = vshrl.u32 %v4047, 16
      %v4302 = vrot.slane %v4300, 4
      %v4303 = vor.u32 %v4302, %v4298
      %v4304 = vrot.slane %v4303, 4
      %v4306 = vshll.u32 %v4048, 16
      %v4308 = vrot.slane %v4306, 5
      %v4309 = vsel %vm4069, %v4304, %v4308
      %v4311 = vshrl.u32 %v4049, 16
      %v4313 = vrot.slane %v4311, 4
      %v4314 = vshll.u32 %v4049, 16
      %v4316 = vrot.slane %v4314, 5
      %v4317 = vor.u32 %v4313, %v4316
      %v4318 = vrot.slane %v4317, 4
      %v4320 = vshll.u32 %v4050, 16
      %v4322 = vrot.slane %v4320, 5
      %v4323 = vsel %vm4069, %v4318, %v4322
      %v4324 = vshrl.u32 %v4050, 16
      %v4326 = vrot.slane %v4324, 4
      %v4327 = vor.u32 %v4326, %v4322
      %v4328 = vrot.slane %v4327, 4
      %v4330 = vshll.u32 %v4051, 16
      %v4332 = vrot.slane %v4330, 5
      %v4333 = vsel %vm4069, %v4328, %v4332
      %v4335 = vshrl.u32 %v4052, 16
      %v4337 = vrot.slane %v4335, 4
      %v4338 = vshll.u32 %v4052, 16
      %v4340 = vrot.slane %v4338, 5
      %v4341 = vor.u32 %v4337, %v4340
      %v4342 = vrot.slane %v4341, 4
      %v4344 = vshll.u32 %v4053, 16
      %v4346 = vrot.slane %v4344, 5
      %v4347 = vsel %vm4069, %v4342, %v4346
      %v4348 = vshrl.u32 %v4053, 16
      %v4350 = vrot.slane %v4348, 4
      %v4351 = vor.u32 %v4350, %v4346
      %v4352 = vrot.slane %v4351, 4
      %v4354 = vshll.u32 %v4054, 16
      %v4356 = vrot.slane %v4354, 5
      %v4357 = vsel %vm4069, %v4352, %v4356
      %v4359 = vshrl.u32 %v4055, 16
      %v4361 = vrot.slane %v4359, 4
      %v4362 = vshll.u32 %v4055, 16
      %v4364 = vrot.slane %v4362, 5
      %v4365 = vor.u32 %v4361, %v4364
      %v4366 = vrot.slane %v4365, 4
      %v4368 = vshll.u32 %v4056, 16
      %v4370 = vrot.slane %v4368, 5
      %v4371 = vsel %vm4069, %v4366, %v4370
      %v4372 = vshrl.u32 %v4056, 16
      %v4374 = vrot.slane %v4372, 4
      %v4375 = vor.u32 %v4374, %v4370
      %v4376 = vrot.slane %v4375, 4
      %v4378 = vshll.u32 %v4057, 16
      %v4380 = vrot.slane %v4378, 5
      %v4381 = vsel %vm4069, %v4376, %v4380
      %v4383 = vshrl.u32 %v4058, 16
      %v4385 = vrot.slane %v4383, 4
      %v4386 = vshll.u32 %v4058, 16
      %v4388 = vrot.slane %v4386, 5
      %v4389 = vor.u32 %v4385, %v4388
      %v4390 = vrot.slane %v4389, 4
      %v4392 = vshll.u32 %v4059, 16
      %v4394 = vrot.slane %v4392, 5
      %v4395 = vsel %vm4069, %v4390, %v4394
      %v4396 = vshrl.u32 %v4059, 16
      %v4398 = vrot.slane %v4396, 4
      %v4399 = vor.u32 %v4398, %v4394
      %v4400 = vrot.slane %v4399, 4
      %v4402 = vshll.u32 %v4060, 16
      %v4404 = vrot.slane %v4402, 5
      %v4405 = vsel %vm4069, %v4400, %v4404
      %v4407 = vshrl.u32 %v4061, 16
      %v4409 = vrot.slane %v4407, 4
      %v4410 = vshll.u32 %v4061, 16
      %v4412 = vrot.slane %v4410, 5
      %v4413 = vor.u32 %v4409, %v4412
      %v4414 = vrot.slane %v4413, 4
      %v4416 = vshll.u32 %v4062, 16
      %v4418 = vrot.slane %v4416, 5
      %v4419 = vsel %vm4069, %v4414, %v4418
      %v4420 = vshrl.u32 %v4062, 16
      %v4422 = vrot.slane %v4420, 4
      %v4423 = vor.u32 %v4422, %v4418
      %v4424 = vrot.slane %v4423, 4
      %v4426 = vshll.u32 %v4063, 16
      %v4428 = vrot.slane %v4426, 5
      %v4429 = vsel %vm4069, %v4424, %v4428
      %v4431 = vshrl.u32 %v4064, 16
      %v4433 = vrot.slane %v4431, 4
      %v4434 = vshll.u32 %v4064, 16
      %v4436 = vrot.slane %v4434, 5
      %v4437 = vor.u32 %v4433, %v4436
      %v4438 = vrot.slane %v4437, 4
      %v4440 = vshll.u32 %v4065, 16
      %v4442 = vrot.slane %v4440, 5
      %v4443 = vsel %vm4069, %v4438, %v4442
      %v4444 = vshrl.u32 %v4065, 16
      %v4446 = vrot.slane %v4444, 4
      %v4447 = vor.u32 %v4446, %v4442
      %v4448 = vrot.slane %v4447, 4
      %v4450 = vshll.u32 %v4066, 16
      %v4452 = vrot.slane %v4450, 5
      %v4453 = vsel %vm4069, %v4448, %v4452
      %s4454 = scalar_lea.vmem %s1, 36
      %v4455 = vld [vmem:[%s4454] sm:$0xf]
      %v4456 = vunpack.c.l.b16 %v4083
      %v4457 = vunpack.c.l.b16 %v4093
      %v4458 = vunpack.c.l.b16 %v4107
      %v4459 = vunpack.c.l.b16 %v4117
      %v4460 = vunpack.c.l.b16 %v4131
      %v4461 = vunpack.c.l.b16 %v4141
      %v4462 = vunpack.c.l.b16 %v4155
      %v4463 = vunpack.c.l.b16 %v4165
      %v4464 = vunpack.c.l.b16 %v4179
      %v4465 = vunpack.c.l.b16 %v4189
      %v4466 = vunpack.c.l.b16 %v4203
      %v4467 = vunpack.c.l.b16 %v4213
      %v4468 = vunpack.c.l.b16 %v4227
      %v4469 = vunpack.c.l.b16 %v4237
      %v4470 = vunpack.c.l.b16 %v4251
      %v4471 = vunpack.c.l.b16 %v4261
      %v4472 = vunpack.c.l.b16 %v4275
      %v4473 = vunpack.c.l.b16 %v4285
      %v4474 = vunpack.c.l.b16 %v4299
      %v4475 = vunpack.c.l.b16 %v4309
      %v4476 = vunpack.c.l.b16 %v4323
      %v4477 = vunpack.c.l.b16 %v4333
      %v4478 = vunpack.c.l.b16 %v4347
      %v4479 = vunpack.c.l.b16 %v4357
      %v4480 = vunpack.c.l.b16 %v4371
      %v4481 = vunpack.c.l.b16 %v4381
      %v4482 = vunpack.c.l.b16 %v4395
      %v4483 = vunpack.c.l.b16 %v4405
      %v4484 = vunpack.c.l.b16 %v4419
      %v4485 = vunpack.c.l.b16 %v4429
      %v4486 = vunpack.c.l.b16 %v4443
      %v4487 = vunpack.c.l.b16 %v4453
      %v4488 = vpack.c.b16 %v4457, %v4456
      %v4489 = vpack.c.b16 %v4459, %v4458
      %v4490 = vpack.c.b16 %v4461, %v4460
      %v4491 = vpack.c.b16 %v4463, %v4462
      %v4492 = vpack.c.b16 %v4465, %v4464
      %v4493 = vpack.c.b16 %v4467, %v4466
      %v4494 = vpack.c.b16 %v4469, %v4468
      %v4495 = vpack.c.b16 %v4471, %v4470
      %v4496 = vpack.c.b16 %v4473, %v4472
      %v4497 = vpack.c.b16 %v4475, %v4474
      %v4498 = vpack.c.b16 %v4477, %v4476
      %v4499 = vpack.c.b16 %v4479, %v4478
      %v4500 = vpack.c.b16 %v4481, %v4480
      %v4501 = vpack.c.b16 %v4483, %v4482
      %v4502 = vpack.c.b16 %v4485, %v4484
      %v4503 = vpack.c.b16 %v4487, %v4486
      %v4505 = vsel %vm466, %v4455, 0
      %v4508 = vsel %vm466, %v4488, 0
      %v4511 = vsel %vm466, %v4489, 0
      %v4514 = vsel %vm466, %v4490, 0
      %v4517 = vsel %vm466, %v4491, 0
      %v4520 = vsel %vm466, %v4492, 0
      %v4523 = vsel %vm466, %v4493, 0
      %v4526 = vsel %vm466, %v4494, 0
      %v4529 = vsel %vm466, %v4495, 0
      %v4532 = vsel %vm466, %v4496, 0
      %v4535 = vsel %vm466, %v4497, 0
      %v4538 = vsel %vm466, %v4498, 0
      %v4541 = vsel %vm466, %v4499, 0
      %v4544 = vsel %vm466, %v4500, 0
      %v4547 = vsel %vm466, %v4501, 0
      %v4550 = vsel %vm466, %v4502, 0
      %v4553 = vsel %vm466, %v4503, 0
      %4555 = vmatprep.subr.bf16.mxu0 0
      %4556 = vmatpush1.bf16.xpose.msra.mxu0 %v4508
      %4557 = vmatprep.subr.bf16.mxu0 0
      %4558 = vmatpush1.bf16.xpose.msra.mxu0 %v4511
      %4559 = vmatprep.subr.bf16.mxu0 0
      %4560 = vmatpush1.bf16.xpose.msra.mxu0 %v4514
      %4561 = vmatprep.subr.bf16.mxu0 0
      %4562 = vmatpush1.bf16.xpose.msra.mxu0 %v4517
      %4563 = vmatprep.subr.bf16.mxu0 0
      %4564 = vmatpush1.bf16.xpose.msra.mxu0 %v4520
      %4565 = vmatprep.subr.bf16.mxu0 0
      %4566 = vmatpush1.bf16.xpose.msra.mxu0 %v4523
      %4567 = vmatprep.subr.bf16.mxu0 0
      %4568 = vmatpush1.bf16.xpose.msra.mxu0 %v4526
      %4569 = vmatprep.subr.bf16.mxu0 0
      %4570 = vmatpush1.bf16.xpose.msra.mxu0 %v4529
      %4571 = vmatprep.subr.bf16.mxu0 0
      %4572 = vmatpush1.bf16.xpose.msra.mxu0 %v4532
      %4573 = vmatprep.subr.bf16.mxu0 0
      %4574 = vmatpush1.bf16.xpose.msra.mxu0 %v4535
      %4575 = vmatprep.subr.bf16.mxu0 0
      %4576 = vmatpush1.bf16.xpose.msra.mxu0 %v4538
      %4577 = vmatprep.subr.bf16.mxu0 0
      %4578 = vmatpush1.bf16.xpose.msra.mxu0 %v4541
      %4579 = vmatprep.subr.bf16.mxu0 0
      %4580 = vmatpush1.bf16.xpose.msra.mxu0 %v4544
      %4581 = vmatprep.subr.bf16.mxu0 0
      %4582 = vmatpush1.bf16.xpose.msra.mxu0 %v4547
      %4583 = vmatprep.subr.bf16.mxu0 0
      %4584 = vmatpush1.bf16.xpose.msra.mxu0 %v4550
      %4585 = vmatprep.subr.bf16.mxu0 0
      %4586 = vmatpush1.bf16.xpose.msra.mxu0 %v4553
      %4587 = vmatprep.mubr.bf16.mxu0 0
      %4588 = vmatmul.mubr.bf16.gmra.mrb[0].mxu0 %v4505
      %v4589 = vpop.f32.mrb[0].mxu0
      %v4590 = vadd.f32 0.0, %v4589
      %v4591 = vpop.f32.mrb[0].mxu0
      %v4592 = vadd.f32 0.0, %v4591
      %v4593 = vpop.f32.mrb[0].mxu0
      %v4594 = vpop.f32.mrb[0].mxu0
      %4595 = vdwg.mxu0
      %v4596 = vadd.f32 %v4013, %v4590
      %v4597 = vadd.f32 %v4014, %v4592
      %v4598 = vld [vmem:[%s4018] sm:$0xe]
      %v4599 = vld [vmem:[%s4018 + $0x8] sm:$0x3]
      %v4600 = vld [vmem:[%s4018 + $0xc] sm:$0xe]
      %v4601 = vld [vmem:[%s4018 + $0x14] sm:$0x3]
      %v4602 = vld [vmem:[%s4018 + $0x18] sm:$0xe]
      %v4603 = vld [vmem:[%s4018 + $0x20] sm:$0x3]
      %v4604 = vld [vmem:[%s4018 + $0x24] sm:$0xe]
      %v4605 = vld [vmem:[%s4018 + $0x2c] sm:$0x3]
      %v4606 = vld [vmem:[%s4018 + $0x30] sm:$0xe]
      %v4607 = vld [vmem:[%s4018 + $0x38] sm:$0x3]
      %v4608 = vld [vmem:[%s4018 + $0x3c] sm:$0xe]
      %v4609 = vld [vmem:[%s4018 + $0x44] sm:$0x3]
      %v4610 = vld [vmem:[%s4018 + $0x48] sm:$0xe]
      %v4611 = vld [vmem:[%s4018 + $0x50] sm:$0x3]
      %v4612 = vld [vmem:[%s4018 + $0x54] sm:$0xe]
      %v4613 = vld [vmem:[%s4018 + $0x5c] sm:$0x3]
      %v4614 = vld [vmem:[%s4018 + $0x60] sm:$0xe]
      %v4615 = vld [vmem:[%s4018 + $0x68] sm:$0x3]
      %v4616 = vld [vmem:[%s4018 + $0x6c] sm:$0xe]
      %v4617 = vld [vmem:[%s4018 + $0x74] sm:$0x3]
      %v4618 = vld [vmem:[%s4018 + $0x78] sm:$0xe]
      %v4619 = vld [vmem:[%s4018 + $0x80] sm:$0x3]
      %v4620 = vld [vmem:[%s4018 + $0x84] sm:$0xe]
      %v4621 = vld [vmem:[%s4018 + $0x8c] sm:$0x3]
      %v4622 = vld [vmem:[%s4018 + $0x90] sm:$0xe]
      %v4623 = vld [vmem:[%s4018 + $0x98] sm:$0x3]
      %v4624 = vld [vmem:[%s4018 + $0x9c] sm:$0xe]
      %v4625 = vld [vmem:[%s4018 + $0xa4] sm:$0x3]
      %v4626 = vld [vmem:[%s4018 + $0xa8] sm:$0xe]
      %v4627 = vld [vmem:[%s4018 + $0xb0] sm:$0x3]
      %v4628 = vld [vmem:[%s4018 + $0xb4] sm:$0xe]
      %v4629 = vld [vmem:[%s4018 + $0xbc] sm:$0x3]
      %v4631 = vshrl.u32 %v4598, 16
      %v4633 = vrot.slane %v4631, 5
      %v4634 = vshll.u32 %v4598, 16
      %v4636 = vrot.slane %v4634, 6
      %v4637 = vor.u32 %v4633, %v4636
      %v4638 = vrot.slane %v4637, 4
      %v4639 = vrot.slane %v4084, 5
      %v4640 = vrot.slane %v4080, 6
      %v4641 = vor.u32 %v4639, %v4640
      %v4642 = vsel %vm579, %v4638, %v4641
      %v4643 = vrot.slane %v4641, 4
      %v4645 = vshrl.u32 %v4599, 16
      %v4647 = vrot.slane %v4645, 5
      %v4648 = vshll.u32 %v4599, 16
      %v4650 = vrot.slane %v4648, 6
      %v4651 = vor.u32 %v4647, %v4650
      %v4652 = vsel %vm579, %v4643, %v4651
      %v4654 = vshrl.u32 %v4600, 16
      %v4656 = vrot.slane %v4654, 5
      %v4657 = vshll.u32 %v4600, 16
      %v4659 = vrot.slane %v4657, 6
      %v4660 = vor.u32 %v4656, %v4659
      %v4661 = vrot.slane %v4660, 4
      %v4662 = vrot.slane %v4108, 5
      %v4663 = vrot.slane %v4104, 6
      %v4664 = vor.u32 %v4662, %v4663
      %v4665 = vsel %vm579, %v4661, %v4664
      %v4666 = vrot.slane %v4664, 4
      %v4668 = vshrl.u32 %v4601, 16
      %v4670 = vrot.slane %v4668, 5
      %v4671 = vshll.u32 %v4601, 16
      %v4673 = vrot.slane %v4671, 6
      %v4674 = vor.u32 %v4670, %v4673
      %v4675 = vsel %vm579, %v4666, %v4674
      %v4677 = vshrl.u32 %v4602, 16
      %v4679 = vrot.slane %v4677, 5
      %v4680 = vshll.u32 %v4602, 16
      %v4682 = vrot.slane %v4680, 6
      %v4683 = vor.u32 %v4679, %v4682
      %v4684 = vrot.slane %v4683, 4
      %v4685 = vrot.slane %v4132, 5
      %v4686 = vrot.slane %v4128, 6
      %v4687 = vor.u32 %v4685, %v4686
      %v4688 = vsel %vm579, %v4684, %v4687
      %v4689 = vrot.slane %v4687, 4
      %v4691 = vshrl.u32 %v4603, 16
      %v4693 = vrot.slane %v4691, 5
      %v4694 = vshll.u32 %v4603, 16
      %v4696 = vrot.slane %v4694, 6
      %v4697 = vor.u32 %v4693, %v4696
      %v4698 = vsel %vm579, %v4689, %v4697
      %v4700 = vshrl.u32 %v4604, 16
      %v4702 = vrot.slane %v4700, 5
      %v4703 = vshll.u32 %v4604, 16
      %v4705 = vrot.slane %v4703, 6
      %v4706 = vor.u32 %v4702, %v4705
      %v4707 = vrot.slane %v4706, 4
      %v4708 = vrot.slane %v4156, 5
      %v4709 = vrot.slane %v4152, 6
      %v4710 = vor.u32 %v4708, %v4709
      %v4711 = vsel %vm579, %v4707, %v4710
      %v4712 = vrot.slane %v4710, 4
      %v4714 = vshrl.u32 %v4605, 16
      %v4716 = vrot.slane %v4714, 5
      %v4717 = vshll.u32 %v4605, 16
      %v4719 = vrot.slane %v4717, 6
      %v4720 = vor.u32 %v4716, %v4719
      %v4721 = vsel %vm579, %v4712, %v4720
      %v4723 = vshrl.u32 %v4606, 16
      %v4725 = vrot.slane %v4723, 5
      %v4726 = vshll.u32 %v4606, 16
      %v4728 = vrot.slane %v4726, 6
      %v4729 = vor.u32 %v4725, %v4728
      %v4730 = vrot.slane %v4729, 4
      %v4731 = vrot.slane %v4180, 5
      %v4732 = vrot.slane %v4176, 6
      %v4733 = vor.u32 %v4731, %v4732
      %v4734 = vsel %vm579, %v4730, %v4733
      %v4735 = vrot.slane %v4733, 4
      %v4737 = vshrl.u32 %v4607, 16
      %v4739 = vrot.slane %v4737, 5
      %v4740 = vshll.u32 %v4607, 16
      %v4742 = vrot.slane %v4740, 6
      %v4743 = vor.u32 %v4739, %v4742
      %v4744 = vsel %vm579, %v4735, %v4743
      %v4746 = vshrl.u32 %v4608, 16
      %v4748 = vrot.slane %v4746, 5
      %v4749 = vshll.u32 %v4608, 16
      %v4751 = vrot.slane %v4749, 6
      %v4752 = vor.u32 %v4748, %v4751
      %v4753 = vrot.slane %v4752, 4
      %v4754 = vrot.slane %v4204, 5
      %v4755 = vrot.slane %v4200, 6
      %v4756 = vor.u32 %v4754, %v4755
      %v4757 = vsel %vm579, %v4753, %v4756
      %v4758 = vrot.slane %v4756, 4
      %v4760 = vshrl.u32 %v4609, 16
      %v4762 = vrot.slane %v4760, 5
      %v4763 = vshll.u32 %v4609, 16
      %v4765 = vrot.slane %v4763, 6
      %v4766 = vor.u32 %v4762, %v4765
      %v4767 = vsel %vm579, %v4758, %v4766
      %v4769 = vshrl.u32 %v4610, 16
      %v4771 = vrot.slane %v4769, 5
      %v4772 = vshll.u32 %v4610, 16
      %v4774 = vrot.slane %v4772, 6
      %v4775 = vor.u32 %v4771, %v4774
      %v4776 = vrot.slane %v4775, 4
      %v4777 = vrot.slane %v4228, 5
      %v4778 = vrot.slane %v4224, 6
      %v4779 = vor.u32 %v4777, %v4778
      %v4780 = vsel %vm579, %v4776, %v4779
      %v4781 = vrot.slane %v4779, 4
      %v4783 = vshrl.u32 %v4611, 16
      %v4785 = vrot.slane %v4783, 5
      %v4786 = vshll.u32 %v4611, 16
      %v4788 = vrot.slane %v4786, 6
      %v4789 = vor.u32 %v4785, %v4788
      %v4790 = vsel %vm579, %v4781, %v4789
      %v4792 = vshrl.u32 %v4612, 16
      %v4794 = vrot.slane %v4792, 5
      %v4795 = vshll.u32 %v4612, 16
      %v4797 = vrot.slane %v4795, 6
      %v4798 = vor.u32 %v4794, %v4797
      %v4799 = vrot.slane %v4798, 4
      %v4800 = vrot.slane %v4252, 5
      %v4801 = vrot.slane %v4248, 6
      %v4802 = vor.u32 %v4800, %v4801
      %v4803 = vsel %vm579, %v4799, %v4802
      %v4804 = vrot.slane %v4802, 4
      %v4806 = vshrl.u32 %v4613, 16
      %v4808 = vrot.slane %v4806, 5
      %v4809 = vshll.u32 %v4613, 16
      %v4811 = vrot.slane %v4809, 6
      %v4812 = vor.u32 %v4808, %v4811
      %v4813 = vsel %vm579, %v4804, %v4812
      %v4815 = vshrl.u32 %v4614, 16
      %v4817 = vrot.slane %v4815, 5
      %v4818 = vshll.u32 %v4614, 16
      %v4820 = vrot.slane %v4818, 6
      %v4821 = vor.u32 %v4817, %v4820
      %v4822 = vrot.slane %v4821, 4
      %v4823 = vrot.slane %v4276, 5
      %v4824 = vrot.slane %v4272, 6
      %v4825 = vor.u32 %v4823, %v4824
      %v4826 = vsel %vm579, %v4822, %v4825
      %v4827 = vrot.slane %v4825, 4
      %v4829 = vshrl.u32 %v4615, 16
      %v4831 = vrot.slane %v4829, 5
      %v4832 = vshll.u32 %v4615, 16
      %v4834 = vrot.slane %v4832, 6
      %v4835 = vor.u32 %v4831, %v4834
      %v4836 = vsel %vm579, %v4827, %v4835
      %v4838 = vshrl.u32 %v4616, 16
      %v4840 = vrot.slane %v4838, 5
      %v4841 = vshll.u32 %v4616, 16
      %v4843 = vrot.slane %v4841, 6
      %v4844 = vor.u32 %v4840, %v4843
      %v4845 = vrot.slane %v4844, 4
      %v4846 = vrot.slane %v4300, 5
      %v4847 = vrot.slane %v4296, 6
      %v4848 = vor.u32 %v4846, %v4847
      %v4849 = vsel %vm579, %v4845, %v4848
      %v4850 = vrot.slane %v4848, 4
      %v4852 = vshrl.u32 %v4617, 16
      %v4854 = vrot.slane %v4852, 5
      %v4855 = vshll.u32 %v4617, 16
      %v4857 = vrot.slane %v4855, 6
      %v4858 = vor.u32 %v4854, %v4857
      %v4859 = vsel %vm579, %v4850, %v4858
      %v4861 = vshrl.u32 %v4618, 16
      %v4863 = vrot.slane %v4861, 5
      %v4864 = vshll.u32 %v4618, 16
      %v4866 = vrot.slane %v4864, 6
      %v4867 = vor.u32 %v4863, %v4866
      %v4868 = vrot.slane %v4867, 4
      %v4869 = vrot.slane %v4324, 5
      %v4870 = vrot.slane %v4320, 6
      %v4871 = vor.u32 %v4869, %v4870
      %v4872 = vsel %vm579, %v4868, %v4871
      %v4873 = vrot.slane %v4871, 4
      %v4875 = vshrl.u32 %v4619, 16
      %v4877 = vrot.slane %v4875, 5
      %v4878 = vshll.u32 %v4619, 16
      %v4880 = vrot.slane %v4878, 6
      %v4881 = vor.u32 %v4877, %v4880
      %v4882 = vsel %vm579, %v4873, %v4881
      %v4884 = vshrl.u32 %v4620, 16
      %v4886 = vrot.slane %v4884, 5
      %v4887 = vshll.u32 %v4620, 16
      %v4889 = vrot.slane %v4887, 6
      %v4890 = vor.u32 %v4886, %v4889
      %v4891 = vrot.slane %v4890, 4
      %v4892 = vrot.slane %v4348, 5
      %v4893 = vrot.slane %v4344, 6
      %v4894 = vor.u32 %v4892, %v4893
      %v4895 = vsel %vm579, %v4891, %v4894
      %v4896 = vrot.slane %v4894, 4
      %v4898 = vshrl.u32 %v4621, 16
      %v4900 = vrot.slane %v4898, 5
      %v4901 = vshll.u32 %v4621, 16
      %v4903 = vrot.slane %v4901, 6
      %v4904 = vor.u32 %v4900, %v4903
      %v4905 = vsel %vm579, %v4896, %v4904
      %v4907 = vshrl.u32 %v4622, 16
      %v4909 = vrot.slane %v4907, 5
      %v4910 = vshll.u32 %v4622, 16
      %v4912 = vrot.slane %v4910, 6
      %v4913 = vor.u32 %v4909, %v4912
      %v4914 = vrot.slane %v4913, 4
      %v4915 = vrot.slane %v4372, 5
      %v4916 = vrot.slane %v4368, 6
      %v4917 = vor.u32 %v4915, %v4916
      %v4918 = vsel %vm579, %v4914, %v4917
      %v4919 = vrot.slane %v4917, 4
      %v4921 = vshrl.u32 %v4623, 16
      %v4923 = vrot.slane %v4921, 5
      %v4924 = vshll.u32 %v4623, 16
      %v4926 = vrot.slane %v4924, 6
      %v4927 = vor.u32 %v4923, %v4926
      %v4928 = vsel %vm579, %v4919, %v4927
      %v4930 = vshrl.u32 %v4624, 16
      %v4932 = vrot.slane %v4930, 5
      %v4933 = vshll.u32 %v4624, 16
      %v4935 = vrot.slane %v4933, 6
      %v4936 = vor.u32 %v4932, %v4935
      %v4937 = vrot.slane %v4936, 4
      %v4938 = vrot.slane %v4396, 5
      %v4939 = vrot.slane %v4392, 6
      %v4940 = vor.u32 %v4938, %v4939
      %v4941 = vsel %vm579, %v4937, %v4940
      %v4942 = vrot.slane %v4940, 4
      %v4944 = vshrl.u32 %v4625, 16
      %v4946 = vrot.slane %v4944, 5
      %v4947 = vshll.u32 %v4625, 16
      %v4949 = vrot.slane %v4947, 6
      %v4950 = vor.u32 %v4946, %v4949
      %v4951 = vsel %vm579, %v4942, %v4950
      %v4953 = vshrl.u32 %v4626, 16
      %v4955 = vrot.slane %v4953, 5
      %v4956 = vshll.u32 %v4626, 16
      %v4958 = vrot.slane %v4956, 6
      %v4959 = vor.u32 %v4955, %v4958
      %v4960 = vrot.slane %v4959, 4
      %v4961 = vrot.slane %v4420, 5
      %v4962 = vrot.slane %v4416, 6
      %v4963 = vor.u32 %v4961, %v4962
      %v4964 = vsel %vm579, %v4960, %v4963
      %v4965 = vrot.slane %v4963, 4
      %v4967 = vshrl.u32 %v4627, 16
      %v4969 = vrot.slane %v4967, 5
      %v4970 = vshll.u32 %v4627, 16
      %v4972 = vrot.slane %v4970, 6
      %v4973 = vor.u32 %v4969, %v4972
      %v4974 = vsel %vm579, %v4965, %v4973
      %v4976 = vshrl.u32 %v4628, 16
      %v4978 = vrot.slane %v4976, 5
      %v4979 = vshll.u32 %v4628, 16
      %v4981 = vrot.slane %v4979, 6
      %v4982 = vor.u32 %v4978, %v4981
      %v4983 = vrot.slane %v4982, 4
      %v4984 = vrot.slane %v4444, 5
      %v4985 = vrot.slane %v4440, 6
      %v4986 = vor.u32 %v4984, %v4985
      %v4987 = vsel %vm579, %v4983, %v4986
      %v4988 = vrot.slane %v4986, 4
      %v4990 = vshrl.u32 %v4629, 16
      %v4992 = vrot.slane %v4990, 5
      %v4993 = vshll.u32 %v4629, 16
      %v4995 = vrot.slane %v4993, 6
      %v4996 = vor.u32 %v4992, %v4995
      %v4997 = vsel %vm579, %v4988, %v4996
      %s4998 = scalar_lea.vmem %s1, 40
      %v4999 = vld [vmem:[%s4998] sm:$0xf]
      %v5000 = vunpack.c.l.b16 %v4642
      %v5001 = vunpack.c.l.b16 %v4652
      %v5002 = vunpack.c.l.b16 %v4665
      %v5003 = vunpack.c.l.b16 %v4675
      %v5004 = vunpack.c.l.b16 %v4688
      %v5005 = vunpack.c.l.b16 %v4698
      %v5006 = vunpack.c.l.b16 %v4711
      %v5007 = vunpack.c.l.b16 %v4721
      %v5008 = vunpack.c.l.b16 %v4734
      %v5009 = vunpack.c.l.b16 %v4744
      %v5010 = vunpack.c.l.b16 %v4757
      %v5011 = vunpack.c.l.b16 %v4767
      %v5012 = vunpack.c.l.b16 %v4780
      %v5013 = vunpack.c.l.b16 %v4790
      %v5014 = vunpack.c.l.b16 %v4803
      %v5015 = vunpack.c.l.b16 %v4813
      %v5016 = vunpack.c.l.b16 %v4826
      %v5017 = vunpack.c.l.b16 %v4836
      %v5018 = vunpack.c.l.b16 %v4849
      %v5019 = vunpack.c.l.b16 %v4859
      %v5020 = vunpack.c.l.b16 %v4872
      %v5021 = vunpack.c.l.b16 %v4882
      %v5022 = vunpack.c.l.b16 %v4895
      %v5023 = vunpack.c.l.b16 %v4905
      %v5024 = vunpack.c.l.b16 %v4918
      %v5025 = vunpack.c.l.b16 %v4928
      %v5026 = vunpack.c.l.b16 %v4941
      %v5027 = vunpack.c.l.b16 %v4951
      %v5028 = vunpack.c.l.b16 %v4964
      %v5029 = vunpack.c.l.b16 %v4974
      %v5030 = vunpack.c.l.b16 %v4987
      %v5031 = vunpack.c.l.b16 %v4997
      %v5032 = vpack.c.b16 %v5001, %v5000
      %v5033 = vpack.c.b16 %v5003, %v5002
      %v5034 = vpack.c.b16 %v5005, %v5004
      %v5035 = vpack.c.b16 %v5007, %v5006
      %v5036 = vpack.c.b16 %v5009, %v5008
      %v5037 = vpack.c.b16 %v5011, %v5010
      %v5038 = vpack.c.b16 %v5013, %v5012
      %v5039 = vpack.c.b16 %v5015, %v5014
      %v5040 = vpack.c.b16 %v5017, %v5016
      %v5041 = vpack.c.b16 %v5019, %v5018
      %v5042 = vpack.c.b16 %v5021, %v5020
      %v5043 = vpack.c.b16 %v5023, %v5022
      %v5044 = vpack.c.b16 %v5025, %v5024
      %v5045 = vpack.c.b16 %v5027, %v5026
      %v5046 = vpack.c.b16 %v5029, %v5028
      %v5047 = vpack.c.b16 %v5031, %v5030
      %v5049 = vsel %vm466, %v4999, 0
      %v5052 = vsel %vm466, %v5032, 0
      %v5055 = vsel %vm466, %v5033, 0
      %v5058 = vsel %vm466, %v5034, 0
      %v5061 = vsel %vm466, %v5035, 0
      %v5064 = vsel %vm466, %v5036, 0
      %v5067 = vsel %vm466, %v5037, 0
      %v5070 = vsel %vm466, %v5038, 0
      %v5073 = vsel %vm466, %v5039, 0
      %v5076 = vsel %vm466, %v5040, 0
      %v5079 = vsel %vm466, %v5041, 0
      %v5082 = vsel %vm466, %v5042, 0
      %v5085 = vsel %vm466, %v5043, 0
      %v5088 = vsel %vm466, %v5044, 0
      %v5091 = vsel %vm466, %v5045, 0
      %v5094 = vsel %vm466, %v5046, 0
      %v5097 = vsel %vm466, %v5047, 0
      %5099 = vmatprep.subr.bf16.mxu0 0
      %5100 = vmatpush1.bf16.xpose.msra.mxu0 %v5052
      %5101 = vmatprep.subr.bf16.mxu0 0
      %5102 = vmatpush1.bf16.xpose.msra.mxu0 %v5055
      %5103 = vmatprep.subr.bf16.mxu0 0
      %5104 = vmatpush1.bf16.xpose.msra.mxu0 %v5058
      %5105 = vmatprep.subr.bf16.mxu0 0
      %5106 = vmatpush1.bf16.xpose.msra.mxu0 %v5061
      %5107 = vmatprep.subr.bf16.mxu0 0
      %5108 = vmatpush1.bf16.xpose.msra.mxu0 %v5064
      %5109 = vmatprep.subr.bf16.mxu0 0
      %5110 = vmatpush1.bf16.xpose.msra.mxu0 %v5067
      %5111 = vmatprep.subr.bf16.mxu0 0
      %5112 = vmatpush1.bf16.xpose.msra.mxu0 %v5070
      %5113 = vmatprep.subr.bf16.mxu0 0
      %5114 = vmatpush1.bf16.xpose.msra.mxu0 %v5073
      %5115 = vmatprep.subr.bf16.mxu0 0
      %5116 = vmatpush1.bf16.xpose.msra.mxu0 %v5076
      %5117 = vmatprep.subr.bf16.mxu0 0
      %5118 = vmatpush1.bf16.xpose.msra.mxu0 %v5079
      %5119 = vmatprep.subr.bf16.mxu0 0
      %5120 = vmatpush1.bf16.xpose.msra.mxu0 %v5082
      %5121 = vmatprep.subr.bf16.mxu0 0
      %5122 = vmatpush1.bf16.xpose.msra.mxu0 %v5085
      %5123 = vmatprep.subr.bf16.mxu0 0
      %5124 = vmatpush1.bf16.xpose.msra.mxu0 %v5088
      %5125 = vmatprep.subr.bf16.mxu0 0
      %5126 = vmatpush1.bf16.xpose.msra.mxu0 %v5091
      %5127 = vmatprep.subr.bf16.mxu0 0
      %5128 = vmatpush1.bf16.xpose.msra.mxu0 %v5094
      %5129 = vmatprep.subr.bf16.mxu0 0
      %5130 = vmatpush1.bf16.xpose.msra.mxu0 %v5097
      %5131 = vmatprep.mubr.bf16.mxu0 0
      %5132 = vmatmul.mubr.bf16.gmra.mrb[0].mxu0 %v5049
      %v5133 = vpop.f32.mrb[0].mxu0
      %v5134 = vadd.f32 0.0, %v5133
      %v5135 = vpop.f32.mrb[0].mxu0
      %v5136 = vadd.f32 0.0, %v5135
      %v5137 = vpop.f32.mrb[0].mxu0
      %v5138 = vpop.f32.mrb[0].mxu0
      %5139 = vdwg.mxu0
      %v5140 = vadd.f32 %v4596, %v5134
      %v5141 = vadd.f32 %v4597, %v5136
      %v5142 = vld [vmem:[%s4018] sm:$0xc]
      %v5143 = vld [vmem:[%s4018 + $0x8] sm:$0x7]
      %v5144 = vld [vmem:[%s4018 + $0xc] sm:$0xc]
      %v5145 = vld [vmem:[%s4018 + $0x14] sm:$0x7]
      %v5146 = vld [vmem:[%s4018 + $0x18] sm:$0xc]
      %v5147 = vld [vmem:[%s4018 + $0x20] sm:$0x7]
      %v5148 = vld [vmem:[%s4018 + $0x24] sm:$0xc]
      %v5149 = vld [vmem:[%s4018 + $0x2c] sm:$0x7]
      %v5150 = vld [vmem:[%s4018 + $0x30] sm:$0xc]
      %v5151 = vld [vmem:[%s4018 + $0x38] sm:$0x7]
      %v5152 = vld [vmem:[%s4018 + $0x3c] sm:$0xc]
      %v5153 = vld [vmem:[%s4018 + $0x44] sm:$0x7]
      %v5154 = vld [vmem:[%s4018 + $0x48] sm:$0xc]
      %v5155 = vld [vmem:[%s4018 + $0x50] sm:$0x7]
      %v5156 = vld [vmem:[%s4018 + $0x54] sm:$0xc]
      %v5157 = vld [vmem:[%s4018 + $0x5c] sm:$0x7]
      %v5158 = vld [vmem:[%s4018 + $0x60] sm:$0xc]
      %v5159 = vld [vmem:[%s4018 + $0x68] sm:$0x7]
      %v5160 = vld [vmem:[%s4018 + $0x6c] sm:$0xc]
      %v5161 = vld [vmem:[%s4018 + $0x74] sm:$0x7]
      %v5162 = vld [vmem:[%s4018 + $0x78] sm:$0xc]
      %v5163 = vld [vmem:[%s4018 + $0x80] sm:$0x7]
      %v5164 = vld [vmem:[%s4018 + $0x84] sm:$0xc]
      %v5165 = vld [vmem:[%s4018 + $0x8c] sm:$0x7]
      %v5166 = vld [vmem:[%s4018 + $0x90] sm:$0xc]
      %v5167 = vld [vmem:[%s4018 + $0x98] sm:$0x7]
      %v5168 = vld [vmem:[%s4018 + $0x9c] sm:$0xc]
      %v5169 = vld [vmem:[%s4018 + $0xa4] sm:$0x7]
      %v5170 = vld [vmem:[%s4018 + $0xa8] sm:$0xc]
      %v5171 = vld [vmem:[%s4018 + $0xb0] sm:$0x7]
      %v5172 = vld [vmem:[%s4018 + $0xb4] sm:$0xc]
      %v5173 = vld [vmem:[%s4018 + $0xbc] sm:$0x7]
      %vm5174 = vsmask.f32 1280
      %vm5175 = vsmask.f32 5392
      %vm5176 = vmor %vm5174, %vm5175
      %v5178 = vshrl.u32 %v5142, 16
      %v5180 = vrot.slane %v5178, 6
      %v5181 = vshll.u32 %v5142, 16
      %v5183 = vrot.slane %v5181, 7
      %v5184 = vor.u32 %v5180, %v5183
      %v5185 = vrot.slane %v5184, 4
      %v5186 = vrot.slane %v4084, 6
      %v5187 = vrot.slane %v4080, 7
      %v5188 = vor.u32 %v5186, %v5187
      %v5189 = vsel %vm5176, %v5185, %v5188
      %v5190 = vrot.slane %v5188, 4
      %v5192 = vshrl.u32 %v5143, 16
      %v5194 = vrot.slane %v5192, 6
      %v5195 = vshll.u32 %v5143, 16
      %v5197 = vrot.slane %v5195, 7
      %v5198 = vor.u32 %v5194, %v5197
      %v5199 = vsel %vm5176, %v5190, %v5198
      %v5201 = vshrl.u32 %v5144, 16
      %v5203 = vrot.slane %v5201, 6
      %v5204 = vshll.u32 %v5144, 16
      %v5206 = vrot.slane %v5204, 7
      %v5207 = vor.u32 %v5203, %v5206
      %v5208 = vrot.slane %v5207, 4
      %v5209 = vrot.slane %v4108, 6
      %v5210 = vrot.slane %v4104, 7
      %v5211 = vor.u32 %v5209, %v5210
      %v5212 = vsel %vm5176, %v5208, %v5211
      %v5213 = vrot.slane %v5211, 4
      %v5215 = vshrl.u32 %v5145, 16
      %v5217 = vrot.slane %v5215, 6
      %v5218 = vshll.u32 %v5145, 16
      %v5220 = vrot.slane %v5218, 7
      %v5221 = vor.u32 %v5217, %v5220
      %v5222 = vsel %vm5176, %v5213, %v5221
      %v5224 = vshrl.u32 %v5146, 16
      %v5226 = vrot.slane %v5224, 6
      %v5227 = vshll.u32 %v5146, 16
      %v5229 = vrot.slane %v5227, 7
      %v5230 = vor.u32 %v5226, %v5229
      %v5231 = vrot.slane %v5230, 4
      %v5232 = vrot.slane %v4132, 6
      %v5233 = vrot.slane %v4128, 7
      %v5234 = vor.u32 %v5232, %v5233
      %v5235 = vsel %vm5176, %v5231, %v5234
      %v5236 = vrot.slane %v5234, 4
      %v5238 = vshrl.u32 %v5147, 16
      %v5240 = vrot.slane %v5238, 6
      %v5241 = vshll.u32 %v5147, 16
      %v5243 = vrot.slane %v5241, 7
      %v5244 = vor.u32 %v5240, %v5243
      %v5245 = vsel %vm5176, %v5236, %v5244
      %v5247 = vshrl.u32 %v5148, 16
      %v5249 = vrot.slane %v5247, 6
      %v5250 = vshll.u32 %v5148, 16
      %v5252 = vrot.slane %v5250, 7
      %v5253 = vor.u32 %v5249, %v5252
      %v5254 = vrot.slane %v5253, 4
      %v5255 = vrot.slane %v4156, 6
      %v5256 = vrot.slane %v4152, 7
      %v5257 = vor.u32 %v5255, %v5256
      %v5258 = vsel %vm5176, %v5254, %v5257
      %v5259 = vrot.slane %v5257, 4
      %v5261 = vshrl.u32 %v5149, 16
      %v5263 = vrot.slane %v5261, 6
      %v5264 = vshll.u32 %v5149, 16
      %v5266 = vrot.slane %v5264, 7
      %v5267 = vor.u32 %v5263, %v5266
      %v5268 = vsel %vm5176, %v5259, %v5267
      %v5270 = vshrl.u32 %v5150, 16
      %v5272 = vrot.slane %v5270, 6
      %v5273 = vshll.u32 %v5150, 16
      %v5275 = vrot.slane %v5273, 7
      %v5276 = vor.u32 %v5272, %v5275
      %v5277 = vrot.slane %v5276, 4
      %v5278 = vrot.slane %v4180, 6
      %v5279 = vrot.slane %v4176, 7
      %v5280 = vor.u32 %v5278, %v5279
      %v5281 = vsel %vm5176, %v5277, %v5280
      %v5282 = vrot.slane %v5280, 4
      %v5284 = vshrl.u32 %v5151, 16
      %v5286 = vrot.slane %v5284, 6
      %v5287 = vshll.u32 %v5151, 16
      %v5289 = vrot.slane %v5287, 7
      %v5290 = vor.u32 %v5286, %v5289
      %v5291 = vsel %vm5176, %v5282, %v5290
      %v5293 = vshrl.u32 %v5152, 16
      %v5295 = vrot.slane %v5293, 6
      %v5296 = vshll.u32 %v5152, 16
      %v5298 = vrot.slane %v5296, 7
      %v5299 = vor.u32 %v5295, %v5298
      %v5300 = vrot.slane %v5299, 4
      %v5301 = vrot.slane %v4204, 6
      %v5302 = vrot.slane %v4200, 7
      %v5303 = vor.u32 %v5301, %v5302
      %v5304 = vsel %vm5176, %v5300, %v5303
      %v5305 = vrot.slane %v5303, 4
      %v5307 = vshrl.u32 %v5153, 16
      %v5309 = vrot.slane %v5307, 6
      %v5310 = vshll.u32 %v5153, 16
      %v5312 = vrot.slane %v5310, 7
      %v5313 = vor.u32 %v5309, %v5312
      %v5314 = vsel %vm5176, %v5305, %v5313
      %v5316 = vshrl.u32 %v5154, 16
      %v5318 = vrot.slane %v5316, 6
      %v5319 = vshll.u32 %v5154, 16
      %v5321 = vrot.slane %v5319, 7
      %v5322 = vor.u32 %v5318, %v5321
      %v5323 = vrot.slane %v5322, 4
      %v5324 = vrot.slane %v4228, 6
      %v5325 = vrot.slane %v4224, 7
      %v5326 = vor.u32 %v5324, %v5325
      %v5327 = vsel %vm5176, %v5323, %v5326
      %v5328 = vrot.slane %v5326, 4
      %v5330 = vshrl.u32 %v5155, 16
      %v5332 = vrot.slane %v5330, 6
      %v5333 = vshll.u32 %v5155, 16
      %v5335 = vrot.slane %v5333, 7
      %v5336 = vor.u32 %v5332, %v5335
      %v5337 = vsel %vm5176, %v5328, %v5336
      %v5339 = vshrl.u32 %v5156, 16
      %v5341 = vrot.slane %v5339, 6
      %v5342 = vshll.u32 %v5156, 16
      %v5344 = vrot.slane %v5342, 7
      %v5345 = vor.u32 %v5341, %v5344
      %v5346 = vrot.slane %v5345, 4
      %v5347 = vrot.slane %v4252, 6
      %v5348 = vrot.slane %v4248, 7
      %v5349 = vor.u32 %v5347, %v5348
      %v5350 = vsel %vm5176, %v5346, %v5349
      %v5351 = vrot.slane %v5349, 4
      %v5353 = vshrl.u32 %v5157, 16
      %v5355 = vrot.slane %v5353, 6
      %v5356 = vshll.u32 %v5157, 16
      %v5358 = vrot.slane %v5356, 7
      %v5359 = vor.u32 %v5355, %v5358
      %v5360 = vsel %vm5176, %v5351, %v5359
      %v5362 = vshrl.u32 %v5158, 16
      %v5364 = vrot.slane %v5362, 6
      %v5365 = vshll.u32 %v5158, 16
      %v5367 = vrot.slane %v5365, 7
      %v5368 = vor.u32 %v5364, %v5367
      %v5369 = vrot.slane %v5368, 4
      %v5370 = vrot.slane %v4276, 6
      %v5371 = vrot.slane %v4272, 7
      %v5372 = vor.u32 %v5370, %v5371
      %v5373 = vsel %vm5176, %v5369, %v5372
      %v5374 = vrot.slane %v5372, 4
      %v5376 = vshrl.u32 %v5159, 16
      %v5378 = vrot.slane %v5376, 6
      %v5379 = vshll.u32 %v5159, 16
      %v5381 = vrot.slane %v5379, 7
      %v5382 = vor.u32 %v5378, %v5381
      %v5383 = vsel %vm5176, %v5374, %v5382
      %v5385 = vshrl.u32 %v5160, 16
      %v5387 = vrot.slane %v5385, 6
      %v5388 = vshll.u32 %v5160, 16
      %v5390 = vrot.slane %v5388, 7
      %v5391 = vor.u32 %v5387, %v5390
      %v5392 = vrot.slane %v5391, 4
      %v5393 = vrot.slane %v4300, 6
      %v5394 = vrot.slane %v4296, 7
      %v5395 = vor.u32 %v5393, %v5394
      %v5396 = vsel %vm5176, %v5392, %v5395
      %v5397 = vrot.slane %v5395, 4
      %v5399 = vshrl.u32 %v5161, 16
      %v5401 = vrot.slane %v5399, 6
      %v5402 = vshll.u32 %v5161, 16
      %v5404 = vrot.slane %v5402, 7
      %v5405 = vor.u32 %v5401, %v5404
      %v5406 = vsel %vm5176, %v5397, %v5405
      %v5408 = vshrl.u32 %v5162, 16
      %v5410 = vrot.slane %v5408, 6
      %v5411 = vshll.u32 %v5162, 16
      %v5413 = vrot.slane %v5411, 7
      %v5414 = vor.u32 %v5410, %v5413
      %v5415 = vrot.slane %v5414, 4
      %v5416 = vrot.slane %v4324, 6
      %v5417 = vrot.slane %v4320, 7
      %v5418 = vor.u32 %v5416, %v5417
      %v5419 = vsel %vm5176, %v5415, %v5418
      %v5420 = vrot.slane %v5418, 4
      %v5422 = vshrl.u32 %v5163, 16
      %v5424 = vrot.slane %v5422, 6
      %v5425 = vshll.u32 %v5163, 16
      %v5427 = vrot.slane %v5425, 7
      %v5428 = vor.u32 %v5424, %v5427
      %v5429 = vsel %vm5176, %v5420, %v5428
      %v5431 = vshrl.u32 %v5164, 16
      %v5433 = vrot.slane %v5431, 6
      %v5434 = vshll.u32 %v5164, 16
      %v5436 = vrot.slane %v5434, 7
      %v5437 = vor.u32 %v5433, %v5436
      %v5438 = vrot.slane %v5437, 4
      %v5439 = vrot.slane %v4348, 6
      %v5440 = vrot.slane %v4344, 7
      %v5441 = vor.u32 %v5439, %v5440
      %v5442 = vsel %vm5176, %v5438, %v5441
      %v5443 = vrot.slane %v5441, 4
      %v5445 = vshrl.u32 %v5165, 16
      %v5447 = vrot.slane %v5445, 6
      %v5448 = vshll.u32 %v5165, 16
      %v5450 = vrot.slane %v5448, 7
      %v5451 = vor.u32 %v5447, %v5450
      %v5452 = vsel %vm5176, %v5443, %v5451
      %v5454 = vshrl.u32 %v5166, 16
      %v5456 = vrot.slane %v5454, 6
      %v5457 = vshll.u32 %v5166, 16
      %v5459 = vrot.slane %v5457, 7
      %v5460 = vor.u32 %v5456, %v5459
      %v5461 = vrot.slane %v5460, 4
      %v5462 = vrot.slane %v4372, 6
      %v5463 = vrot.slane %v4368, 7
      %v5464 = vor.u32 %v5462, %v5463
      %v5465 = vsel %vm5176, %v5461, %v5464
      %v5466 = vrot.slane %v5464, 4
      %v5468 = vshrl.u32 %v5167, 16
      %v5470 = vrot.slane %v5468, 6
      %v5471 = vshll.u32 %v5167, 16
      %v5473 = vrot.slane %v5471, 7
      %v5474 = vor.u32 %v5470, %v5473
      %v5475 = vsel %vm5176, %v5466, %v5474
      %v5477 = vshrl.u32 %v5168, 16
      %v5479 = vrot.slane %v5477, 6
      %v5480 = vshll.u32 %v5168, 16
      %v5482 = vrot.slane %v5480, 7
      %v5483 = vor.u32 %v5479, %v5482
      %v5484 = vrot.slane %v5483, 4
      %v5485 = vrot.slane %v4396, 6
      %v5486 = vrot.slane %v4392, 7
      %v5487 = vor.u32 %v5485, %v5486
      %v5488 = vsel %vm5176, %v5484, %v5487
      %v5489 = vrot.slane %v5487, 4
      %v5491 = vshrl.u32 %v5169, 16
      %v5493 = vrot.slane %v5491, 6
      %v5494 = vshll.u32 %v5169, 16
      %v5496 = vrot.slane %v5494, 7
      %v5497 = vor.u32 %v5493, %v5496
      %v5498 = vsel %vm5176, %v5489, %v5497
      %v5500 = vshrl.u32 %v5170, 16
      %v5502 = vrot.slane %v5500, 6
      %v5503 = vshll.u32 %v5170, 16
      %v5505 = vrot.slane %v5503, 7
      %v5506 = vor.u32 %v5502, %v5505
      %v5507 = vrot.slane %v5506, 4
      %v5508 = vrot.slane %v4420, 6
      %v5509 = vrot.slane %v4416, 7
      %v5510 = vor.u32 %v5508, %v5509
      %v5511 = vsel %vm5176, %v5507, %v5510
      %v5512 = vrot.slane %v5510, 4
      %v5514 = vshrl.u32 %v5171, 16
      %v5516 = vrot.slane %v5514, 6
      %v5517 = vshll.u32 %v5171, 16
      %v5519 = vrot.slane %v5517, 7
      %v5520 = vor.u32 %v5516, %v5519
      %v5521 = vsel %vm5176, %v5512, %v5520
      %v5523 = vshrl.u32 %v5172, 16
      %v5525 = vrot.slane %v5523, 6
      %v5526 = vshll.u32 %v5172, 16
      %v5528 = vrot.slane %v5526, 7
      %v5529 = vor.u32 %v5525, %v5528
      %v5530 = vrot.slane %v5529, 4
      %v5531 = vrot.slane %v4444, 6
      %v5532 = vrot.slane %v4440, 7
      %v5533 = vor.u32 %v5531, %v5532
      %v5534 = vsel %vm5176, %v5530, %v5533
      %v5535 = vrot.slane %v5533, 4
      %v5537 = vshrl.u32 %v5173, 16
      %v5539 = vrot.slane %v5537, 6
      %v5540 = vshll.u32 %v5173, 16
      %v5542 = vrot.slane %v5540, 7
      %v5543 = vor.u32 %v5539, %v5542
      %v5544 = vsel %vm5176, %v5535, %v5543
      %s5545 = scalar_lea.vmem %s1, 44
      %v5546 = vld [vmem:[%s5545] sm:$0xf]
      %v5547 = vunpack.c.l.b16 %v5189
      %v5548 = vunpack.c.l.b16 %v5199
      %v5549 = vunpack.c.l.b16 %v5212
      %v5550 = vunpack.c.l.b16 %v5222
      %v5551 = vunpack.c.l.b16 %v5235
      %v5552 = vunpack.c.l.b16 %v5245
      %v5553 = vunpack.c.l.b16 %v5258
      %v5554 = vunpack.c.l.b16 %v5268
      %v5555 = vunpack.c.l.b16 %v5281
      %v5556 = vunpack.c.l.b16 %v5291
      %v5557 = vunpack.c.l.b16 %v5304
      %v5558 = vunpack.c.l.b16 %v5314
      %v5559 = vunpack.c.l.b16 %v5327
      %v5560 = vunpack.c.l.b16 %v5337
      %v5561 = vunpack.c.l.b16 %v5350
      %v5562 = vunpack.c.l.b16 %v5360
      %v5563 = vunpack.c.l.b16 %v5373
      %v5564 = vunpack.c.l.b16 %v5383
      %v5565 = vunpack.c.l.b16 %v5396
      %v5566 = vunpack.c.l.b16 %v5406
      %v5567 = vunpack.c.l.b16 %v5419
      %v5568 = vunpack.c.l.b16 %v5429
      %v5569 = vunpack.c.l.b16 %v5442
      %v5570 = vunpack.c.l.b16 %v5452
      %v5571 = vunpack.c.l.b16 %v5465
      %v5572 = vunpack.c.l.b16 %v5475
      %v5573 = vunpack.c.l.b16 %v5488
      %v5574 = vunpack.c.l.b16 %v5498
      %v5575 = vunpack.c.l.b16 %v5511
      %v5576 = vunpack.c.l.b16 %v5521
      %v5577 = vunpack.c.l.b16 %v5534
      %v5578 = vunpack.c.l.b16 %v5544
      %v5579 = vpack.c.b16 %v5548, %v5547
      %v5580 = vpack.c.b16 %v5550, %v5549
      %v5581 = vpack.c.b16 %v5552, %v5551
      %v5582 = vpack.c.b16 %v5554, %v5553
      %v5583 = vpack.c.b16 %v5556, %v5555
      %v5584 = vpack.c.b16 %v5558, %v5557
      %v5585 = vpack.c.b16 %v5560, %v5559
      %v5586 = vpack.c.b16 %v5562, %v5561
      %v5587 = vpack.c.b16 %v5564, %v5563
      %v5588 = vpack.c.b16 %v5566, %v5565
      %v5589 = vpack.c.b16 %v5568, %v5567
      %v5590 = vpack.c.b16 %v5570, %v5569
      %v5591 = vpack.c.b16 %v5572, %v5571
      %v5592 = vpack.c.b16 %v5574, %v5573
      %v5593 = vpack.c.b16 %v5576, %v5575
      %v5594 = vpack.c.b16 %v5578, %v5577
      %v5596 = vsel %vm466, %v5546, 0
      %v5599 = vsel %vm466, %v5579, 0
      %v5602 = vsel %vm466, %v5580, 0
      %v5605 = vsel %vm466, %v5581, 0
      %v5608 = vsel %vm466, %v5582, 0
      %v5611 = vsel %vm466, %v5583, 0
      %v5614 = vsel %vm466, %v5584, 0
      %v5617 = vsel %vm466, %v5585, 0
      %v5620 = vsel %vm466, %v5586, 0
      %v5623 = vsel %vm466, %v5587, 0
      %v5626 = vsel %vm466, %v5588, 0
      %v5629 = vsel %vm466, %v5589, 0
      %v5632 = vsel %vm466, %v5590, 0
      %v5635 = vsel %vm466, %v5591, 0
      %v5638 = vsel %vm466, %v5592, 0
      %v5641 = vsel %vm466, %v5593, 0
      %v5644 = vsel %vm466, %v5594, 0
      %5646 = vmatprep.subr.bf16.mxu0 0
      %5647 = vmatpush1.bf16.xpose.msra.mxu0 %v5599
      %5648 = vmatprep.subr.bf16.mxu0 0
      %5649 = vmatpush1.bf16.xpose.msra.mxu0 %v5602
      %5650 = vmatprep.subr.bf16.mxu0 0
      %5651 = vmatpush1.bf16.xpose.msra.mxu0 %v5605
      %5652 = vmatprep.subr.bf16.mxu0 0
      %5653 = vmatpush1.bf16.xpose.msra.mxu0 %v5608
      %5654 = vmatprep.subr.bf16.mxu0 0
      %5655 = vmatpush1.bf16.xpose.msra.mxu0 %v5611
      %5656 = vmatprep.subr.bf16.mxu0 0
      %5657 = vmatpush1.bf16.xpose.msra.mxu0 %v5614
      %5658 = vmatprep.subr.bf16.mxu0 0
      %5659 = vmatpush1.bf16.xpose.msra.mxu0 %v5617
      %5660 = vmatprep.subr.bf16.mxu0 0
      %5661 = vmatpush1.bf16.xpose.msra.mxu0 %v5620
      %5662 = vmatprep.subr.bf16.mxu0 0
      %5663 = vmatpush1.bf16.xpose.msra.mxu0 %v5623
      %5664 = vmatprep.subr.bf16.mxu0 0
      %5665 = vmatpush1.bf16.xpose.msra.mxu0 %v5626
      %5666 = vmatprep.subr.bf16.mxu0 0
      %5667 = vmatpush1.bf16.xpose.msra.mxu0 %v5629
      %5668 = vmatprep.subr.bf16.mxu0 0
      %5669 = vmatpush1.bf16.xpose.msra.mxu0 %v5632
      %5670 = vmatprep.subr.bf16.mxu0 0
      %5671 = vmatpush1.bf16.xpose.msra.mxu0 %v5635
      %5672 = vmatprep.subr.bf16.mxu0 0
      %5673 = vmatpush1.bf16.xpose.msra.mxu0 %v5638
      %5674 = vmatprep.subr.bf16.mxu0 0
      %5675 = vmatpush1.bf16.xpose.msra.mxu0 %v5641
      %5676 = vmatprep.subr.bf16.mxu0 0
      %5677 = vmatpush1.bf16.xpose.msra.mxu0 %v5644
      %5678 = vmatprep.mubr.bf16.mxu0 0
      %5679 = vmatmul.mubr.bf16.gmra.mrb[0].mxu0 %v5596
      %v5680 = vpop.f32.mrb[0].mxu0
      %v5681 = vadd.f32 0.0, %v5680
      %v5682 = vpop.f32.mrb[0].mxu0
      %v5683 = vadd.f32 0.0, %v5682
      %v5684 = vpop.f32.mrb[0].mxu0
      %v5685 = vpop.f32.mrb[0].mxu0
      %5686 = vdwg.mxu0
      %v5687 = vadd.f32 %v5140, %v5681
      %v5688 = vadd.f32 %v5141, %v5683
      %v5689 = vld [vmem:[%s1482] sm:$0xf]
      %v5690 = vld [vmem:[%s1482 + $0xc] sm:$0xf]
      %v5691 = vld [vmem:[%s1482 + $0x18] sm:$0xf]
      %v5692 = vld [vmem:[%s1482 + $0x24] sm:$0xf]
      %v5693 = vld [vmem:[%s1482 + $0x30] sm:$0xf]
      %v5694 = vld [vmem:[%s1482 + $0x3c] sm:$0xf]
      %v5695 = vld [vmem:[%s1482 + $0x48] sm:$0xf]
      %v5696 = vld [vmem:[%s1482 + $0x54] sm:$0xf]
      %v5697 = vld [vmem:[%s1482 + $0x60] sm:$0xf]
      %v5698 = vld [vmem:[%s1482 + $0x6c] sm:$0xf]
      %v5699 = vld [vmem:[%s1482 + $0x78] sm:$0xf]
      %v5700 = vld [vmem:[%s1482 + $0x84] sm:$0xf]
      %v5701 = vld [vmem:[%s1482 + $0x90] sm:$0xf]
      %v5702 = vld [vmem:[%s1482 + $0x9c] sm:$0xf]
      %v5703 = vld [vmem:[%s1482 + $0xa8] sm:$0xf]
      %v5704 = vld [vmem:[%s1482 + $0xb4] sm:$0xf]
      %v5706 = vshrl.u32 %v5689, 16
      %v5708 = vrot.slane %v5706, 4
      %v5709 = vshll.u32 %v5689, 16
      %v5711 = vrot.slane %v5709, 5
      %v5712 = vor.u32 %v5708, %v5711
      %v5713 = vrot.slane %v5712, 4
      %v5714 = vrot.slane %v1864, 5
      %v5715 = vsel %vm4069, %v5713, %v5714
      %v5716 = vrot.slane %v1861, 4
      %v5717 = vor.u32 %v5716, %v5714
      %v5718 = vrot.slane %v5717, 4
      %v5720 = vshll.u32 %v1485, 16
      %v5722 = vrot.slane %v5720, 5
      %v5723 = vsel %vm4069, %v5718, %v5722
      %v5725 = vshrl.u32 %v5690, 16
      %v5727 = vrot.slane %v5725, 4
      %v5728 = vshll.u32 %v5690, 16
      %v5730 = vrot.slane %v5728, 5
      %v5731 = vor.u32 %v5727, %v5730
      %v5732 = vrot.slane %v5731, 4
      %v5733 = vrot.slane %v1892, 5
      %v5734 = vsel %vm4069, %v5732, %v5733
      %v5735 = vrot.slane %v1889, 4
      %v5736 = vor.u32 %v5735, %v5733
      %v5737 = vrot.slane %v5736, 4
      %v5739 = vshll.u32 %v1488, 16
      %v5741 = vrot.slane %v5739, 5
      %v5742 = vsel %vm4069, %v5737, %v5741
      %v5744 = vshrl.u32 %v5691, 16
      %v5746 = vrot.slane %v5744, 4
      %v5747 = vshll.u32 %v5691, 16
      %v5749 = vrot.slane %v5747, 5
      %v5750 = vor.u32 %v5746, %v5749
      %v5751 = vrot.slane %v5750, 4
      %v5752 = vrot.slane %v1920, 5
      %v5753 = vsel %vm4069, %v5751, %v5752
      %v5754 = vrot.slane %v1917, 4
      %v5755 = vor.u32 %v5754, %v5752
      %v5756 = vrot.slane %v5755, 4
      %v5758 = vshll.u32 %v1491, 16
      %v5760 = vrot.slane %v5758, 5
      %v5761 = vsel %vm4069, %v5756, %v5760
      %v5763 = vshrl.u32 %v5692, 16
      %v5765 = vrot.slane %v5763, 4
      %v5766 = vshll.u32 %v5692, 16
      %v5768 = vrot.slane %v5766, 5
      %v5769 = vor.u32 %v5765, %v5768
      %v5770 = vrot.slane %v5769, 4
      %v5771 = vrot.slane %v1948, 5
      %v5772 = vsel %vm4069, %v5770, %v5771
      %v5773 = vrot.slane %v1945, 4
      %v5774 = vor.u32 %v5773, %v5771
      %v5775 = vrot.slane %v5774, 4
      %v5777 = vshll.u32 %v1494, 16
      %v5779 = vrot.slane %v5777, 5
      %v5780 = vsel %vm4069, %v5775, %v5779
      %v5782 = vshrl.u32 %v5693, 16
      %v5784 = vrot.slane %v5782, 4
      %v5785 = vshll.u32 %v5693, 16
      %v5787 = vrot.slane %v5785, 5
      %v5788 = vor.u32 %v5784, %v5787
      %v5789 = vrot.slane %v5788, 4
      %v5790 = vrot.slane %v1976, 5
      %v5791 = vsel %vm4069, %v5789, %v5790
      %v5792 = vrot.slane %v1973, 4
      %v5793 = vor.u32 %v5792, %v5790
      %v5794 = vrot.slane %v5793, 4
      %v5796 = vshll.u32 %v1497, 16
      %v5798 = vrot.slane %v5796, 5
      %v5799 = vsel %vm4069, %v5794, %v5798
      %v5801 = vshrl.u32 %v5694, 16
      %v5803 = vrot.slane %v5801, 4
      %v5804 = vshll.u32 %v5694, 16
      %v5806 = vrot.slane %v5804, 5
      %v5807 = vor.u32 %v5803, %v5806
      %v5808 = vrot.slane %v5807, 4
      %v5809 = vrot.slane %v2004, 5
      %v5810 = vsel %vm4069, %v5808, %v5809
      %v5811 = vrot.slane %v2001, 4
      %v5812 = vor.u32 %v5811, %v5809
      %v5813 = vrot.slane %v5812, 4
      %v5815 = vshll.u32 %v1500, 16
      %v5817 = vrot.slane %v5815, 5
      %v5818 = vsel %vm4069, %v5813, %v5817
      %v5820 = vshrl.u32 %v5695, 16
      %v5822 = vrot.slane %v5820, 4
      %v5823 = vshll.u32 %v5695, 16
      %v5825 = vrot.slane %v5823, 5
      %v5826 = vor.u32 %v5822, %v5825
      %v5827 = vrot.slane %v5826, 4
      %v5828 = vrot.slane %v2032, 5
      %v5829 = vsel %vm4069, %v5827, %v5828
      %v5830 = vrot.slane %v2029, 4
      %v5831 = vor.u32 %v5830, %v5828
      %v5832 = vrot.slane %v5831, 4
      %v5834 = vshll.u32 %v1503, 16
      %v5836 = vrot.slane %v5834, 5
      %v5837 = vsel %vm4069, %v5832, %v5836
      %v5839 = vshrl.u32 %v5696, 16
      %v5841 = vrot.slane %v5839, 4
      %v5842 = vshll.u32 %v5696, 16
      %v5844 = vrot.slane %v5842, 5
      %v5845 = vor.u32 %v5841, %v5844
      %v5846 = vrot.slane %v5845, 4
      %v5847 = vrot.slane %v2060, 5
      %v5848 = vsel %vm4069, %v5846, %v5847
      %v5849 = vrot.slane %v2057, 4
      %v5850 = vor.u32 %v5849, %v5847
      %v5851 = vrot.slane %v5850, 4
      %v5853 = vshll.u32 %v1506, 16
      %v5855 = vrot.slane %v5853, 5
      %v5856 = vsel %vm4069, %v5851, %v5855
      %v5858 = vshrl.u32 %v5697, 16
      %v5860 = vrot.slane %v5858, 4
      %v5861 = vshll.u32 %v5697, 16
      %v5863 = vrot.slane %v5861, 5
      %v5864 = vor.u32 %v5860, %v5863
      %v5865 = vrot.slane %v5864, 4
      %v5866 = vrot.slane %v2088, 5
      %v5867 = vsel %vm4069, %v5865, %v5866
      %v5868 = vrot.slane %v2085, 4
      %v5869 = vor.u32 %v5868, %v5866
      %v5870 = vrot.slane %v5869, 4
      %v5872 = vshll.u32 %v1509, 16
      %v5874 = vrot.slane %v5872, 5
      %v5875 = vsel %vm4069, %v5870, %v5874
      %v5877 = vshrl.u32 %v5698, 16
      %v5879 = vrot.slane %v5877, 4
      %v5880 = vshll.u32 %v5698, 16
      %v5882 = vrot.slane %v5880, 5
      %v5883 = vor.u32 %v5879, %v5882
      %v5884 = vrot.slane %v5883, 4
      %v5885 = vrot.slane %v2116, 5
      %v5886 = vsel %vm4069, %v5884, %v5885
      %v5887 = vrot.slane %v2113, 4
      %v5888 = vor.u32 %v5887, %v5885
      %v5889 = vrot.slane %v5888, 4
      %v5891 = vshll.u32 %v1512, 16
      %v5893 = vrot.slane %v5891, 5
      %v5894 = vsel %vm4069, %v5889, %v5893
      %v5896 = vshrl.u32 %v5699, 16
      %v5898 = vrot.slane %v5896, 4
      %v5899 = vshll.u32 %v5699, 16
      %v5901 = vrot.slane %v5899, 5
      %v5902 = vor.u32 %v5898, %v5901
      %v5903 = vrot.slane %v5902, 4
      %v5904 = vrot.slane %v2144, 5
      %v5905 = vsel %vm4069, %v5903, %v5904
      %v5906 = vrot.slane %v2141, 4
      %v5907 = vor.u32 %v5906, %v5904
      %v5908 = vrot.slane %v5907, 4
      %v5910 = vshll.u32 %v1515, 16
      %v5912 = vrot.slane %v5910, 5
      %v5913 = vsel %vm4069, %v5908, %v5912
      %v5915 = vshrl.u32 %v5700, 16
      %v5917 = vrot.slane %v5915, 4
      %v5918 = vshll.u32 %v5700, 16
      %v5920 = vrot.slane %v5918, 5
      %v5921 = vor.u32 %v5917, %v5920
      %v5922 = vrot.slane %v5921, 4
      %v5923 = vrot.slane %v2172, 5
      %v5924 = vsel %vm4069, %v5922, %v5923
      %v5925 = vrot.slane %v2169, 4
      %v5926 = vor.u32 %v5925, %v5923
      %v5927 = vrot.slane %v5926, 4
      %v5929 = vshll.u32 %v1518, 16
      %v5931 = vrot.slane %v5929, 5
      %v5932 = vsel %vm4069, %v5927, %v5931
      %v5934 = vshrl.u32 %v5701, 16
      %v5936 = vrot.slane %v5934, 4
      %v5937 = vshll.u32 %v5701, 16
      %v5939 = vrot.slane %v5937, 5
      %v5940 = vor.u32 %v5936, %v5939
      %v5941 = vrot.slane %v5940, 4
      %v5942 = vrot.slane %v2200, 5
      %v5943 = vsel %vm4069, %v5941, %v5942
      %v5944 = vrot.slane %v2197, 4
      %v5945 = vor.u32 %v5944, %v5942
      %v5946 = vrot.slane %v5945, 4
      %v5948 = vshll.u32 %v1521, 16
      %v5950 = vrot.slane %v5948, 5
      %v5951 = vsel %vm4069, %v5946, %v5950
      %v5953 = vshrl.u32 %v5702, 16
      %v5955 = vrot.slane %v5953, 4
      %v5956 = vshll.u32 %v5702, 16
      %v5958 = vrot.slane %v5956, 5
      %v5959 = vor.u32 %v5955, %v5958
      %v5960 = vrot.slane %v5959, 4
      %v5961 = vrot.slane %v2228, 5
      %v5962 = vsel %vm4069, %v5960, %v5961
      %v5963 = vrot.slane %v2225, 4
      %v5964 = vor.u32 %v5963, %v5961
      %v5965 = vrot.slane %v5964, 4
      %v5967 = vshll.u32 %v1524, 16
      %v5969 = vrot.slane %v5967, 5
      %v5970 = vsel %vm4069, %v5965, %v5969
      %v5972 = vshrl.u32 %v5703, 16
      %v5974 = vrot.slane %v5972, 4
      %v5975 = vshll.u32 %v5703, 16
      %v5977 = vrot.slane %v5975, 5
      %v5978 = vor.u32 %v5974, %v5977
      %v5979 = vrot.slane %v5978, 4
      %v5980 = vrot.slane %v2256, 5
      %v5981 = vsel %vm4069, %v5979, %v5980
      %v5982 = vrot.slane %v2253, 4
      %v5983 = vor.u32 %v5982, %v5980
      %v5984 = vrot.slane %v5983, 4
      %v5986 = vshll.u32 %v1527, 16
      %v5988 = vrot.slane %v5986, 5
      %v5989 = vsel %vm4069, %v5984, %v5988
      %v5991 = vshrl.u32 %v5704, 16
      %v5993 = vrot.slane %v5991, 4
      %v5994 = vshll.u32 %v5704, 16
      %v5996 = vrot.slane %v5994, 5
      %v5997 = vor.u32 %v5993, %v5996
      %v5998 = vrot.slane %v5997, 4
      %v5999 = vrot.slane %v2284, 5
      %v6000 = vsel %vm4069, %v5998, %v5999
      %v6001 = vrot.slane %v2281, 4
      %v6002 = vor.u32 %v6001, %v5999
      %v6003 = vrot.slane %v6002, 4
      %v6005 = vshll.u32 %v1530, 16
      %v6007 = vrot.slane %v6005, 5
      %v6008 = vsel %vm4069, %v6003, %v6007
      %s6009 = scalar_lea.vmem %s1, 48
      %v6010 = vld [vmem:[%s6009] sm:$0xf]
      %v6011 = vunpack.c.l.b16 %v5715
      %v6012 = vunpack.c.l.b16 %v5723
      %v6013 = vunpack.c.l.b16 %v5734
      %v6014 = vunpack.c.l.b16 %v5742
      %v6015 = vunpack.c.l.b16 %v5753
      %v6016 = vunpack.c.l.b16 %v5761
      %v6017 = vunpack.c.l.b16 %v5772
      %v6018 = vunpack.c.l.b16 %v5780
      %v6019 = vunpack.c.l.b16 %v5791
      %v6020 = vunpack.c.l.b16 %v5799
      %v6021 = vunpack.c.l.b16 %v5810
      %v6022 = vunpack.c.l.b16 %v5818
      %v6023 = vunpack.c.l.b16 %v5829
      %v6024 = vunpack.c.l.b16 %v5837
      %v6025 = vunpack.c.l.b16 %v5848
      %v6026 = vunpack.c.l.b16 %v5856
      %v6027 = vunpack.c.l.b16 %v5867
      %v6028 = vunpack.c.l.b16 %v5875
      %v6029 = vunpack.c.l.b16 %v5886
      %v6030 = vunpack.c.l.b16 %v5894
      %v6031 = vunpack.c.l.b16 %v5905
      %v6032 = vunpack.c.l.b16 %v5913
      %v6033 = vunpack.c.l.b16 %v5924
      %v6034 = vunpack.c.l.b16 %v5932
      %v6035 = vunpack.c.l.b16 %v5943
      %v6036 = vunpack.c.l.b16 %v5951
      %v6037 = vunpack.c.l.b16 %v5962
      %v6038 = vunpack.c.l.b16 %v5970
      %v6039 = vunpack.c.l.b16 %v5981
      %v6040 = vunpack.c.l.b16 %v5989
      %v6041 = vunpack.c.l.b16 %v6000
      %v6042 = vunpack.c.l.b16 %v6008
      %v6043 = vpack.c.b16 %v6012, %v6011
      %v6044 = vpack.c.b16 %v6014, %v6013
      %v6045 = vpack.c.b16 %v6016, %v6015
      %v6046 = vpack.c.b16 %v6018, %v6017
      %v6047 = vpack.c.b16 %v6020, %v6019
      %v6048 = vpack.c.b16 %v6022, %v6021
      %v6049 = vpack.c.b16 %v6024, %v6023
      %v6050 = vpack.c.b16 %v6026, %v6025
      %v6051 = vpack.c.b16 %v6028, %v6027
      %v6052 = vpack.c.b16 %v6030, %v6029
      %v6053 = vpack.c.b16 %v6032, %v6031
      %v6054 = vpack.c.b16 %v6034, %v6033
      %v6055 = vpack.c.b16 %v6036, %v6035
      %v6056 = vpack.c.b16 %v6038, %v6037
      %v6057 = vpack.c.b16 %v6040, %v6039
      %v6058 = vpack.c.b16 %v6042, %v6041
      %v6060 = vsel %vm466, %v6010, 0
      %v6063 = vsel %vm466, %v6043, 0
      %v6066 = vsel %vm466, %v6044, 0
      %v6069 = vsel %vm466, %v6045, 0
      %v6072 = vsel %vm466, %v6046, 0
      %v6075 = vsel %vm466, %v6047, 0
      %v6078 = vsel %vm466, %v6048, 0
      %v6081 = vsel %vm466, %v6049, 0
      %v6084 = vsel %vm466, %v6050, 0
      %v6087 = vsel %vm466, %v6051, 0
      %v6090 = vsel %vm466, %v6052, 0
      %v6093 = vsel %vm466, %v6053, 0
      %v6096 = vsel %vm466, %v6054, 0
      %v6099 = vsel %vm466, %v6055, 0
      %v6102 = vsel %vm466, %v6056, 0
      %v6105 = vsel %vm466, %v6057, 0
      %v6108 = vsel %vm466, %v6058, 0
      %6110 = vmatprep.subr.bf16.mxu0 0
      %6111 = vmatpush1.bf16.xpose.msra.mxu0 %v6063
      %6112 = vmatprep.subr.bf16.mxu0 0
      %6113 = vmatpush1.bf16.xpose.msra.mxu0 %v6066
      %6114 = vmatprep.subr.bf16.mxu0 0
      %6115 = vmatpush1.bf16.xpose.msra.mxu0 %v6069
      %6116 = vmatprep.subr.bf16.mxu0 0
      %6117 = vmatpush1.bf16.xpose.msra.mxu0 %v6072
      %6118 = vmatprep.subr.bf16.mxu0 0
      %6119 = vmatpush1.bf16.xpose.msra.mxu0 %v6075
      %6120 = vmatprep.subr.bf16.mxu0 0
      %6121 = vmatpush1.bf16.xpose.msra.mxu0 %v6078
      %6122 = vmatprep.subr.bf16.mxu0 0
      %6123 = vmatpush1.bf16.xpose.msra.mxu0 %v6081
      %6124 = vmatprep.subr.bf16.mxu0 0
      %6125 = vmatpush1.bf16.xpose.msra.mxu0 %v6084
      %6126 = vmatprep.subr.bf16.mxu0 0
      %6127 = vmatpush1.bf16.xpose.msra.mxu0 %v6087
      %6128 = vmatprep.subr.bf16.mxu0 0
      %6129 = vmatpush1.bf16.xpose.msra.mxu0 %v6090
      %6130 = vmatprep.subr.bf16.mxu0 0
      %6131 = vmatpush1.bf16.xpose.msra.mxu0 %v6093
      %6132 = vmatprep.subr.bf16.mxu0 0
      %6133 = vmatpush1.bf16.xpose.msra.mxu0 %v6096
      %6134 = vmatprep.subr.bf16.mxu0 0
      %6135 = vmatpush1.bf16.xpose.msra.mxu0 %v6099
      %6136 = vmatprep.subr.bf16.mxu0 0
      %6137 = vmatpush1.bf16.xpose.msra.mxu0 %v6102
      %6138 = vmatprep.subr.bf16.mxu0 0
      %6139 = vmatpush1.bf16.xpose.msra.mxu0 %v6105
      %6140 = vmatprep.subr.bf16.mxu0 0
      %6141 = vmatpush1.bf16.xpose.msra.mxu0 %v6108
      %6142 = vmatprep.mubr.bf16.mxu0 0
      %6143 = vmatmul.mubr.bf16.gmra.mrb[0].mxu0 %v6060
      %v6144 = vpop.f32.mrb[0].mxu0
      %v6145 = vadd.f32 0.0, %v6144
      %v6146 = vpop.f32.mrb[0].mxu0
      %v6147 = vadd.f32 0.0, %v6146
      %v6148 = vpop.f32.mrb[0].mxu0
      %v6149 = vpop.f32.mrb[0].mxu0
      %6150 = vdwg.mxu0
      %v6151 = vadd.f32 %v5687, %v6145
      %v6152 = vadd.f32 %v5688, %v6147
      %s6153 = scalar_lea.vmem %s1, 52
      %v6154 = vld [vmem:[%s6153] sm:$0xf]
      %v6156 = vsel %vm466, %v6154, 0
      %6158 = vmatprep.subr.bf16.mxu0 0
      %6159 = vmatpush1.bf16.xpose.msra.mxu0 %v2353
      %6160 = vmatprep.subr.bf16.mxu0 0
      %6161 = vmatpush1.bf16.xpose.msra.mxu0 %v2356
      %6162 = vmatprep.subr.bf16.mxu0 0
      %6163 = vmatpush1.bf16.xpose.msra.mxu0 %v2359
      %6164 = vmatprep.subr.bf16.mxu0 0
      %6165 = vmatpush1.bf16.xpose.msra.mxu0 %v2362
      %6166 = vmatprep.subr.bf16.mxu0 0
      %6167 = vmatpush1.bf16.xpose.msra.mxu0 %v2365
      %6168 = vmatprep.subr.bf16.mxu0 0
      %6169 = vmatpush1.bf16.xpose.msra.mxu0 %v2368
      %6170 = vmatprep.subr.bf16.mxu0 0
      %6171 = vmatpush1.bf16.xpose.msra.mxu0 %v2371
      %6172 = vmatprep.subr.bf16.mxu0 0
      %6173 = vmatpush1.bf16.xpose.msra.mxu0 %v2374
      %6174 = vmatprep.subr.bf16.mxu0 0
      %6175 = vmatpush1.bf16.xpose.msra.mxu0 %v2377
      %6176 = vmatprep.subr.bf16.mxu0 0
      %6177 = vmatpush1.bf16.xpose.msra.mxu0 %v2380
      %6178 = vmatprep.subr.bf16.mxu0 0
      %6179 = vmatpush1.bf16.xpose.msra.mxu0 %v2383
      %6180 = vmatprep.subr.bf16.mxu0 0
      %6181 = vmatpush1.bf16.xpose.msra.mxu0 %v2386
      %6182 = vmatprep.subr.bf16.mxu0 0
      %6183 = vmatpush1.bf16.xpose.msra.mxu0 %v2389
      %6184 = vmatprep.subr.bf16.mxu0 0
      %6185 = vmatpush1.bf16.xpose.msra.mxu0 %v2392
      %6186 = vmatprep.subr.bf16.mxu0 0
      %6187 = vmatpush1.bf16.xpose.msra.mxu0 %v2395
      %6188 = vmatprep.subr.bf16.mxu0 0
      %6189 = vmatpush1.bf16.xpose.msra.mxu0 %v2398
      %6190 = vmatprep.mubr.bf16.mxu0 0
      %6191 = vmatmul.mubr.bf16.gmra.mrb[0].mxu0 %v6156
      %v6192 = vpop.f32.mrb[0].mxu0
      %v6193 = vadd.f32 0.0, %v6192
      %v6194 = vpop.f32.mrb[0].mxu0
      %v6195 = vadd.f32 0.0, %v6194
      %v6196 = vpop.f32.mrb[0].mxu0
      %v6197 = vpop.f32.mrb[0].mxu0
      %6198 = vdwg.mxu0
      %v6199 = vadd.f32 %v6151, %v6193
      %v6200 = vadd.f32 %v6152, %v6195
      %v6201 = vld [vmem:[%s1482 + $0x8] sm:$0x7]
      %v6202 = vld [vmem:[%s1482 + $0x14] sm:$0x7]
      %v6203 = vld [vmem:[%s1482 + $0x20] sm:$0x7]
      %v6204 = vld [vmem:[%s1482 + $0x2c] sm:$0x7]
      %v6205 = vld [vmem:[%s1482 + $0x38] sm:$0x7]
      %v6206 = vld [vmem:[%s1482 + $0x44] sm:$0x7]
      %v6207 = vld [vmem:[%s1482 + $0x50] sm:$0x7]
      %v6208 = vld [vmem:[%s1482 + $0x5c] sm:$0x7]
      %v6209 = vld [vmem:[%s1482 + $0x68] sm:$0x7]
      %v6210 = vld [vmem:[%s1482 + $0x74] sm:$0x7]
      %v6211 = vld [vmem:[%s1482 + $0x80] sm:$0x7]
      %v6212 = vld [vmem:[%s1482 + $0x8c] sm:$0x7]
      %v6213 = vld [vmem:[%s1482 + $0x98] sm:$0x7]
      %v6214 = vld [vmem:[%s1482 + $0xa4] sm:$0x7]
      %v6215 = vld [vmem:[%s1482 + $0xb0] sm:$0x7]
      %v6216 = vld [vmem:[%s1482 + $0xbc] sm:$0x7]
      %v6218 = vshrl.u32 %v2443, 16
      %v6220 = vrot.slane %v6218, 6
      %v6221 = vshll.u32 %v2443, 16
      %v6223 = vrot.slane %v6221, 7
      %v6224 = vor.u32 %v6220, %v6223
      %v6225 = vrot.slane %v6224, 4
      %v6226 = vrot.slane %v1861, 6
      %v6227 = vrot.slane %v1864, 7
      %v6228 = vor.u32 %v6226, %v6227
      %v6229 = vsel %vm5176, %v6225, %v6228
      %v6230 = vrot.slane %v6228, 4
      %v6232 = vshrl.u32 %v6201, 16
      %v6234 = vrot.slane %v6232, 6
      %v6235 = vshll.u32 %v6201, 16
      %v6237 = vrot.slane %v6235, 7
      %v6238 = vor.u32 %v6234, %v6237
      %v6239 = vsel %vm5176, %v6230, %v6238
      %v6241 = vshrl.u32 %v2444, 16
      %v6243 = vrot.slane %v6241, 6
      %v6244 = vshll.u32 %v2444, 16
      %v6246 = vrot.slane %v6244, 7
      %v6247 = vor.u32 %v6243, %v6246
      %v6248 = vrot.slane %v6247, 4
      %v6249 = vrot.slane %v1889, 6
      %v6250 = vrot.slane %v1892, 7
      %v6251 = vor.u32 %v6249, %v6250
      %v6252 = vsel %vm5176, %v6248, %v6251
      %v6253 = vrot.slane %v6251, 4
      %v6255 = vshrl.u32 %v6202, 16
      %v6257 = vrot.slane %v6255, 6
      %v6258 = vshll.u32 %v6202, 16
      %v6260 = vrot.slane %v6258, 7
      %v6261 = vor.u32 %v6257, %v6260
      %v6262 = vsel %vm5176, %v6253, %v6261
      %v6264 = vshrl.u32 %v2445, 16
      %v6266 = vrot.slane %v6264, 6
      %v6267 = vshll.u32 %v2445, 16
      %v6269 = vrot.slane %v6267, 7
      %v6270 = vor.u32 %v6266, %v6269
      %v6271 = vrot.slane %v6270, 4
      %v6272 = vrot.slane %v1917, 6
      %v6273 = vrot.slane %v1920, 7
      %v6274 = vor.u32 %v6272, %v6273
      %v6275 = vsel %vm5176, %v6271, %v6274
      %v6276 = vrot.slane %v6274, 4
      %v6278 = vshrl.u32 %v6203, 16
      %v6280 = vrot.slane %v6278, 6
      %v6281 = vshll.u32 %v6203, 16
      %v6283 = vrot.slane %v6281, 7
      %v6284 = vor.u32 %v6280, %v6283
      %v6285 = vsel %vm5176, %v6276, %v6284
      %v6287 = vshrl.u32 %v2446, 16
      %v6289 = vrot.slane %v6287, 6
      %v6290 = vshll.u32 %v2446, 16
      %v6292 = vrot.slane %v6290, 7
      %v6293 = vor.u32 %v6289, %v6292
      %v6294 = vrot.slane %v6293, 4
      %v6295 = vrot.slane %v1945, 6
      %v6296 = vrot.slane %v1948, 7
      %v6297 = vor.u32 %v6295, %v6296
      %v6298 = vsel %vm5176, %v6294, %v6297
      %v6299 = vrot.slane %v6297, 4
      %v6301 = vshrl.u32 %v6204, 16
      %v6303 = vrot.slane %v6301, 6
      %v6304 = vshll.u32 %v6204, 16
      %v6306 = vrot.slane %v6304, 7
      %v6307 = vor.u32 %v6303, %v6306
      %v6308 = vsel %vm5176, %v6299, %v6307
      %v6310 = vshrl.u32 %v2447, 16
      %v6312 = vrot.slane %v6310, 6
      %v6313 = vshll.u32 %v2447, 16
      %v6315 = vrot.slane %v6313, 7
      %v6316 = vor.u32 %v6312, %v6315
      %v6317 = vrot.slane %v6316, 4
      %v6318 = vrot.slane %v1973, 6
      %v6319 = vrot.slane %v1976, 7
      %v6320 = vor.u32 %v6318, %v6319
      %v6321 = vsel %vm5176, %v6317, %v6320
      %v6322 = vrot.slane %v6320, 4
      %v6324 = vshrl.u32 %v6205, 16
      %v6326 = vrot.slane %v6324, 6
      %v6327 = vshll.u32 %v6205, 16
      %v6329 = vrot.slane %v6327, 7
      %v6330 = vor.u32 %v6326, %v6329
      %v6331 = vsel %vm5176, %v6322, %v6330
      %v6333 = vshrl.u32 %v2448, 16
      %v6335 = vrot.slane %v6333, 6
      %v6336 = vshll.u32 %v2448, 16
      %v6338 = vrot.slane %v6336, 7
      %v6339 = vor.u32 %v6335, %v6338
      %v6340 = vrot.slane %v6339, 4
      %v6341 = vrot.slane %v2001, 6
      %v6342 = vrot.slane %v2004, 7
      %v6343 = vor.u32 %v6341, %v6342
      %v6344 = vsel %vm5176, %v6340, %v6343
      %v6345 = vrot.slane %v6343, 4
      %v6347 = vshrl.u32 %v6206, 16
      %v6349 = vrot.slane %v6347, 6
      %v6350 = vshll.u32 %v6206, 16
      %v6352 = vrot.slane %v6350, 7
      %v6353 = vor.u32 %v6349, %v6352
      %v6354 = vsel %vm5176, %v6345, %v6353
      %v6356 = vshrl.u32 %v2449, 16
      %v6358 = vrot.slane %v6356, 6
      %v6359 = vshll.u32 %v2449, 16
      %v6361 = vrot.slane %v6359, 7
      %v6362 = vor.u32 %v6358, %v6361
      %v6363 = vrot.slane %v6362, 4
      %v6364 = vrot.slane %v2029, 6
      %v6365 = vrot.slane %v2032, 7
      %v6366 = vor.u32 %v6364, %v6365
      %v6367 = vsel %vm5176, %v6363, %v6366
      %v6368 = vrot.slane %v6366, 4
      %v6370 = vshrl.u32 %v6207, 16
      %v6372 = vrot.slane %v6370, 6
      %v6373 = vshll.u32 %v6207, 16
      %v6375 = vrot.slane %v6373, 7
      %v6376 = vor.u32 %v6372, %v6375
      %v6377 = vsel %vm5176, %v6368, %v6376
      %v6379 = vshrl.u32 %v2450, 16
      %v6381 = vrot.slane %v6379, 6
      %v6382 = vshll.u32 %v2450, 16
      %v6384 = vrot.slane %v6382, 7
      %v6385 = vor.u32 %v6381, %v6384
      %v6386 = vrot.slane %v6385, 4
      %v6387 = vrot.slane %v2057, 6
      %v6388 = vrot.slane %v2060, 7
      %v6389 = vor.u32 %v6387, %v6388
      %v6390 = vsel %vm5176, %v6386, %v6389
      %v6391 = vrot.slane %v6389, 4
      %v6393 = vshrl.u32 %v6208, 16
      %v6395 = vrot.slane %v6393, 6
      %v6396 = vshll.u32 %v6208, 16
      %v6398 = vrot.slane %v6396, 7
      %v6399 = vor.u32 %v6395, %v6398
      %v6400 = vsel %vm5176, %v6391, %v6399
      %v6402 = vshrl.u32 %v2451, 16
      %v6404 = vrot.slane %v6402, 6
      %v6405 = vshll.u32 %v2451, 16
      %v6407 = vrot.slane %v6405, 7
      %v6408 = vor.u32 %v6404, %v6407
      %v6409 = vrot.slane %v6408, 4
      %v6410 = vrot.slane %v2085, 6
      %v6411 = vrot.slane %v2088, 7
      %v6412 = vor.u32 %v6410, %v6411
      %v6413 = vsel %vm5176, %v6409, %v6412
      %v6414 = vrot.slane %v6412, 4
      %v6416 = vshrl.u32 %v6209, 16
      %v6418 = vrot.slane %v6416, 6
      %v6419 = vshll.u32 %v6209, 16
      %v6421 = vrot.slane %v6419, 7
      %v6422 = vor.u32 %v6418, %v6421
      %v6423 = vsel %vm5176, %v6414, %v6422
      %v6425 = vshrl.u32 %v2452, 16
      %v6427 = vrot.slane %v6425, 6
      %v6428 = vshll.u32 %v2452, 16
      %v6430 = vrot.slane %v6428, 7
      %v6431 = vor.u32 %v6427, %v6430
      %v6432 = vrot.slane %v6431, 4
      %v6433 = vrot.slane %v2113, 6
      %v6434 = vrot.slane %v2116, 7
      %v6435 = vor.u32 %v6433, %v6434
      %v6436 = vsel %vm5176, %v6432, %v6435
      %v6437 = vrot.slane %v6435, 4
      %v6439 = vshrl.u32 %v6210, 16
      %v6441 = vrot.slane %v6439, 6
      %v6442 = vshll.u32 %v6210, 16
      %v6444 = vrot.slane %v6442, 7
      %v6445 = vor.u32 %v6441, %v6444
      %v6446 = vsel %vm5176, %v6437, %v6445
      %v6448 = vshrl.u32 %v2453, 16
      %v6450 = vrot.slane %v6448, 6
      %v6451 = vshll.u32 %v2453, 16
      %v6453 = vrot.slane %v6451, 7
      %v6454 = vor.u32 %v6450, %v6453
      %v6455 = vrot.slane %v6454, 4
      %v6456 = vrot.slane %v2141, 6
      %v6457 = vrot.slane %v2144, 7
      %v6458 = vor.u32 %v6456, %v6457
      %v6459 = vsel %vm5176, %v6455, %v6458
      %v6460 = vrot.slane %v6458, 4
      %v6462 = vshrl.u32 %v6211, 16
      %v6464 = vrot.slane %v6462, 6
      %v6465 = vshll.u32 %v6211, 16
      %v6467 = vrot.slane %v6465, 7
      %v6468 = vor.u32 %v6464, %v6467
      %v6469 = vsel %vm5176, %v6460, %v6468
      %v6471 = vshrl.u32 %v2454, 16
      %v6473 = vrot.slane %v6471, 6
      %v6474 = vshll.u32 %v2454, 16
      %v6476 = vrot.slane %v6474, 7
      %v6477 = vor.u32 %v6473, %v6476
      %v6478 = vrot.slane %v6477, 4
      %v6479 = vrot.slane %v2169, 6
      %v6480 = vrot.slane %v2172, 7
      %v6481 = vor.u32 %v6479, %v6480
      %v6482 = vsel %vm5176, %v6478, %v6481
      %v6483 = vrot.slane %v6481, 4
      %v6485 = vshrl.u32 %v6212, 16
      %v6487 = vrot.slane %v6485, 6
      %v6488 = vshll.u32 %v6212, 16
      %v6490 = vrot.slane %v6488, 7
      %v6491 = vor.u32 %v6487, %v6490
      %v6492 = vsel %vm5176, %v6483, %v6491
      %v6494 = vshrl.u32 %v2455, 16
      %v6496 = vrot.slane %v6494, 6
      %v6497 = vshll.u32 %v2455, 16
      %v6499 = vrot.slane %v6497, 7
      %v6500 = vor.u32 %v6496, %v6499
      %v6501 = vrot.slane %v6500, 4
      %v6502 = vrot.slane %v2197, 6
      %v6503 = vrot.slane %v2200, 7
      %v6504 = vor.u32 %v6502, %v6503
      %v6505 = vsel %vm5176, %v6501, %v6504
      %v6506 = vrot.slane %v6504, 4
      %v6508 = vshrl.u32 %v6213, 16
      %v6510 = vrot.slane %v6508, 6
      %v6511 = vshll.u32 %v6213, 16
      %v6513 = vrot.slane %v6511, 7
      %v6514 = vor.u32 %v6510, %v6513
      %v6515 = vsel %vm5176, %v6506, %v6514
      %v6517 = vshrl.u32 %v2456, 16
      %v6519 = vrot.slane %v6517, 6
      %v6520 = vshll.u32 %v2456, 16
      %v6522 = vrot.slane %v6520, 7
      %v6523 = vor.u32 %v6519, %v6522
      %v6524 = vrot.slane %v6523, 4
      %v6525 = vrot.slane %v2225, 6
      %v6526 = vrot.slane %v2228, 7
      %v6527 = vor.u32 %v6525, %v6526
      %v6528 = vsel %vm5176, %v6524, %v6527
      %v6529 = vrot.slane %v6527, 4
      %v6531 = vshrl.u32 %v6214, 16
      %v6533 = vrot.slane %v6531, 6
      %v6534 = vshll.u32 %v6214, 16
      %v6536 = vrot.slane %v6534, 7
      %v6537 = vor.u32 %v6533, %v6536
      %v6538 = vsel %vm5176, %v6529, %v6537
      %v6540 = vshrl.u32 %v2457, 16
      %v6542 = vrot.slane %v6540, 6
      %v6543 = vshll.u32 %v2457, 16
      %v6545 = vrot.slane %v6543, 7
      %v6546 = vor.u32 %v6542, %v6545
      %v6547 = vrot.slane %v6546, 4
      %v6548 = vrot.slane %v2253, 6
      %v6549 = vrot.slane %v2256, 7
      %v6550 = vor.u32 %v6548, %v6549
      %v6551 = vsel %vm5176, %v6547, %v6550
      %v6552 = vrot.slane %v6550, 4
      %v6554 = vshrl.u32 %v6215, 16
      %v6556 = vrot.slane %v6554, 6
      %v6557 = vshll.u32 %v6215, 16
      %v6559 = vrot.slane %v6557, 7
      %v6560 = vor.u32 %v6556, %v6559
      %v6561 = vsel %vm5176, %v6552, %v6560
      %v6563 = vshrl.u32 %v2458, 16
      %v6565 = vrot.slane %v6563, 6
      %v6566 = vshll.u32 %v2458, 16
      %v6568 = vrot.slane %v6566, 7
      %v6569 = vor.u32 %v6565, %v6568
      %v6570 = vrot.slane %v6569, 4
      %v6571 = vrot.slane %v2281, 6
      %v6572 = vrot.slane %v2284, 7
      %v6573 = vor.u32 %v6571, %v6572
      %v6574 = vsel %vm5176, %v6570, %v6573
      %v6575 = vrot.slane %v6573, 4
      %v6577 = vshrl.u32 %v6216, 16
      %v6579 = vrot.slane %v6577, 6
      %v6580 = vshll.u32 %v6216, 16
      %v6582 = vrot.slane %v6580, 7
      %v6583 = vor.u32 %v6579, %v6582
      %v6584 = vsel %vm5176, %v6575, %v6583
      %s6585 = scalar_lea.vmem %s1, 56
      %v6586 = vld [vmem:[%s6585] sm:$0xf]
      %v6587 = vunpack.c.l.b16 %v6229
      %v6588 = vunpack.c.l.b16 %v6239
      %v6589 = vunpack.c.l.b16 %v6252
      %v6590 = vunpack.c.l.b16 %v6262
      %v6591 = vunpack.c.l.b16 %v6275
      %v6592 = vunpack.c.l.b16 %v6285
      %v6593 = vunpack.c.l.b16 %v6298
      %v6594 = vunpack.c.l.b16 %v6308
      %v6595 = vunpack.c.l.b16 %v6321
      %v6596 = vunpack.c.l.b16 %v6331
      %v6597 = vunpack.c.l.b16 %v6344
      %v6598 = vunpack.c.l.b16 %v6354
      %v6599 = vunpack.c.l.b16 %v6367
      %v6600 = vunpack.c.l.b16 %v6377
      %v6601 = vunpack.c.l.b16 %v6390
      %v6602 = vunpack.c.l.b16 %v6400
      %v6603 = vunpack.c.l.b16 %v6413
      %v6604 = vunpack.c.l.b16 %v6423
      %v6605 = vunpack.c.l.b16 %v6436
      %v6606 = vunpack.c.l.b16 %v6446
      %v6607 = vunpack.c.l.b16 %v6459
      %v6608 = vunpack.c.l.b16 %v6469
      %v6609 = vunpack.c.l.b16 %v6482
      %v6610 = vunpack.c.l.b16 %v6492
      %v6611 = vunpack.c.l.b16 %v6505
      %v6612 = vunpack.c.l.b16 %v6515
      %v6613 = vunpack.c.l.b16 %v6528
      %v6614 = vunpack.c.l.b16 %v6538
      %v6615 = vunpack.c.l.b16 %v6551
      %v6616 = vunpack.c.l.b16 %v6561
      %v6617 = vunpack.c.l.b16 %v6574
      %v6618 = vunpack.c.l.b16 %v6584
      %v6619 = vpack.c.b16 %v6588, %v6587
      %v6620 = vpack.c.b16 %v6590, %v6589
      %v6621 = vpack.c.b16 %v6592, %v6591
      %v6622 = vpack.c.b16 %v6594, %v6593
      %v6623 = vpack.c.b16 %v6596, %v6595
      %v6624 = vpack.c.b16 %v6598, %v6597
      %v6625 = vpack.c.b16 %v6600, %v6599
      %v6626 = vpack.c.b16 %v6602, %v6601
      %v6627 = vpack.c.b16 %v6604, %v6603
      %v6628 = vpack.c.b16 %v6606, %v6605
      %v6629 = vpack.c.b16 %v6608, %v6607
      %v6630 = vpack.c.b16 %v6610, %v6609
      %v6631 = vpack.c.b16 %v6612, %v6611
      %v6632 = vpack.c.b16 %v6614, %v6613
      %v6633 = vpack.c.b16 %v6616, %v6615
      %v6634 = vpack.c.b16 %v6618, %v6617
      %v6636 = vsel %vm466, %v6586, 0
      %v6639 = vsel %vm466, %v6619, 0
      %v6642 = vsel %vm466, %v6620, 0
      %v6645 = vsel %vm466, %v6621, 0
      %v6648 = vsel %vm466, %v6622, 0
      %v6651 = vsel %vm466, %v6623, 0
      %v6654 = vsel %vm466, %v6624, 0
      %v6657 = vsel %vm466, %v6625, 0
      %v6660 = vsel %vm466, %v6626, 0
      %v6663 = vsel %vm466, %v6627, 0
      %v6666 = vsel %vm466, %v6628, 0
      %v6669 = vsel %vm466, %v6629, 0
      %v6672 = vsel %vm466, %v6630, 0
      %v6675 = vsel %vm466, %v6631, 0
      %v6678 = vsel %vm466, %v6632, 0
      %v6681 = vsel %vm466, %v6633, 0
      %v6684 = vsel %vm466, %v6634, 0
      %6686 = vmatprep.subr.bf16.mxu0 0
      %6687 = vmatpush1.bf16.xpose.msra.mxu0 %v6639
      %6688 = vmatprep.subr.bf16.mxu0 0
      %6689 = vmatpush1.bf16.xpose.msra.mxu0 %v6642
      %6690 = vmatprep.subr.bf16.mxu0 0
      %6691 = vmatpush1.bf16.xpose.msra.mxu0 %v6645
      %6692 = vmatprep.subr.bf16.mxu0 0
      %6693 = vmatpush1.bf16.xpose.msra.mxu0 %v6648
      %6694 = vmatprep.subr.bf16.mxu0 0
      %6695 = vmatpush1.bf16.xpose.msra.mxu0 %v6651
      %6696 = vmatprep.subr.bf16.mxu0 0
      %6697 = vmatpush1.bf16.xpose.msra.mxu0 %v6654
      %6698 = vmatprep.subr.bf16.mxu0 0
      %6699 = vmatpush1.bf16.xpose.msra.mxu0 %v6657
      %6700 = vmatprep.subr.bf16.mxu0 0
      %6701 = vmatpush1.bf16.xpose.msra.mxu0 %v6660
      %6702 = vmatprep.subr.bf16.mxu0 0
      %6703 = vmatpush1.bf16.xpose.msra.mxu0 %v6663
      %6704 = vmatprep.subr.bf16.mxu0 0
      %6705 = vmatpush1.bf16.xpose.msra.mxu0 %v6666
      %6706 = vmatprep.subr.bf16.mxu0 0
      %6707 = vmatpush1.bf16.xpose.msra.mxu0 %v6669
      %6708 = vmatprep.subr.bf16.mxu0 0
      %6709 = vmatpush1.bf16.xpose.msra.mxu0 %v6672
      %6710 = vmatprep.subr.bf16.mxu0 0
      %6711 = vmatpush1.bf16.xpose.msra.mxu0 %v6675
      %6712 = vmatprep.subr.bf16.mxu0 0
      %6713 = vmatpush1.bf16.xpose.msra.mxu0 %v6678
      %6714 = vmatprep.subr.bf16.mxu0 0
      %6715 = vmatpush1.bf16.xpose.msra.mxu0 %v6681
      %6716 = vmatprep.subr.bf16.mxu0 0
      %6717 = vmatpush1.bf16.xpose.msra.mxu0 %v6684
      %6718 = vmatprep.mubr.bf16.mxu0 0
      %6719 = vmatmul.mubr.bf16.gmra.mrb[0].mxu0 %v6636
      %v6720 = vpop.f32.mrb[0].mxu0
      %v6721 = vadd.f32 0.0, %v6720
      %v6722 = vpop.f32.mrb[0].mxu0
      %v6723 = vadd.f32 0.0, %v6722
      %v6724 = vpop.f32.mrb[0].mxu0
      %v6725 = vpop.f32.mrb[0].mxu0
      %6726 = vdwg.mxu0
      %v6727 = vadd.f32 %v6199, %v6721
      %v6728 = vadd.f32 %v6200, %v6723
      %s6729 = sadd.s32 %s195, 5
      %s6730 = smul.u32 %s6729, 3
      %s6731 = smul.addr %s6730, 4
      %s6732 = scalar_lea.vmem %s183, %s6731
      %v6733 = vld [vmem:[%s6732] sm:$0xf]
      %v6734 = vld [vmem:[%s6732 + $0x4] sm:$0xf]
      %v6735 = vld [vmem:[%s6732 + $0x8] sm:$0x1]
      %v6736 = vld [vmem:[%s6732 + $0xc] sm:$0xf]
      %v6737 = vld [vmem:[%s6732 + $0x10] sm:$0xf]
      %v6738 = vld [vmem:[%s6732 + $0x14] sm:$0x1]
      %v6739 = vld [vmem:[%s6732 + $0x18] sm:$0xf]
      %v6740 = vld [vmem:[%s6732 + $0x1c] sm:$0xf]
      %v6741 = vld [vmem:[%s6732 + $0x20] sm:$0x1]
      %v6742 = vld [vmem:[%s6732 + $0x24] sm:$0xf]
      %v6743 = vld [vmem:[%s6732 + $0x28] sm:$0xf]
      %v6744 = vld [vmem:[%s6732 + $0x2c] sm:$0x1]
      %v6745 = vld [vmem:[%s6732 + $0x30] sm:$0xf]
      %v6746 = vld [vmem:[%s6732 + $0x34] sm:$0xf]
      %v6747 = vld [vmem:[%s6732 + $0x38] sm:$0x1]
      %v6748 = vld [vmem:[%s6732 + $0x3c] sm:$0xf]
      %v6749 = vld [vmem:[%s6732 + $0x40] sm:$0xf]
      %v6750 = vld [vmem:[%s6732 + $0x44] sm:$0x1]
      %v6751 = vld [vmem:[%s6732 + $0x48] sm:$0xf]
      %v6752 = vld [vmem:[%s6732 + $0x4c] sm:$0xf]
      %v6753 = vld [vmem:[%s6732 + $0x50] sm:$0x1]
      %v6754 = vld [vmem:[%s6732 + $0x54] sm:$0xf]
      %v6755 = vld [vmem:[%s6732 + $0x58] sm:$0xf]
      %v6756 = vld [vmem:[%s6732 + $0x5c] sm:$0x1]
      %v6757 = vld [vmem:[%s6732 + $0x60] sm:$0xf]
      %v6758 = vld [vmem:[%s6732 + $0x64] sm:$0xf]
      %v6759 = vld [vmem:[%s6732 + $0x68] sm:$0x1]
      %v6760 = vld [vmem:[%s6732 + $0x6c] sm:$0xf]
      %v6761 = vld [vmem:[%s6732 + $0x70] sm:$0xf]
      %v6762 = vld [vmem:[%s6732 + $0x74] sm:$0x1]
      %v6763 = vld [vmem:[%s6732 + $0x78] sm:$0xf]
      %v6764 = vld [vmem:[%s6732 + $0x7c] sm:$0xf]
      %v6765 = vld [vmem:[%s6732 + $0x80] sm:$0x1]
      %v6766 = vld [vmem:[%s6732 + $0x84] sm:$0xf]
      %v6767 = vld [vmem:[%s6732 + $0x88] sm:$0xf]
      %v6768 = vld [vmem:[%s6732 + $0x8c] sm:$0x1]
      %v6769 = vld [vmem:[%s6732 + $0x90] sm:$0xf]
      %v6770 = vld [vmem:[%s6732 + $0x94] sm:$0xf]
      %v6771 = vld [vmem:[%s6732 + $0x98] sm:$0x1]
      %v6772 = vld [vmem:[%s6732 + $0x9c] sm:$0xf]
      %v6773 = vld [vmem:[%s6732 + $0xa0] sm:$0xf]
      %v6774 = vld [vmem:[%s6732 + $0xa4] sm:$0x1]
      %v6775 = vld [vmem:[%s6732 + $0xa8] sm:$0xf]
      %v6776 = vld [vmem:[%s6732 + $0xac] sm:$0xf]
      %v6777 = vld [vmem:[%s6732 + $0xb0] sm:$0x1]
      %v6778 = vld [vmem:[%s6732 + $0xb4] sm:$0xf]
      %v6779 = vld [vmem:[%s6732 + $0xb8] sm:$0xf]
      %v6780 = vld [vmem:[%s6732 + $0xbc] sm:$0x1]
      %v6782 = vshrl.u32 %v6733, 16
      %v6784 = vrot.slane %v6782, 4
      %v6785 = vshll.u32 %v6733, 16
      %v6787 = vrot.slane %v6785, 5
      %v6788 = vor.u32 %v6784, %v6787
      %v6789 = vrot.slane %v6788, 4
      %v6791 = vshll.u32 %v6734, 16
      %v6793 = vrot.slane %v6791, 5
      %v6794 = vsel %vm4069, %v6789, %v6793
      %v6795 = vshrl.u32 %v6734, 16
      %v6797 = vrot.slane %v6795, 4
      %v6798 = vor.u32 %v6797, %v6793
      %v6799 = vrot.slane %v6798, 4
      %v6801 = vshll.u32 %v6735, 16
      %v6803 = vrot.slane %v6801, 5
      %v6804 = vsel %vm4069, %v6799, %v6803
      %v6806 = vshrl.u32 %v6736, 16
      %v6808 = vrot.slane %v6806, 4
      %v6809 = vshll.u32 %v6736, 16
      %v6811 = vrot.slane %v6809, 5
      %v6812 = vor.u32 %v6808, %v6811
      %v6813 = vrot.slane %v6812, 4
      %v6815 = vshll.u32 %v6737, 16
      %v6817 = vrot.slane %v6815, 5
      %v6818 = vsel %vm4069, %v6813, %v6817
      %v6819 = vshrl.u32 %v6737, 16
      %v6821 = vrot.slane %v6819, 4
      %v6822 = vor.u32 %v6821, %v6817
      %v6823 = vrot.slane %v6822, 4
      %v6825 = vshll.u32 %v6738, 16
      %v6827 = vrot.slane %v6825, 5
      %v6828 = vsel %vm4069, %v6823, %v6827
      %v6830 = vshrl.u32 %v6739, 16
      %v6832 = vrot.slane %v6830, 4
      %v6833 = vshll.u32 %v6739, 16
      %v6835 = vrot.slane %v6833, 5
      %v6836 = vor.u32 %v6832, %v6835
      %v6837 = vrot.slane %v6836, 4
      %v6839 = vshll.u32 %v6740, 16
      %v6841 = vrot.slane %v6839, 5
      %v6842 = vsel %vm4069, %v6837, %v6841
      %v6843 = vshrl.u32 %v6740, 16
      %v6845 = vrot.slane %v6843, 4
      %v6846 = vor.u32 %v6845, %v6841
      %v6847 = vrot.slane %v6846, 4
      %v6849 = vshll.u32 %v6741, 16
      %v6851 = vrot.slane %v6849, 5
      %v6852 = vsel %vm4069, %v6847, %v6851
      %v6854 = vshrl.u32 %v6742, 16
      %v6856 = vrot.slane %v6854, 4
      %v6857 = vshll.u32 %v6742, 16
      %v6859 = vrot.slane %v6857, 5
      %v6860 = vor.u32 %v6856, %v6859
      %v6861 = vrot.slane %v6860, 4
      %v6863 = vshll.u32 %v6743, 16
      %v6865 = vrot.slane %v6863, 5
      %v6866 = vsel %vm4069, %v6861, %v6865
      %v6867 = vshrl.u32 %v6743, 16
      %v6869 = vrot.slane %v6867, 4
      %v6870 = vor.u32 %v6869, %v6865
      %v6871 = vrot.slane %v6870, 4
      %v6873 = vshll.u32 %v6744, 16
      %v6875 = vrot.slane %v6873, 5
      %v6876 = vsel %vm4069, %v6871, %v6875
      %v6878 = vshrl.u32 %v6745, 16
      %v6880 = vrot.slane %v6878, 4
      %v6881 = vshll.u32 %v6745, 16
      %v6883 = vrot.slane %v6881, 5
      %v6884 = vor.u32 %v6880, %v6883
      %v6885 = vrot.slane %v6884, 4
      %v6887 = vshll.u32 %v6746, 16
      %v6889 = vrot.slane %v6887, 5
      %v6890 = vsel %vm4069, %v6885, %v6889
      %v6891 = vshrl.u32 %v6746, 16
      %v6893 = vrot.slane %v6891, 4
      %v6894 = vor.u32 %v6893, %v6889
      %v6895 = vrot.slane %v6894, 4
      %v6897 = vshll.u32 %v6747, 16
      %v6899 = vrot.slane %v6897, 5
      %v6900 = vsel %vm4069, %v6895, %v6899
      %v6902 = vshrl.u32 %v6748, 16
      %v6904 = vrot.slane %v6902, 4
      %v6905 = vshll.u32 %v6748, 16
      %v6907 = vrot.slane %v6905, 5
      %v6908 = vor.u32 %v6904, %v6907
      %v6909 = vrot.slane %v6908, 4
      %v6911 = vshll.u32 %v6749, 16
      %v6913 = vrot.slane %v6911, 5
      %v6914 = vsel %vm4069, %v6909, %v6913
      %v6915 = vshrl.u32 %v6749, 16
      %v6917 = vrot.slane %v6915, 4
      %v6918 = vor.u32 %v6917, %v6913
      %v6919 = vrot.slane %v6918, 4
      %v6921 = vshll.u32 %v6750, 16
      %v6923 = vrot.slane %v6921, 5
      %v6924 = vsel %vm4069, %v6919, %v6923
      %v6926 = vshrl.u32 %v6751, 16
      %v6928 = vrot.slane %v6926, 4
      %v6929 = vshll.u32 %v6751, 16
      %v6931 = vrot.slane %v6929, 5
      %v6932 = vor.u32 %v6928, %v6931
      %v6933 = vrot.slane %v6932, 4
      %v6935 = vshll.u32 %v6752, 16
      %v6937 = vrot.slane %v6935, 5
      %v6938 = vsel %vm4069, %v6933, %v6937
      %v6939 = vshrl.u32 %v6752, 16
      %v6941 = vrot.slane %v6939, 4
      %v6942 = vor.u32 %v6941, %v6937
      %v6943 = vrot.slane %v6942, 4
      %v6945 = vshll.u32 %v6753, 16
      %v6947 = vrot.slane %v6945, 5
      %v6948 = vsel %vm4069, %v6943, %v6947
      %v6950 = vshrl.u32 %v6754, 16
      %v6952 = vrot.slane %v6950, 4
      %v6953 = vshll.u32 %v6754, 16
      %v6955 = vrot.slane %v6953, 5
      %v6956 = vor.u32 %v6952, %v6955
      %v6957 = vrot.slane %v6956, 4
      %v6959 = vshll.u32 %v6755, 16
      %v6961 = vrot.slane %v6959, 5
      %v6962 = vsel %vm4069, %v6957, %v6961
      %v6963 = vshrl.u32 %v6755, 16
      %v6965 = vrot.slane %v6963, 4
      %v6966 = vor.u32 %v6965, %v6961
      %v6967 = vrot.slane %v6966, 4
      %v6969 = vshll.u32 %v6756, 16
      %v6971 = vrot.slane %v6969, 5
      %v6972 = vsel %vm4069, %v6967, %v6971
      %v6974 = vshrl.u32 %v6757, 16
      %v6976 = vrot.slane %v6974, 4
      %v6977 = vshll.u32 %v6757, 16
      %v6979 = vrot.slane %v6977, 5
      %v6980 = vor.u32 %v6976, %v6979
      %v6981 = vrot.slane %v6980, 4
      %v6983 = vshll.u32 %v6758, 16
      %v6985 = vrot.slane %v6983, 5
      %v6986 = vsel %vm4069, %v6981, %v6985
      %v6987 = vshrl.u32 %v6758, 16
      %v6989 = vrot.slane %v6987, 4
      %v6990 = vor.u32 %v6989, %v6985
      %v6991 = vrot.slane %v6990, 4
      %v6993 = vshll.u32 %v6759, 16
      %v6995 = vrot.slane %v6993, 5
      %v6996 = vsel %vm4069, %v6991, %v6995
      %v6998 = vshrl.u32 %v6760, 16
      %v7000 = vrot.slane %v6998, 4
      %v7001 = vshll.u32 %v6760, 16
      %v7003 = vrot.slane %v7001, 5
      %v7004 = vor.u32 %v7000, %v7003
      %v7005 = vrot.slane %v7004, 4
      %v7007 = vshll.u32 %v6761, 16
      %v7009 = vrot.slane %v7007, 5
      %v7010 = vsel %vm4069, %v7005, %v7009
      %v7011 = vshrl.u32 %v6761, 16
      %v7013 = vrot.slane %v7011, 4
      %v7014 = vor.u32 %v7013, %v7009
      %v7015 = vrot.slane %v7014, 4
      %v7017 = vshll.u32 %v6762, 16
      %v7019 = vrot.slane %v7017, 5
      %v7020 = vsel %vm4069, %v7015, %v7019
      %v7022 = vshrl.u32 %v6763, 16
      %v7024 = vrot.slane %v7022, 4
      %v7025 = vshll.u32 %v6763, 16
      %v7027 = vrot.slane %v7025, 5
      %v7028 = vor.u32 %v7024, %v7027
      %v7029 = vrot.slane %v7028, 4
      %v7031 = vshll.u32 %v6764, 16
      %v7033 = vrot.slane %v7031, 5
      %v7034 = vsel %vm4069, %v7029, %v7033
      %v7035 = vshrl.u32 %v6764, 16
      %v7037 = vrot.slane %v7035, 4
      %v7038 = vor.u32 %v7037, %v7033
      %v7039 = vrot.slane %v7038, 4
      %v7041 = vshll.u32 %v6765, 16
      %v7043 = vrot.slane %v7041, 5
      %v7044 = vsel %vm4069, %v7039, %v7043
      %v7046 = vshrl.u32 %v6766, 16
      %v7048 = vrot.slane %v7046, 4
      %v7049 = vshll.u32 %v6766, 16
      %v7051 = vrot.slane %v7049, 5
      %v7052 = vor.u32 %v7048, %v7051
      %v7053 = vrot.slane %v7052, 4
      %v7055 = vshll.u32 %v6767, 16
      %v7057 = vrot.slane %v7055, 5
      %v7058 = vsel %vm4069, %v7053, %v7057
      %v7059 = vshrl.u32 %v6767, 16
      %v7061 = vrot.slane %v7059, 4
      %v7062 = vor.u32 %v7061, %v7057
      %v7063 = vrot.slane %v7062, 4
      %v7065 = vshll.u32 %v6768, 16
      %v7067 = vrot.slane %v7065, 5
      %v7068 = vsel %vm4069, %v7063, %v7067
      %v7070 = vshrl.u32 %v6769, 16
      %v7072 = vrot.slane %v7070, 4
      %v7073 = vshll.u32 %v6769, 16
      %v7075 = vrot.slane %v7073, 5
      %v7076 = vor.u32 %v7072, %v7075
      %v7077 = vrot.slane %v7076, 4
      %v7079 = vshll.u32 %v6770, 16
      %v7081 = vrot.slane %v7079, 5
      %v7082 = vsel %vm4069, %v7077, %v7081
      %v7083 = vshrl.u32 %v6770, 16
      %v7085 = vrot.slane %v7083, 4
      %v7086 = vor.u32 %v7085, %v7081
      %v7087 = vrot.slane %v7086, 4
      %v7089 = vshll.u32 %v6771, 16
      %v7091 = vrot.slane %v7089, 5
      %v7092 = vsel %vm4069, %v7087, %v7091
      %v7094 = vshrl.u32 %v6772, 16
      %v7096 = vrot.slane %v7094, 4
      %v7097 = vshll.u32 %v6772, 16
      %v7099 = vrot.slane %v7097, 5
      %v7100 = vor.u32 %v7096, %v7099
      %v7101 = vrot.slane %v7100, 4
      %v7103 = vshll.u32 %v6773, 16
      %v7105 = vrot.slane %v7103, 5
      %v7106 = vsel %vm4069, %v7101, %v7105
      %v7107 = vshrl.u32 %v6773, 16
      %v7109 = vrot.slane %v7107, 4
      %v7110 = vor.u32 %v7109, %v7105
      %v7111 = vrot.slane %v7110, 4
      %v7113 = vshll.u32 %v6774, 16
      %v7115 = vrot.slane %v7113, 5
      %v7116 = vsel %vm4069, %v7111, %v7115
      %v7118 = vshrl.u32 %v6775, 16
      %v7120 = vrot.slane %v7118, 4
      %v7121 = vshll.u32 %v6775, 16
      %v7123 = vrot.slane %v7121, 5
      %v7124 = vor.u32 %v7120, %v7123
      %v7125 = vrot.slane %v7124, 4
      %v7127 = vshll.u32 %v6776, 16
      %v7129 = vrot.slane %v7127, 5
      %v7130 = vsel %vm4069, %v7125, %v7129
      %v7131 = vshrl.u32 %v6776, 16
      %v7133 = vrot.slane %v7131, 4
      %v7134 = vor.u32 %v7133, %v7129
      %v7135 = vrot.slane %v7134, 4
      %v7137 = vshll.u32 %v6777, 16
      %v7139 = vrot.slane %v7137, 5
      %v7140 = vsel %vm4069, %v7135, %v7139
      %v7142 = vshrl.u32 %v6778, 16
      %v7144 = vrot.slane %v7142, 4
      %v7145 = vshll.u32 %v6778, 16
      %v7147 = vrot.slane %v7145, 5
      %v7148 = vor.u32 %v7144, %v7147
      %v7149 = vrot.slane %v7148, 4
      %v7151 = vshll.u32 %v6779, 16
      %v7153 = vrot.slane %v7151, 5
      %v7154 = vsel %vm4069, %v7149, %v7153
      %v7155 = vshrl.u32 %v6779, 16
      %v7157 = vrot.slane %v7155, 4
      %v7158 = vor.u32 %v7157, %v7153
      %v7159 = vrot.slane %v7158, 4
      %v7161 = vshll.u32 %v6780, 16
      %v7163 = vrot.slane %v7161, 5
      %v7164 = vsel %vm4069, %v7159, %v7163
      %s7165 = scalar_lea.vmem %s1, 60
      %v7166 = vld [vmem:[%s7165] sm:$0xf]
      %v7167 = vunpack.c.l.b16 %v6794
      %v7168 = vunpack.c.l.b16 %v6804
      %v7169 = vunpack.c.l.b16 %v6818
      %v7170 = vunpack.c.l.b16 %v6828
      %v7171 = vunpack.c.l.b16 %v6842
      %v7172 = vunpack.c.l.b16 %v6852
      %v7173 = vunpack.c.l.b16 %v6866
      %v7174 = vunpack.c.l.b16 %v6876
      %v7175 = vunpack.c.l.b16 %v6890
      %v7176 = vunpack.c.l.b16 %v6900
      %v7177 = vunpack.c.l.b16 %v6914
      %v7178 = vunpack.c.l.b16 %v6924
      %v7179 = vunpack.c.l.b16 %v6938
      %v7180 = vunpack.c.l.b16 %v6948
      %v7181 = vunpack.c.l.b16 %v6962
      %v7182 = vunpack.c.l.b16 %v6972
      %v7183 = vunpack.c.l.b16 %v6986
      %v7184 = vunpack.c.l.b16 %v6996
      %v7185 = vunpack.c.l.b16 %v7010
      %v7186 = vunpack.c.l.b16 %v7020
      %v7187 = vunpack.c.l.b16 %v7034
      %v7188 = vunpack.c.l.b16 %v7044
      %v7189 = vunpack.c.l.b16 %v7058
      %v7190 = vunpack.c.l.b16 %v7068
      %v7191 = vunpack.c.l.b16 %v7082
      %v7192 = vunpack.c.l.b16 %v7092
      %v7193 = vunpack.c.l.b16 %v7106
      %v7194 = vunpack.c.l.b16 %v7116
      %v7195 = vunpack.c.l.b16 %v7130
      %v7196 = vunpack.c.l.b16 %v7140
      %v7197 = vunpack.c.l.b16 %v7154
      %v7198 = vunpack.c.l.b16 %v7164
      %v7199 = vpack.c.b16 %v7168, %v7167
      %v7200 = vpack.c.b16 %v7170, %v7169
      %v7201 = vpack.c.b16 %v7172, %v7171
      %v7202 = vpack.c.b16 %v7174, %v7173
      %v7203 = vpack.c.b16 %v7176, %v7175
      %v7204 = vpack.c.b16 %v7178, %v7177
      %v7205 = vpack.c.b16 %v7180, %v7179
      %v7206 = vpack.c.b16 %v7182, %v7181
      %v7207 = vpack.c.b16 %v7184, %v7183
      %v7208 = vpack.c.b16 %v7186, %v7185
      %v7209 = vpack.c.b16 %v7188, %v7187
      %v7210 = vpack.c.b16 %v7190, %v7189
      %v7211 = vpack.c.b16 %v7192, %v7191
      %v7212 = vpack.c.b16 %v7194, %v7193
      %v7213 = vpack.c.b16 %v7196, %v7195
      %v7214 = vpack.c.b16 %v7198, %v7197
      %v7216 = vsel %vm466, %v7166, 0
      %v7219 = vsel %vm466, %v7199, 0
      %v7222 = vsel %vm466, %v7200, 0
      %v7225 = vsel %vm466, %v7201, 0
      %v7228 = vsel %vm466, %v7202, 0
      %v7231 = vsel %vm466, %v7203, 0
      %v7234 = vsel %vm466, %v7204, 0
      %v7237 = vsel %vm466, %v7205, 0
      %v7240 = vsel %vm466, %v7206, 0
      %v7243 = vsel %vm466, %v7207, 0
      %v7246 = vsel %vm466, %v7208, 0
      %v7249 = vsel %vm466, %v7209, 0
      %v7252 = vsel %vm466, %v7210, 0
      %v7255 = vsel %vm466, %v7211, 0
      %v7258 = vsel %vm466, %v7212, 0
      %v7261 = vsel %vm466, %v7213, 0
      %v7264 = vsel %vm466, %v7214, 0
      %7266 = vmatprep.subr.bf16.mxu0 0
      %7267 = vmatpush1.bf16.xpose.msra.mxu0 %v7219
      %7268 = vmatprep.subr.bf16.mxu0 0
      %7269 = vmatpush1.bf16.xpose.msra.mxu0 %v7222
      %7270 = vmatprep.subr.bf16.mxu0 0
      %7271 = vmatpush1.bf16.xpose.msra.mxu0 %v7225
      %7272 = vmatprep.subr.bf16.mxu0 0
      %7273 = vmatpush1.bf16.xpose.msra.mxu0 %v7228
      %7274 = vmatprep.subr.bf16.mxu0 0
      %7275 = vmatpush1.bf16.xpose.msra.mxu0 %v7231
      %7276 = vmatprep.subr.bf16.mxu0 0
      %7277 = vmatpush1.bf16.xpose.msra.mxu0 %v7234
      %7278 = vmatprep.subr.bf16.mxu0 0
      %7279 = vmatpush1.bf16.xpose.msra.mxu0 %v7237
      %7280 = vmatprep.subr.bf16.mxu0 0
      %7281 = vmatpush1.bf16.xpose.msra.mxu0 %v7240
      %7282 = vmatprep.subr.bf16.mxu0 0
      %7283 = vmatpush1.bf16.xpose.msra.mxu0 %v7243
      %7284 = vmatprep.subr.bf16.mxu0 0
      %7285 = vmatpush1.bf16.xpose.msra.mxu0 %v7246
      %7286 = vmatprep.subr.bf16.mxu0 0
      %7287 = vmatpush1.bf16.xpose.msra.mxu0 %v7249
      %7288 = vmatprep.subr.bf16.mxu0 0
      %7289 = vmatpush1.bf16.xpose.msra.mxu0 %v7252
      %7290 = vmatprep.subr.bf16.mxu0 0
      %7291 = vmatpush1.bf16.xpose.msra.mxu0 %v7255
      %7292 = vmatprep.subr.bf16.mxu0 0
      %7293 = vmatpush1.bf16.xpose.msra.mxu0 %v7258
      %7294 = vmatprep.subr.bf16.mxu0 0
      %7295 = vmatpush1.bf16.xpose.msra.mxu0 %v7261
      %7296 = vmatprep.subr.bf16.mxu0 0
      %7297 = vmatpush1.bf16.xpose.msra.mxu0 %v7264
      %7298 = vmatprep.mubr.bf16.mxu0 0
      %7299 = vmatmul.mubr.bf16.gmra.mrb[0].mxu0 %v7216
      %v7300 = vpop.f32.mrb[0].mxu0
      %v7301 = vadd.f32 0.0, %v7300
      %v7302 = vpop.f32.mrb[0].mxu0
      %v7303 = vadd.f32 0.0, %v7302
      %v7304 = vpop.f32.mrb[0].mxu0
      %v7305 = vpop.f32.mrb[0].mxu0
      %7306 = vdwg.mxu0
      %v7307 = vadd.f32 %v6727, %v7301
      %v7308 = vadd.f32 %v6728, %v7303
      %v7309 = vld [vmem:[%s6732] sm:$0xe]
      %v7310 = vld [vmem:[%s6732 + $0x8] sm:$0x3]
      %v7311 = vld [vmem:[%s6732 + $0xc] sm:$0xe]
      %v7312 = vld [vmem:[%s6732 + $0x14] sm:$0x3]
      %v7313 = vld [vmem:[%s6732 + $0x18] sm:$0xe]
      %v7314 = vld [vmem:[%s6732 + $0x20] sm:$0x3]
      %v7315 = vld [vmem:[%s6732 + $0x24] sm:$0xe]
      %v7316 = vld [vmem:[%s6732 + $0x2c] sm:$0x3]
      %v7317 = vld [vmem:[%s6732 + $0x30] sm:$0xe]
      %v7318 = vld [vmem:[%s6732 + $0x38] sm:$0x3]
      %v7319 = vld [vmem:[%s6732 + $0x3c] sm:$0xe]
      %v7320 = vld [vmem:[%s6732 + $0x44] sm:$0x3]
      %v7321 = vld [vmem:[%s6732 + $0x48] sm:$0xe]
      %v7322 = vld [vmem:[%s6732 + $0x50] sm:$0x3]
      %v7323 = vld [vmem:[%s6732 + $0x54] sm:$0xe]
      %v7324 = vld [vmem:[%s6732 + $0x5c] sm:$0x3]
      %v7325 = vld [vmem:[%s6732 + $0x60] sm:$0xe]
      %v7326 = vld [vmem:[%s6732 + $0x68] sm:$0x3]
      %v7327 = vld [vmem:[%s6732 + $0x6c] sm:$0xe]
      %v7328 = vld [vmem:[%s6732 + $0x74] sm:$0x3]
      %v7329 = vld [vmem:[%s6732 + $0x78] sm:$0xe]
      %v7330 = vld [vmem:[%s6732 + $0x80] sm:$0x3]
      %v7331 = vld [vmem:[%s6732 + $0x84] sm:$0xe]
      %v7332 = vld [vmem:[%s6732 + $0x8c] sm:$0x3]
      %v7333 = vld [vmem:[%s6732 + $0x90] sm:$0xe]
      %v7334 = vld [vmem:[%s6732 + $0x98] sm:$0x3]
      %v7335 = vld [vmem:[%s6732 + $0x9c] sm:$0xe]
      %v7336 = vld [vmem:[%s6732 + $0xa4] sm:$0x3]
      %v7337 = vld [vmem:[%s6732 + $0xa8] sm:$0xe]
      %v7338 = vld [vmem:[%s6732 + $0xb0] sm:$0x3]
      %v7339 = vld [vmem:[%s6732 + $0xb4] sm:$0xe]
      %v7340 = vld [vmem:[%s6732 + $0xbc] sm:$0x3]
      %v7342 = vshrl.u32 %v7309, 16
      %v7344 = vrot.slane %v7342, 5
      %v7345 = vshll.u32 %v7309, 16
      %v7347 = vrot.slane %v7345, 6
      %v7348 = vor.u32 %v7344, %v7347
      %v7349 = vrot.slane %v7348, 4
      %v7350 = vrot.slane %v6795, 5
      %v7351 = vrot.slane %v6791, 6
      %v7352 = vor.u32 %v7350, %v7351
      %v7353 = vsel %vm579, %v7349, %v7352
      %v7354 = vrot.slane %v7352, 4
      %v7356 = vshrl.u32 %v7310, 16
      %v7358 = vrot.slane %v7356, 5
      %v7359 = vshll.u32 %v7310, 16
      %v7361 = vrot.slane %v7359, 6
      %v7362 = vor.u32 %v7358, %v7361
      %v7363 = vsel %vm579, %v7354, %v7362
      %v7365 = vshrl.u32 %v7311, 16
      %v7367 = vrot.slane %v7365, 5
      %v7368 = vshll.u32 %v7311, 16
      %v7370 = vrot.slane %v7368, 6
      %v7371 = vor.u32 %v7367, %v7370
      %v7372 = vrot.slane %v7371, 4
      %v7373 = vrot.slane %v6819, 5
      %v7374 = vrot.slane %v6815, 6
      %v7375 = vor.u32 %v7373, %v7374
      %v7376 = vsel %vm579, %v7372, %v7375
      %v7377 = vrot.slane %v7375, 4
      %v7379 = vshrl.u32 %v7312, 16
      %v7381 = vrot.slane %v7379, 5
      %v7382 = vshll.u32 %v7312, 16
      %v7384 = vrot.slane %v7382, 6
      %v7385 = vor.u32 %v7381, %v7384
      %v7386 = vsel %vm579, %v7377, %v7385
      %v7388 = vshrl.u32 %v7313, 16
      %v7390 = vrot.slane %v7388, 5
      %v7391 = vshll.u32 %v7313, 16
      %v7393 = vrot.slane %v7391, 6
      %v7394 = vor.u32 %v7390, %v7393
      %v7395 = vrot.slane %v7394, 4
      %v7396 = vrot.slane %v6843, 5
      %v7397 = vrot.slane %v6839, 6
      %v7398 = vor.u32 %v7396, %v7397
      %v7399 = vsel %vm579, %v7395, %v7398
      %v7400 = vrot.slane %v7398, 4
      %v7402 = vshrl.u32 %v7314, 16
      %v7404 = vrot.slane %v7402, 5
      %v7405 = vshll.u32 %v7314, 16
      %v7407 = vrot.slane %v7405, 6
      %v7408 = vor.u32 %v7404, %v7407
      %v7409 = vsel %vm579, %v7400, %v7408
      %v7411 = vshrl.u32 %v7315, 16
      %v7413 = vrot.slane %v7411, 5
      %v7414 = vshll.u32 %v7315, 16
      %v7416 = vrot.slane %v7414, 6
      %v7417 = vor.u32 %v7413, %v7416
      %v7418 = vrot.slane %v7417, 4
      %v7419 = vrot.slane %v6867, 5
      %v7420 = vrot.slane %v6863, 6
      %v7421 = vor.u32 %v7419, %v7420
      %v7422 = vsel %vm579, %v7418, %v7421
      %v7423 = vrot.slane %v7421, 4
      %v7425 = vshrl.u32 %v7316, 16
      %v7427 = vrot.slane %v7425, 5
      %v7428 = vshll.u32 %v7316, 16
      %v7430 = vrot.slane %v7428, 6
      %v7431 = vor.u32 %v7427, %v7430
      %v7432 = vsel %vm579, %v7423, %v7431
      %v7434 = vshrl.u32 %v7317, 16
      %v7436 = vrot.slane %v7434, 5
      %v7437 = vshll.u32 %v7317, 16
      %v7439 = vrot.slane %v7437, 6
      %v7440 = vor.u32 %v7436, %v7439
      %v7441 = vrot.slane %v7440, 4
      %v7442 = vrot.slane %v6891, 5
      %v7443 = vrot.slane %v6887, 6
      %v7444 = vor.u32 %v7442, %v7443
      %v7445 = vsel %vm579, %v7441, %v7444
      %v7446 = vrot.slane %v7444, 4
      %v7448 = vshrl.u32 %v7318, 16
      %v7450 = vrot.slane %v7448, 5
      %v7451 = vshll.u32 %v7318, 16
      %v7453 = vrot.slane %v7451, 6
      %v7454 = vor.u32 %v7450, %v7453
      %v7455 = vsel %vm579, %v7446, %v7454
      %v7457 = vshrl.u32 %v7319, 16
      %v7459 = vrot.slane %v7457, 5
      %v7460 = vshll.u32 %v7319, 16
      %v7462 = vrot.slane %v7460, 6
      %v7463 = vor.u32 %v7459, %v7462
      %v7464 = vrot.slane %v7463, 4
      %v7465 = vrot.slane %v6915, 5
      %v7466 = vrot.slane %v6911, 6
      %v7467 = vor.u32 %v7465, %v7466
      %v7468 = vsel %vm579, %v7464, %v7467
      %v7469 = vrot.slane %v7467, 4
      %v7471 = vshrl.u32 %v7320, 16
      %v7473 = vrot.slane %v7471, 5
      %v7474 = vshll.u32 %v7320, 16
      %v7476 = vrot.slane %v7474, 6
      %v7477 = vor.u32 %v7473, %v7476
      %v7478 = vsel %vm579, %v7469, %v7477
      %v7480 = vshrl.u32 %v7321, 16
      %v7482 = vrot.slane %v7480, 5
      %v7483 = vshll.u32 %v7321, 16
      %v7485 = vrot.slane %v7483, 6
      %v7486 = vor.u32 %v7482, %v7485
      %v7487 = vrot.slane %v7486, 4
      %v7488 = vrot.slane %v6939, 5
      %v7489 = vrot.slane %v6935, 6
      %v7490 = vor.u32 %v7488, %v7489
      %v7491 = vsel %vm579, %v7487, %v7490
      %v7492 = vrot.slane %v7490, 4
      %v7494 = vshrl.u32 %v7322, 16
      %v7496 = vrot.slane %v7494, 5
      %v7497 = vshll.u32 %v7322, 16
      %v7499 = vrot.slane %v7497, 6
      %v7500 = vor.u32 %v7496, %v7499
      %v7501 = vsel %vm579, %v7492, %v7500
      %v7503 = vshrl.u32 %v7323, 16
      %v7505 = vrot.slane %v7503, 5
      %v7506 = vshll.u32 %v7323, 16
      %v7508 = vrot.slane %v7506, 6
      %v7509 = vor.u32 %v7505, %v7508
      %v7510 = vrot.slane %v7509, 4
      %v7511 = vrot.slane %v6963, 5
      %v7512 = vrot.slane %v6959, 6
      %v7513 = vor.u32 %v7511, %v7512
      %v7514 = vsel %vm579, %v7510, %v7513
      %v7515 = vrot.slane %v7513, 4
      %v7517 = vshrl.u32 %v7324, 16
      %v7519 = vrot.slane %v7517, 5
      %v7520 = vshll.u32 %v7324, 16
      %v7522 = vrot.slane %v7520, 6
      %v7523 = vor.u32 %v7519, %v7522
      %v7524 = vsel %vm579, %v7515, %v7523
      %v7526 = vshrl.u32 %v7325, 16
      %v7528 = vrot.slane %v7526, 5
      %v7529 = vshll.u32 %v7325, 16
      %v7531 = vrot.slane %v7529, 6
      %v7532 = vor.u32 %v7528, %v7531
      %v7533 = vrot.slane %v7532, 4
      %v7534 = vrot.slane %v6987, 5
      %v7535 = vrot.slane %v6983, 6
      %v7536 = vor.u32 %v7534, %v7535
      %v7537 = vsel %vm579, %v7533, %v7536
      %v7538 = vrot.slane %v7536, 4
      %v7540 = vshrl.u32 %v7326, 16
      %v7542 = vrot.slane %v7540, 5
      %v7543 = vshll.u32 %v7326, 16
      %v7545 = vrot.slane %v7543, 6
      %v7546 = vor.u32 %v7542, %v7545
      %v7547 = vsel %vm579, %v7538, %v7546
      %v7549 = vshrl.u32 %v7327, 16
      %v7551 = vrot.slane %v7549, 5
      %v7552 = vshll.u32 %v7327, 16
      %v7554 = vrot.slane %v7552, 6
      %v7555 = vor.u32 %v7551, %v7554
      %v7556 = vrot.slane %v7555, 4
      %v7557 = vrot.slane %v7011, 5
      %v7558 = vrot.slane %v7007, 6
      %v7559 = vor.u32 %v7557, %v7558
      %v7560 = vsel %vm579, %v7556, %v7559
      %v7561 = vrot.slane %v7559, 4
      %v7563 = vshrl.u32 %v7328, 16
      %v7565 = vrot.slane %v7563, 5
      %v7566 = vshll.u32 %v7328, 16
      %v7568 = vrot.slane %v7566, 6
      %v7569 = vor.u32 %v7565, %v7568
      %v7570 = vsel %vm579, %v7561, %v7569
      %v7572 = vshrl.u32 %v7329, 16
      %v7574 = vrot.slane %v7572, 5
      %v7575 = vshll.u32 %v7329, 16
      %v7577 = vrot.slane %v7575, 6
      %v7578 = vor.u32 %v7574, %v7577
      %v7579 = vrot.slane %v7578, 4
      %v7580 = vrot.slane %v7035, 5
      %v7581 = vrot.slane %v7031, 6
      %v7582 = vor.u32 %v7580, %v7581
      %v7583 = vsel %vm579, %v7579, %v7582
      %v7584 = vrot.slane %v7582, 4
      %v7586 = vshrl.u32 %v7330, 16
      %v7588 = vrot.slane %v7586, 5
      %v7589 = vshll.u32 %v7330, 16
      %v7591 = vrot.slane %v7589, 6
      %v7592 = vor.u32 %v7588, %v7591
      %v7593 = vsel %vm579, %v7584, %v7592
      %v7595 = vshrl.u32 %v7331, 16
      %v7597 = vrot.slane %v7595, 5
      %v7598 = vshll.u32 %v7331, 16
      %v7600 = vrot.slane %v7598, 6
      %v7601 = vor.u32 %v7597, %v7600
      %v7602 = vrot.slane %v7601, 4
      %v7603 = vrot.slane %v7059, 5
      %v7604 = vrot.slane %v7055, 6
      %v7605 = vor.u32 %v7603, %v7604
      %v7606 = vsel %vm579, %v7602, %v7605
      %v7607 = vrot.slane %v7605, 4
      %v7609 = vshrl.u32 %v7332, 16
      %v7611 = vrot.slane %v7609, 5
      %v7612 = vshll.u32 %v7332, 16
      %v7614 = vrot.slane %v7612, 6
      %v7615 = vor.u32 %v7611, %v7614
      %v7616 = vsel %vm579, %v7607, %v7615
      %v7618 = vshrl.u32 %v7333, 16
      %v7620 = vrot.slane %v7618, 5
      %v7621 = vshll.u32 %v7333, 16
      %v7623 = vrot.slane %v7621, 6
      %v7624 = vor.u32 %v7620, %v7623
      %v7625 = vrot.slane %v7624, 4
      %v7626 = vrot.slane %v7083, 5
      %v7627 = vrot.slane %v7079, 6
      %v7628 = vor.u32 %v7626, %v7627
      %v7629 = vsel %vm579, %v7625, %v7628
      %v7630 = vrot.slane %v7628, 4
      %v7632 = vshrl.u32 %v7334, 16
      %v7634 = vrot.slane %v7632, 5
      %v7635 = vshll.u32 %v7334, 16
      %v7637 = vrot.slane %v7635, 6
      %v7638 = vor.u32 %v7634, %v7637
      %v7639 = vsel %vm579, %v7630, %v7638
      %v7641 = vshrl.u32 %v7335, 16
      %v7643 = vrot.slane %v7641, 5
      %v7644 = vshll.u32 %v7335, 16
      %v7646 = vrot.slane %v7644, 6
      %v7647 = vor.u32 %v7643, %v7646
      %v7648 = vrot.slane %v7647, 4
      %v7649 = vrot.slane %v7107, 5
      %v7650 = vrot.slane %v7103, 6
      %v7651 = vor.u32 %v7649, %v7650
      %v7652 = vsel %vm579, %v7648, %v7651
      %v7653 = vrot.slane %v7651, 4
      %v7655 = vshrl.u32 %v7336, 16
      %v7657 = vrot.slane %v7655, 5
      %v7658 = vshll.u32 %v7336, 16
      %v7660 = vrot.slane %v7658, 6
      %v7661 = vor.u32 %v7657, %v7660
      %v7662 = vsel %vm579, %v7653, %v7661
      %v7664 = vshrl.u32 %v7337, 16
      %v7666 = vrot.slane %v7664, 5
      %v7667 = vshll.u32 %v7337, 16
      %v7669 = vrot.slane %v7667, 6
      %v7670 = vor.u32 %v7666, %v7669
      %v7671 = vrot.slane %v7670, 4
      %v7672 = vrot.slane %v7131, 5
      %v7673 = vrot.slane %v7127, 6
      %v7674 = vor.u32 %v7672, %v7673
      %v7675 = vsel %vm579, %v7671, %v7674
      %v7676 = vrot.slane %v7674, 4
      %v7678 = vshrl.u32 %v7338, 16
      %v7680 = vrot.slane %v7678, 5
      %v7681 = vshll.u32 %v7338, 16
      %v7683 = vrot.slane %v7681, 6
      %v7684 = vor.u32 %v7680, %v7683
      %v7685 = vsel %vm579, %v7676, %v7684
      %v7687 = vshrl.u32 %v7339, 16
      %v7689 = vrot.slane %v7687, 5
      %v7690 = vshll.u32 %v7339, 16
      %v7692 = vrot.slane %v7690, 6
      %v7693 = vor.u32 %v7689, %v7692
      %v7694 = vrot.slane %v7693, 4
      %v7695 = vrot.slane %v7155, 5
      %v7696 = vrot.slane %v7151, 6
      %v7697 = vor.u32 %v7695, %v7696
      %v7698 = vsel %vm579, %v7694, %v7697
      %v7699 = vrot.slane %v7697, 4
      %v7701 = vshrl.u32 %v7340, 16
      %v7703 = vrot.slane %v7701, 5
      %v7704 = vshll.u32 %v7340, 16
      %v7706 = vrot.slane %v7704, 6
      %v7707 = vor.u32 %v7703, %v7706
      %v7708 = vsel %vm579, %v7699, %v7707
      %s7709 = scalar_lea.vmem %s1, 64
      %v7710 = vld [vmem:[%s7709] sm:$0xf]
      %v7711 = vunpack.c.l.b16 %v7353
      %v7712 = vunpack.c.l.b16 %v7363
      %v7713 = vunpack.c.l.b16 %v7376
      %v7714 = vunpack.c.l.b16 %v7386
      %v7715 = vunpack.c.l.b16 %v7399
      %v7716 = vunpack.c.l.b16 %v7409
      %v7717 = vunpack.c.l.b16 %v7422
      %v7718 = vunpack.c.l.b16 %v7432
      %v7719 = vunpack.c.l.b16 %v7445
      %v7720 = vunpack.c.l.b16 %v7455
      %v7721 = vunpack.c.l.b16 %v7468
      %v7722 = vunpack.c.l.b16 %v7478
      %v7723 = vunpack.c.l.b16 %v7491
      %v7724 = vunpack.c.l.b16 %v7501
      %v7725 = vunpack.c.l.b16 %v7514
      %v7726 = vunpack.c.l.b16 %v7524
      %v7727 = vunpack.c.l.b16 %v7537
      %v7728 = vunpack.c.l.b16 %v7547
      %v7729 = vunpack.c.l.b16 %v7560
      %v7730 = vunpack.c.l.b16 %v7570
      %v7731 = vunpack.c.l.b16 %v7583
      %v7732 = vunpack.c.l.b16 %v7593
      %v7733 = vunpack.c.l.b16 %v7606
      %v7734 = vunpack.c.l.b16 %v7616
      %v7735 = vunpack.c.l.b16 %v7629
      %v7736 = vunpack.c.l.b16 %v7639
      %v7737 = vunpack.c.l.b16 %v7652
      %v7738 = vunpack.c.l.b16 %v7662
      %v7739 = vunpack.c.l.b16 %v7675
      %v7740 = vunpack.c.l.b16 %v7685
      %v7741 = vunpack.c.l.b16 %v7698
      %v7742 = vunpack.c.l.b16 %v7708
      %v7743 = vpack.c.b16 %v7712, %v7711
      %v7744 = vpack.c.b16 %v7714, %v7713
      %v7745 = vpack.c.b16 %v7716, %v7715
      %v7746 = vpack.c.b16 %v7718, %v7717
      %v7747 = vpack.c.b16 %v7720, %v7719
      %v7748 = vpack.c.b16 %v7722, %v7721
      %v7749 = vpack.c.b16 %v7724, %v7723
      %v7750 = vpack.c.b16 %v7726, %v7725
      %v7751 = vpack.c.b16 %v7728, %v7727
      %v7752 = vpack.c.b16 %v7730, %v7729
      %v7753 = vpack.c.b16 %v7732, %v7731
      %v7754 = vpack.c.b16 %v7734, %v7733
      %v7755 = vpack.c.b16 %v7736, %v7735
      %v7756 = vpack.c.b16 %v7738, %v7737
      %v7757 = vpack.c.b16 %v7740, %v7739
      %v7758 = vpack.c.b16 %v7742, %v7741
      %v7760 = vsel %vm466, %v7710, 0
      %v7763 = vsel %vm466, %v7743, 0
      %v7766 = vsel %vm466, %v7744, 0
      %v7769 = vsel %vm466, %v7745, 0
      %v7772 = vsel %vm466, %v7746, 0
      %v7775 = vsel %vm466, %v7747, 0
      %v7778 = vsel %vm466, %v7748, 0
      %v7781 = vsel %vm466, %v7749, 0
      %v7784 = vsel %vm466, %v7750, 0
      %v7787 = vsel %vm466, %v7751, 0
      %v7790 = vsel %vm466, %v7752, 0
      %v7793 = vsel %vm466, %v7753, 0
      %v7796 = vsel %vm466, %v7754, 0
      %v7799 = vsel %vm466, %v7755, 0
      %v7802 = vsel %vm466, %v7756, 0
      %v7805 = vsel %vm466, %v7757, 0
      %v7808 = vsel %vm466, %v7758, 0
      %7810 = vmatprep.subr.bf16.mxu0 0
      %7811 = vmatpush1.bf16.xpose.msra.mxu0 %v7763
      %7812 = vmatprep.subr.bf16.mxu0 0
      %7813 = vmatpush1.bf16.xpose.msra.mxu0 %v7766
      %7814 = vmatprep.subr.bf16.mxu0 0
      %7815 = vmatpush1.bf16.xpose.msra.mxu0 %v7769
      %7816 = vmatprep.subr.bf16.mxu0 0
      %7817 = vmatpush1.bf16.xpose.msra.mxu0 %v7772
      %7818 = vmatprep.subr.bf16.mxu0 0
      %7819 = vmatpush1.bf16.xpose.msra.mxu0 %v7775
      %7820 = vmatprep.subr.bf16.mxu0 0
      %7821 = vmatpush1.bf16.xpose.msra.mxu0 %v7778
      %7822 = vmatprep.subr.bf16.mxu0 0
      %7823 = vmatpush1.bf16.xpose.msra.mxu0 %v7781
      %7824 = vmatprep.subr.bf16.mxu0 0
      %7825 = vmatpush1.bf16.xpose.msra.mxu0 %v7784
      %7826 = vmatprep.subr.bf16.mxu0 0
      %7827 = vmatpush1.bf16.xpose.msra.mxu0 %v7787
      %7828 = vmatprep.subr.bf16.mxu0 0
      %7829 = vmatpush1.bf16.xpose.msra.mxu0 %v7790
      %7830 = vmatprep.subr.bf16.mxu0 0
      %7831 = vmatpush1.bf16.xpose.msra.mxu0 %v7793
      %7832 = vmatprep.subr.bf16.mxu0 0
      %7833 = vmatpush1.bf16.xpose.msra.mxu0 %v7796
      %7834 = vmatprep.subr.bf16.mxu0 0
      %7835 = vmatpush1.bf16.xpose.msra.mxu0 %v7799
      %7836 = vmatprep.subr.bf16.mxu0 0
      %7837 = vmatpush1.bf16.xpose.msra.mxu0 %v7802
      %7838 = vmatprep.subr.bf16.mxu0 0
      %7839 = vmatpush1.bf16.xpose.msra.mxu0 %v7805
      %7840 = vmatprep.subr.bf16.mxu0 0
      %7841 = vmatpush1.bf16.xpose.msra.mxu0 %v7808
      %7842 = vmatprep.mubr.bf16.mxu0 0
      %7843 = vmatmul.mubr.bf16.gmra.mrb[0].mxu0 %v7760
      %v7844 = vpop.f32.mrb[0].mxu0
      %v7845 = vadd.f32 0.0, %v7844
      %v7846 = vpop.f32.mrb[0].mxu0
      %v7847 = vadd.f32 0.0, %v7846
      %v7848 = vpop.f32.mrb[0].mxu0
      %v7849 = vpop.f32.mrb[0].mxu0
      %7850 = vdwg.mxu0
      %v7851 = vadd.f32 %v7307, %v7845
      %v7852 = vadd.f32 %v7308, %v7847
      %v7853 = vld [vmem:[%s6732] sm:$0xc]
      %v7854 = vld [vmem:[%s6732 + $0x8] sm:$0x7]
      %v7855 = vld [vmem:[%s6732 + $0xc] sm:$0xc]
      %v7856 = vld [vmem:[%s6732 + $0x14] sm:$0x7]
      %v7857 = vld [vmem:[%s6732 + $0x18] sm:$0xc]
      %v7858 = vld [vmem:[%s6732 + $0x20] sm:$0x7]
      %v7859 = vld [vmem:[%s6732 + $0x24] sm:$0xc]
      %v7860 = vld [vmem:[%s6732 + $0x2c] sm:$0x7]
      %v7861 = vld [vmem:[%s6732 + $0x30] sm:$0xc]
      %v7862 = vld [vmem:[%s6732 + $0x38] sm:$0x7]
      %v7863 = vld [vmem:[%s6732 + $0x3c] sm:$0xc]
      %v7864 = vld [vmem:[%s6732 + $0x44] sm:$0x7]
      %v7865 = vld [vmem:[%s6732 + $0x48] sm:$0xc]
      %v7866 = vld [vmem:[%s6732 + $0x50] sm:$0x7]
      %v7867 = vld [vmem:[%s6732 + $0x54] sm:$0xc]
      %v7868 = vld [vmem:[%s6732 + $0x5c] sm:$0x7]
      %v7869 = vld [vmem:[%s6732 + $0x60] sm:$0xc]
      %v7870 = vld [vmem:[%s6732 + $0x68] sm:$0x7]
      %v7871 = vld [vmem:[%s6732 + $0x6c] sm:$0xc]
      %v7872 = vld [vmem:[%s6732 + $0x74] sm:$0x7]
      %v7873 = vld [vmem:[%s6732 + $0x78] sm:$0xc]
      %v7874 = vld [vmem:[%s6732 + $0x80] sm:$0x7]
      %v7875 = vld [vmem:[%s6732 + $0x84] sm:$0xc]
      %v7876 = vld [vmem:[%s6732 + $0x8c] sm:$0x7]
      %v7877 = vld [vmem:[%s6732 + $0x90] sm:$0xc]
      %v7878 = vld [vmem:[%s6732 + $0x98] sm:$0x7]
      %v7879 = vld [vmem:[%s6732 + $0x9c] sm:$0xc]
      %v7880 = vld [vmem:[%s6732 + $0xa4] sm:$0x7]
      %v7881 = vld [vmem:[%s6732 + $0xa8] sm:$0xc]
      %v7882 = vld [vmem:[%s6732 + $0xb0] sm:$0x7]
      %v7883 = vld [vmem:[%s6732 + $0xb4] sm:$0xc]
      %v7884 = vld [vmem:[%s6732 + $0xbc] sm:$0x7]
      %v7886 = vshrl.u32 %v7853, 16
      %v7888 = vrot.slane %v7886, 6
      %v7889 = vshll.u32 %v7853, 16
      %v7891 = vrot.slane %v7889, 7
      %v7892 = vor.u32 %v7888, %v7891
      %v7893 = vrot.slane %v7892, 4
      %v7894 = vrot.slane %v6795, 6
      %v7895 = vrot.slane %v6791, 7
      %v7896 = vor.u32 %v7894, %v7895
      %v7897 = vsel %vm5176, %v7893, %v7896
      %v7898 = vrot.slane %v7896, 4
      %v7900 = vshrl.u32 %v7854, 16
      %v7902 = vrot.slane %v7900, 6
      %v7903 = vshll.u32 %v7854, 16
      %v7905 = vrot.slane %v7903, 7
      %v7906 = vor.u32 %v7902, %v7905
      %v7907 = vsel %vm5176, %v7898, %v7906
      %v7909 = vshrl.u32 %v7855, 16
      %v7911 = vrot.slane %v7909, 6
      %v7912 = vshll.u32 %v7855, 16
      %v7914 = vrot.slane %v7912, 7
      %v7915 = vor.u32 %v7911, %v7914
      %v7916 = vrot.slane %v7915, 4
      %v7917 = vrot.slane %v6819, 6
      %v7918 = vrot.slane %v6815, 7
      %v7919 = vor.u32 %v7917, %v7918
      %v7920 = vsel %vm5176, %v7916, %v7919
      %v7921 = vrot.slane %v7919, 4
      %v7923 = vshrl.u32 %v7856, 16
      %v7925 = vrot.slane %v7923, 6
      %v7926 = vshll.u32 %v7856, 16
      %v7928 = vrot.slane %v7926, 7
      %v7929 = vor.u32 %v7925, %v7928
      %v7930 = vsel %vm5176, %v7921, %v7929
      %v7932 = vshrl.u32 %v7857, 16
      %v7934 = vrot.slane %v7932, 6
      %v7935 = vshll.u32 %v7857, 16
      %v7937 = vrot.slane %v7935, 7
      %v7938 = vor.u32 %v7934, %v7937
      %v7939 = vrot.slane %v7938, 4
      %v7940 = vrot.slane %v6843, 6
      %v7941 = vrot.slane %v6839, 7
      %v7942 = vor.u32 %v7940, %v7941
      %v7943 = vsel %vm5176, %v7939, %v7942
      %v7944 = vrot.slane %v7942, 4
      %v7946 = vshrl.u32 %v7858, 16
      %v7948 = vrot.slane %v7946, 6
      %v7949 = vshll.u32 %v7858, 16
      %v7951 = vrot.slane %v7949, 7
      %v7952 = vor.u32 %v7948, %v7951
      %v7953 = vsel %vm5176, %v7944, %v7952
      %v7955 = vshrl.u32 %v7859, 16
      %v7957 = vrot.slane %v7955, 6
      %v7958 = vshll.u32 %v7859, 16
      %v7960 = vrot.slane %v7958, 7
      %v7961 = vor.u32 %v7957, %v7960
      %v7962 = vrot.slane %v7961, 4
      %v7963 = vrot.slane %v6867, 6
      %v7964 = vrot.slane %v6863, 7
      %v7965 = vor.u32 %v7963, %v7964
      %v7966 = vsel %vm5176, %v7962, %v7965
      %v7967 = vrot.slane %v7965, 4
      %v7969 = vshrl.u32 %v7860, 16
      %v7971 = vrot.slane %v7969, 6
      %v7972 = vshll.u32 %v7860, 16
      %v7974 = vrot.slane %v7972, 7
      %v7975 = vor.u32 %v7971, %v7974
      %v7976 = vsel %vm5176, %v7967, %v7975
      %v7978 = vshrl.u32 %v7861, 16
      %v7980 = vrot.slane %v7978, 6
      %v7981 = vshll.u32 %v7861, 16
      %v7983 = vrot.slane %v7981, 7
      %v7984 = vor.u32 %v7980, %v7983
      %v7985 = vrot.slane %v7984, 4
      %v7986 = vrot.slane %v6891, 6
      %v7987 = vrot.slane %v6887, 7
      %v7988 = vor.u32 %v7986, %v7987
      %v7989 = vsel %vm5176, %v7985, %v7988
      %v7990 = vrot.slane %v7988, 4
      %v7992 = vshrl.u32 %v7862, 16
      %v7994 = vrot.slane %v7992, 6
      %v7995 = vshll.u32 %v7862, 16
      %v7997 = vrot.slane %v7995, 7
      %v7998 = vor.u32 %v7994, %v7997
      %v7999 = vsel %vm5176, %v7990, %v7998
      %v8001 = vshrl.u32 %v7863, 16
      %v8003 = vrot.slane %v8001, 6
      %v8004 = vshll.u32 %v7863, 16
      %v8006 = vrot.slane %v8004, 7
      %v8007 = vor.u32 %v8003, %v8006
      %v8008 = vrot.slane %v8007, 4
      %v8009 = vrot.slane %v6915, 6
      %v8010 = vrot.slane %v6911, 7
      %v8011 = vor.u32 %v8009, %v8010
      %v8012 = vsel %vm5176, %v8008, %v8011
      %v8013 = vrot.slane %v8011, 4
      %v8015 = vshrl.u32 %v7864, 16
      %v8017 = vrot.slane %v8015, 6
      %v8018 = vshll.u32 %v7864, 16
      %v8020 = vrot.slane %v8018, 7
      %v8021 = vor.u32 %v8017, %v8020
      %v8022 = vsel %vm5176, %v8013, %v8021
      %v8024 = vshrl.u32 %v7865, 16
      %v8026 = vrot.slane %v8024, 6
      %v8027 = vshll.u32 %v7865, 16
      %v8029 = vrot.slane %v8027, 7
      %v8030 = vor.u32 %v8026, %v8029
      %v8031 = vrot.slane %v8030, 4
      %v8032 = vrot.slane %v6939, 6
      %v8033 = vrot.slane %v6935, 7
      %v8034 = vor.u32 %v8032, %v8033
      %v8035 = vsel %vm5176, %v8031, %v8034
      %v8036 = vrot.slane %v8034, 4
      %v8038 = vshrl.u32 %v7866, 16
      %v8040 = vrot.slane %v8038, 6
      %v8041 = vshll.u32 %v7866, 16
      %v8043 = vrot.slane %v8041, 7
      %v8044 = vor.u32 %v8040, %v8043
      %v8045 = vsel %vm5176, %v8036, %v8044
      %v8047 = vshrl.u32 %v7867, 16
      %v8049 = vrot.slane %v8047, 6
      %v8050 = vshll.u32 %v7867, 16
      %v8052 = vrot.slane %v8050, 7
      %v8053 = vor.u32 %v8049, %v8052
      %v8054 = vrot.slane %v8053, 4
      %v8055 = vrot.slane %v6963, 6
      %v8056 = vrot.slane %v6959, 7
      %v8057 = vor.u32 %v8055, %v8056
      %v8058 = vsel %vm5176, %v8054, %v8057
      %v8059 = vrot.slane %v8057, 4
      %v8061 = vshrl.u32 %v7868, 16
      %v8063 = vrot.slane %v8061, 6
      %v8064 = vshll.u32 %v7868, 16
      %v8066 = vrot.slane %v8064, 7
      %v8067 = vor.u32 %v8063, %v8066
      %v8068 = vsel %vm5176, %v8059, %v8067
      %v8070 = vshrl.u32 %v7869, 16
      %v8072 = vrot.slane %v8070, 6
      %v8073 = vshll.u32 %v7869, 16
      %v8075 = vrot.slane %v8073, 7
      %v8076 = vor.u32 %v8072, %v8075
      %v8077 = vrot.slane %v8076, 4
      %v8078 = vrot.slane %v6987, 6
      %v8079 = vrot.slane %v6983, 7
      %v8080 = vor.u32 %v8078, %v8079
      %v8081 = vsel %vm5176, %v8077, %v8080
      %v8082 = vrot.slane %v8080, 4
      %v8084 = vshrl.u32 %v7870, 16
      %v8086 = vrot.slane %v8084, 6
      %v8087 = vshll.u32 %v7870, 16
      %v8089 = vrot.slane %v8087, 7
      %v8090 = vor.u32 %v8086, %v8089
      %v8091 = vsel %vm5176, %v8082, %v8090
      %v8093 = vshrl.u32 %v7871, 16
      %v8095 = vrot.slane %v8093, 6
      %v8096 = vshll.u32 %v7871, 16
      %v8098 = vrot.slane %v8096, 7
      %v8099 = vor.u32 %v8095, %v8098
      %v8100 = vrot.slane %v8099, 4
      %v8101 = vrot.slane %v7011, 6
      %v8102 = vrot.slane %v7007, 7
      %v8103 = vor.u32 %v8101, %v8102
      %v8104 = vsel %vm5176, %v8100, %v8103
      %v8105 = vrot.slane %v8103, 4
      %v8107 = vshrl.u32 %v7872, 16
      %v8109 = vrot.slane %v8107, 6
      %v8110 = vshll.u32 %v7872, 16
      %v8112 = vrot.slane %v8110, 7
      %v8113 = vor.u32 %v8109, %v8112
      %v8114 = vsel %vm5176, %v8105, %v8113
      %v8116 = vshrl.u32 %v7873, 16
      %v8118 = vrot.slane %v8116, 6
      %v8119 = vshll.u32 %v7873, 16
      %v8121 = vrot.slane %v8119, 7
      %v8122 = vor.u32 %v8118, %v8121
      %v8123 = vrot.slane %v8122, 4
      %v8124 = vrot.slane %v7035, 6
      %v8125 = vrot.slane %v7031, 7
      %v8126 = vor.u32 %v8124, %v8125
      %v8127 = vsel %vm5176, %v8123, %v8126
      %v8128 = vrot.slane %v8126, 4
      %v8130 = vshrl.u32 %v7874, 16
      %v8132 = vrot.slane %v8130, 6
      %v8133 = vshll.u32 %v7874, 16
      %v8135 = vrot.slane %v8133, 7
      %v8136 = vor.u32 %v8132, %v8135
      %v8137 = vsel %vm5176, %v8128, %v8136
      %v8139 = vshrl.u32 %v7875, 16
      %v8141 = vrot.slane %v8139, 6
      %v8142 = vshll.u32 %v7875, 16
      %v8144 = vrot.slane %v8142, 7
      %v8145 = vor.u32 %v8141, %v8144
      %v8146 = vrot.slane %v8145, 4
      %v8147 = vrot.slane %v7059, 6
      %v8148 = vrot.slane %v7055, 7
      %v8149 = vor.u32 %v8147, %v8148
      %v8150 = vsel %vm5176, %v8146, %v8149
      %v8151 = vrot.slane %v8149, 4
      %v8153 = vshrl.u32 %v7876, 16
      %v8155 = vrot.slane %v8153, 6
      %v8156 = vshll.u32 %v7876, 16
      %v8158 = vrot.slane %v8156, 7
      %v8159 = vor.u32 %v8155, %v8158
      %v8160 = vsel %vm5176, %v8151, %v8159
      %v8162 = vshrl.u32 %v7877, 16
      %v8164 = vrot.slane %v8162, 6
      %v8165 = vshll.u32 %v7877, 16
      %v8167 = vrot.slane %v8165, 7
      %v8168 = vor.u32 %v8164, %v8167
      %v8169 = vrot.slane %v8168, 4
      %v8170 = vrot.slane %v7083, 6
      %v8171 = vrot.slane %v7079, 7
      %v8172 = vor.u32 %v8170, %v8171
      %v8173 = vsel %vm5176, %v8169, %v8172
      %v8174 = vrot.slane %v8172, 4
      %v8176 = vshrl.u32 %v7878, 16
      %v8178 = vrot.slane %v8176, 6
      %v8179 = vshll.u32 %v7878, 16
      %v8181 = vrot.slane %v8179, 7
      %v8182 = vor.u32 %v8178, %v8181
      %v8183 = vsel %vm5176, %v8174, %v8182
      %v8185 = vshrl.u32 %v7879, 16
      %v8187 = vrot.slane %v8185, 6
      %v8188 = vshll.u32 %v7879, 16
      %v8190 = vrot.slane %v8188, 7
      %v8191 = vor.u32 %v8187, %v8190
      %v8192 = vrot.slane %v8191, 4
      %v8193 = vrot.slane %v7107, 6
      %v8194 = vrot.slane %v7103, 7
      %v8195 = vor.u32 %v8193, %v8194
      %v8196 = vsel %vm5176, %v8192, %v8195
      %v8197 = vrot.slane %v8195, 4
      %v8199 = vshrl.u32 %v7880, 16
      %v8201 = vrot.slane %v8199, 6
      %v8202 = vshll.u32 %v7880, 16
      %v8204 = vrot.slane %v8202, 7
      %v8205 = vor.u32 %v8201, %v8204
      %v8206 = vsel %vm5176, %v8197, %v8205
      %v8208 = vshrl.u32 %v7881, 16
      %v8210 = vrot.slane %v8208, 6
      %v8211 = vshll.u32 %v7881, 16
      %v8213 = vrot.slane %v8211, 7
      %v8214 = vor.u32 %v8210, %v8213
      %v8215 = vrot.slane %v8214, 4
      %v8216 = vrot.slane %v7131, 6
      %v8217 = vrot.slane %v7127, 7
      %v8218 = vor.u32 %v8216, %v8217
      %v8219 = vsel %vm5176, %v8215, %v8218
      %v8220 = vrot.slane %v8218, 4
      %v8222 = vshrl.u32 %v7882, 16
      %v8224 = vrot.slane %v8222, 6
      %v8225 = vshll.u32 %v7882, 16
      %v8227 = vrot.slane %v8225, 7
      %v8228 = vor.u32 %v8224, %v8227
      %v8229 = vsel %vm5176, %v8220, %v8228
      %v8231 = vshrl.u32 %v7883, 16
      %v8233 = vrot.slane %v8231, 6
      %v8234 = vshll.u32 %v7883, 16
      %v8236 = vrot.slane %v8234, 7
      %v8237 = vor.u32 %v8233, %v8236
      %v8238 = vrot.slane %v8237, 4
      %v8239 = vrot.slane %v7155, 6
      %v8240 = vrot.slane %v7151, 7
      %v8241 = vor.u32 %v8239, %v8240
      %v8242 = vsel %vm5176, %v8238, %v8241
      %v8243 = vrot.slane %v8241, 4
      %v8245 = vshrl.u32 %v7884, 16
      %v8247 = vrot.slane %v8245, 6
      %v8248 = vshll.u32 %v7884, 16
      %v8250 = vrot.slane %v8248, 7
      %v8251 = vor.u32 %v8247, %v8250
      %v8252 = vsel %vm5176, %v8243, %v8251
      %s8253 = scalar_lea.vmem %s1, 68
      %v8254 = vld [vmem:[%s8253] sm:$0xf]
      %v8255 = vunpack.c.l.b16 %v7897
      %v8256 = vunpack.c.l.b16 %v7907
      %v8257 = vunpack.c.l.b16 %v7920
      %v8258 = vunpack.c.l.b16 %v7930
      %v8259 = vunpack.c.l.b16 %v7943
      %v8260 = vunpack.c.l.b16 %v7953
      %v8261 = vunpack.c.l.b16 %v7966
      %v8262 = vunpack.c.l.b16 %v7976
      %v8263 = vunpack.c.l.b16 %v7989
      %v8264 = vunpack.c.l.b16 %v7999
      %v8265 = vunpack.c.l.b16 %v8012
      %v8266 = vunpack.c.l.b16 %v8022
      %v8267 = vunpack.c.l.b16 %v8035
      %v8268 = vunpack.c.l.b16 %v8045
      %v8269 = vunpack.c.l.b16 %v8058
      %v8270 = vunpack.c.l.b16 %v8068
      %v8271 = vunpack.c.l.b16 %v8081
      %v8272 = vunpack.c.l.b16 %v8091
      %v8273 = vunpack.c.l.b16 %v8104
      %v8274 = vunpack.c.l.b16 %v8114
      %v8275 = vunpack.c.l.b16 %v8127
      %v8276 = vunpack.c.l.b16 %v8137
      %v8277 = vunpack.c.l.b16 %v8150
      %v8278 = vunpack.c.l.b16 %v8160
      %v8279 = vunpack.c.l.b16 %v8173
      %v8280 = vunpack.c.l.b16 %v8183
      %v8281 = vunpack.c.l.b16 %v8196
      %v8282 = vunpack.c.l.b16 %v8206
      %v8283 = vunpack.c.l.b16 %v8219
      %v8284 = vunpack.c.l.b16 %v8229
      %v8285 = vunpack.c.l.b16 %v8242
      %v8286 = vunpack.c.l.b16 %v8252
      %v8287 = vpack.c.b16 %v8256, %v8255
      %v8288 = vpack.c.b16 %v8258, %v8257
      %v8289 = vpack.c.b16 %v8260, %v8259
      %v8290 = vpack.c.b16 %v8262, %v8261
      %v8291 = vpack.c.b16 %v8264, %v8263
      %v8292 = vpack.c.b16 %v8266, %v8265
      %v8293 = vpack.c.b16 %v8268, %v8267
      %v8294 = vpack.c.b16 %v8270, %v8269
      %v8295 = vpack.c.b16 %v8272, %v8271
      %v8296 = vpack.c.b16 %v8274, %v8273
      %v8297 = vpack.c.b16 %v8276, %v8275
      %v8298 = vpack.c.b16 %v8278, %v8277
      %v8299 = vpack.c.b16 %v8280, %v8279
      %v8300 = vpack.c.b16 %v8282, %v8281
      %v8301 = vpack.c.b16 %v8284, %v8283
      %v8302 = vpack.c.b16 %v8286, %v8285
      %v8304 = vsel %vm466, %v8254, 0
      %v8307 = vsel %vm466, %v8287, 0
      %v8310 = vsel %vm466, %v8288, 0
      %v8313 = vsel %vm466, %v8289, 0
      %v8316 = vsel %vm466, %v8290, 0
      %v8319 = vsel %vm466, %v8291, 0
      %v8322 = vsel %vm466, %v8292, 0
      %v8325 = vsel %vm466, %v8293, 0
      %v8328 = vsel %vm466, %v8294, 0
      %v8331 = vsel %vm466, %v8295, 0
      %v8334 = vsel %vm466, %v8296, 0
      %v8337 = vsel %vm466, %v8297, 0
      %v8340 = vsel %vm466, %v8298, 0
      %v8343 = vsel %vm466, %v8299, 0
      %v8346 = vsel %vm466, %v8300, 0
      %v8349 = vsel %vm466, %v8301, 0
      %v8352 = vsel %vm466, %v8302, 0
      %8354 = vmatprep.subr.bf16.mxu0 0
      %8355 = vmatpush1.bf16.xpose.msra.mxu0 %v8307
      %8356 = vmatprep.subr.bf16.mxu0 0
      %8357 = vmatpush1.bf16.xpose.msra.mxu0 %v8310
      %8358 = vmatprep.subr.bf16.mxu0 0
      %8359 = vmatpush1.bf16.xpose.msra.mxu0 %v8313
      %8360 = vmatprep.subr.bf16.mxu0 0
      %8361 = vmatpush1.bf16.xpose.msra.mxu0 %v8316
      %8362 = vmatprep.subr.bf16.mxu0 0
      %8363 = vmatpush1.bf16.xpose.msra.mxu0 %v8319
      %8364 = vmatprep.subr.bf16.mxu0 0
      %8365 = vmatpush1.bf16.xpose.msra.mxu0 %v8322
      %8366 = vmatprep.subr.bf16.mxu0 0
      %8367 = vmatpush1.bf16.xpose.msra.mxu0 %v8325
      %8368 = vmatprep.subr.bf16.mxu0 0
      %8369 = vmatpush1.bf16.xpose.msra.mxu0 %v8328
      %8370 = vmatprep.subr.bf16.mxu0 0
      %8371 = vmatpush1.bf16.xpose.msra.mxu0 %v8331
      %8372 = vmatprep.subr.bf16.mxu0 0
      %8373 = vmatpush1.bf16.xpose.msra.mxu0 %v8334
      %8374 = vmatprep.subr.bf16.mxu0 0
      %8375 = vmatpush1.bf16.xpose.msra.mxu0 %v8337
      %8376 = vmatprep.subr.bf16.mxu0 0
      %8377 = vmatpush1.bf16.xpose.msra.mxu0 %v8340
      %8378 = vmatprep.subr.bf16.mxu0 0
      %8379 = vmatpush1.bf16.xpose.msra.mxu0 %v8343
      %8380 = vmatprep.subr.bf16.mxu0 0
      %8381 = vmatpush1.bf16.xpose.msra.mxu0 %v8346
      %8382 = vmatprep.subr.bf16.mxu0 0
      %8383 = vmatpush1.bf16.xpose.msra.mxu0 %v8349
      %8384 = vmatprep.subr.bf16.mxu0 0
      %8385 = vmatpush1.bf16.xpose.msra.mxu0 %v8352
      %8386 = vmatprep.mubr.bf16.mxu0 0
      %8387 = vmatmul.mubr.bf16.gmra.mrb[0].mxu0 %v8304
      %v8388 = vpop.f32.mrb[0].mxu0
      %v8389 = vadd.f32 0.0, %v8388
      %v8390 = vpop.f32.mrb[0].mxu0
      %v8391 = vadd.f32 0.0, %v8390
      %v8392 = vpop.f32.mrb[0].mxu0
      %v8393 = vpop.f32.mrb[0].mxu0
      %8394 = vdwg.mxu0
      %v8395 = vadd.f32 %v7851, %v8389
      %v8396 = vadd.f32 %v7852, %v8391
      %s8397 = smul.u32 %s195, 3
      %s8398 = smul.addr %s8397, 4
      %s8399 = scalar_lea.vmem %s183, %s8398
      %v8400 = vld [vmem:[%s8399] sm:$0xf]
      %v8401 = vld [vmem:[%s8399 + $0x4] sm:$0xf]
      %v8402 = vld [vmem:[%s8399 + $0xc] sm:$0xf]
      %v8403 = vld [vmem:[%s8399 + $0x10] sm:$0xf]
      %v8404 = vld [vmem:[%s8399 + $0x18] sm:$0xf]
      %v8405 = vld [vmem:[%s8399 + $0x1c] sm:$0xf]
      %v8406 = vld [vmem:[%s8399 + $0x24] sm:$0xf]
      %v8407 = vld [vmem:[%s8399 + $0x28] sm:$0xf]
      %v8408 = vld [vmem:[%s8399 + $0x30] sm:$0xf]
      %v8409 = vld [vmem:[%s8399 + $0x34] sm:$0xf]
      %v8410 = vld [vmem:[%s8399 + $0x3c] sm:$0xf]
      %v8411 = vld [vmem:[%s8399 + $0x40] sm:$0xf]
      %v8412 = vld [vmem:[%s8399 + $0x48] sm:$0xf]
      %v8413 = vld [vmem:[%s8399 + $0x4c] sm:$0xf]
      %v8414 = vld [vmem:[%s8399 + $0x54] sm:$0xf]
      %v8415 = vld [vmem:[%s8399 + $0x58] sm:$0xf]
      %v8416 = vld [vmem:[%s8399 + $0x60] sm:$0xf]
      %v8417 = vld [vmem:[%s8399 + $0x64] sm:$0xf]
      %v8418 = vld [vmem:[%s8399 + $0x6c] sm:$0xf]
      %v8419 = vld [vmem:[%s8399 + $0x70] sm:$0xf]
      %v8420 = vld [vmem:[%s8399 + $0x78] sm:$0xf]
      %v8421 = vld [vmem:[%s8399 + $0x7c] sm:$0xf]
      %v8422 = vld [vmem:[%s8399 + $0x84] sm:$0xf]
      %v8423 = vld [vmem:[%s8399 + $0x88] sm:$0xf]
      %v8424 = vld [vmem:[%s8399 + $0x90] sm:$0xf]
      %v8425 = vld [vmem:[%s8399 + $0x94] sm:$0xf]
      %v8426 = vld [vmem:[%s8399 + $0x9c] sm:$0xf]
      %v8427 = vld [vmem:[%s8399 + $0xa0] sm:$0xf]
      %v8428 = vld [vmem:[%s8399 + $0xa8] sm:$0xf]
      %v8429 = vld [vmem:[%s8399 + $0xac] sm:$0xf]
      %v8430 = vld [vmem:[%s8399 + $0xb4] sm:$0xf]
      %v8431 = vld [vmem:[%s8399 + $0xb8] sm:$0xf]
      %s8432 = scalar_lea.vmem %s1, 72
      %v8433 = vld [vmem:[%s8432] sm:$0xf]
      %v8466 = vunpack.c.l.b16 %v8400
      %v8467 = vunpack.c.l.b16 %v8401
      %v8468 = vunpack.c.l.b16 %v8402
      %v8469 = vunpack.c.l.b16 %v8403
      %v8470 = vunpack.c.l.b16 %v8404
      %v8471 = vunpack.c.l.b16 %v8405
      %v8472 = vunpack.c.l.b16 %v8406
      %v8473 = vunpack.c.l.b16 %v8407
      %v8474 = vunpack.c.l.b16 %v8408
      %v8475 = vunpack.c.l.b16 %v8409
      %v8476 = vunpack.c.l.b16 %v8410
      %v8477 = vunpack.c.l.b16 %v8411
      %v8478 = vunpack.c.l.b16 %v8412
      %v8479 = vunpack.c.l.b16 %v8413
      %v8480 = vunpack.c.l.b16 %v8414
      %v8481 = vunpack.c.l.b16 %v8415
      %v8482 = vunpack.c.l.b16 %v8416
      %v8483 = vunpack.c.l.b16 %v8417
      %v8484 = vunpack.c.l.b16 %v8418
      %v8485 = vunpack.c.l.b16 %v8419
      %v8486 = vunpack.c.l.b16 %v8420
      %v8487 = vunpack.c.l.b16 %v8421
      %v8488 = vunpack.c.l.b16 %v8422
      %v8489 = vunpack.c.l.b16 %v8423
      %v8490 = vunpack.c.l.b16 %v8424
      %v8491 = vunpack.c.l.b16 %v8425
      %v8492 = vunpack.c.l.b16 %v8426
      %v8493 = vunpack.c.l.b16 %v8427
      %v8494 = vunpack.c.l.b16 %v8428
      %v8495 = vunpack.c.l.b16 %v8429
      %v8496 = vunpack.c.l.b16 %v8430
      %v8497 = vunpack.c.l.b16 %v8431
      %v8498 = vpack.c.b16 %v8467, %v8466
      %v8499 = vpack.c.b16 %v8469, %v8468
      %v8500 = vpack.c.b16 %v8471, %v8470
      %v8501 = vpack.c.b16 %v8473, %v8472
      %v8502 = vpack.c.b16 %v8475, %v8474
      %v8503 = vpack.c.b16 %v8477, %v8476
      %v8504 = vpack.c.b16 %v8479, %v8478
      %v8505 = vpack.c.b16 %v8481, %v8480
      %v8506 = vpack.c.b16 %v8483, %v8482
      %v8507 = vpack.c.b16 %v8485, %v8484
      %v8508 = vpack.c.b16 %v8487, %v8486
      %v8509 = vpack.c.b16 %v8489, %v8488
      %v8510 = vpack.c.b16 %v8491, %v8490
      %v8511 = vpack.c.b16 %v8493, %v8492
      %v8512 = vpack.c.b16 %v8495, %v8494
      %v8513 = vpack.c.b16 %v8497, %v8496
      %v8515 = vsel %vm466, %v8433, 0
      %v8518 = vsel %vm466, %v8498, 0
      %v8521 = vsel %vm466, %v8499, 0
      %v8524 = vsel %vm466, %v8500, 0
      %v8527 = vsel %vm466, %v8501, 0
      %v8530 = vsel %vm466, %v8502, 0
      %v8533 = vsel %vm466, %v8503, 0
      %v8536 = vsel %vm466, %v8504, 0
      %v8539 = vsel %vm466, %v8505, 0
      %v8542 = vsel %vm466, %v8506, 0
      %v8545 = vsel %vm466, %v8507, 0
      %v8548 = vsel %vm466, %v8508, 0
      %v8551 = vsel %vm466, %v8509, 0
      %v8554 = vsel %vm466, %v8510, 0
      %v8557 = vsel %vm466, %v8511, 0
      %v8560 = vsel %vm466, %v8512, 0
      %v8563 = vsel %vm466, %v8513, 0
      %8565 = vmatprep.subr.bf16.mxu0 0
      %8566 = vmatpush1.bf16.xpose.msra.mxu0 %v8518
      %8567 = vmatprep.subr.bf16.mxu0 0
      %8568 = vmatpush1.bf16.xpose.msra.mxu0 %v8521
      %8569 = vmatprep.subr.bf16.mxu0 0
      %8570 = vmatpush1.bf16.xpose.msra.mxu0 %v8524
      %8571 = vmatprep.subr.bf16.mxu0 0
      %8572 = vmatpush1.bf16.xpose.msra.mxu0 %v8527
      %8573 = vmatprep.subr.bf16.mxu0 0
      %8574 = vmatpush1.bf16.xpose.msra.mxu0 %v8530
      %8575 = vmatprep.subr.bf16.mxu0 0
      %8576 = vmatpush1.bf16.xpose.msra.mxu0 %v8533
      %8577 = vmatprep.subr.bf16.mxu0 0
      %8578 = vmatpush1.bf16.xpose.msra.mxu0 %v8536
      %8579 = vmatprep.subr.bf16.mxu0 0
      %8580 = vmatpush1.bf16.xpose.msra.mxu0 %v8539
      %8581 = vmatprep.subr.bf16.mxu0 0
      %8582 = vmatpush1.bf16.xpose.msra.mxu0 %v8542
      %8583 = vmatprep.subr.bf16.mxu0 0
      %8584 = vmatpush1.bf16.xpose.msra.mxu0 %v8545
      %8585 = vmatprep.subr.bf16.mxu0 0
      %8586 = vmatpush1.bf16.xpose.msra.mxu0 %v8548
      %8587 = vmatprep.subr.bf16.mxu0 0
      %8588 = vmatpush1.bf16.xpose.msra.mxu0 %v8551
      %8589 = vmatprep.subr.bf16.mxu0 0
      %8590 = vmatpush1.bf16.xpose.msra.mxu0 %v8554
      %8591 = vmatprep.subr.bf16.mxu0 0
      %8592 = vmatpush1.bf16.xpose.msra.mxu0 %v8557
      %8593 = vmatprep.subr.bf16.mxu0 0
      %8594 = vmatpush1.bf16.xpose.msra.mxu0 %v8560
      %8595 = vmatprep.subr.bf16.mxu0 0
      %8596 = vmatpush1.bf16.xpose.msra.mxu0 %v8563
      %8597 = vmatprep.mubr.bf16.mxu0 0
      %8598 = vmatmul.mubr.bf16.gmra.mrb[0].mxu0 %v8515
      %v8599 = vpop.f32.mrb[0].mxu0
      %v8600 = vadd.f32 0.0, %v8599
      %v8601 = vpop.f32.mrb[0].mxu0
      %v8602 = vadd.f32 0.0, %v8601
      %v8603 = vpop.f32.mrb[0].mxu0
      %v8604 = vpop.f32.mrb[0].mxu0
      %8605 = vdwg.mxu0
      %v8606 = vadd.f32 %v8395, %v8600
      %v8607 = vadd.f32 %v8396, %v8602
      %v8608 = vld [vmem:[%s8399] sm:$0xe]
      %v8609 = vld [vmem:[%s8399 + $0x4] sm:$0xf]
      %v8610 = vld [vmem:[%s8399 + $0x8] sm:$0x3]
      %v8611 = vld [vmem:[%s8399 + $0xc] sm:$0xe]
      %v8612 = vld [vmem:[%s8399 + $0x10] sm:$0xf]
      %v8613 = vld [vmem:[%s8399 + $0x14] sm:$0x3]
      %v8614 = vld [vmem:[%s8399 + $0x18] sm:$0xe]
      %v8615 = vld [vmem:[%s8399 + $0x1c] sm:$0xf]
      %v8616 = vld [vmem:[%s8399 + $0x20] sm:$0x3]
      %v8617 = vld [vmem:[%s8399 + $0x24] sm:$0xe]
      %v8618 = vld [vmem:[%s8399 + $0x28] sm:$0xf]
      %v8619 = vld [vmem:[%s8399 + $0x2c] sm:$0x3]
      %v8620 = vld [vmem:[%s8399 + $0x30] sm:$0xe]
      %v8621 = vld [vmem:[%s8399 + $0x34] sm:$0xf]
      %v8622 = vld [vmem:[%s8399 + $0x38] sm:$0x3]
      %v8623 = vld [vmem:[%s8399 + $0x3c] sm:$0xe]
      %v8624 = vld [vmem:[%s8399 + $0x40] sm:$0xf]
      %v8625 = vld [vmem:[%s8399 + $0x44] sm:$0x3]
      %v8626 = vld [vmem:[%s8399 + $0x48] sm:$0xe]
      %v8627 = vld [vmem:[%s8399 + $0x4c] sm:$0xf]
      %v8628 = vld [vmem:[%s8399 + $0x50] sm:$0x3]
      %v8629 = vld [vmem:[%s8399 + $0x54] sm:$0xe]
      %v8630 = vld [vmem:[%s8399 + $0x58] sm:$0xf]
      %v8631 = vld [vmem:[%s8399 + $0x5c] sm:$0x3]
      %v8632 = vld [vmem:[%s8399 + $0x60] sm:$0xe]
      %v8633 = vld [vmem:[%s8399 + $0x64] sm:$0xf]
      %v8634 = vld [vmem:[%s8399 + $0x68] sm:$0x3]
      %v8635 = vld [vmem:[%s8399 + $0x6c] sm:$0xe]
      %v8636 = vld [vmem:[%s8399 + $0x70] sm:$0xf]
      %v8637 = vld [vmem:[%s8399 + $0x74] sm:$0x3]
      %v8638 = vld [vmem:[%s8399 + $0x78] sm:$0xe]
      %v8639 = vld [vmem:[%s8399 + $0x7c] sm:$0xf]
      %v8640 = vld [vmem:[%s8399 + $0x80] sm:$0x3]
      %v8641 = vld [vmem:[%s8399 + $0x84] sm:$0xe]
      %v8642 = vld [vmem:[%s8399 + $0x88] sm:$0xf]
      %v8643 = vld [vmem:[%s8399 + $0x8c] sm:$0x3]
      %v8644 = vld [vmem:[%s8399 + $0x90] sm:$0xe]
      %v8645 = vld [vmem:[%s8399 + $0x94] sm:$0xf]
      %v8646 = vld [vmem:[%s8399 + $0x98] sm:$0x3]
      %v8647 = vld [vmem:[%s8399 + $0x9c] sm:$0xe]
      %v8648 = vld [vmem:[%s8399 + $0xa0] sm:$0xf]
      %v8649 = vld [vmem:[%s8399 + $0xa4] sm:$0x3]
      %v8650 = vld [vmem:[%s8399 + $0xa8] sm:$0xe]
      %v8651 = vld [vmem:[%s8399 + $0xac] sm:$0xf]
      %v8652 = vld [vmem:[%s8399 + $0xb0] sm:$0x3]
      %v8653 = vld [vmem:[%s8399 + $0xb4] sm:$0xe]
      %v8654 = vld [vmem:[%s8399 + $0xb8] sm:$0xf]
      %v8655 = vld [vmem:[%s8399 + $0xbc] sm:$0x3]
      %v8657 = vshrl.u32 %v8608, 16
      %v8659 = vrot.slane %v8657, 5
      %v8660 = vshll.u32 %v8608, 16
      %v8662 = vrot.slane %v8660, 6
      %v8663 = vor.u32 %v8659, %v8662
      %v8664 = vrot.slane %v8663, 4
      %v8666 = vshrl.u32 %v8609, 16
      %v8668 = vrot.slane %v8666, 5
      %v8669 = vshll.u32 %v8609, 16
      %v8671 = vrot.slane %v8669, 6
      %v8672 = vor.u32 %v8668, %v8671
      %v8673 = vsel %vm579, %v8664, %v8672
      %v8674 = vrot.slane %v8672, 4
      %v8676 = vshrl.u32 %v8610, 16
      %v8678 = vrot.slane %v8676, 5
      %v8679 = vshll.u32 %v8610, 16
      %v8681 = vrot.slane %v8679, 6
      %v8682 = vor.u32 %v8678, %v8681
      %v8683 = vsel %vm579, %v8674, %v8682
      %v8685 = vshrl.u32 %v8611, 16
      %v8687 = vrot.slane %v8685, 5
      %v8688 = vshll.u32 %v8611, 16
      %v8690 = vrot.slane %v8688, 6
      %v8691 = vor.u32 %v8687, %v8690
      %v8692 = vrot.slane %v8691, 4
      %v8694 = vshrl.u32 %v8612, 16
      %v8696 = vrot.slane %v8694, 5
      %v8697 = vshll.u32 %v8612, 16
      %v8699 = vrot.slane %v8697, 6
      %v8700 = vor.u32 %v8696, %v8699
      %v8701 = vsel %vm579, %v8692, %v8700
      %v8702 = vrot.slane %v8700, 4
      %v8704 = vshrl.u32 %v8613, 16
      %v8706 = vrot.slane %v8704, 5
      %v8707 = vshll.u32 %v8613, 16
      %v8709 = vrot.slane %v8707, 6
      %v8710 = vor.u32 %v8706, %v8709
      %v8711 = vsel %vm579, %v8702, %v8710
      %v8713 = vshrl.u32 %v8614, 16
      %v8715 = vrot.slane %v8713, 5
      %v8716 = vshll.u32 %v8614, 16
      %v8718 = vrot.slane %v8716, 6
      %v8719 = vor.u32 %v8715, %v8718
      %v8720 = vrot.slane %v8719, 4
      %v8722 = vshrl.u32 %v8615, 16
      %v8724 = vrot.slane %v8722, 5
      %v8725 = vshll.u32 %v8615, 16
      %v8727 = vrot.slane %v8725, 6
      %v8728 = vor.u32 %v8724, %v8727
      %v8729 = vsel %vm579, %v8720, %v8728
      %v8730 = vrot.slane %v8728, 4
      %v8732 = vshrl.u32 %v8616, 16
      %v8734 = vrot.slane %v8732, 5
      %v8735 = vshll.u32 %v8616, 16
      %v8737 = vrot.slane %v8735, 6
      %v8738 = vor.u32 %v8734, %v8737
      %v8739 = vsel %vm579, %v8730, %v8738
      %v8741 = vshrl.u32 %v8617, 16
      %v8743 = vrot.slane %v8741, 5
      %v8744 = vshll.u32 %v8617, 16
      %v8746 = vrot.slane %v8744, 6
      %v8747 = vor.u32 %v8743, %v8746
      %v8748 = vrot.slane %v8747, 4
      %v8750 = vshrl.u32 %v8618, 16
      %v8752 = vrot.slane %v8750, 5
      %v8753 = vshll.u32 %v8618, 16
      %v8755 = vrot.slane %v8753, 6
      %v8756 = vor.u32 %v8752, %v8755
      %v8757 = vsel %vm579, %v8748, %v8756
      %v8758 = vrot.slane %v8756, 4
      %v8760 = vshrl.u32 %v8619, 16
      %v8762 = vrot.slane %v8760, 5
      %v8763 = vshll.u32 %v8619, 16
      %v8765 = vrot.slane %v8763, 6
      %v8766 = vor.u32 %v8762, %v8765
      %v8767 = vsel %vm579, %v8758, %v8766
      %v8769 = vshrl.u32 %v8620, 16
      %v8771 = vrot.slane %v8769, 5
      %v8772 = vshll.u32 %v8620, 16
      %v8774 = vrot.slane %v8772, 6
      %v8775 = vor.u32 %v8771, %v8774
      %v8776 = vrot.slane %v8775, 4
      %v8778 = vshrl.u32 %v8621, 16
      %v8780 = vrot.slane %v8778, 5
      %v8781 = vshll.u32 %v8621, 16
      %v8783 = vrot.slane %v8781, 6
      %v8784 = vor.u32 %v8780, %v8783
      %v8785 = vsel %vm579, %v8776, %v8784
      %v8786 = vrot.slane %v8784, 4
      %v8788 = vshrl.u32 %v8622, 16
      %v8790 = vrot.slane %v8788, 5
      %v8791 = vshll.u32 %v8622, 16
      %v8793 = vrot.slane %v8791, 6
      %v8794 = vor.u32 %v8790, %v8793
      %v8795 = vsel %vm579, %v8786, %v8794
      %v8797 = vshrl.u32 %v8623, 16
      %v8799 = vrot.slane %v8797, 5
      %v8800 = vshll.u32 %v8623, 16
      %v8802 = vrot.slane %v8800, 6
      %v8803 = vor.u32 %v8799, %v8802
      %v8804 = vrot.slane %v8803, 4
      %v8806 = vshrl.u32 %v8624, 16
      %v8808 = vrot.slane %v8806, 5
      %v8809 = vshll.u32 %v8624, 16
      %v8811 = vrot.slane %v8809, 6
      %v8812 = vor.u32 %v8808, %v8811
      %v8813 = vsel %vm579, %v8804, %v8812
      %v8814 = vrot.slane %v8812, 4
      %v8816 = vshrl.u32 %v8625, 16
      %v8818 = vrot.slane %v8816, 5
      %v8819 = vshll.u32 %v8625, 16
      %v8821 = vrot.slane %v8819, 6
      %v8822 = vor.u32 %v8818, %v8821
      %v8823 = vsel %vm579, %v8814, %v8822
      %v8825 = vshrl.u32 %v8626, 16
      %v8827 = vrot.slane %v8825, 5
      %v8828 = vshll.u32 %v8626, 16
      %v8830 = vrot.slane %v8828, 6
      %v8831 = vor.u32 %v8827, %v8830
      %v8832 = vrot.slane %v8831, 4
      %v8834 = vshrl.u32 %v8627, 16
      %v8836 = vrot.slane %v8834, 5
      %v8837 = vshll.u32 %v8627, 16
      %v8839 = vrot.slane %v8837, 6
      %v8840 = vor.u32 %v8836, %v8839
      %v8841 = vsel %vm579, %v8832, %v8840
      %v8842 = vrot.slane %v8840, 4
      %v8844 = vshrl.u32 %v8628, 16
      %v8846 = vrot.slane %v8844, 5
      %v8847 = vshll.u32 %v8628, 16
      %v8849 = vrot.slane %v8847, 6
      %v8850 = vor.u32 %v8846, %v8849
      %v8851 = vsel %vm579, %v8842, %v8850
      %v8853 = vshrl.u32 %v8629, 16
      %v8855 = vrot.slane %v8853, 5
      %v8856 = vshll.u32 %v8629, 16
      %v8858 = vrot.slane %v8856, 6
      %v8859 = vor.u32 %v8855, %v8858
      %v8860 = vrot.slane %v8859, 4
      %v8862 = vshrl.u32 %v8630, 16
      %v8864 = vrot.slane %v8862, 5
      %v8865 = vshll.u32 %v8630, 16
      %v8867 = vrot.slane %v8865, 6
      %v8868 = vor.u32 %v8864, %v8867
      %v8869 = vsel %vm579, %v8860, %v8868
      %v8870 = vrot.slane %v8868, 4
      %v8872 = vshrl.u32 %v8631, 16
      %v8874 = vrot.slane %v8872, 5
      %v8875 = vshll.u32 %v8631, 16
      %v8877 = vrot.slane %v8875, 6
      %v8878 = vor.u32 %v8874, %v8877
      %v8879 = vsel %vm579, %v8870, %v8878
      %v8881 = vshrl.u32 %v8632, 16
      %v8883 = vrot.slane %v8881, 5
      %v8884 = vshll.u32 %v8632, 16
      %v8886 = vrot.slane %v8884, 6
      %v8887 = vor.u32 %v8883, %v8886
      %v8888 = vrot.slane %v8887, 4
      %v8890 = vshrl.u32 %v8633, 16
      %v8892 = vrot.slane %v8890, 5
      %v8893 = vshll.u32 %v8633, 16
      %v8895 = vrot.slane %v8893, 6
      %v8896 = vor.u32 %v8892, %v8895
      %v8897 = vsel %vm579, %v8888, %v8896
      %v8898 = vrot.slane %v8896, 4
      %v8900 = vshrl.u32 %v8634, 16
      %v8902 = vrot.slane %v8900, 5
      %v8903 = vshll.u32 %v8634, 16
      %v8905 = vrot.slane %v8903, 6
      %v8906 = vor.u32 %v8902, %v8905
      %v8907 = vsel %vm579, %v8898, %v8906
      %v8909 = vshrl.u32 %v8635, 16
      %v8911 = vrot.slane %v8909, 5
      %v8912 = vshll.u32 %v8635, 16
      %v8914 = vrot.slane %v8912, 6
      %v8915 = vor.u32 %v8911, %v8914
      %v8916 = vrot.slane %v8915, 4
      %v8918 = vshrl.u32 %v8636, 16
      %v8920 = vrot.slane %v8918, 5
      %v8921 = vshll.u32 %v8636, 16
      %v8923 = vrot.slane %v8921, 6
      %v8924 = vor.u32 %v8920, %v8923
      %v8925 = vsel %vm579, %v8916, %v8924
      %v8926 = vrot.slane %v8924, 4
      %v8928 = vshrl.u32 %v8637, 16
      %v8930 = vrot.slane %v8928, 5
      %v8931 = vshll.u32 %v8637, 16
      %v8933 = vrot.slane %v8931, 6
      %v8934 = vor.u32 %v8930, %v8933
      %v8935 = vsel %vm579, %v8926, %v8934
      %v8937 = vshrl.u32 %v8638, 16
      %v8939 = vrot.slane %v8937, 5
      %v8940 = vshll.u32 %v8638, 16
      %v8942 = vrot.slane %v8940, 6
      %v8943 = vor.u32 %v8939, %v8942
      %v8944 = vrot.slane %v8943, 4
      %v8946 = vshrl.u32 %v8639, 16
      %v8948 = vrot.slane %v8946, 5
      %v8949 = vshll.u32 %v8639, 16
      %v8951 = vrot.slane %v8949, 6
      %v8952 = vor.u32 %v8948, %v8951
      %v8953 = vsel %vm579, %v8944, %v8952
      %v8954 = vrot.slane %v8952, 4
      %v8956 = vshrl.u32 %v8640, 16
      %v8958 = vrot.slane %v8956, 5
      %v8959 = vshll.u32 %v8640, 16
      %v8961 = vrot.slane %v8959, 6
      %v8962 = vor.u32 %v8958, %v8961
      %v8963 = vsel %vm579, %v8954, %v8962
      %v8965 = vshrl.u32 %v8641, 16
      %v8967 = vrot.slane %v8965, 5
      %v8968 = vshll.u32 %v8641, 16
      %v8970 = vrot.slane %v8968, 6
      %v8971 = vor.u32 %v8967, %v8970
      %v8972 = vrot.slane %v8971, 4
      %v8974 = vshrl.u32 %v8642, 16
      %v8976 = vrot.slane %v8974, 5
      %v8977 = vshll.u32 %v8642, 16
      %v8979 = vrot.slane %v8977, 6
      %v8980 = vor.u32 %v8976, %v8979
      %v8981 = vsel %vm579, %v8972, %v8980
      %v8982 = vrot.slane %v8980, 4
      %v8984 = vshrl.u32 %v8643, 16
      %v8986 = vrot.slane %v8984, 5
      %v8987 = vshll.u32 %v8643, 16
      %v8989 = vrot.slane %v8987, 6
      %v8990 = vor.u32 %v8986, %v8989
      %v8991 = vsel %vm579, %v8982, %v8990
      %v8993 = vshrl.u32 %v8644, 16
      %v8995 = vrot.slane %v8993, 5
      %v8996 = vshll.u32 %v8644, 16
      %v8998 = vrot.slane %v8996, 6
      %v8999 = vor.u32 %v8995, %v8998
      %v9000 = vrot.slane %v8999, 4
      %v9002 = vshrl.u32 %v8645, 16
      %v9004 = vrot.slane %v9002, 5
      %v9005 = vshll.u32 %v8645, 16
      %v9007 = vrot.slane %v9005, 6
      %v9008 = vor.u32 %v9004, %v9007
      %v9009 = vsel %vm579, %v9000, %v9008
      %v9010 = vrot.slane %v9008, 4
      %v9012 = vshrl.u32 %v8646, 16
      %v9014 = vrot.slane %v9012, 5
      %v9015 = vshll.u32 %v8646, 16
      %v9017 = vrot.slane %v9015, 6
      %v9018 = vor.u32 %v9014, %v9017
      %v9019 = vsel %vm579, %v9010, %v9018
      %v9021 = vshrl.u32 %v8647, 16
      %v9023 = vrot.slane %v9021, 5
      %v9024 = vshll.u32 %v8647, 16
      %v9026 = vrot.slane %v9024, 6
      %v9027 = vor.u32 %v9023, %v9026
      %v9028 = vrot.slane %v9027, 4
      %v9030 = vshrl.u32 %v8648, 16
      %v9032 = vrot.slane %v9030, 5
      %v9033 = vshll.u32 %v8648, 16
      %v9035 = vrot.slane %v9033, 6
      %v9036 = vor.u32 %v9032, %v9035
      %v9037 = vsel %vm579, %v9028, %v9036
      %v9038 = vrot.slane %v9036, 4
      %v9040 = vshrl.u32 %v8649, 16
      %v9042 = vrot.slane %v9040, 5
      %v9043 = vshll.u32 %v8649, 16
      %v9045 = vrot.slane %v9043, 6
      %v9046 = vor.u32 %v9042, %v9045
      %v9047 = vsel %vm579, %v9038, %v9046
      %v9049 = vshrl.u32 %v8650, 16
      %v9051 = vrot.slane %v9049, 5
      %v9052 = vshll.u32 %v8650, 16
      %v9054 = vrot.slane %v9052, 6
      %v9055 = vor.u32 %v9051, %v9054
      %v9056 = vrot.slane %v9055, 4
      %v9058 = vshrl.u32 %v8651, 16
      %v9060 = vrot.slane %v9058, 5
      %v9061 = vshll.u32 %v8651, 16
      %v9063 = vrot.slane %v9061, 6
      %v9064 = vor.u32 %v9060, %v9063
      %v9065 = vsel %vm579, %v9056, %v9064
      %v9066 = vrot.slane %v9064, 4
      %v9068 = vshrl.u32 %v8652, 16
      %v9070 = vrot.slane %v9068, 5
      %v9071 = vshll.u32 %v8652, 16
      %v9073 = vrot.slane %v9071, 6
      %v9074 = vor.u32 %v9070, %v9073
      %v9075 = vsel %vm579, %v9066, %v9074
      %v9077 = vshrl.u32 %v8653, 16
      %v9079 = vrot.slane %v9077, 5
      %v9080 = vshll.u32 %v8653, 16
      %v9082 = vrot.slane %v9080, 6
      %v9083 = vor.u32 %v9079, %v9082
      %v9084 = vrot.slane %v9083, 4
      %v9086 = vshrl.u32 %v8654, 16
      %v9088 = vrot.slane %v9086, 5
      %v9089 = vshll.u32 %v8654, 16
      %v9091 = vrot.slane %v9089, 6
      %v9092 = vor.u32 %v9088, %v9091
      %v9093 = vsel %vm579, %v9084, %v9092
      %v9094 = vrot.slane %v9092, 4
      %v9096 = vshrl.u32 %v8655, 16
      %v9098 = vrot.slane %v9096, 5
      %v9099 = vshll.u32 %v8655, 16
      %v9101 = vrot.slane %v9099, 6
      %v9102 = vor.u32 %v9098, %v9101
      %v9103 = vsel %vm579, %v9094, %v9102
      %s9104 = scalar_lea.vmem %s1, 76
      %v9105 = vld [vmem:[%s9104] sm:$0xf]
      %v9106 = vunpack.c.l.b16 %v8673
      %v9107 = vunpack.c.l.b16 %v8683
      %v9108 = vunpack.c.l.b16 %v8701
      %v9109 = vunpack.c.l.b16 %v8711
      %v9110 = vunpack.c.l.b16 %v8729
      %v9111 = vunpack.c.l.b16 %v8739
      %v9112 = vunpack.c.l.b16 %v8757
      %v9113 = vunpack.c.l.b16 %v8767
      %v9114 = vunpack.c.l.b16 %v8785
      %v9115 = vunpack.c.l.b16 %v8795
      %v9116 = vunpack.c.l.b16 %v8813
      %v9117 = vunpack.c.l.b16 %v8823
      %v9118 = vunpack.c.l.b16 %v8841
      %v9119 = vunpack.c.l.b16 %v8851
      %v9120 = vunpack.c.l.b16 %v8869
      %v9121 = vunpack.c.l.b16 %v8879
      %v9122 = vunpack.c.l.b16 %v8897
      %v9123 = vunpack.c.l.b16 %v8907
      %v9124 = vunpack.c.l.b16 %v8925
      %v9125 = vunpack.c.l.b16 %v8935
      %v9126 = vunpack.c.l.b16 %v8953
      %v9127 = vunpack.c.l.b16 %v8963
      %v9128 = vunpack.c.l.b16 %v8981
      %v9129 = vunpack.c.l.b16 %v8991
      %v9130 = vunpack.c.l.b16 %v9009
      %v9131 = vunpack.c.l.b16 %v9019
      %v9132 = vunpack.c.l.b16 %v9037
      %v9133 = vunpack.c.l.b16 %v9047
      %v9134 = vunpack.c.l.b16 %v9065
      %v9135 = vunpack.c.l.b16 %v9075
      %v9136 = vunpack.c.l.b16 %v9093
      %v9137 = vunpack.c.l.b16 %v9103
      %v9138 = vpack.c.b16 %v9107, %v9106
      %v9139 = vpack.c.b16 %v9109, %v9108
      %v9140 = vpack.c.b16 %v9111, %v9110
      %v9141 = vpack.c.b16 %v9113, %v9112
      %v9142 = vpack.c.b16 %v9115, %v9114
      %v9143 = vpack.c.b16 %v9117, %v9116
      %v9144 = vpack.c.b16 %v9119, %v9118
      %v9145 = vpack.c.b16 %v9121, %v9120
      %v9146 = vpack.c.b16 %v9123, %v9122
      %v9147 = vpack.c.b16 %v9125, %v9124
      %v9148 = vpack.c.b16 %v9127, %v9126
      %v9149 = vpack.c.b16 %v9129, %v9128
      %v9150 = vpack.c.b16 %v9131, %v9130
      %v9151 = vpack.c.b16 %v9133, %v9132
      %v9152 = vpack.c.b16 %v9135, %v9134
      %v9153 = vpack.c.b16 %v9137, %v9136
      %v9155 = vsel %vm466, %v9105, 0
      %v9158 = vsel %vm466, %v9138, 0
      %v9161 = vsel %vm466, %v9139, 0
      %v9164 = vsel %vm466, %v9140, 0
      %v9167 = vsel %vm466, %v9141, 0
      %v9170 = vsel %vm466, %v9142, 0
      %v9173 = vsel %vm466, %v9143, 0
      %v9176 = vsel %vm466, %v9144, 0
      %v9179 = vsel %vm466, %v9145, 0
      %v9182 = vsel %vm466, %v9146, 0
      %v9185 = vsel %vm466, %v9147, 0
      %v9188 = vsel %vm466, %v9148, 0
      %v9191 = vsel %vm466, %v9149, 0
      %v9194 = vsel %vm466, %v9150, 0
      %v9197 = vsel %vm466, %v9151, 0
      %v9200 = vsel %vm466, %v9152, 0
      %v9203 = vsel %vm466, %v9153, 0
      %9205 = vmatprep.subr.bf16.mxu0 0
      %9206 = vmatpush1.bf16.xpose.msra.mxu0 %v9158
      %9207 = vmatprep.subr.bf16.mxu0 0
      %9208 = vmatpush1.bf16.xpose.msra.mxu0 %v9161
      %9209 = vmatprep.subr.bf16.mxu0 0
      %9210 = vmatpush1.bf16.xpose.msra.mxu0 %v9164
      %9211 = vmatprep.subr.bf16.mxu0 0
      %9212 = vmatpush1.bf16.xpose.msra.mxu0 %v9167
      %9213 = vmatprep.subr.bf16.mxu0 0
      %9214 = vmatpush1.bf16.xpose.msra.mxu0 %v9170
      %9215 = vmatprep.subr.bf16.mxu0 0
      %9216 = vmatpush1.bf16.xpose.msra.mxu0 %v9173
      %9217 = vmatprep.subr.bf16.mxu0 0
      %9218 = vmatpush1.bf16.xpose.msra.mxu0 %v9176
      %9219 = vmatprep.subr.bf16.mxu0 0
      %9220 = vmatpush1.bf16.xpose.msra.mxu0 %v9179
      %9221 = vmatprep.subr.bf16.mxu0 0
      %9222 = vmatpush1.bf16.xpose.msra.mxu0 %v9182
      %9223 = vmatprep.subr.bf16.mxu0 0
      %9224 = vmatpush1.bf16.xpose.msra.mxu0 %v9185
      %9225 = vmatprep.subr.bf16.mxu0 0
      %9226 = vmatpush1.bf16.xpose.msra.mxu0 %v9188
      %9227 = vmatprep.subr.bf16.mxu0 0
      %9228 = vmatpush1.bf16.xpose.msra.mxu0 %v9191
      %9229 = vmatprep.subr.bf16.mxu0 0
      %9230 = vmatpush1.bf16.xpose.msra.mxu0 %v9194
      %9231 = vmatprep.subr.bf16.mxu0 0
      %9232 = vmatpush1.bf16.xpose.msra.mxu0 %v9197
      %9233 = vmatprep.subr.bf16.mxu0 0
      %9234 = vmatpush1.bf16.xpose.msra.mxu0 %v9200
      %9235 = vmatprep.subr.bf16.mxu0 0
      %9236 = vmatpush1.bf16.xpose.msra.mxu0 %v9203
      %9237 = vmatprep.mubr.bf16.mxu0 0
      %9238 = vmatmul.mubr.bf16.gmra.mrb[0].mxu0 %v9155
      %v9239 = vpop.f32.mrb[0].mxu0
      %v9240 = vadd.f32 0.0, %v9239
      %v9241 = vpop.f32.mrb[0].mxu0
      %v9242 = vadd.f32 0.0, %v9241
      %v9243 = vpop.f32.mrb[0].mxu0
      %v9244 = vpop.f32.mrb[0].mxu0
      %9245 = vdwg.mxu0
      %v9246 = vadd.f32 %v8606, %v9240
      %v9247 = vadd.f32 %v8607, %v9242
      %v9248 = vld [vmem:[%s8399] sm:$0x8]
      %v9249 = vld [vmem:[%s8399 + $0x8] sm:$0x7]
      %v9250 = vld [vmem:[%s8399 + $0xc] sm:$0x8]
      %v9251 = vld [vmem:[%s8399 + $0x14] sm:$0x7]
      %v9252 = vld [vmem:[%s8399 + $0x18] sm:$0x8]
      %v9253 = vld [vmem:[%s8399 + $0x20] sm:$0x7]
      %v9254 = vld [vmem:[%s8399 + $0x24] sm:$0x8]
      %v9255 = vld [vmem:[%s8399 + $0x2c] sm:$0x7]
      %v9256 = vld [vmem:[%s8399 + $0x30] sm:$0x8]
      %v9257 = vld [vmem:[%s8399 + $0x38] sm:$0x7]
      %v9258 = vld [vmem:[%s8399 + $0x3c] sm:$0x8]
      %v9259 = vld [vmem:[%s8399 + $0x44] sm:$0x7]
      %v9260 = vld [vmem:[%s8399 + $0x48] sm:$0x8]
      %v9261 = vld [vmem:[%s8399 + $0x50] sm:$0x7]
      %v9262 = vld [vmem:[%s8399 + $0x54] sm:$0x8]
      %v9263 = vld [vmem:[%s8399 + $0x5c] sm:$0x7]
      %v9264 = vld [vmem:[%s8399 + $0x60] sm:$0x8]
      %v9265 = vld [vmem:[%s8399 + $0x68] sm:$0x7]
      %v9266 = vld [vmem:[%s8399 + $0x6c] sm:$0x8]
      %v9267 = vld [vmem:[%s8399 + $0x74] sm:$0x7]
      %v9268 = vld [vmem:[%s8399 + $0x78] sm:$0x8]
      %v9269 = vld [vmem:[%s8399 + $0x80] sm:$0x7]
      %v9270 = vld [vmem:[%s8399 + $0x84] sm:$0x8]
      %v9271 = vld [vmem:[%s8399 + $0x8c] sm:$0x7]
      %v9272 = vld [vmem:[%s8399 + $0x90] sm:$0x8]
      %v9273 = vld [vmem:[%s8399 + $0x98] sm:$0x7]
      %v9274 = vld [vmem:[%s8399 + $0x9c] sm:$0x8]
      %v9275 = vld [vmem:[%s8399 + $0xa4] sm:$0x7]
      %v9276 = vld [vmem:[%s8399 + $0xa8] sm:$0x8]
      %v9277 = vld [vmem:[%s8399 + $0xb0] sm:$0x7]
      %v9278 = vld [vmem:[%s8399 + $0xb4] sm:$0x8]
      %v9279 = vld [vmem:[%s8399 + $0xbc] sm:$0x7]
      %vm9328 = vcmask 1040384
      %vm9329 = vcmask 1044484
      %vm9330 = vmor %vm9328, %vm9329
      %v9331 = vrot.slane %v9248, 7
      %v9332 = vrot.slane %v9331, 4
      %v9333 = vrot.slane %v8609, 7
      %v9334 = vsel %vm9330, %v9332, %v9333
      %v9335 = vrot.slane %v9333, 4
      %v9336 = vrot.slane %v9249, 7
      %v9337 = vsel %vm9330, %v9335, %v9336
      %v9338 = vrot.slane %v9250, 7
      %v9339 = vrot.slane %v9338, 4
      %v9340 = vrot.slane %v8612, 7
      %v9341 = vsel %vm9330, %v9339, %v9340
      %v9342 = vrot.slane %v9340, 4
      %v9343 = vrot.slane %v9251, 7
      %v9344 = vsel %vm9330, %v9342, %v9343
      %v9345 = vrot.slane %v9252, 7
      %v9346 = vrot.slane %v9345, 4
      %v9347 = vrot.slane %v8615, 7
      %v9348 = vsel %vm9330, %v9346, %v9347
      %v9349 = vrot.slane %v9347, 4
      %v9350 = vrot.slane %v9253, 7
      %v9351 = vsel %vm9330, %v9349, %v9350
      %v9352 = vrot.slane %v9254, 7
      %v9353 = vrot.slane %v9352, 4
      %v9354 = vrot.slane %v8618, 7
      %v9355 = vsel %vm9330, %v9353, %v9354
      %v9356 = vrot.slane %v9354, 4
      %v9357 = vrot.slane %v9255, 7
      %v9358 = vsel %vm9330, %v9356, %v9357
      %v9359 = vrot.slane %v9256, 7
      %v9360 = vrot.slane %v9359, 4
      %v9361 = vrot.slane %v8621, 7
      %v9362 = vsel %vm9330, %v9360, %v9361
      %v9363 = vrot.slane %v9361, 4
      %v9364 = vrot.slane %v9257, 7
      %v9365 = vsel %vm9330, %v9363, %v9364
      %v9366 = vrot.slane %v9258, 7
      %v9367 = vrot.slane %v9366, 4
      %v9368 = vrot.slane %v8624, 7
      %v9369 = vsel %vm9330, %v9367, %v9368
      %v9370 = vrot.slane %v9368, 4
      %v9371 = vrot.slane %v9259, 7
      %v9372 = vsel %vm9330, %v9370, %v9371
      %v9373 = vrot.slane %v9260, 7
      %v9374 = vrot.slane %v9373, 4
      %v9375 = vrot.slane %v8627, 7
      %v9376 = vsel %vm9330, %v9374, %v9375
      %v9377 = vrot.slane %v9375, 4
      %v9378 = vrot.slane %v9261, 7
      %v9379 = vsel %vm9330, %v9377, %v9378
      %v9380 = vrot.slane %v9262, 7
      %v9381 = vrot.slane %v9380, 4
      %v9382 = vrot.slane %v8630, 7
      %v9383 = vsel %vm9330, %v9381, %v9382
      %v9384 = vrot.slane %v9382, 4
      %v9385 = vrot.slane %v9263, 7
      %v9386 = vsel %vm9330, %v9384, %v9385
      %v9387 = vrot.slane %v9264, 7
      %v9388 = vrot.slane %v9387, 4
      %v9389 = vrot.slane %v8633, 7
      %v9390 = vsel %vm9330, %v9388, %v9389
      %v9391 = vrot.slane %v9389, 4
      %v9392 = vrot.slane %v9265, 7
      %v9393 = vsel %vm9330, %v9391, %v9392
      %v9394 = vrot.slane %v9266, 7
      %v9395 = vrot.slane %v9394, 4
      %v9396 = vrot.slane %v8636, 7
      %v9397 = vsel %vm9330, %v9395, %v9396
      %v9398 = vrot.slane %v9396, 4
      %v9399 = vrot.slane %v9267, 7
      %v9400 = vsel %vm9330, %v9398, %v9399
      %v9401 = vrot.slane %v9268, 7
      %v9402 = vrot.slane %v9401, 4
      %v9403 = vrot.slane %v8639, 7
      %v9404 = vsel %vm9330, %v9402, %v9403
      %v9405 = vrot.slane %v9403, 4
      %v9406 = vrot.slane %v9269, 7
      %v9407 = vsel %vm9330, %v9405, %v9406
      %v9408 = vrot.slane %v9270, 7
      %v9409 = vrot.slane %v9408, 4
      %v9410 = vrot.slane %v8642, 7
      %v9411 = vsel %vm9330, %v9409, %v9410
      %v9412 = vrot.slane %v9410, 4
      %v9413 = vrot.slane %v9271, 7
      %v9414 = vsel %vm9330, %v9412, %v9413
      %v9415 = vrot.slane %v9272, 7
      %v9416 = vrot.slane %v9415, 4
      %v9417 = vrot.slane %v8645, 7
      %v9418 = vsel %vm9330, %v9416, %v9417
      %v9419 = vrot.slane %v9417, 4
      %v9420 = vrot.slane %v9273, 7
      %v9421 = vsel %vm9330, %v9419, %v9420
      %v9422 = vrot.slane %v9274, 7
      %v9423 = vrot.slane %v9422, 4
      %v9424 = vrot.slane %v8648, 7
      %v9425 = vsel %vm9330, %v9423, %v9424
      %v9426 = vrot.slane %v9424, 4
      %v9427 = vrot.slane %v9275, 7
      %v9428 = vsel %vm9330, %v9426, %v9427
      %v9429 = vrot.slane %v9276, 7
      %v9430 = vrot.slane %v9429, 4
      %v9431 = vrot.slane %v8651, 7
      %v9432 = vsel %vm9330, %v9430, %v9431
      %v9433 = vrot.slane %v9431, 4
      %v9434 = vrot.slane %v9277, 7
      %v9435 = vsel %vm9330, %v9433, %v9434
      %v9436 = vrot.slane %v9278, 7
      %v9437 = vrot.slane %v9436, 4
      %v9438 = vrot.slane %v8654, 7
      %v9439 = vsel %vm9330, %v9437, %v9438
      %v9440 = vrot.slane %v9438, 4
      %v9441 = vrot.slane %v9279, 7
      %v9442 = vsel %vm9330, %v9440, %v9441
      %s9443 = scalar_lea.vmem %s1, 80
      %v9444 = vld [vmem:[%s9443] sm:$0xf]
      %v9445 = vunpack.c.l.b16 %v9334
      %v9446 = vunpack.c.l.b16 %v9337
      %v9447 = vunpack.c.l.b16 %v9341
      %v9448 = vunpack.c.l.b16 %v9344
      %v9449 = vunpack.c.l.b16 %v9348
      %v9450 = vunpack.c.l.b16 %v9351
      %v9451 = vunpack.c.l.b16 %v9355
      %v9452 = vunpack.c.l.b16 %v9358
      %v9453 = vunpack.c.l.b16 %v9362
      %v9454 = vunpack.c.l.b16 %v9365
      %v9455 = vunpack.c.l.b16 %v9369
      %v9456 = vunpack.c.l.b16 %v9372
      %v9457 = vunpack.c.l.b16 %v9376
      %v9458 = vunpack.c.l.b16 %v9379
      %v9459 = vunpack.c.l.b16 %v9383
      %v9460 = vunpack.c.l.b16 %v9386
      %v9461 = vunpack.c.l.b16 %v9390
      %v9462 = vunpack.c.l.b16 %v9393
      %v9463 = vunpack.c.l.b16 %v9397
      %v9464 = vunpack.c.l.b16 %v9400
      %v9465 = vunpack.c.l.b16 %v9404
      %v9466 = vunpack.c.l.b16 %v9407
      %v9467 = vunpack.c.l.b16 %v9411
      %v9468 = vunpack.c.l.b16 %v9414
      %v9469 = vunpack.c.l.b16 %v9418
      %v9470 = vunpack.c.l.b16 %v9421
      %v9471 = vunpack.c.l.b16 %v9425
      %v9472 = vunpack.c.l.b16 %v9428
      %v9473 = vunpack.c.l.b16 %v9432
      %v9474 = vunpack.c.l.b16 %v9435
      %v9475 = vunpack.c.l.b16 %v9439
      %v9476 = vunpack.c.l.b16 %v9442
      %v9477 = vpack.c.b16 %v9446, %v9445
      %v9478 = vpack.c.b16 %v9448, %v9447
      %v9479 = vpack.c.b16 %v9450, %v9449
      %v9480 = vpack.c.b16 %v9452, %v9451
      %v9481 = vpack.c.b16 %v9454, %v9453
      %v9482 = vpack.c.b16 %v9456, %v9455
      %v9483 = vpack.c.b16 %v9458, %v9457
      %v9484 = vpack.c.b16 %v9460, %v9459
      %v9485 = vpack.c.b16 %v9462, %v9461
      %v9486 = vpack.c.b16 %v9464, %v9463
      %v9487 = vpack.c.b16 %v9466, %v9465
      %v9488 = vpack.c.b16 %v9468, %v9467
      %v9489 = vpack.c.b16 %v9470, %v9469
      %v9490 = vpack.c.b16 %v9472, %v9471
      %v9491 = vpack.c.b16 %v9474, %v9473
      %v9492 = vpack.c.b16 %v9476, %v9475
      %v9494 = vsel %vm466, %v9444, 0
      %v9497 = vsel %vm466, %v9477, 0
      %v9500 = vsel %vm466, %v9478, 0
      %v9503 = vsel %vm466, %v9479, 0
      %v9506 = vsel %vm466, %v9480, 0
      %v9509 = vsel %vm466, %v9481, 0
      %v9512 = vsel %vm466, %v9482, 0
      %v9515 = vsel %vm466, %v9483, 0
      %v9518 = vsel %vm466, %v9484, 0
      %v9521 = vsel %vm466, %v9485, 0
      %v9524 = vsel %vm466, %v9486, 0
      %v9527 = vsel %vm466, %v9487, 0
      %v9530 = vsel %vm466, %v9488, 0
      %v9533 = vsel %vm466, %v9489, 0
      %v9536 = vsel %vm466, %v9490, 0
      %v9539 = vsel %vm466, %v9491, 0
      %v9542 = vsel %vm466, %v9492, 0
      %9544 = vmatprep.subr.bf16.mxu0 0
      %9545 = vmatpush1.bf16.xpose.msra.mxu0 %v9497
      %9546 = vmatprep.subr.bf16.mxu0 0
      %9547 = vmatpush1.bf16.xpose.msra.mxu0 %v9500
      %9548 = vmatprep.subr.bf16.mxu0 0
      %9549 = vmatpush1.bf16.xpose.msra.mxu0 %v9503
      %9550 = vmatprep.subr.bf16.mxu0 0
      %9551 = vmatpush1.bf16.xpose.msra.mxu0 %v9506
      %9552 = vmatprep.subr.bf16.mxu0 0
      %9553 = vmatpush1.bf16.xpose.msra.mxu0 %v9509
      %9554 = vmatprep.subr.bf16.mxu0 0
      %9555 = vmatpush1.bf16.xpose.msra.mxu0 %v9512
      %9556 = vmatprep.subr.bf16.mxu0 0
      %9557 = vmatpush1.bf16.xpose.msra.mxu0 %v9515
      %9558 = vmatprep.subr.bf16.mxu0 0
      %9559 = vmatpush1.bf16.xpose.msra.mxu0 %v9518
      %9560 = vmatprep.subr.bf16.mxu0 0
      %9561 = vmatpush1.bf16.xpose.msra.mxu0 %v9521
      %9562 = vmatprep.subr.bf16.mxu0 0
      %9563 = vmatpush1.bf16.xpose.msra.mxu0 %v9524
      %9564 = vmatprep.subr.bf16.mxu0 0
      %9565 = vmatpush1.bf16.xpose.msra.mxu0 %v9527
      %9566 = vmatprep.subr.bf16.mxu0 0
      %9567 = vmatpush1.bf16.xpose.msra.mxu0 %v9530
      %9568 = vmatprep.subr.bf16.mxu0 0
      %9569 = vmatpush1.bf16.xpose.msra.mxu0 %v9533
      %9570 = vmatprep.subr.bf16.mxu0 0
      %9571 = vmatpush1.bf16.xpose.msra.mxu0 %v9536
      %9572 = vmatprep.subr.bf16.mxu0 0
      %9573 = vmatpush1.bf16.xpose.msra.mxu0 %v9539
      %9574 = vmatprep.subr.bf16.mxu0 0
      %9575 = vmatpush1.bf16.xpose.msra.mxu0 %v9542
      %9576 = vmatprep.mubr.bf16.mxu0 0
      %9577 = vmatmul.mubr.bf16.gmra.mrb[0].mxu0 %v9494
      %v9578 = vpop.f32.mrb[0].mxu0
      %v9579 = vadd.f32 0.0, %v9578
      %v9580 = vpop.f32.mrb[0].mxu0
      %v9581 = vadd.f32 0.0, %v9580
      %v9582 = vpop.f32.mrb[0].mxu0
      %v9583 = vpop.f32.mrb[0].mxu0
      %9584 = vdwg.mxu0
      %v9585 = vadd.f32 %v9246, %v9579
      %v9586 = vadd.f32 %v9247, %v9581
      %v9587 = vld [vmem:[%s1482] sm:$0xf]
      %v9588 = vld [vmem:[%s1482 + $0x4] sm:$0xf]
      %v9589 = vld [vmem:[%s1482 + $0xc] sm:$0xf]
      %v9590 = vld [vmem:[%s1482 + $0x10] sm:$0xf]
      %v9591 = vld [vmem:[%s1482 + $0x18] sm:$0xf]
      %v9592 = vld [vmem:[%s1482 + $0x1c] sm:$0xf]
      %v9593 = vld [vmem:[%s1482 + $0x24] sm:$0xf]
      %v9594 = vld [vmem:[%s1482 + $0x28] sm:$0xf]
      %v9595 = vld [vmem:[%s1482 + $0x30] sm:$0xf]
      %v9596 = vld [vmem:[%s1482 + $0x34] sm:$0xf]
      %v9597 = vld [vmem:[%s1482 + $0x3c] sm:$0xf]
      %v9598 = vld [vmem:[%s1482 + $0x40] sm:$0xf]
      %v9599 = vld [vmem:[%s1482 + $0x48] sm:$0xf]
      %v9600 = vld [vmem:[%s1482 + $0x4c] sm:$0xf]
      %v9601 = vld [vmem:[%s1482 + $0x54] sm:$0xf]
      %v9602 = vld [vmem:[%s1482 + $0x58] sm:$0xf]
      %v9603 = vld [vmem:[%s1482 + $0x60] sm:$0xf]
      %v9604 = vld [vmem:[%s1482 + $0x64] sm:$0xf]
      %v9605 = vld [vmem:[%s1482 + $0x6c] sm:$0xf]
      %v9606 = vld [vmem:[%s1482 + $0x70] sm:$0xf]
      %v9607 = vld [vmem:[%s1482 + $0x78] sm:$0xf]
      %v9608 = vld [vmem:[%s1482 + $0x7c] sm:$0xf]
      %v9609 = vld [vmem:[%s1482 + $0x84] sm:$0xf]
      %v9610 = vld [vmem:[%s1482 + $0x88] sm:$0xf]
      %v9611 = vld [vmem:[%s1482 + $0x90] sm:$0xf]
      %v9612 = vld [vmem:[%s1482 + $0x94] sm:$0xf]
      %v9613 = vld [vmem:[%s1482 + $0x9c] sm:$0xf]
      %v9614 = vld [vmem:[%s1482 + $0xa0] sm:$0xf]
      %v9615 = vld [vmem:[%s1482 + $0xa8] sm:$0xf]
      %v9616 = vld [vmem:[%s1482 + $0xac] sm:$0xf]
      %v9617 = vld [vmem:[%s1482 + $0xb4] sm:$0xf]
      %v9618 = vld [vmem:[%s1482 + $0xb8] sm:$0xf]
      %s9619 = scalar_lea.vmem %s1, 84
      %v9620 = vld [vmem:[%s9619] sm:$0xf]
      %v9653 = vunpack.c.l.b16 %v9587
      %v9654 = vunpack.c.l.b16 %v9588
      %v9655 = vunpack.c.l.b16 %v9589
      %v9656 = vunpack.c.l.b16 %v9590
      %v9657 = vunpack.c.l.b16 %v9591
      %v9658 = vunpack.c.l.b16 %v9592
      %v9659 = vunpack.c.l.b16 %v9593
      %v9660 = vunpack.c.l.b16 %v9594
      %v9661 = vunpack.c.l.b16 %v9595
      %v9662 = vunpack.c.l.b16 %v9596
      %v9663 = vunpack.c.l.b16 %v9597
      %v9664 = vunpack.c.l.b16 %v9598
      %v9665 = vunpack.c.l.b16 %v9599
      %v9666 = vunpack.c.l.b16 %v9600
      %v9667 = vunpack.c.l.b16 %v9601
      %v9668 = vunpack.c.l.b16 %v9602
      %v9669 = vunpack.c.l.b16 %v9603
      %v9670 = vunpack.c.l.b16 %v9604
      %v9671 = vunpack.c.l.b16 %v9605
      %v9672 = vunpack.c.l.b16 %v9606
      %v9673 = vunpack.c.l.b16 %v9607
      %v9674 = vunpack.c.l.b16 %v9608
      %v9675 = vunpack.c.l.b16 %v9609
      %v9676 = vunpack.c.l.b16 %v9610
      %v9677 = vunpack.c.l.b16 %v9611
      %v9678 = vunpack.c.l.b16 %v9612
      %v9679 = vunpack.c.l.b16 %v9613
      %v9680 = vunpack.c.l.b16 %v9614
      %v9681 = vunpack.c.l.b16 %v9615
      %v9682 = vunpack.c.l.b16 %v9616
      %v9683 = vunpack.c.l.b16 %v9617
      %v9684 = vunpack.c.l.b16 %v9618
      %v9685 = vpack.c.b16 %v9654, %v9653
      %v9686 = vpack.c.b16 %v9656, %v9655
      %v9687 = vpack.c.b16 %v9658, %v9657
      %v9688 = vpack.c.b16 %v9660, %v9659
      %v9689 = vpack.c.b16 %v9662, %v9661
      %v9690 = vpack.c.b16 %v9664, %v9663
      %v9691 = vpack.c.b16 %v9666, %v9665
      %v9692 = vpack.c.b16 %v9668, %v9667
      %v9693 = vpack.c.b16 %v9670, %v9669
      %v9694 = vpack.c.b16 %v9672, %v9671
      %v9695 = vpack.c.b16 %v9674, %v9673
      %v9696 = vpack.c.b16 %v9676, %v9675
      %v9697 = vpack.c.b16 %v9678, %v9677
      %v9698 = vpack.c.b16 %v9680, %v9679
      %v9699 = vpack.c.b16 %v9682, %v9681
      %v9700 = vpack.c.b16 %v9684, %v9683
      %v9702 = vsel %vm466, %v9620, 0
      %v9705 = vsel %vm466, %v9685, 0
      %v9708 = vsel %vm466, %v9686, 0
      %v9711 = vsel %vm466, %v9687, 0
      %v9714 = vsel %vm466, %v9688, 0
      %v9717 = vsel %vm466, %v9689, 0
      %v9720 = vsel %vm466, %v9690, 0
      %v9723 = vsel %vm466, %v9691, 0
      %v9726 = vsel %vm466, %v9692, 0
      %v9729 = vsel %vm466, %v9693, 0
      %v9732 = vsel %vm466, %v9694, 0
      %v9735 = vsel %vm466, %v9695, 0
      %v9738 = vsel %vm466, %v9696, 0
      %v9741 = vsel %vm466, %v9697, 0
      %v9744 = vsel %vm466, %v9698, 0
      %v9747 = vsel %vm466, %v9699, 0
      %v9750 = vsel %vm466, %v9700, 0
      %9752 = vmatprep.subr.bf16.mxu0 0
      %9753 = vmatpush1.bf16.xpose.msra.mxu0 %v9705
      %9754 = vmatprep.subr.bf16.mxu0 0
      %9755 = vmatpush1.bf16.xpose.msra.mxu0 %v9708
      %9756 = vmatprep.subr.bf16.mxu0 0
      %9757 = vmatpush1.bf16.xpose.msra.mxu0 %v9711
      %9758 = vmatprep.subr.bf16.mxu0 0
      %9759 = vmatpush1.bf16.xpose.msra.mxu0 %v9714
      %9760 = vmatprep.subr.bf16.mxu0 0
      %9761 = vmatpush1.bf16.xpose.msra.mxu0 %v9717
      %9762 = vmatprep.subr.bf16.mxu0 0
      %9763 = vmatpush1.bf16.xpose.msra.mxu0 %v9720
      %9764 = vmatprep.subr.bf16.mxu0 0
      %9765 = vmatpush1.bf16.xpose.msra.mxu0 %v9723
      %9766 = vmatprep.subr.bf16.mxu0 0
      %9767 = vmatpush1.bf16.xpose.msra.mxu0 %v9726
      %9768 = vmatprep.subr.bf16.mxu0 0
      %9769 = vmatpush1.bf16.xpose.msra.mxu0 %v9729
      %9770 = vmatprep.subr.bf16.mxu0 0
      %9771 = vmatpush1.bf16.xpose.msra.mxu0 %v9732
      %9772 = vmatprep.subr.bf16.mxu0 0
      %9773 = vmatpush1.bf16.xpose.msra.mxu0 %v9735
      %9774 = vmatprep.subr.bf16.mxu0 0
      %9775 = vmatpush1.bf16.xpose.msra.mxu0 %v9738
      %9776 = vmatprep.subr.bf16.mxu0 0
      %9777 = vmatpush1.bf16.xpose.msra.mxu0 %v9741
      %9778 = vmatprep.subr.bf16.mxu0 0
      %9779 = vmatpush1.bf16.xpose.msra.mxu0 %v9744
      %9780 = vmatprep.subr.bf16.mxu0 0
      %9781 = vmatpush1.bf16.xpose.msra.mxu0 %v9747
      %9782 = vmatprep.subr.bf16.mxu0 0
      %9783 = vmatpush1.bf16.xpose.msra.mxu0 %v9750
      %9784 = vmatprep.mubr.bf16.mxu0 0
      %9785 = vmatmul.mubr.bf16.gmra.mrb[0].mxu0 %v9702
      %v9786 = vpop.f32.mrb[0].mxu0
      %v9787 = vadd.f32 0.0, %v9786
      %v9788 = vpop.f32.mrb[0].mxu0
      %v9789 = vadd.f32 0.0, %v9788
      %v9790 = vpop.f32.mrb[0].mxu0
      %v9791 = vpop.f32.mrb[0].mxu0
      %9792 = vdwg.mxu0
      %v9793 = vadd.f32 %v9585, %v9787
      %v9794 = vadd.f32 %v9586, %v9789
      %s9795 = scalar_lea.vmem %s1, 88
      %v9796 = vld [vmem:[%s9795] sm:$0xf]
      %v9798 = vsel %vm466, %v9796, 0
      %9800 = vmatprep.subr.bf16.mxu0 0
      %9801 = vmatpush1.bf16.xpose.msra.mxu0 %v2353
      %9802 = vmatprep.subr.bf16.mxu0 0
      %9803 = vmatpush1.bf16.xpose.msra.mxu0 %v2356
      %9804 = vmatprep.subr.bf16.mxu0 0
      %9805 = vmatpush1.bf16.xpose.msra.mxu0 %v2359
      %9806 = vmatprep.subr.bf16.mxu0 0
      %9807 = vmatpush1.bf16.xpose.msra.mxu0 %v2362
      %9808 = vmatprep.subr.bf16.mxu0 0
      %9809 = vmatpush1.bf16.xpose.msra.mxu0 %v2365
      %9810 = vmatprep.subr.bf16.mxu0 0
      %9811 = vmatpush1.bf16.xpose.msra.mxu0 %v2368
      %9812 = vmatprep.subr.bf16.mxu0 0
      %9813 = vmatpush1.bf16.xpose.msra.mxu0 %v2371
      %9814 = vmatprep.subr.bf16.mxu0 0
      %9815 = vmatpush1.bf16.xpose.msra.mxu0 %v2374
      %9816 = vmatprep.subr.bf16.mxu0 0
      %9817 = vmatpush1.bf16.xpose.msra.mxu0 %v2377
      %9818 = vmatprep.subr.bf16.mxu0 0
      %9819 = vmatpush1.bf16.xpose.msra.mxu0 %v2380
      %9820 = vmatprep.subr.bf16.mxu0 0
      %9821 = vmatpush1.bf16.xpose.msra.mxu0 %v2383
      %9822 = vmatprep.subr.bf16.mxu0 0
      %9823 = vmatpush1.bf16.xpose.msra.mxu0 %v2386
      %9824 = vmatprep.subr.bf16.mxu0 0
      %9825 = vmatpush1.bf16.xpose.msra.mxu0 %v2389
      %9826 = vmatprep.subr.bf16.mxu0 0
      %9827 = vmatpush1.bf16.xpose.msra.mxu0 %v2392
      %9828 = vmatprep.subr.bf16.mxu0 0
      %9829 = vmatpush1.bf16.xpose.msra.mxu0 %v2395
      %9830 = vmatprep.subr.bf16.mxu0 0
      %9831 = vmatpush1.bf16.xpose.msra.mxu0 %v2398
      %9832 = vmatprep.mubr.bf16.mxu0 0
      %9833 = vmatmul.mubr.bf16.gmra.mrb[0].mxu0 %v9798
      %v9834 = vpop.f32.mrb[0].mxu0
      %v9835 = vadd.f32 0.0, %v9834
      %v9836 = vpop.f32.mrb[0].mxu0
      %v9837 = vadd.f32 0.0, %v9836
      %v9838 = vpop.f32.mrb[0].mxu0
      %v9839 = vpop.f32.mrb[0].mxu0
      %9840 = vdwg.mxu0
      %v9841 = vadd.f32 %v9793, %v9835
      %v9842 = vadd.f32 %v9794, %v9837
      %v9843 = vld [vmem:[%s1482] sm:$0x8]
      %v9844 = vld [vmem:[%s1482 + $0xc] sm:$0x8]
      %v9845 = vld [vmem:[%s1482 + $0x18] sm:$0x8]
      %v9846 = vld [vmem:[%s1482 + $0x24] sm:$0x8]
      %v9847 = vld [vmem:[%s1482 + $0x30] sm:$0x8]
      %v9848 = vld [vmem:[%s1482 + $0x3c] sm:$0x8]
      %v9849 = vld [vmem:[%s1482 + $0x48] sm:$0x8]
      %v9850 = vld [vmem:[%s1482 + $0x54] sm:$0x8]
      %v9851 = vld [vmem:[%s1482 + $0x60] sm:$0x8]
      %v9852 = vld [vmem:[%s1482 + $0x6c] sm:$0x8]
      %v9853 = vld [vmem:[%s1482 + $0x78] sm:$0x8]
      %v9854 = vld [vmem:[%s1482 + $0x84] sm:$0x8]
      %v9855 = vld [vmem:[%s1482 + $0x90] sm:$0x8]
      %v9856 = vld [vmem:[%s1482 + $0x9c] sm:$0x8]
      %v9857 = vld [vmem:[%s1482 + $0xa8] sm:$0x8]
      %v9858 = vld [vmem:[%s1482 + $0xb4] sm:$0x8]
      %v9891 = vrot.slane %v9843, 7
      %v9892 = vrot.slane %v9891, 4
      %v9893 = vrot.slane %v1484, 7
      %v9894 = vsel %vm9330, %v9892, %v9893
      %v9895 = vrot.slane %v9893, 4
      %v9896 = vrot.slane %v6201, 7
      %v9897 = vsel %vm9330, %v9895, %v9896
      %v9898 = vrot.slane %v9844, 7
      %v9899 = vrot.slane %v9898, 4
      %v9900 = vrot.slane %v1487, 7
      %v9901 = vsel %vm9330, %v9899, %v9900
      %v9902 = vrot.slane %v9900, 4
      %v9903 = vrot.slane %v6202, 7
      %v9904 = vsel %vm9330, %v9902, %v9903
      %v9905 = vrot.slane %v9845, 7
      %v9906 = vrot.slane %v9905, 4
      %v9907 = vrot.slane %v1490, 7
      %v9908 = vsel %vm9330, %v9906, %v9907
      %v9909 = vrot.slane %v9907, 4
      %v9910 = vrot.slane %v6203, 7
      %v9911 = vsel %vm9330, %v9909, %v9910
      %v9912 = vrot.slane %v9846, 7
      %v9913 = vrot.slane %v9912, 4
      %v9914 = vrot.slane %v1493, 7
      %v9915 = vsel %vm9330, %v9913, %v9914
      %v9916 = vrot.slane %v9914, 4
      %v9917 = vrot.slane %v6204, 7
      %v9918 = vsel %vm9330, %v9916, %v9917
      %v9919 = vrot.slane %v9847, 7
      %v9920 = vrot.slane %v9919, 4
      %v9921 = vrot.slane %v1496, 7
      %v9922 = vsel %vm9330, %v9920, %v9921
      %v9923 = vrot.slane %v9921, 4
      %v9924 = vrot.slane %v6205, 7
      %v9925 = vsel %vm9330, %v9923, %v9924
      %v9926 = vrot.slane %v9848, 7
      %v9927 = vrot.slane %v9926, 4
      %v9928 = vrot.slane %v1499, 7
      %v9929 = vsel %vm9330, %v9927, %v9928
      %v9930 = vrot.slane %v9928, 4
      %v9931 = vrot.slane %v6206, 7
      %v9932 = vsel %vm9330, %v9930, %v9931
      %v9933 = vrot.slane %v9849, 7
      %v9934 = vrot.slane %v9933, 4
      %v9935 = vrot.slane %v1502, 7
      %v9936 = vsel %vm9330, %v9934, %v9935
      %v9937 = vrot.slane %v9935, 4
      %v9938 = vrot.slane %v6207, 7
      %v9939 = vsel %vm9330, %v9937, %v9938
      %v9940 = vrot.slane %v9850, 7
      %v9941 = vrot.slane %v9940, 4
      %v9942 = vrot.slane %v1505, 7
      %v9943 = vsel %vm9330, %v9941, %v9942
      %v9944 = vrot.slane %v9942, 4
      %v9945 = vrot.slane %v6208, 7
      %v9946 = vsel %vm9330, %v9944, %v9945
      %v9947 = vrot.slane %v9851, 7
      %v9948 = vrot.slane %v9947, 4
      %v9949 = vrot.slane %v1508, 7
      %v9950 = vsel %vm9330, %v9948, %v9949
      %v9951 = vrot.slane %v9949, 4
      %v9952 = vrot.slane %v6209, 7
      %v9953 = vsel %vm9330, %v9951, %v9952
      %v9954 = vrot.slane %v9852, 7
      %v9955 = vrot.slane %v9954, 4
      %v9956 = vrot.slane %v1511, 7
      %v9957 = vsel %vm9330, %v9955, %v9956
      %v9958 = vrot.slane %v9956, 4
      %v9959 = vrot.slane %v6210, 7
      %v9960 = vsel %vm9330, %v9958, %v9959
      %v9961 = vrot.slane %v9853, 7
      %v9962 = vrot.slane %v9961, 4
      %v9963 = vrot.slane %v1514, 7
      %v9964 = vsel %vm9330, %v9962, %v9963
      %v9965 = vrot.slane %v9963, 4
      %v9966 = vrot.slane %v6211, 7
      %v9967 = vsel %vm9330, %v9965, %v9966
      %v9968 = vrot.slane %v9854, 7
      %v9969 = vrot.slane %v9968, 4
      %v9970 = vrot.slane %v1517, 7
      %v9971 = vsel %vm9330, %v9969, %v9970
      %v9972 = vrot.slane %v9970, 4
      %v9973 = vrot.slane %v6212, 7
      %v9974 = vsel %vm9330, %v9972, %v9973
      %v9975 = vrot.slane %v9855, 7
      %v9976 = vrot.slane %v9975, 4
      %v9977 = vrot.slane %v1520, 7
      %v9978 = vsel %vm9330, %v9976, %v9977
      %v9979 = vrot.slane %v9977, 4
      %v9980 = vrot.slane %v6213, 7
      %v9981 = vsel %vm9330, %v9979, %v9980
      %v9982 = vrot.slane %v9856, 7
      %v9983 = vrot.slane %v9982, 4
      %v9984 = vrot.slane %v1523, 7
      %v9985 = vsel %vm9330, %v9983, %v9984
      %v9986 = vrot.slane %v9984, 4
      %v9987 = vrot.slane %v6214, 7
      %v9988 = vsel %vm9330, %v9986, %v9987
      %v9989 = vrot.slane %v9857, 7
      %v9990 = vrot.slane %v9989, 4
      %v9991 = vrot.slane %v1526, 7
      %v9992 = vsel %vm9330, %v9990, %v9991
      %v9993 = vrot.slane %v9991, 4
      %v9994 = vrot.slane %v6215, 7
      %v9995 = vsel %vm9330, %v9993, %v9994
      %v9996 = vrot.slane %v9858, 7
      %v9997 = vrot.slane %v9996, 4
      %v9998 = vrot.slane %v1529, 7
      %v9999 = vsel %vm9330, %v9997, %v9998
      %v10000 = vrot.slane %v9998, 4
      %v10001 = vrot.slane %v6216, 7
      %v10002 = vsel %vm9330, %v10000, %v10001
      %s10003 = scalar_lea.vmem %s1, 92
      %v10004 = vld [vmem:[%s10003] sm:$0xf]
      %v10005 = vunpack.c.l.b16 %v9894
      %v10006 = vunpack.c.l.b16 %v9897
      %v10007 = vunpack.c.l.b16 %v9901
      %v10008 = vunpack.c.l.b16 %v9904
      %v10009 = vunpack.c.l.b16 %v9908
      %v10010 = vunpack.c.l.b16 %v9911
      %v10011 = vunpack.c.l.b16 %v9915
      %v10012 = vunpack.c.l.b16 %v9918
      %v10013 = vunpack.c.l.b16 %v9922
      %v10014 = vunpack.c.l.b16 %v9925
      %v10015 = vunpack.c.l.b16 %v9929
      %v10016 = vunpack.c.l.b16 %v9932
      %v10017 = vunpack.c.l.b16 %v9936
      %v10018 = vunpack.c.l.b16 %v9939
      %v10019 = vunpack.c.l.b16 %v9943
      %v10020 = vunpack.c.l.b16 %v9946
      %v10021 = vunpack.c.l.b16 %v9950
      %v10022 = vunpack.c.l.b16 %v9953
      %v10023 = vunpack.c.l.b16 %v9957
      %v10024 = vunpack.c.l.b16 %v9960
      %v10025 = vunpack.c.l.b16 %v9964
      %v10026 = vunpack.c.l.b16 %v9967
      %v10027 = vunpack.c.l.b16 %v9971
      %v10028 = vunpack.c.l.b16 %v9974
      %v10029 = vunpack.c.l.b16 %v9978
      %v10030 = vunpack.c.l.b16 %v9981
      %v10031 = vunpack.c.l.b16 %v9985
      %v10032 = vunpack.c.l.b16 %v9988
      %v10033 = vunpack.c.l.b16 %v9992
      %v10034 = vunpack.c.l.b16 %v9995
      %v10035 = vunpack.c.l.b16 %v9999
      %v10036 = vunpack.c.l.b16 %v10002
      %v10037 = vpack.c.b16 %v10006, %v10005
      %v10038 = vpack.c.b16 %v10008, %v10007
      %v10039 = vpack.c.b16 %v10010, %v10009
      %v10040 = vpack.c.b16 %v10012, %v10011
      %v10041 = vpack.c.b16 %v10014, %v10013
      %v10042 = vpack.c.b16 %v10016, %v10015
      %v10043 = vpack.c.b16 %v10018, %v10017
      %v10044 = vpack.c.b16 %v10020, %v10019
      %v10045 = vpack.c.b16 %v10022, %v10021
      %v10046 = vpack.c.b16 %v10024, %v10023
      %v10047 = vpack.c.b16 %v10026, %v10025
      %v10048 = vpack.c.b16 %v10028, %v10027
      %v10049 = vpack.c.b16 %v10030, %v10029
      %v10050 = vpack.c.b16 %v10032, %v10031
      %v10051 = vpack.c.b16 %v10034, %v10033
      %v10052 = vpack.c.b16 %v10036, %v10035
      %v10054 = vsel %vm466, %v10004, 0
      %v10057 = vsel %vm466, %v10037, 0
      %v10060 = vsel %vm466, %v10038, 0
      %v10063 = vsel %vm466, %v10039, 0
      %v10066 = vsel %vm466, %v10040, 0
      %v10069 = vsel %vm466, %v10041, 0
      %v10072 = vsel %vm466, %v10042, 0
      %v10075 = vsel %vm466, %v10043, 0
      %v10078 = vsel %vm466, %v10044, 0
      %v10081 = vsel %vm466, %v10045, 0
      %v10084 = vsel %vm466, %v10046, 0
      %v10087 = vsel %vm466, %v10047, 0
      %v10090 = vsel %vm466, %v10048, 0
      %v10093 = vsel %vm466, %v10049, 0
      %v10096 = vsel %vm466, %v10050, 0
      %v10099 = vsel %vm466, %v10051, 0
      %v10102 = vsel %vm466, %v10052, 0
      %10104 = vmatprep.subr.bf16.mxu0 0
      %10105 = vmatpush1.bf16.xpose.msra.mxu0 %v10057
      %10106 = vmatprep.subr.bf16.mxu0 0
      %10107 = vmatpush1.bf16.xpose.msra.mxu0 %v10060
      %10108 = vmatprep.subr.bf16.mxu0 0
      %10109 = vmatpush1.bf16.xpose.msra.mxu0 %v10063
      %10110 = vmatprep.subr.bf16.mxu0 0
      %10111 = vmatpush1.bf16.xpose.msra.mxu0 %v10066
      %10112 = vmatprep.subr.bf16.mxu0 0
      %10113 = vmatpush1.bf16.xpose.msra.mxu0 %v10069
      %10114 = vmatprep.subr.bf16.mxu0 0
      %10115 = vmatpush1.bf16.xpose.msra.mxu0 %v10072
      %10116 = vmatprep.subr.bf16.mxu0 0
      %10117 = vmatpush1.bf16.xpose.msra.mxu0 %v10075
      %10118 = vmatprep.subr.bf16.mxu0 0
      %10119 = vmatpush1.bf16.xpose.msra.mxu0 %v10078
      %10120 = vmatprep.subr.bf16.mxu0 0
      %10121 = vmatpush1.bf16.xpose.msra.mxu0 %v10081
      %10122 = vmatprep.subr.bf16.mxu0 0
      %10123 = vmatpush1.bf16.xpose.msra.mxu0 %v10084
      %10124 = vmatprep.subr.bf16.mxu0 0
      %10125 = vmatpush1.bf16.xpose.msra.mxu0 %v10087
      %10126 = vmatprep.subr.bf16.mxu0 0
      %10127 = vmatpush1.bf16.xpose.msra.mxu0 %v10090
      %10128 = vmatprep.subr.bf16.mxu0 0
      %10129 = vmatpush1.bf16.xpose.msra.mxu0 %v10093
      %10130 = vmatprep.subr.bf16.mxu0 0
      %10131 = vmatpush1.bf16.xpose.msra.mxu0 %v10096
      %10132 = vmatprep.subr.bf16.mxu0 0
      %10133 = vmatpush1.bf16.xpose.msra.mxu0 %v10099
      %10134 = vmatprep.subr.bf16.mxu0 0
      %10135 = vmatpush1.bf16.xpose.msra.mxu0 %v10102
      %10136 = vmatprep.mubr.bf16.mxu0 0
      %10137 = vmatmul.mubr.bf16.gmra.mrb[0].mxu0 %v10054
      %v10138 = vpop.f32.mrb[0].mxu0
      %v10139 = vadd.f32 0.0, %v10138
      %v10140 = vpop.f32.mrb[0].mxu0
      %v10141 = vadd.f32 0.0, %v10140
      %v10142 = vpop.f32.mrb[0].mxu0
      %v10143 = vpop.f32.mrb[0].mxu0
      %10144 = vdwg.mxu0
      %v10145 = vadd.f32 %v9841, %v10139
      %v10146 = vadd.f32 %v9842, %v10141
      %s10147 = sadd.s32 %s195, 6
      %s10148 = smul.u32 %s10147, 3
      %s10149 = smul.addr %s10148, 4
      %s10150 = scalar_lea.vmem %s183, %s10149
      %v10151 = vld [vmem:[%s10150] sm:$0xf]
      %v10152 = vld [vmem:[%s10150 + $0x4] sm:$0xf]
      %v10153 = vld [vmem:[%s10150 + $0xc] sm:$0xf]
      %v10154 = vld [vmem:[%s10150 + $0x10] sm:$0xf]
      %v10155 = vld [vmem:[%s10150 + $0x18] sm:$0xf]
      %v10156 = vld [vmem:[%s10150 + $0x1c] sm:$0xf]
      %v10157 = vld [vmem:[%s10150 + $0x24] sm:$0xf]
      %v10158 = vld [vmem:[%s10150 + $0x28] sm:$0xf]
      %v10159 = vld [vmem:[%s10150 + $0x30] sm:$0xf]
      %v10160 = vld [vmem:[%s10150 + $0x34] sm:$0xf]
      %v10161 = vld [vmem:[%s10150 + $0x3c] sm:$0xf]
      %v10162 = vld [vmem:[%s10150 + $0x40] sm:$0xf]
      %v10163 = vld [vmem:[%s10150 + $0x48] sm:$0xf]
      %v10164 = vld [vmem:[%s10150 + $0x4c] sm:$0xf]
      %v10165 = vld [vmem:[%s10150 + $0x54] sm:$0xf]
      %v10166 = vld [vmem:[%s10150 + $0x58] sm:$0xf]
      %v10167 = vld [vmem:[%s10150 + $0x60] sm:$0xf]
      %v10168 = vld [vmem:[%s10150 + $0x64] sm:$0xf]
      %v10169 = vld [vmem:[%s10150 + $0x6c] sm:$0xf]
      %v10170 = vld [vmem:[%s10150 + $0x70] sm:$0xf]
      %v10171 = vld [vmem:[%s10150 + $0x78] sm:$0xf]
      %v10172 = vld [vmem:[%s10150 + $0x7c] sm:$0xf]
      %v10173 = vld [vmem:[%s10150 + $0x84] sm:$0xf]
      %v10174 = vld [vmem:[%s10150 + $0x88] sm:$0xf]
      %v10175 = vld [vmem:[%s10150 + $0x90] sm:$0xf]
      %v10176 = vld [vmem:[%s10150 + $0x94] sm:$0xf]
      %v10177 = vld [vmem:[%s10150 + $0x9c] sm:$0xf]
      %v10178 = vld [vmem:[%s10150 + $0xa0] sm:$0xf]
      %v10179 = vld [vmem:[%s10150 + $0xa8] sm:$0xf]
      %v10180 = vld [vmem:[%s10150 + $0xac] sm:$0xf]
      %v10181 = vld [vmem:[%s10150 + $0xb4] sm:$0xf]
      %v10182 = vld [vmem:[%s10150 + $0xb8] sm:$0xf]
      %s10183 = scalar_lea.vmem %s1, 96
      %v10184 = vld [vmem:[%s10183] sm:$0xf]
      %v10217 = vunpack.c.l.b16 %v10151
      %v10218 = vunpack.c.l.b16 %v10152
      %v10219 = vunpack.c.l.b16 %v10153
      %v10220 = vunpack.c.l.b16 %v10154
      %v10221 = vunpack.c.l.b16 %v10155
      %v10222 = vunpack.c.l.b16 %v10156
      %v10223 = vunpack.c.l.b16 %v10157
      %v10224 = vunpack.c.l.b16 %v10158
      %v10225 = vunpack.c.l.b16 %v10159
      %v10226 = vunpack.c.l.b16 %v10160
      %v10227 = vunpack.c.l.b16 %v10161
      %v10228 = vunpack.c.l.b16 %v10162
      %v10229 = vunpack.c.l.b16 %v10163
      %v10230 = vunpack.c.l.b16 %v10164
      %v10231 = vunpack.c.l.b16 %v10165
      %v10232 = vunpack.c.l.b16 %v10166
      %v10233 = vunpack.c.l.b16 %v10167
      %v10234 = vunpack.c.l.b16 %v10168
      %v10235 = vunpack.c.l.b16 %v10169
      %v10236 = vunpack.c.l.b16 %v10170
      %v10237 = vunpack.c.l.b16 %v10171
      %v10238 = vunpack.c.l.b16 %v10172
      %v10239 = vunpack.c.l.b16 %v10173
      %v10240 = vunpack.c.l.b16 %v10174
      %v10241 = vunpack.c.l.b16 %v10175
      %v10242 = vunpack.c.l.b16 %v10176
      %v10243 = vunpack.c.l.b16 %v10177
      %v10244 = vunpack.c.l.b16 %v10178
      %v10245 = vunpack.c.l.b16 %v10179
      %v10246 = vunpack.c.l.b16 %v10180
      %v10247 = vunpack.c.l.b16 %v10181
      %v10248 = vunpack.c.l.b16 %v10182
      %v10249 = vpack.c.b16 %v10218, %v10217
      %v10250 = vpack.c.b16 %v10220, %v10219
      %v10251 = vpack.c.b16 %v10222, %v10221
      %v10252 = vpack.c.b16 %v10224, %v10223
      %v10253 = vpack.c.b16 %v10226, %v10225
      %v10254 = vpack.c.b16 %v10228, %v10227
      %v10255 = vpack.c.b16 %v10230, %v10229
      %v10256 = vpack.c.b16 %v10232, %v10231
      %v10257 = vpack.c.b16 %v10234, %v10233
      %v10258 = vpack.c.b16 %v10236, %v10235
      %v10259 = vpack.c.b16 %v10238, %v10237
      %v10260 = vpack.c.b16 %v10240, %v10239
      %v10261 = vpack.c.b16 %v10242, %v10241
      %v10262 = vpack.c.b16 %v10244, %v10243
      %v10263 = vpack.c.b16 %v10246, %v10245
      %v10264 = vpack.c.b16 %v10248, %v10247
      %v10266 = vsel %vm466, %v10184, 0
      %v10269 = vsel %vm466, %v10249, 0
      %v10272 = vsel %vm466, %v10250, 0
      %v10275 = vsel %vm466, %v10251, 0
      %v10278 = vsel %vm466, %v10252, 0
      %v10281 = vsel %vm466, %v10253, 0
      %v10284 = vsel %vm466, %v10254, 0
      %v10287 = vsel %vm466, %v10255, 0
      %v10290 = vsel %vm466, %v10256, 0
      %v10293 = vsel %vm466, %v10257, 0
      %v10296 = vsel %vm466, %v10258, 0
      %v10299 = vsel %vm466, %v10259, 0
      %v10302 = vsel %vm466, %v10260, 0
      %v10305 = vsel %vm466, %v10261, 0
      %v10308 = vsel %vm466, %v10262, 0
      %v10311 = vsel %vm466, %v10263, 0
      %v10314 = vsel %vm466, %v10264, 0
      %10316 = vmatprep.subr.bf16.mxu0 0
      %10317 = vmatpush1.bf16.xpose.msra.mxu0 %v10269
      %10318 = vmatprep.subr.bf16.mxu0 0
      %10319 = vmatpush1.bf16.xpose.msra.mxu0 %v10272
      %10320 = vmatprep.subr.bf16.mxu0 0
      %10321 = vmatpush1.bf16.xpose.msra.mxu0 %v10275
      %10322 = vmatprep.subr.bf16.mxu0 0
      %10323 = vmatpush1.bf16.xpose.msra.mxu0 %v10278
      %10324 = vmatprep.subr.bf16.mxu0 0
      %10325 = vmatpush1.bf16.xpose.msra.mxu0 %v10281
      %10326 = vmatprep.subr.bf16.mxu0 0
      %10327 = vmatpush1.bf16.xpose.msra.mxu0 %v10284
      %10328 = vmatprep.subr.bf16.mxu0 0
      %10329 = vmatpush1.bf16.xpose.msra.mxu0 %v10287
      %10330 = vmatprep.subr.bf16.mxu0 0
      %10331 = vmatpush1.bf16.xpose.msra.mxu0 %v10290
      %10332 = vmatprep.subr.bf16.mxu0 0
      %10333 = vmatpush1.bf16.xpose.msra.mxu0 %v10293
      %10334 = vmatprep.subr.bf16.mxu0 0
      %10335 = vmatpush1.bf16.xpose.msra.mxu0 %v10296
      %10336 = vmatprep.subr.bf16.mxu0 0
      %10337 = vmatpush1.bf16.xpose.msra.mxu0 %v10299
      %10338 = vmatprep.subr.bf16.mxu0 0
      %10339 = vmatpush1.bf16.xpose.msra.mxu0 %v10302
      %10340 = vmatprep.subr.bf16.mxu0 0
      %10341 = vmatpush1.bf16.xpose.msra.mxu0 %v10305
      %10342 = vmatprep.subr.bf16.mxu0 0
      %10343 = vmatpush1.bf16.xpose.msra.mxu0 %v10308
      %10344 = vmatprep.subr.bf16.mxu0 0
      %10345 = vmatpush1.bf16.xpose.msra.mxu0 %v10311
      %10346 = vmatprep.subr.bf16.mxu0 0
      %10347 = vmatpush1.bf16.xpose.msra.mxu0 %v10314
      %10348 = vmatprep.mubr.bf16.mxu0 0
      %10349 = vmatmul.mubr.bf16.gmra.mrb[0].mxu0 %v10266
      %v10350 = vpop.f32.mrb[0].mxu0
      %v10351 = vadd.f32 0.0, %v10350
      %v10352 = vpop.f32.mrb[0].mxu0
      %v10353 = vadd.f32 0.0, %v10352
      %v10354 = vpop.f32.mrb[0].mxu0
      %v10355 = vpop.f32.mrb[0].mxu0
      %10356 = vdwg.mxu0
      %v10357 = vadd.f32 %v10145, %v10351
      %v10358 = vadd.f32 %v10146, %v10353
      %v10359 = vld [vmem:[%s10150] sm:$0xe]
      %v10360 = vld [vmem:[%s10150 + $0x4] sm:$0xf]
      %v10361 = vld [vmem:[%s10150 + $0x8] sm:$0x3]
      %v10362 = vld [vmem:[%s10150 + $0xc] sm:$0xe]
      %v10363 = vld [vmem:[%s10150 + $0x10] sm:$0xf]
      %v10364 = vld [vmem:[%s10150 + $0x14] sm:$0x3]
      %v10365 = vld [vmem:[%s10150 + $0x18] sm:$0xe]
      %v10366 = vld [vmem:[%s10150 + $0x1c] sm:$0xf]
      %v10367 = vld [vmem:[%s10150 + $0x20] sm:$0x3]
      %v10368 = vld [vmem:[%s10150 + $0x24] sm:$0xe]
      %v10369 = vld [vmem:[%s10150 + $0x28] sm:$0xf]
      %v10370 = vld [vmem:[%s10150 + $0x2c] sm:$0x3]
      %v10371 = vld [vmem:[%s10150 + $0x30] sm:$0xe]
      %v10372 = vld [vmem:[%s10150 + $0x34] sm:$0xf]
      %v10373 = vld [vmem:[%s10150 + $0x38] sm:$0x3]
      %v10374 = vld [vmem:[%s10150 + $0x3c] sm:$0xe]
      %v10375 = vld [vmem:[%s10150 + $0x40] sm:$0xf]
      %v10376 = vld [vmem:[%s10150 + $0x44] sm:$0x3]
      %v10377 = vld [vmem:[%s10150 + $0x48] sm:$0xe]
      %v10378 = vld [vmem:[%s10150 + $0x4c] sm:$0xf]
      %v10379 = vld [vmem:[%s10150 + $0x50] sm:$0x3]
      %v10380 = vld [vmem:[%s10150 + $0x54] sm:$0xe]
      %v10381 = vld [vmem:[%s10150 + $0x58] sm:$0xf]
      %v10382 = vld [vmem:[%s10150 + $0x5c] sm:$0x3]
      %v10383 = vld [vmem:[%s10150 + $0x60] sm:$0xe]
      %v10384 = vld [vmem:[%s10150 + $0x64] sm:$0xf]
      %v10385 = vld [vmem:[%s10150 + $0x68] sm:$0x3]
      %v10386 = vld [vmem:[%s10150 + $0x6c] sm:$0xe]
      %v10387 = vld [vmem:[%s10150 + $0x70] sm:$0xf]
      %v10388 = vld [vmem:[%s10150 + $0x74] sm:$0x3]
      %v10389 = vld [vmem:[%s10150 + $0x78] sm:$0xe]
      %v10390 = vld [vmem:[%s10150 + $0x7c] sm:$0xf]
      %v10391 = vld [vmem:[%s10150 + $0x80] sm:$0x3]
      %v10392 = vld [vmem:[%s10150 + $0x84] sm:$0xe]
      %v10393 = vld [vmem:[%s10150 + $0x88] sm:$0xf]
      %v10394 = vld [vmem:[%s10150 + $0x8c] sm:$0x3]
      %v10395 = vld [vmem:[%s10150 + $0x90] sm:$0xe]
      %v10396 = vld [vmem:[%s10150 + $0x94] sm:$0xf]
      %v10397 = vld [vmem:[%s10150 + $0x98] sm:$0x3]
      %v10398 = vld [vmem:[%s10150 + $0x9c] sm:$0xe]
      %v10399 = vld [vmem:[%s10150 + $0xa0] sm:$0xf]
      %v10400 = vld [vmem:[%s10150 + $0xa4] sm:$0x3]
      %v10401 = vld [vmem:[%s10150 + $0xa8] sm:$0xe]
      %v10402 = vld [vmem:[%s10150 + $0xac] sm:$0xf]
      %v10403 = vld [vmem:[%s10150 + $0xb0] sm:$0x3]
      %v10404 = vld [vmem:[%s10150 + $0xb4] sm:$0xe]
      %v10405 = vld [vmem:[%s10150 + $0xb8] sm:$0xf]
      %v10406 = vld [vmem:[%s10150 + $0xbc] sm:$0x3]
      %v10408 = vshrl.u32 %v10359, 16
      %v10410 = vrot.slane %v10408, 5
      %v10411 = vshll.u32 %v10359, 16
      %v10413 = vrot.slane %v10411, 6
      %v10414 = vor.u32 %v10410, %v10413
      %v10415 = vrot.slane %v10414, 4
      %v10417 = vshrl.u32 %v10360, 16
      %v10419 = vrot.slane %v10417, 5
      %v10420 = vshll.u32 %v10360, 16
      %v10422 = vrot.slane %v10420, 6
      %v10423 = vor.u32 %v10419, %v10422
      %v10424 = vsel %vm579, %v10415, %v10423
      %v10425 = vrot.slane %v10423, 4
      %v10427 = vshrl.u32 %v10361, 16
      %v10429 = vrot.slane %v10427, 5
      %v10430 = vshll.u32 %v10361, 16
      %v10432 = vrot.slane %v10430, 6
      %v10433 = vor.u32 %v10429, %v10432
      %v10434 = vsel %vm579, %v10425, %v10433
      %v10436 = vshrl.u32 %v10362, 16
      %v10438 = vrot.slane %v10436, 5
      %v10439 = vshll.u32 %v10362, 16
      %v10441 = vrot.slane %v10439, 6
      %v10442 = vor.u32 %v10438, %v10441
      %v10443 = vrot.slane %v10442, 4
      %v10445 = vshrl.u32 %v10363, 16
      %v10447 = vrot.slane %v10445, 5
      %v10448 = vshll.u32 %v10363, 16
      %v10450 = vrot.slane %v10448, 6
      %v10451 = vor.u32 %v10447, %v10450
      %v10452 = vsel %vm579, %v10443, %v10451
      %v10453 = vrot.slane %v10451, 4
      %v10455 = vshrl.u32 %v10364, 16
      %v10457 = vrot.slane %v10455, 5
      %v10458 = vshll.u32 %v10364, 16
      %v10460 = vrot.slane %v10458, 6
      %v10461 = vor.u32 %v10457, %v10460
      %v10462 = vsel %vm579, %v10453, %v10461
      %v10464 = vshrl.u32 %v10365, 16
      %v10466 = vrot.slane %v10464, 5
      %v10467 = vshll.u32 %v10365, 16
      %v10469 = vrot.slane %v10467, 6
      %v10470 = vor.u32 %v10466, %v10469
      %v10471 = vrot.slane %v10470, 4
      %v10473 = vshrl.u32 %v10366, 16
      %v10475 = vrot.slane %v10473, 5
      %v10476 = vshll.u32 %v10366, 16
      %v10478 = vrot.slane %v10476, 6
      %v10479 = vor.u32 %v10475, %v10478
      %v10480 = vsel %vm579, %v10471, %v10479
      %v10481 = vrot.slane %v10479, 4
      %v10483 = vshrl.u32 %v10367, 16
      %v10485 = vrot.slane %v10483, 5
      %v10486 = vshll.u32 %v10367, 16
      %v10488 = vrot.slane %v10486, 6
      %v10489 = vor.u32 %v10485, %v10488
      %v10490 = vsel %vm579, %v10481, %v10489
      %v10492 = vshrl.u32 %v10368, 16
      %v10494 = vrot.slane %v10492, 5
      %v10495 = vshll.u32 %v10368, 16
      %v10497 = vrot.slane %v10495, 6
      %v10498 = vor.u32 %v10494, %v10497
      %v10499 = vrot.slane %v10498, 4
      %v10501 = vshrl.u32 %v10369, 16
      %v10503 = vrot.slane %v10501, 5
      %v10504 = vshll.u32 %v10369, 16
      %v10506 = vrot.slane %v10504, 6
      %v10507 = vor.u32 %v10503, %v10506
      %v10508 = vsel %vm579, %v10499, %v10507
      %v10509 = vrot.slane %v10507, 4
      %v10511 = vshrl.u32 %v10370, 16
      %v10513 = vrot.slane %v10511, 5
      %v10514 = vshll.u32 %v10370, 16
      %v10516 = vrot.slane %v10514, 6
      %v10517 = vor.u32 %v10513, %v10516
      %v10518 = vsel %vm579, %v10509, %v10517
      %v10520 = vshrl.u32 %v10371, 16
      %v10522 = vrot.slane %v10520, 5
      %v10523 = vshll.u32 %v10371, 16
      %v10525 = vrot.slane %v10523, 6
      %v10526 = vor.u32 %v10522, %v10525
      %v10527 = vrot.slane %v10526, 4
      %v10529 = vshrl.u32 %v10372, 16
      %v10531 = vrot.slane %v10529, 5
      %v10532 = vshll.u32 %v10372, 16
      %v10534 = vrot.slane %v10532, 6
      %v10535 = vor.u32 %v10531, %v10534
      %v10536 = vsel %vm579, %v10527, %v10535
      %v10537 = vrot.slane %v10535, 4
      %v10539 = vshrl.u32 %v10373, 16
      %v10541 = vrot.slane %v10539, 5
      %v10542 = vshll.u32 %v10373, 16
      %v10544 = vrot.slane %v10542, 6
      %v10545 = vor.u32 %v10541, %v10544
      %v10546 = vsel %vm579, %v10537, %v10545
      %v10548 = vshrl.u32 %v10374, 16
      %v10550 = vrot.slane %v10548, 5
      %v10551 = vshll.u32 %v10374, 16
      %v10553 = vrot.slane %v10551, 6
      %v10554 = vor.u32 %v10550, %v10553
      %v10555 = vrot.slane %v10554, 4
      %v10557 = vshrl.u32 %v10375, 16
      %v10559 = vrot.slane %v10557, 5
      %v10560 = vshll.u32 %v10375, 16
      %v10562 = vrot.slane %v10560, 6
      %v10563 = vor.u32 %v10559, %v10562
      %v10564 = vsel %vm579, %v10555, %v10563
      %v10565 = vrot.slane %v10563, 4
      %v10567 = vshrl.u32 %v10376, 16
      %v10569 = vrot.slane %v10567, 5
      %v10570 = vshll.u32 %v10376, 16
      %v10572 = vrot.slane %v10570, 6
      %v10573 = vor.u32 %v10569, %v10572
      %v10574 = vsel %vm579, %v10565, %v10573
      %v10576 = vshrl.u32 %v10377, 16
      %v10578 = vrot.slane %v10576, 5
      %v10579 = vshll.u32 %v10377, 16
      %v10581 = vrot.slane %v10579, 6
      %v10582 = vor.u32 %v10578, %v10581
      %v10583 = vrot.slane %v10582, 4
      %v10585 = vshrl.u32 %v10378, 16
      %v10587 = vrot.slane %v10585, 5
      %v10588 = vshll.u32 %v10378, 16
      %v10590 = vrot.slane %v10588, 6
      %v10591 = vor.u32 %v10587, %v10590
      %v10592 = vsel %vm579, %v10583, %v10591
      %v10593 = vrot.slane %v10591, 4
      %v10595 = vshrl.u32 %v10379, 16
      %v10597 = vrot.slane %v10595, 5
      %v10598 = vshll.u32 %v10379, 16
      %v10600 = vrot.slane %v10598, 6
      %v10601 = vor.u32 %v10597, %v10600
      %v10602 = vsel %vm579, %v10593, %v10601
      %v10604 = vshrl.u32 %v10380, 16
      %v10606 = vrot.slane %v10604, 5
      %v10607 = vshll.u32 %v10380, 16
      %v10609 = vrot.slane %v10607, 6
      %v10610 = vor.u32 %v10606, %v10609
      %v10611 = vrot.slane %v10610, 4
      %v10613 = vshrl.u32 %v10381, 16
      %v10615 = vrot.slane %v10613, 5
      %v10616 = vshll.u32 %v10381, 16
      %v10618 = vrot.slane %v10616, 6
      %v10619 = vor.u32 %v10615, %v10618
      %v10620 = vsel %vm579, %v10611, %v10619
      %v10621 = vrot.slane %v10619, 4
      %v10623 = vshrl.u32 %v10382, 16
      %v10625 = vrot.slane %v10623, 5
      %v10626 = vshll.u32 %v10382, 16
      %v10628 = vrot.slane %v10626, 6
      %v10629 = vor.u32 %v10625, %v10628
      %v10630 = vsel %vm579, %v10621, %v10629
      %v10632 = vshrl.u32 %v10383, 16
      %v10634 = vrot.slane %v10632, 5
      %v10635 = vshll.u32 %v10383, 16
      %v10637 = vrot.slane %v10635, 6
      %v10638 = vor.u32 %v10634, %v10637
      %v10639 = vrot.slane %v10638, 4
      %v10641 = vshrl.u32 %v10384, 16
      %v10643 = vrot.slane %v10641, 5
      %v10644 = vshll.u32 %v10384, 16
      %v10646 = vrot.slane %v10644, 6
      %v10647 = vor.u32 %v10643, %v10646
      %v10648 = vsel %vm579, %v10639, %v10647
      %v10649 = vrot.slane %v10647, 4
      %v10651 = vshrl.u32 %v10385, 16
      %v10653 = vrot.slane %v10651, 5
      %v10654 = vshll.u32 %v10385, 16
      %v10656 = vrot.slane %v10654, 6
      %v10657 = vor.u32 %v10653, %v10656
      %v10658 = vsel %vm579, %v10649, %v10657
      %v10660 = vshrl.u32 %v10386, 16
      %v10662 = vrot.slane %v10660, 5
      %v10663 = vshll.u32 %v10386, 16
      %v10665 = vrot.slane %v10663, 6
      %v10666 = vor.u32 %v10662, %v10665
      %v10667 = vrot.slane %v10666, 4
      %v10669 = vshrl.u32 %v10387, 16
      %v10671 = vrot.slane %v10669, 5
      %v10672 = vshll.u32 %v10387, 16
      %v10674 = vrot.slane %v10672, 6
      %v10675 = vor.u32 %v10671, %v10674
      %v10676 = vsel %vm579, %v10667, %v10675
      %v10677 = vrot.slane %v10675, 4
      %v10679 = vshrl.u32 %v10388, 16
      %v10681 = vrot.slane %v10679, 5
      %v10682 = vshll.u32 %v10388, 16
      %v10684 = vrot.slane %v10682, 6
      %v10685 = vor.u32 %v10681, %v10684
      %v10686 = vsel %vm579, %v10677, %v10685
      %v10688 = vshrl.u32 %v10389, 16
      %v10690 = vrot.slane %v10688, 5
      %v10691 = vshll.u32 %v10389, 16
      %v10693 = vrot.slane %v10691, 6
      %v10694 = vor.u32 %v10690, %v10693
      %v10695 = vrot.slane %v10694, 4
      %v10697 = vshrl.u32 %v10390, 16
      %v10699 = vrot.slane %v10697, 5
      %v10700 = vshll.u32 %v10390, 16
      %v10702 = vrot.slane %v10700, 6
      %v10703 = vor.u32 %v10699, %v10702
      %v10704 = vsel %vm579, %v10695, %v10703
      %v10705 = vrot.slane %v10703, 4
      %v10707 = vshrl.u32 %v10391, 16
      %v10709 = vrot.slane %v10707, 5
      %v10710 = vshll.u32 %v10391, 16
      %v10712 = vrot.slane %v10710, 6
      %v10713 = vor.u32 %v10709, %v10712
      %v10714 = vsel %vm579, %v10705, %v10713
      %v10716 = vshrl.u32 %v10392, 16
      %v10718 = vrot.slane %v10716, 5
      %v10719 = vshll.u32 %v10392, 16
      %v10721 = vrot.slane %v10719, 6
      %v10722 = vor.u32 %v10718, %v10721
      %v10723 = vrot.slane %v10722, 4
      %v10725 = vshrl.u32 %v10393, 16
      %v10727 = vrot.slane %v10725, 5
      %v10728 = vshll.u32 %v10393, 16
      %v10730 = vrot.slane %v10728, 6
      %v10731 = vor.u32 %v10727, %v10730
      %v10732 = vsel %vm579, %v10723, %v10731
      %v10733 = vrot.slane %v10731, 4
      %v10735 = vshrl.u32 %v10394, 16
      %v10737 = vrot.slane %v10735, 5
      %v10738 = vshll.u32 %v10394, 16
      %v10740 = vrot.slane %v10738, 6
      %v10741 = vor.u32 %v10737, %v10740
      %v10742 = vsel %vm579, %v10733, %v10741
      %v10744 = vshrl.u32 %v10395, 16
      %v10746 = vrot.slane %v10744, 5
      %v10747 = vshll.u32 %v10395, 16
      %v10749 = vrot.slane %v10747, 6
      %v10750 = vor.u32 %v10746, %v10749
      %v10751 = vrot.slane %v10750, 4
      %v10753 = vshrl.u32 %v10396, 16
      %v10755 = vrot.slane %v10753, 5
      %v10756 = vshll.u32 %v10396, 16
      %v10758 = vrot.slane %v10756, 6
      %v10759 = vor.u32 %v10755, %v10758
      %v10760 = vsel %vm579, %v10751, %v10759
      %v10761 = vrot.slane %v10759, 4
      %v10763 = vshrl.u32 %v10397, 16
      %v10765 = vrot.slane %v10763, 5
      %v10766 = vshll.u32 %v10397, 16
      %v10768 = vrot.slane %v10766, 6
      %v10769 = vor.u32 %v10765, %v10768
      %v10770 = vsel %vm579, %v10761, %v10769
      %v10772 = vshrl.u32 %v10398, 16
      %v10774 = vrot.slane %v10772, 5
      %v10775 = vshll.u32 %v10398, 16
      %v10777 = vrot.slane %v10775, 6
      %v10778 = vor.u32 %v10774, %v10777
      %v10779 = vrot.slane %v10778, 4
      %v10781 = vshrl.u32 %v10399, 16
      %v10783 = vrot.slane %v10781, 5
      %v10784 = vshll.u32 %v10399, 16
      %v10786 = vrot.slane %v10784, 6
      %v10787 = vor.u32 %v10783, %v10786
      %v10788 = vsel %vm579, %v10779, %v10787
      %v10789 = vrot.slane %v10787, 4
      %v10791 = vshrl.u32 %v10400, 16
      %v10793 = vrot.slane %v10791, 5
      %v10794 = vshll.u32 %v10400, 16
      %v10796 = vrot.slane %v10794, 6
      %v10797 = vor.u32 %v10793, %v10796
      %v10798 = vsel %vm579, %v10789, %v10797
      %v10800 = vshrl.u32 %v10401, 16
      %v10802 = vrot.slane %v10800, 5
      %v10803 = vshll.u32 %v10401, 16
      %v10805 = vrot.slane %v10803, 6
      %v10806 = vor.u32 %v10802, %v10805
      %v10807 = vrot.slane %v10806, 4
      %v10809 = vshrl.u32 %v10402, 16
      %v10811 = vrot.slane %v10809, 5
      %v10812 = vshll.u32 %v10402, 16
      %v10814 = vrot.slane %v10812, 6
      %v10815 = vor.u32 %v10811, %v10814
      %v10816 = vsel %vm579, %v10807, %v10815
      %v10817 = vrot.slane %v10815, 4
      %v10819 = vshrl.u32 %v10403, 16
      %v10821 = vrot.slane %v10819, 5
      %v10822 = vshll.u32 %v10403, 16
      %v10824 = vrot.slane %v10822, 6
      %v10825 = vor.u32 %v10821, %v10824
      %v10826 = vsel %vm579, %v10817, %v10825
      %v10828 = vshrl.u32 %v10404, 16
      %v10830 = vrot.slane %v10828, 5
      %v10831 = vshll.u32 %v10404, 16
      %v10833 = vrot.slane %v10831, 6
      %v10834 = vor.u32 %v10830, %v10833
      %v10835 = vrot.slane %v10834, 4
      %v10837 = vshrl.u32 %v10405, 16
      %v10839 = vrot.slane %v10837, 5
      %v10840 = vshll.u32 %v10405, 16
      %v10842 = vrot.slane %v10840, 6
      %v10843 = vor.u32 %v10839, %v10842
      %v10844 = vsel %vm579, %v10835, %v10843
      %v10845 = vrot.slane %v10843, 4
      %v10847 = vshrl.u32 %v10406, 16
      %v10849 = vrot.slane %v10847, 5
      %v10850 = vshll.u32 %v10406, 16
      %v10852 = vrot.slane %v10850, 6
      %v10853 = vor.u32 %v10849, %v10852
      %v10854 = vsel %vm579, %v10845, %v10853
      %s10855 = scalar_lea.vmem %s1, 100
      %v10856 = vld [vmem:[%s10855] sm:$0xf]
      %v10857 = vunpack.c.l.b16 %v10424
      %v10858 = vunpack.c.l.b16 %v10434
      %v10859 = vunpack.c.l.b16 %v10452
      %v10860 = vunpack.c.l.b16 %v10462
      %v10861 = vunpack.c.l.b16 %v10480
      %v10862 = vunpack.c.l.b16 %v10490
      %v10863 = vunpack.c.l.b16 %v10508
      %v10864 = vunpack.c.l.b16 %v10518
      %v10865 = vunpack.c.l.b16 %v10536
      %v10866 = vunpack.c.l.b16 %v10546
      %v10867 = vunpack.c.l.b16 %v10564
      %v10868 = vunpack.c.l.b16 %v10574
      %v10869 = vunpack.c.l.b16 %v10592
      %v10870 = vunpack.c.l.b16 %v10602
      %v10871 = vunpack.c.l.b16 %v10620
      %v10872 = vunpack.c.l.b16 %v10630
      %v10873 = vunpack.c.l.b16 %v10648
      %v10874 = vunpack.c.l.b16 %v10658
      %v10875 = vunpack.c.l.b16 %v10676
      %v10876 = vunpack.c.l.b16 %v10686
      %v10877 = vunpack.c.l.b16 %v10704
      %v10878 = vunpack.c.l.b16 %v10714
      %v10879 = vunpack.c.l.b16 %v10732
      %v10880 = vunpack.c.l.b16 %v10742
      %v10881 = vunpack.c.l.b16 %v10760
      %v10882 = vunpack.c.l.b16 %v10770
      %v10883 = vunpack.c.l.b16 %v10788
      %v10884 = vunpack.c.l.b16 %v10798
      %v10885 = vunpack.c.l.b16 %v10816
      %v10886 = vunpack.c.l.b16 %v10826
      %v10887 = vunpack.c.l.b16 %v10844
      %v10888 = vunpack.c.l.b16 %v10854
      %v10889 = vpack.c.b16 %v10858, %v10857
      %v10890 = vpack.c.b16 %v10860, %v10859
      %v10891 = vpack.c.b16 %v10862, %v10861
      %v10892 = vpack.c.b16 %v10864, %v10863
      %v10893 = vpack.c.b16 %v10866, %v10865
      %v10894 = vpack.c.b16 %v10868, %v10867
      %v10895 = vpack.c.b16 %v10870, %v10869
      %v10896 = vpack.c.b16 %v10872, %v10871
      %v10897 = vpack.c.b16 %v10874, %v10873
      %v10898 = vpack.c.b16 %v10876, %v10875
      %v10899 = vpack.c.b16 %v10878, %v10877
      %v10900 = vpack.c.b16 %v10880, %v10879
      %v10901 = vpack.c.b16 %v10882, %v10881
      %v10902 = vpack.c.b16 %v10884, %v10883
      %v10903 = vpack.c.b16 %v10886, %v10885
      %v10904 = vpack.c.b16 %v10888, %v10887
      %v10906 = vsel %vm466, %v10856, 0
      %v10909 = vsel %vm466, %v10889, 0
      %v10912 = vsel %vm466, %v10890, 0
      %v10915 = vsel %vm466, %v10891, 0
      %v10918 = vsel %vm466, %v10892, 0
      %v10921 = vsel %vm466, %v10893, 0
      %v10924 = vsel %vm466, %v10894, 0
      %v10927 = vsel %vm466, %v10895, 0
      %v10930 = vsel %vm466, %v10896, 0
      %v10933 = vsel %vm466, %v10897, 0
      %v10936 = vsel %vm466, %v10898, 0
      %v10939 = vsel %vm466, %v10899, 0
      %v10942 = vsel %vm466, %v10900, 0
      %v10945 = vsel %vm466, %v10901, 0
      %v10948 = vsel %vm466, %v10902, 0
      %v10951 = vsel %vm466, %v10903, 0
      %v10954 = vsel %vm466, %v10904, 0
      %10956 = vmatprep.subr.bf16.mxu0 0
      %10957 = vmatpush1.bf16.xpose.msra.mxu0 %v10909
      %10958 = vmatprep.subr.bf16.mxu0 0
      %10959 = vmatpush1.bf16.xpose.msra.mxu0 %v10912
      %10960 = vmatprep.subr.bf16.mxu0 0
      %10961 = vmatpush1.bf16.xpose.msra.mxu0 %v10915
      %10962 = vmatprep.subr.bf16.mxu0 0
      %10963 = vmatpush1.bf16.xpose.msra.mxu0 %v10918
      %10964 = vmatprep.subr.bf16.mxu0 0
      %10965 = vmatpush1.bf16.xpose.msra.mxu0 %v10921
      %10966 = vmatprep.subr.bf16.mxu0 0
      %10967 = vmatpush1.bf16.xpose.msra.mxu0 %v10924
      %10968 = vmatprep.subr.bf16.mxu0 0
      %10969 = vmatpush1.bf16.xpose.msra.mxu0 %v10927
      %10970 = vmatprep.subr.bf16.mxu0 0
      %10971 = vmatpush1.bf16.xpose.msra.mxu0 %v10930
      %10972 = vmatprep.subr.bf16.mxu0 0
      %10973 = vmatpush1.bf16.xpose.msra.mxu0 %v10933
      %10974 = vmatprep.subr.bf16.mxu0 0
      %10975 = vmatpush1.bf16.xpose.msra.mxu0 %v10936
      %10976 = vmatprep.subr.bf16.mxu0 0
      %10977 = vmatpush1.bf16.xpose.msra.mxu0 %v10939
      %10978 = vmatprep.subr.bf16.mxu0 0
      %10979 = vmatpush1.bf16.xpose.msra.mxu0 %v10942
      %10980 = vmatprep.subr.bf16.mxu0 0
      %10981 = vmatpush1.bf16.xpose.msra.mxu0 %v10945
      %10982 = vmatprep.subr.bf16.mxu0 0
      %10983 = vmatpush1.bf16.xpose.msra.mxu0 %v10948
      %10984 = vmatprep.subr.bf16.mxu0 0
      %10985 = vmatpush1.bf16.xpose.msra.mxu0 %v10951
      %10986 = vmatprep.subr.bf16.mxu0 0
      %10987 = vmatpush1.bf16.xpose.msra.mxu0 %v10954
      %10988 = vmatprep.mubr.bf16.mxu0 0
      %10989 = vmatmul.mubr.bf16.gmra.mrb[0].mxu0 %v10906
      %v10990 = vpop.f32.mrb[0].mxu0
      %v10991 = vadd.f32 0.0, %v10990
      %v10992 = vpop.f32.mrb[0].mxu0
      %v10993 = vadd.f32 0.0, %v10992
      %v10994 = vpop.f32.mrb[0].mxu0
      %v10995 = vpop.f32.mrb[0].mxu0
      %10996 = vdwg.mxu0
      %v10997 = vadd.f32 %v10357, %v10991
      %v10998 = vadd.f32 %v10358, %v10993
      %v10999 = vld [vmem:[%s10150] sm:$0x8]
      %v11000 = vld [vmem:[%s10150 + $0x8] sm:$0x7]
      %v11001 = vld [vmem:[%s10150 + $0xc] sm:$0x8]
      %v11002 = vld [vmem:[%s10150 + $0x14] sm:$0x7]
      %v11003 = vld [vmem:[%s10150 + $0x18] sm:$0x8]
      %v11004 = vld [vmem:[%s10150 + $0x20] sm:$0x7]
      %v11005 = vld [vmem:[%s10150 + $0x24] sm:$0x8]
      %v11006 = vld [vmem:[%s10150 + $0x2c] sm:$0x7]
      %v11007 = vld [vmem:[%s10150 + $0x30] sm:$0x8]
      %v11008 = vld [vmem:[%s10150 + $0x38] sm:$0x7]
      %v11009 = vld [vmem:[%s10150 + $0x3c] sm:$0x8]
      %v11010 = vld [vmem:[%s10150 + $0x44] sm:$0x7]
      %v11011 = vld [vmem:[%s10150 + $0x48] sm:$0x8]
      %v11012 = vld [vmem:[%s10150 + $0x50] sm:$0x7]
      %v11013 = vld [vmem:[%s10150 + $0x54] sm:$0x8]
      %v11014 = vld [vmem:[%s10150 + $0x5c] sm:$0x7]
      %v11015 = vld [vmem:[%s10150 + $0x60] sm:$0x8]
      %v11016 = vld [vmem:[%s10150 + $0x68] sm:$0x7]
      %v11017 = vld [vmem:[%s10150 + $0x6c] sm:$0x8]
      %v11018 = vld [vmem:[%s10150 + $0x74] sm:$0x7]
      %v11019 = vld [vmem:[%s10150 + $0x78] sm:$0x8]
      %v11020 = vld [vmem:[%s10150 + $0x80] sm:$0x7]
      %v11021 = vld [vmem:[%s10150 + $0x84] sm:$0x8]
      %v11022 = vld [vmem:[%s10150 + $0x8c] sm:$0x7]
      %v11023 = vld [vmem:[%s10150 + $0x90] sm:$0x8]
      %v11024 = vld [vmem:[%s10150 + $0x98] sm:$0x7]
      %v11025 = vld [vmem:[%s10150 + $0x9c] sm:$0x8]
      %v11026 = vld [vmem:[%s10150 + $0xa4] sm:$0x7]
      %v11027 = vld [vmem:[%s10150 + $0xa8] sm:$0x8]
      %v11028 = vld [vmem:[%s10150 + $0xb0] sm:$0x7]
      %v11029 = vld [vmem:[%s10150 + $0xb4] sm:$0x8]
      %v11030 = vld [vmem:[%s10150 + $0xbc] sm:$0x7]
      %v11079 = vrot.slane %v10999, 7
      %v11080 = vrot.slane %v11079, 4
      %v11081 = vrot.slane %v10360, 7
      %v11082 = vsel %vm9330, %v11080, %v11081
      %v11083 = vrot.slane %v11081, 4
      %v11084 = vrot.slane %v11000, 7
      %v11085 = vsel %vm9330, %v11083, %v11084
      %v11086 = vrot.slane %v11001, 7
      %v11087 = vrot.slane %v11086, 4
      %v11088 = vrot.slane %v10363, 7
      %v11089 = vsel %vm9330, %v11087, %v11088
      %v11090 = vrot.slane %v11088, 4
      %v11091 = vrot.slane %v11002, 7
      %v11092 = vsel %vm9330, %v11090, %v11091
      %v11093 = vrot.slane %v11003, 7
      %v11094 = vrot.slane %v11093, 4
      %v11095 = vrot.slane %v10366, 7
      %v11096 = vsel %vm9330, %v11094, %v11095
      %v11097 = vrot.slane %v11095, 4
      %v11098 = vrot.slane %v11004, 7
      %v11099 = vsel %vm9330, %v11097, %v11098
      %v11100 = vrot.slane %v11005, 7
      %v11101 = vrot.slane %v11100, 4
      %v11102 = vrot.slane %v10369, 7
      %v11103 = vsel %vm9330, %v11101, %v11102
      %v11104 = vrot.slane %v11102, 4
      %v11105 = vrot.slane %v11006, 7
      %v11106 = vsel %vm9330, %v11104, %v11105
      %v11107 = vrot.slane %v11007, 7
      %v11108 = vrot.slane %v11107, 4
      %v11109 = vrot.slane %v10372, 7
      %v11110 = vsel %vm9330, %v11108, %v11109
      %v11111 = vrot.slane %v11109, 4
      %v11112 = vrot.slane %v11008, 7
      %v11113 = vsel %vm9330, %v11111, %v11112
      %v11114 = vrot.slane %v11009, 7
      %v11115 = vrot.slane %v11114, 4
      %v11116 = vrot.slane %v10375, 7
      %v11117 = vsel %vm9330, %v11115, %v11116
      %v11118 = vrot.slane %v11116, 4
      %v11119 = vrot.slane %v11010, 7
      %v11120 = vsel %vm9330, %v11118, %v11119
      %v11121 = vrot.slane %v11011, 7
      %v11122 = vrot.slane %v11121, 4
      %v11123 = vrot.slane %v10378, 7
      %v11124 = vsel %vm9330, %v11122, %v11123
      %v11125 = vrot.slane %v11123, 4
      %v11126 = vrot.slane %v11012, 7
      %v11127 = vsel %vm9330, %v11125, %v11126
      %v11128 = vrot.slane %v11013, 7
      %v11129 = vrot.slane %v11128, 4
      %v11130 = vrot.slane %v10381, 7
      %v11131 = vsel %vm9330, %v11129, %v11130
      %v11132 = vrot.slane %v11130, 4
      %v11133 = vrot.slane %v11014, 7
      %v11134 = vsel %vm9330, %v11132, %v11133
      %v11135 = vrot.slane %v11015, 7
      %v11136 = vrot.slane %v11135, 4
      %v11137 = vrot.slane %v10384, 7
      %v11138 = vsel %vm9330, %v11136, %v11137
      %v11139 = vrot.slane %v11137, 4
      %v11140 = vrot.slane %v11016, 7
      %v11141 = vsel %vm9330, %v11139, %v11140
      %v11142 = vrot.slane %v11017, 7
      %v11143 = vrot.slane %v11142, 4
      %v11144 = vrot.slane %v10387, 7
      %v11145 = vsel %vm9330, %v11143, %v11144
      %v11146 = vrot.slane %v11144, 4
      %v11147 = vrot.slane %v11018, 7
      %v11148 = vsel %vm9330, %v11146, %v11147
      %v11149 = vrot.slane %v11019, 7
      %v11150 = vrot.slane %v11149, 4
      %v11151 = vrot.slane %v10390, 7
      %v11152 = vsel %vm9330, %v11150, %v11151
      %v11153 = vrot.slane %v11151, 4
      %v11154 = vrot.slane %v11020, 7
      %v11155 = vsel %vm9330, %v11153, %v11154
      %v11156 = vrot.slane %v11021, 7
      %v11157 = vrot.slane %v11156, 4
      %v11158 = vrot.slane %v10393, 7
      %v11159 = vsel %vm9330, %v11157, %v11158
      %v11160 = vrot.slane %v11158, 4
      %v11161 = vrot.slane %v11022, 7
      %v11162 = vsel %vm9330, %v11160, %v11161
      %v11163 = vrot.slane %v11023, 7
      %v11164 = vrot.slane %v11163, 4
      %v11165 = vrot.slane %v10396, 7
      %v11166 = vsel %vm9330, %v11164, %v11165
      %v11167 = vrot.slane %v11165, 4
      %v11168 = vrot.slane %v11024, 7
      %v11169 = vsel %vm9330, %v11167, %v11168
      %v11170 = vrot.slane %v11025, 7
      %v11171 = vrot.slane %v11170, 4
      %v11172 = vrot.slane %v10399, 7
      %v11173 = vsel %vm9330, %v11171, %v11172
      %v11174 = vrot.slane %v11172, 4
      %v11175 = vrot.slane %v11026, 7
      %v11176 = vsel %vm9330, %v11174, %v11175
      %v11177 = vrot.slane %v11027, 7
      %v11178 = vrot.slane %v11177, 4
      %v11179 = vrot.slane %v10402, 7
      %v11180 = vsel %vm9330, %v11178, %v11179
      %v11181 = vrot.slane %v11179, 4
      %v11182 = vrot.slane %v11028, 7
      %v11183 = vsel %vm9330, %v11181, %v11182
      %v11184 = vrot.slane %v11029, 7
      %v11185 = vrot.slane %v11184, 4
      %v11186 = vrot.slane %v10405, 7
      %v11187 = vsel %vm9330, %v11185, %v11186
      %v11188 = vrot.slane %v11186, 4
      %v11189 = vrot.slane %v11030, 7
      %v11190 = vsel %vm9330, %v11188, %v11189
      %s11191 = scalar_lea.vmem %s1, 104
      %v11192 = vld [vmem:[%s11191] sm:$0xf]
      %v11193 = vunpack.c.l.b16 %v11082
      %v11194 = vunpack.c.l.b16 %v11085
      %v11195 = vunpack.c.l.b16 %v11089
      %v11196 = vunpack.c.l.b16 %v11092
      %v11197 = vunpack.c.l.b16 %v11096
      %v11198 = vunpack.c.l.b16 %v11099
      %v11199 = vunpack.c.l.b16 %v11103
      %v11200 = vunpack.c.l.b16 %v11106
      %v11201 = vunpack.c.l.b16 %v11110
      %v11202 = vunpack.c.l.b16 %v11113
      %v11203 = vunpack.c.l.b16 %v11117
      %v11204 = vunpack.c.l.b16 %v11120
      %v11205 = vunpack.c.l.b16 %v11124
      %v11206 = vunpack.c.l.b16 %v11127
      %v11207 = vunpack.c.l.b16 %v11131
      %v11208 = vunpack.c.l.b16 %v11134
      %v11209 = vunpack.c.l.b16 %v11138
      %v11210 = vunpack.c.l.b16 %v11141
      %v11211 = vunpack.c.l.b16 %v11145
      %v11212 = vunpack.c.l.b16 %v11148
      %v11213 = vunpack.c.l.b16 %v11152
      %v11214 = vunpack.c.l.b16 %v11155
      %v11215 = vunpack.c.l.b16 %v11159
      %v11216 = vunpack.c.l.b16 %v11162
      %v11217 = vunpack.c.l.b16 %v11166
      %v11218 = vunpack.c.l.b16 %v11169
      %v11219 = vunpack.c.l.b16 %v11173
      %v11220 = vunpack.c.l.b16 %v11176
      %v11221 = vunpack.c.l.b16 %v11180
      %v11222 = vunpack.c.l.b16 %v11183
      %v11223 = vunpack.c.l.b16 %v11187
      %v11224 = vunpack.c.l.b16 %v11190
      %v11225 = vpack.c.b16 %v11194, %v11193
      %v11226 = vpack.c.b16 %v11196, %v11195
      %v11227 = vpack.c.b16 %v11198, %v11197
      %v11228 = vpack.c.b16 %v11200, %v11199
      %v11229 = vpack.c.b16 %v11202, %v11201
      %v11230 = vpack.c.b16 %v11204, %v11203
      %v11231 = vpack.c.b16 %v11206, %v11205
      %v11232 = vpack.c.b16 %v11208, %v11207
      %v11233 = vpack.c.b16 %v11210, %v11209
      %v11234 = vpack.c.b16 %v11212, %v11211
      %v11235 = vpack.c.b16 %v11214, %v11213
      %v11236 = vpack.c.b16 %v11216, %v11215
      %v11237 = vpack.c.b16 %v11218, %v11217
      %v11238 = vpack.c.b16 %v11220, %v11219
      %v11239 = vpack.c.b16 %v11222, %v11221
      %v11240 = vpack.c.b16 %v11224, %v11223
      %v11242 = vsel %vm466, %v11192, 0
      %v11245 = vsel %vm466, %v11225, 0
      %v11248 = vsel %vm466, %v11226, 0
      %v11251 = vsel %vm466, %v11227, 0
      %v11254 = vsel %vm466, %v11228, 0
      %v11257 = vsel %vm466, %v11229, 0
      %v11260 = vsel %vm466, %v11230, 0
      %v11263 = vsel %vm466, %v11231, 0
      %v11266 = vsel %vm466, %v11232, 0
      %v11269 = vsel %vm466, %v11233, 0
      %v11272 = vsel %vm466, %v11234, 0
      %v11275 = vsel %vm466, %v11235, 0
      %v11278 = vsel %vm466, %v11236, 0
      %v11281 = vsel %vm466, %v11237, 0
      %v11284 = vsel %vm466, %v11238, 0
      %v11287 = vsel %vm466, %v11239, 0
      %v11290 = vsel %vm466, %v11240, 0
      %11292 = vmatprep.subr.bf16.mxu0 0
      %11293 = vmatpush1.bf16.xpose.msra.mxu0 %v11245
      %11294 = vmatprep.subr.bf16.mxu0 0
      %11295 = vmatpush1.bf16.xpose.msra.mxu0 %v11248
      %11296 = vmatprep.subr.bf16.mxu0 0
      %11297 = vmatpush1.bf16.xpose.msra.mxu0 %v11251
      %11298 = vmatprep.subr.bf16.mxu0 0
      %11299 = vmatpush1.bf16.xpose.msra.mxu0 %v11254
      %11300 = vmatprep.subr.bf16.mxu0 0
      %11301 = vmatpush1.bf16.xpose.msra.mxu0 %v11257
      %11302 = vmatprep.subr.bf16.mxu0 0
      %11303 = vmatpush1.bf16.xpose.msra.mxu0 %v11260
      %11304 = vmatprep.subr.bf16.mxu0 0
      %11305 = vmatpush1.bf16.xpose.msra.mxu0 %v11263
      %11306 = vmatprep.subr.bf16.mxu0 0
      %11307 = vmatpush1.bf16.xpose.msra.mxu0 %v11266
      %11308 = vmatprep.subr.bf16.mxu0 0
      %11309 = vmatpush1.bf16.xpose.msra.mxu0 %v11269
      %11310 = vmatprep.subr.bf16.mxu0 0
      %11311 = vmatpush1.bf16.xpose.msra.mxu0 %v11272
      %11312 = vmatprep.subr.bf16.mxu0 0
      %11313 = vmatpush1.bf16.xpose.msra.mxu0 %v11275
      %11314 = vmatprep.subr.bf16.mxu0 0
      %11315 = vmatpush1.bf16.xpose.msra.mxu0 %v11278
      %11316 = vmatprep.subr.bf16.mxu0 0
      %11317 = vmatpush1.bf16.xpose.msra.mxu0 %v11281
      %11318 = vmatprep.subr.bf16.mxu0 0
      %11319 = vmatpush1.bf16.xpose.msra.mxu0 %v11284
      %11320 = vmatprep.subr.bf16.mxu0 0
      %11321 = vmatpush1.bf16.xpose.msra.mxu0 %v11287
      %11322 = vmatprep.subr.bf16.mxu0 0
      %11323 = vmatpush1.bf16.xpose.msra.mxu0 %v11290
      %11324 = vmatprep.mubr.bf16.mxu0 0
      %11325 = vmatmul.mubr.bf16.gmra.mrb[0].mxu0 %v11242
      %v11326 = vpop.f32.mrb[0].mxu0
      %v11327 = vadd.f32 0.0, %v11326
      %v11328 = vpop.f32.mrb[0].mxu0
      %v11329 = vadd.f32 0.0, %v11328
      %v11330 = vpop.f32.mrb[0].mxu0
      %v11331 = vpop.f32.mrb[0].mxu0
      %11332 = vdwg.mxu0
      %v11333 = vadd.f32 %v10997, %v11327
      %v11334 = vadd.f32 %v10998, %v11329
      %11335 = vst [vmem:[%s192] sm:$0xff] %v11333
      %11336 = vst [vmem:[%s192 + $0x8] sm:$0xff] %v11334
      %s11337 = smul.u32 2, %s19
      %p11338 = scmp.lt.s32.totalorder %s18, 1
      %s11339 = scalar_select %p11338, %s18, 1
      %p11340 = scmp.lt.s32.totalorder %s11337, 1
      %s11341 = scalar_select %p11340, %s11337, 1
      %s11342 = smul.addr %s11339, 2
      %s11343 = sadd.s32 %s11341, %s11342
      %s11344 = smul.addr %s11343, 8
      %s11345 = scalar_lea.vmem %s3, %s11344
      // Predicated region
      $region33: #{asppv2_forward.1} parent=31 // pred_check
        %p11346 = pneg %p114
      $region34: #{asppv2_forward.1} parent=31 // pred_check_branch
        %11348 = sbr.rel (%p11346) target = $region36
      $region35: #{asppv2_forward.1} parent=31 // pred_region
        %s11349 = smul.u32 2, %s19
      $region36: #{asppv2_forward.1} parent=31 // pred_fallthru
        _
    $region32: #{asppv2_forward.1} parent=5 // pred_fallthru
      _
    %p11350 = scmp.le.s32.totalorder 2, %s9
    // Predicated region
    $region37: #{asppv2_forward.1} parent=5 // pred_check
      %p11351 = pneg %p11350
    $region38: #{asppv2_forward.1} parent=5 // pred_check_branch
      %11353 = sbr.rel (%p11351) target = $region40
    $region39: #{asppv2_forward.1} parent=5 // pred_region
      %s11354 = ssub.s32 %s9, 2
      // Predicated region
      $region41: #{asppv2_forward.1} parent=39 // pred_check
        %p11355 = pneg %p120
      $region42: #{asppv2_forward.1} parent=39 // pred_check_branch
        %11357 = sbr.rel (%p11355) target = $region44
      $region43: #{asppv2_forward.1} parent=39 // pred_region
        %s11358 = smul.u32 2, %s21
        %p11359 = scmp.lt.s32.totalorder %s20, 1
        %s11360 = scalar_select %p11359, %s20, 1
        %p11361 = scmp.lt.s32.totalorder %s11358, 1
        %s11362 = scalar_select %p11361, %s11358, 1
        %s11363 = smul.addr %s11360, 2
        %s11364 = sadd.s32 %s11362, %s11363
        %s11365 = smul.addr %s11364, 8
        %s11366 = scalar_lea.vmem %s3, %s11365
      $region44: #{asppv2_forward.1} parent=39 // pred_fallthru
        _
    $region40: #{asppv2_forward.1} parent=5 // pred_fallthru
      _
  $region6: #{asppv2_forward.1} parent=0 // loop_footer
    %s13 = sadd.s32 1, %s9
  $region7: #{asppv2_forward.1} parent=0 // loop_footer_branch
    %8 = sbr.rel target = $region3
  $region8: #{asppv2_forward.1} parent=0 // loop_exit
    _

</llo_original>
